<compile_context>
chip_gen: v7x
topology: tpu7x:2x2x1
jax: 0.10.0
libtpu: 0.0.40
codegen_flags: <defaults>
</compile_context>

<pallas_src>
import jax
import jax.numpy as jnp
from jax.experimental import pallas as pl
from jax.experimental.pallas import tpu as pltpu

BN_EPS = 1e-5
CIN_PAD = 16     # xyz (3) channels zero-padded to 16 for clean bf16 tiling
TRANS_PAD = 16   # 3x3 = 9 transform entries padded to 16 lanes
NEG_INF = -1e9   # bias for padded logit columns -> exp() underflows to 0


def _relu(x):
    return jnp.maximum(x, 0.0)


def _choose_tm(n):
    """Point-row tile: up to 1024 rows, padding waste capped at ~13%."""
    if n <= 1024:
        return max(16, ((n + 15) // 16) * 16)
    best_tm, best_waste = 128, 1.0
    for tm in (1024, 768, 512, 384, 256, 128):
        n_pad = -(-n // tm) * tm
        waste = (n_pad - n) / n_pad
        if waste <= 0.13:
            return tm
        if waste < best_waste:
            best_tm, best_waste = tm, waste
    return best_tm


# ----------------------------------------------------------------------------
# Pallas kernels
# ----------------------------------------------------------------------------
def _tnet_kernel(x_ref, w1_ref, b1_ref, w2_ref, b2_ref, w3_ref, b3_ref,
                 fw1_ref, fb1_ref, fw2_ref, fb2_ref, fw3_ref, fb3_ref,
                 trans_ref, gmax_sc):
    """TNet: per-point MLP 3->64->128->1024 + running max + fused FC head.

    The pooled (1, 1024) feature lives in a VMEM scratch (never hits HBM);
    the FC head 1024->512->256->9 runs once per batch as a last-tile epilogue.
    """
    t = pl.program_id(1)
    x = x_ref[0]                                              # (TM, CIN_PAD) bf16
    h = _relu(jnp.dot(x, w1_ref[...], preferred_element_type=jnp.float32)
              + b1_ref[...])
    h = _relu(jnp.dot(h.astype(jnp.bfloat16), w2_ref[...],
                      preferred_element_type=jnp.float32) + b2_ref[...])
    h = _relu(jnp.dot(h.astype(jnp.bfloat16), w3_ref[...],
                      preferred_element_type=jnp.float32) + b3_ref[...])
    tile_max = jnp.max(h, axis=0, keepdims=True)              # (1, 1024)

    @pl.when(t == 0)
    def _():
        gmax_sc[...] = tile_max

    @pl.when(t > 0)
    def _():
        gmax_sc[...] = jnp.maximum(gmax_sc[...], tile_max)

    @pl.when(t == pl.num_programs(1) - 1)
    def _():
        g = gmax_sc[...].astype(jnp.bfloat16)                 # (1, 1024)
        f = _relu(jnp.dot(g, fw1_ref[...],
                          preferred_element_type=jnp.float32) + fb1_ref[...])
        f = _relu(jnp.dot(f.astype(jnp.bfloat16), fw2_ref[...],
                          preferred_element_type=jnp.float32) + fb2_ref[...])
        trans_ref[0] = jnp.dot(f.astype(jnp.bfloat16), fw3_ref[...],
                               preferred_element_type=jnp.float32) + fb3_ref[...]


def _feat_kernel(x_ref, w1b_ref, b1_ref, w2_ref, b2_ref, w3_ref, b3_ref,
                 gmax_ref):
    """PointNetfeat conv chain (input transform folded into conv1) + max pool.

    Only the per-batch (1, 1024) global max is written to HBM; the 64-channel
    pointfeat is NOT materialized (recomputed inside the head kernel).
    conv3 has BN but no ReLU, matching the reference.
    """
    t = pl.program_id(1)
    x = x_ref[0]                                              # (TM, CIN_PAD) bf16
    h = _relu(jnp.dot(x, w1b_ref[0], preferred_element_type=jnp.float32)
              + b1_ref[...])
    h = _relu(jnp.dot(h.astype(jnp.bfloat16), w2_ref[...],
                      preferred_element_type=jnp.float32) + b2_ref[...])
    h = jnp.dot(h.astype(jnp.bfloat16), w3_ref[...],
                preferred_element_type=jnp.float32) + b3_ref[...]   # no ReLU
    tile_max = jnp.max(h, axis=0, keepdims=True)

    @pl.when(t == 0)
    def _():
        gmax_ref[0] = tile_max

    @pl.when(t > 0)
    def _():
        gmax_ref[0] = jnp.maximum(gmax_ref[0], tile_max)


def _head_kernel(x_ref, w1b_ref, b1_ref, g_ref, wg_ref, bc1_ref, wpf_ref,
                 w2_ref, b2_ref, w3_ref, b3_ref, w4_ref, b4_ref, o_ref):
    """Dense head: recompute pointfeat, split c1 (global bias + pointfeat),
    c2, c3, c4 and a fused log_softmax over a lane-dense (128-padded) axis.

    The global-feature bias g @ W_g + b_c1 is recomputed per tile (M=1
    matmul, negligible) so both grid axes stay "parallel".
    """
    g = g_ref[0].astype(jnp.bfloat16)                         # (1, 1024)
    gbias = jnp.dot(g, wg_ref[...],
                    preferred_element_type=jnp.float32) + bc1_ref[...]  # (1, 512)

    x = x_ref[0]                                              # (TM, CIN_PAD) bf16
    h1 = _relu(jnp.dot(x, w1b_ref[0], preferred_element_type=jnp.float32)
               + b1_ref[...])                                 # (TM, 64) pointfeat
    h = _relu(jnp.dot(h1.astype(jnp.bfloat16), wpf_ref[...],
                      preferred_element_type=jnp.float32) + gbias)       # (TM, 512)
    h = _relu(jnp.dot(h.astype(jnp.bfloat16), w2_ref[...],
                      preferred_element_type=jnp.float32) + b2_ref[...])  # (TM, 256)
    h = _relu(jnp.dot(h.astype(jnp.bfloat16), w3_ref[...],
                      preferred_element_type=jnp.float32) + b3_ref[...])  # (TM, 128)
    logits = jnp.dot(h.astype(jnp.bfloat16), w4_ref[...],
                     preferred_element_type=jnp.float32) + b4_ref[...]    # (TM, KP)
    # padded class columns carry bias NEG_INF -> exp underflows to exactly 0
    m = jnp.max(logits, axis=-1, keepdims=True)
    e = jnp.exp(logits - m)
    o_ref[0] = (logits - m) - jnp.log(jnp.sum(e, axis=-1, keepdims=True))


# ----------------------------------------------------------------------------
# pallas_call wrappers
# ----------------------------------------------------------------------------
def tnet_chain(x_pad, w1, b1, w2, b2, w3, b3, fw1, fb1, fw2, fb2, fw3, fb3, tm):
    B, n_pad, cin = x_pad.shape
    nt = n_pad // tm
    const = lambda b, t: (0, 0)
    return pl.pallas_call(
        _tnet_kernel,
        out_shape=jax.ShapeDtypeStruct((B, 1, TRANS_PAD), jnp.float32),
        grid=(B, nt),
        in_specs=[
            pl.BlockSpec((1, tm, cin), lambda b, t: (b, t, 0)),
            pl.BlockSpec((cin, 64), const),
            pl.BlockSpec((1, 64), const),
            pl.BlockSpec((64, 128), const),
            pl.BlockSpec((1, 128), const),
            pl.BlockSpec((128, 1024), const),
            pl.BlockSpec((1, 1024), const),
            pl.BlockSpec((1024, 512), const),
            pl.BlockSpec((1, 512), const),
            pl.BlockSpec((512, 256), const),
            pl.BlockSpec((1, 256), const),
            pl.BlockSpec((256, TRANS_PAD), const),
            pl.BlockSpec((1, TRANS_PAD), const),
        ],
        out_specs=pl.BlockSpec((1, 1, TRANS_PAD), lambda b, t: (b, 0, 0)),
        scratch_shapes=[pltpu.VMEM((1, 1024), jnp.float32)],
        compiler_params=pltpu.CompilerParams(
            dimension_semantics=("parallel", "arbitrary")),
    )(x_pad, w1, b1, w2, b2, w3, b3, fw1, fb1, fw2, fb2, fw3, fb3)


def feat_chain(x_pad, w1b, b1, w2, b2, w3, b3, tm):
    B, n_pad, cin = x_pad.shape
    nt = n_pad // tm
    const = lambda b, t: (0, 0)
    return pl.pallas_call(
        _feat_kernel,
        out_shape=jax.ShapeDtypeStruct((B, 1, 1024), jnp.float32),
        grid=(B, nt),
        in_specs=[
            pl.BlockSpec((1, tm, cin), lambda b, t: (b, t, 0)),
            pl.BlockSpec((1, cin, 64), lambda b, t: (b, 0, 0)),
            pl.BlockSpec((1, 64), const),
            pl.BlockSpec((64, 128), const),
            pl.BlockSpec((1, 128), const),
            pl.BlockSpec((128, 1024), const),
            pl.BlockSpec((1, 1024), const),
        ],
        out_specs=pl.BlockSpec((1, 1, 1024), lambda b, t: (b, 0, 0)),
        compiler_params=pltpu.CompilerParams(
            dimension_semantics=("parallel", "arbitrary")),
    )(x_pad, w1b, b1, w2, b2, w3, b3)


def head_chain(x_pad, w1b, b1, g, wg, bc1, wpf, w2, b2, w3, b3, w4, b4, tm):
    B, n_pad, cin = x_pad.shape
    nt = n_pad // tm
    kp = w4.shape[1]
    const = lambda b, t: (0, 0)
    return pl.pallas_call(
        _head_kernel,
        out_shape=jax.ShapeDtypeStruct((B, n_pad, kp), jnp.float32),
        grid=(B, nt),
        in_specs=[
            pl.BlockSpec((1, tm, cin), lambda b, t: (b, t, 0)),
            pl.BlockSpec((1, cin, 64), lambda b, t: (b, 0, 0)),
            pl.BlockSpec((1, 64), const),
            pl.BlockSpec((1, 1, 1024), lambda b, t: (b, 0, 0)),
            pl.BlockSpec((1024, 512), const),
            pl.BlockSpec((1, 512), const),
            pl.BlockSpec((64, 512), const),
            pl.BlockSpec((512, 256), const),
            pl.BlockSpec((1, 256), const),
            pl.BlockSpec((256, 128), const),
            pl.BlockSpec((1, 128), const),
            pl.BlockSpec((128, kp), const),
            pl.BlockSpec((1, kp), const),
        ],
        out_specs=pl.BlockSpec((1, tm, kp), lambda b, t: (b, t, 0)),
        compiler_params=pltpu.CompilerParams(
            dimension_semantics=("parallel", "parallel")),
    )(x_pad, w1b, b1, g, wg, bc1, wpf, w2, b2, w3, b3, w4, b4)


# ----------------------------------------------------------------------------
# Deterministic parameter construction (BN folded into conv/linear weights)
# ----------------------------------------------------------------------------
def _fold_bn(w, b, gamma, beta, mean, var, eps=BN_EPS):
    s = gamma / jnp.sqrt(var + eps)
    return w * s[None, :], s * (b - mean) + beta


def _linear_params(key, cin, cout, scale=0.05):
    kw, kb = jax.random.split(key)
    w = scale * jax.random.normal(kw, (cin, cout), jnp.float32)
    b = scale * jax.random.normal(kb, (cout,), jnp.float32)
    return w, b


def _linear_bn_params(key, cin, cout):
    kl, kg, kbt, km, kv = jax.random.split(key, 5)
    w, b = _linear_params(kl, cin, cout)
    gamma = 1.0 + 0.1 * jax.random.normal(kg, (cout,), jnp.float32)
    beta = 0.1 * jax.random.normal(kbt, (cout,), jnp.float32)
    mean = 0.1 * jax.random.normal(km, (cout,), jnp.float32)
    var = jnp.abs(1.0 + 0.1 * jax.random.normal(kv, (cout,), jnp.float32))
    return _fold_bn(w, b, gamma, beta, mean, var)


def init_params(key, num_classes):
    keys = jax.random.split(key, 13)
    p = {}
    # TNet(k=3)
    p["t_conv1"] = _linear_bn_params(keys[0], 3, 64)
    p["t_conv2"] = _linear_bn_params(keys[1], 64, 128)
    p["t_conv3"] = _linear_bn_params(keys[2], 128, 1024)
    p["t_fc1"] = _linear_bn_params(keys[3], 1024, 512)
    p["t_fc2"] = _linear_bn_params(keys[4], 512, 256)
    w3, _ = _linear_params(keys[5], 256, 9)
    p["t_fc3"] = (w3, jnp.eye(3, dtype=jnp.float32).reshape(-1))  # bias = identity
    # PointNetfeat (global_feat=False, feature_transform=False)
    p["f_conv1"] = _linear_bn_params(keys[6], 3, 64)
    p["f_conv2"] = _linear_bn_params(keys[7], 64, 128)
    p["f_conv3"] = _linear_bn_params(keys[8], 128, 1024)   # BN, no ReLU
    # PointNetDenseCls head
    p["c1"] = _linear_bn_params(keys[9], 1088, 512)
    p["c2"] = _linear_bn_params(keys[10], 512, 256)
    p["c3"] = _linear_bn_params(keys[11], 256, 128)
    p["c4"] = _linear_params(keys[12], 128, num_classes)   # plain conv, bias only
    return p


def _prep(wb, pad_in=None, pad_out=None, bias_pad_value=0.0):
    """f32 (w, b) -> (bf16 w [opt. padded], f32 (1, C) bias [opt. padded])."""
    w, b = wb
    if pad_in is not None and w.shape[0] < pad_in:
        w = jnp.pad(w, ((0, pad_in - w.shape[0]), (0, 0)))
    if pad_out is not None and w.shape[1] < pad_out:
        extra = pad_out - w.shape[1]
        w = jnp.pad(w, ((0, 0), (0, extra)))
        b = jnp.pad(b, (0, extra), constant_values=bias_pad_value)
    return w.astype(jnp.bfloat16), b.reshape(1, -1).astype(jnp.float32)


# ----------------------------------------------------------------------------
# Forward pass
# ----------------------------------------------------------------------------
@jax.jit
def pointnet_densecls_forward(p, x):
    # x: (B, 3, N) -- same NCW layout the PyTorch module expects
    B, _, N = x.shape
    x_pts = jnp.transpose(x, (0, 2, 1))                      # (B, N, 3)

    tm = _choose_tm(N)
    n_pad = -(-N // tm) * tm
    if n_pad > N:
        # Replicate existing points so the fused max-pool stays exact.
        x_pts = jnp.pad(x_pts, ((0, 0), (0, n_pad - N), (0, 0)), mode="edge")
    x_pad = jnp.pad(x_pts, ((0, 0), (0, 0), (0, CIN_PAD - 3))).astype(jnp.bfloat16)

    # --- TNet(k=3): single fused pallas_call (point MLP + max + FC head) ---
    tw1, tb1 = _prep(p["t_conv1"], pad_in=CIN_PAD)
    tw2, tb2 = _prep(p["t_conv2"])
    tw3, tb3 = _prep(p["t_conv3"])
    fw1, fb1 = _prep(p["t_fc1"])
    fw2, fb2 = _prep(p["t_fc2"])
    fw3, fb3 = _prep(p["t_fc3"], pad_out=TRANS_PAD)
    trans_pad = tnet_chain(x_pad, tw1, tb1, tw2, tb2, tw3, tb3,
                           fw1, fb1, fw2, fb2, fw3, fb3, tm)   # (B, 1, 16)
    trans = trans_pad[:, 0, :9].reshape(B, 3, 3)               # (B, 3, 3)

    # --- PointNetfeat: input transform folded into per-batch conv1 weight ---
    w_f1, b_f1 = p["f_conv1"]                                  # (3, 64), (64,)
    w1b = jnp.einsum("bij,jk->bik", trans, w_f1)               # (B, 3, 64)
    w1b = jnp.pad(w1b, ((0, 0), (0, CIN_PAD - 3), (0, 0))).astype(jnp.bfloat16)
    b_f1r = b_f1.reshape(1, -1).astype(jnp.float32)
    cw2, cb2 = _prep(p["f_conv2"])
    cw3, cb3 = _prep(p["f_conv3"])
    g_f = feat_chain(x_pad, w1b, b_f1r, cw2, cb2, cw3, cb3, tm)  # (B, 1, 1024)

    # --- Dense head: concat eliminated (W_c1 split), pointfeat recomputed, ---
    # --- lane-dense (128-padded) logits + fused log_softmax                ---
    k = int(p["c4"][0].shape[1])
    kp = max(128, ((k + 127) // 128) * 128)
    w_c1, b_c1 = p["c1"]                                       # (1088, 512), (512,)
    wg = w_c1[:1024].astype(jnp.bfloat16)                      # global part
    wpf = w_c1[1024:].astype(jnp.bfloat16)                     # pointfeat part
    bc1 = b_c1.reshape(1, -1).astype(jnp.float32)
    hw2, hb2 = _prep(p["c2"])
    hw3, hb3 = _prep(p["c3"])
    hw4, hb4 = _prep(p["c4"], pad_out=kp, bias_pad_value=NEG_INF)
    out_pad = head_chain(x_pad, w1b, b_f1r, g_f, wg, bc1, wpf,
                         hw2, hb2, hw3, hb3, hw4, hb4, tm)     # (B, n_pad, kp)

    out = out_pad[:, :N, :k]                                   # (B, N, k) log-probs
    trans_feat = None                                          # feature_transform=False
    return out, trans, trans_feat


# ----------------------------------------------------------------------------
if __name__ == "__main__":
    key = jax.random.PRNGKey(0)
    kx, kp_ = jax.random.split(key)

    B, N, NUM_CLASSES = 2, 64, 4
    x = jax.random.normal(kx, (B, 3, N), jnp.float32)          # (batch, 3 coords, points)
    params = init_params(kp_, NUM_CLASSES)

    out, trans, trans_feat = pointnet_densecls_forward(params, x)
    jax.block_until_ready(out)
    jax.block_until_ready(trans)

    assert out.shape == (B, N, NUM_CLASSES)
    assert trans.shape == (B, 3, 3)
    assert trans_feat is None
    # log_softmax rows should sum to 1 after exp (padded columns contribute 0)
    assert jnp.allclose(jnp.exp(out).sum(-1), 1.0, atol=1e-4)

    print("KERNEL_OK")
</pallas_src>

<mosaic_0001>
module attributes {stable_mosaic.version = 11 : i64} {
  func.func @_tnet_kernel(%arg0: i32, %arg1: i32, %arg2: memref<1x64x16xbf16, #tpu.memory_space<vmem>>, %arg3: memref<16x64xbf16, #tpu.memory_space<vmem>>, %arg4: memref<1x64xf32, #tpu.memory_space<vmem>>, %arg5: memref<64x128xbf16, #tpu.memory_space<vmem>>, %arg6: memref<1x128xf32, #tpu.memory_space<vmem>>, %arg7: memref<128x1024xbf16, #tpu.memory_space<vmem>>, %arg8: memref<1x1024xf32, #tpu.memory_space<vmem>>, %arg9: memref<1024x512xbf16, #tpu.memory_space<vmem>>, %arg10: memref<1x512xf32, #tpu.memory_space<vmem>>, %arg11: memref<512x256xbf16, #tpu.memory_space<vmem>>, %arg12: memref<1x256xf32, #tpu.memory_space<vmem>>, %arg13: memref<256x16xbf16, #tpu.memory_space<vmem>>, %arg14: memref<1x16xf32, #tpu.memory_space<vmem>>, %arg15: memref<1x1x16xf32, #tpu.memory_space<vmem>>, %arg16: memref<1x1024xf32, #tpu.memory_space<vmem>>) attributes {dimension_semantics = [#tpu.dimension_semantics<parallel>, #tpu.dimension_semantics<arbitrary>], iteration_bounds = array<i64: 2, 1>, scalar_prefetch = 0 : i64, scratch_operands = 1 : i64, tpu.core_type = #tpu.core_type<tc>, window_params = [{transform_indices = @transform_0, window_bounds = array<i64: 1, 64, 16>}, {pipeline_mode = #tpu.pipeline_mode<synchronous>, transform_indices = @transform_1, window_bounds = array<i64: 16, 64>}, {pipeline_mode = #tpu.pipeline_mode<synchronous>, transform_indices = @transform_2, window_bounds = array<i64: 1, 64>}, {pipeline_mode = #tpu.pipeline_mode<synchronous>, transform_indices = @transform_3, window_bounds = array<i64: 64, 128>}, {pipeline_mode = #tpu.pipeline_mode<synchronous>, transform_indices = @transform_4, window_bounds = array<i64: 1, 128>}, {pipeline_mode = #tpu.pipeline_mode<synchronous>, transform_indices = @transform_5, window_bounds = array<i64: 128, 1024>}, {pipeline_mode = #tpu.pipeline_mode<synchronous>, transform_indices = @transform_6, window_bounds = array<i64: 1, 1024>}, {pipeline_mode = #tpu.pipeline_mode<synchronous>, transform_indices = @transform_7, window_bounds = array<i64: 1024, 512>}, {pipeline_mode = #tpu.pipeline_mode<synchronous>, transform_indices = @transform_8, window_bounds = array<i64: 1, 512>}, {pipeline_mode = #tpu.pipeline_mode<synchronous>, transform_indices = @transform_9, window_bounds = array<i64: 512, 256>}, {pipeline_mode = #tpu.pipeline_mode<synchronous>, transform_indices = @transform_10, window_bounds = array<i64: 1, 256>}, {pipeline_mode = #tpu.pipeline_mode<synchronous>, transform_indices = @transform_11, window_bounds = array<i64: 256, 16>}, {pipeline_mode = #tpu.pipeline_mode<synchronous>, transform_indices = @transform_12, window_bounds = array<i64: 1, 16>}, {transform_indices = @transform_13, window_bounds = array<i64: 1, 1, 16>}]} {
    %c0 = arith.constant 0 : index
    %c0_0 = arith.constant 0 : index
    %c0_1 = arith.constant 0 : index
    %0 = vector.load %arg2[%c0, %c0_0, %c0_1] : memref<1x64x16xbf16, #tpu.memory_space<vmem>>, vector<1x64x16xbf16>
    %1 = vector.shape_cast %0 : vector<1x64x16xbf16> to vector<64x16xbf16>
    %c0_2 = arith.constant 0 : index
    %c0_3 = arith.constant 0 : index
    %2 = vector.load %arg3[%c0_2, %c0_3] : memref<16x64xbf16, #tpu.memory_space<vmem>>, vector<16x64xbf16>
    %cst = arith.constant dense<0.000000e+00> : vector<64x64xf32>
    %3 = tpu.matmul %1, %2, %cst {dimension_numbers = #tpu.dot_dimension_numbers<[1], [0], [0], [1], [0, 0, 1, 1], [], []>} : vector<64x16xbf16>, vector<16x64xbf16>, vector<64x64xf32> -> vector<64x64xf32>
    %c0_4 = arith.constant 0 : index
    %c0_5 = arith.constant 0 : index
    %4 = vector.load %arg4[%c0_4, %c0_5] : memref<1x64xf32, #tpu.memory_space<vmem>>, vector<1x64xf32>
    %5 = vector.broadcast %4 : vector<1x64xf32> to vector<64x64xf32>
    %6 = arith.addf %3, %5 : vector<64x64xf32>
    %cst_6 = arith.constant 0.000000e+00 : f32
    %7 = vector.broadcast %cst_6 : f32 to vector<64x64xf32>
    %8 = arith.maximumf %6, %7 : vector<64x64xf32>
    %9 = arith.truncf %8 : vector<64x64xf32> to vector<64x64xbf16>
    %c0_7 = arith.constant 0 : index
    %c0_8 = arith.constant 0 : index
    %10 = vector.load %arg5[%c0_7, %c0_8] : memref<64x128xbf16, #tpu.memory_space<vmem>>, vector<64x128xbf16>
    %cst_9 = arith.constant dense<0.000000e+00> : vector<64x128xf32>
    %11 = tpu.matmul %9, %10, %cst_9 {dimension_numbers = #tpu.dot_dimension_numbers<[1], [0], [0], [1], [0, 0, 1, 1], [], []>} : vector<64x64xbf16>, vector<64x128xbf16>, vector<64x128xf32> -> vector<64x128xf32>
    %c0_10 = arith.constant 0 : index
    %c0_11 = arith.constant 0 : index
    %12 = vector.load %arg6[%c0_10, %c0_11] : memref<1x128xf32, #tpu.memory_space<vmem>>, vector<1x128xf32>
    %13 = vector.broadcast %12 : vector<1x128xf32> to vector<64x128xf32>
    %14 = arith.addf %11, %13 : vector<64x128xf32>
    %cst_12 = arith.constant 0.000000e+00 : f32
    %15 = vector.broadcast %cst_12 : f32 to vector<64x128xf32>
    %16 = arith.maximumf %14, %15 : vector<64x128xf32>
    %17 = arith.truncf %16 : vector<64x128xf32> to vector<64x128xbf16>
    %c0_13 = arith.constant 0 : index
    %c0_14 = arith.constant 0 : index
    %18 = vector.load %arg7[%c0_13, %c0_14] : memref<128x1024xbf16, #tpu.memory_space<vmem>>, vector<128x1024xbf16>
    %cst_15 = arith.constant dense<0.000000e+00> : vector<64x1024xf32>
    %19 = tpu.matmul %17, %18, %cst_15 {dimension_numbers = #tpu.dot_dimension_numbers<[1], [0], [0], [1], [0, 0, 1, 1], [], []>} : vector<64x128xbf16>, vector<128x1024xbf16>, vector<64x1024xf32> -> vector<64x1024xf32>
    %c0_16 = arith.constant 0 : index
    %c0_17 = arith.constant 0 : index
    %20 = vector.load %arg8[%c0_16, %c0_17] : memref<1x1024xf32, #tpu.memory_space<vmem>>, vector<1x1024xf32>
    %21 = vector.broadcast %20 : vector<1x1024xf32> to vector<64x1024xf32>
    %22 = arith.addf %19, %21 : vector<64x1024xf32>
    %cst_18 = arith.constant 0.000000e+00 : f32
    %23 = vector.broadcast %cst_18 : f32 to vector<64x1024xf32>
    %24 = arith.maximumf %22, %23 : vector<64x1024xf32>
    %cst_19 = arith.constant dense<0xFF800000> : vector<1024xf32>
    %25 = vector.multi_reduction <maximumf>, %24, %cst_19 [0] : vector<64x1024xf32> to vector<1024xf32>
    %26 = vector.shape_cast %25 : vector<1024xf32> to vector<1x1024xf32>
    %c0_i32 = arith.constant 0 : i32
    %27 = arith.cmpi eq, %arg1, %c0_i32 : i32
    %28 = arith.extui %27 : i1 to i32
    %c0_i32_20 = arith.constant 0 : i32
    %29 = arith.cmpi ne, %28, %c0_i32_20 : i32
    scf.if %29 {
      %c0_25 = arith.constant 0 : index
      %c0_26 = arith.constant 0 : index
      %36 = vector.load %arg16[%c0_25, %c0_26] : memref<1x1024xf32, #tpu.memory_space<vmem>>, vector<1x1024xf32>
      tpu.vector_store %arg16[%c0_25, %c0_26], %26 {strides = array<i32>} : memref<1x1024xf32, #tpu.memory_space<vmem>>, vector<1x1024xf32>,
    } else {
    }
    %c0_i32_21 = arith.constant 0 : i32
    %30 = arith.cmpi sgt, %arg1, %c0_i32_21 : i32
    %31 = arith.extui %30 : i1 to i32
    %c0_i32_22 = arith.constant 0 : i32
    %32 = arith.cmpi ne, %31, %c0_i32_22 : i32
    scf.if %32 {
      %c0_25 = arith.constant 0 : index
      %c0_26 = arith.constant 0 : index
      %36 = vector.load %arg16[%c0_25, %c0_26] : memref<1x1024xf32, #tpu.memory_space<vmem>>, vector<1x1024xf32>
      %37 = arith.maximumf %36, %26 : vector<1x1024xf32>
      %c0_27 = arith.constant 0 : index
      %c0_28 = arith.constant 0 : index
      %38 = vector.load %arg16[%c0_27, %c0_28] : memref<1x1024xf32, #tpu.memory_space<vmem>>, vector<1x1024xf32>
      tpu.vector_store %arg16[%c0_27, %c0_28], %37 {strides = array<i32>} : memref<1x1024xf32, #tpu.memory_space<vmem>>, vector<1x1024xf32>,
    } else {
    }
    %c0_i32_23 = arith.constant 0 : i32
    %33 = arith.cmpi eq, %arg1, %c0_i32_23 : i32
    %34 = arith.extui %33 : i1 to i32
    %c0_i32_24 = arith.constant 0 : i32
    %35 = arith.cmpi ne, %34, %c0_i32_24 : i32
    scf.if %35 {
      %c0_25 = arith.constant 0 : index
      %c0_26 = arith.constant 0 : index
      %36 = vector.load %arg16[%c0_25, %c0_26] : memref<1x1024xf32, #tpu.memory_space<vmem>>, vector<1x1024xf32>
      %37 = arith.truncf %36 : vector<1x1024xf32> to vector<1x1024xbf16>
      %c0_27 = arith.constant 0 : index
      %c0_28 = arith.constant 0 : index
      %38 = vector.load %arg9[%c0_27, %c0_28] : memref<1024x512xbf16, #tpu.memory_space<vmem>>, vector<1024x512xbf16>
      %cst_29 = arith.constant dense<0.000000e+00> : vector<1x512xf32>
      %39 = tpu.matmul %37, %38, %cst_29 {dimension_numbers = #tpu.dot_dimension_numbers<[1], [0], [0], [1], [0, 0, 1, 1], [], []>} : vector<1x1024xbf16>, vector<1024x512xbf16>, vector<1x512xf32> -> vector<1x512xf32>
      %c0_30 = arith.constant 0 : index
      %c0_31 = arith.constant 0 : index
      %40 = vector.load %arg10[%c0_30, %c0_31] : memref<1x512xf32, #tpu.memory_space<vmem>>, vector<1x512xf32>
      %41 = arith.addf %39, %40 : vector<1x512xf32>
      %cst_32 = arith.constant 0.000000e+00 : f32
      %42 = vector.broadcast %cst_32 : f32 to vector<1x512xf32>
      %43 = arith.maximumf %41, %42 : vector<1x512xf32>
      %44 = arith.truncf %43 : vector<1x512xf32> to vector<1x512xbf16>
      %c0_33 = arith.constant 0 : index
      %c0_34 = arith.constant 0 : index
      %45 = vector.load %arg11[%c0_33, %c0_34] : memref<512x256xbf16, #tpu.memory_space<vmem>>, vector<512x256xbf16>
      %cst_35 = arith.constant dense<0.000000e+00> : vector<1x256xf32>
      %46 = tpu.matmul %44, %45, %cst_35 {dimension_numbers = #tpu.dot_dimension_numbers<[1], [0], [0], [1], [0, 0, 1, 1], [], []>} : vector<1x512xbf16>, vector<512x256xbf16>, vector<1x256xf32> -> vector<1x256xf32>
      %c0_36 = arith.constant 0 : index
      %c0_37 = arith.constant 0 : index
      %47 = vector.load %arg12[%c0_36, %c0_37] : memref<1x256xf32, #tpu.memory_space<vmem>>, vector<1x256xf32>
      %48 = arith.addf %46, %47 : vector<1x256xf32>
      %cst_38 = arith.constant 0.000000e+00 : f32
      %49 = vector.broadcast %cst_38 : f32 to vector<1x256xf32>
      %50 = arith.maximumf %48, %49 : vector<1x256xf32>
      %51 = arith.truncf %50 : vector<1x256xf32> to vector<1x256xbf16>
      %c0_39 = arith.constant 0 : index
      %c0_40 = arith.constant 0 : index
      %52 = vector.load %arg13[%c0_39, %c0_40] : memref<256x16xbf16, #tpu.memory_space<vmem>>, vector<256x16xbf16>
      %cst_41 = arith.constant dense<0.000000e+00> : vector<1x16xf32>
      %53 = tpu.matmul %51, %52, %cst_41 {dimension_numbers = #tpu.dot_dimension_numbers<[1], [0], [0], [1], [0, 0, 1, 1], [], []>} : vector<1x256xbf16>, vector<256x16xbf16>, vector<1x16xf32> -> vector<1x16xf32>
      %c0_42 = arith.constant 0 : index
      %c0_43 = arith.constant 0 : index
      %54 = vector.load %arg14[%c0_42, %c0_43] : memref<1x16xf32, #tpu.memory_space<vmem>>, vector<1x16xf32>
      %55 = arith.addf %53, %54 : vector<1x16xf32>
      %c0_44 = arith.constant 0 : index
      %c0_45 = arith.constant 0 : index
      %c0_46 = arith.constant 0 : index
      %56 = vector.load %arg15[%c0_44, %c0_45, %c0_46] : memref<1x1x16xf32, #tpu.memory_space<vmem>>, vector<1x1x16xf32>
      %57 = vector.shape_cast %56 : vector<1x1x16xf32> to vector<1x16xf32>
      %58 = vector.shape_cast %55 : vector<1x16xf32> to vector<1x1x16xf32>
      tpu.vector_store %arg15[%c0_44, %c0_45, %c0_46], %58 {strides = array<i32>} : memref<1x1x16xf32, #tpu.memory_space<vmem>>, vector<1x1x16xf32>,
    } else {
    }
    return
  }
  func.func @transform_0(%arg0: i32, %arg1: i32) -> (i32, i32, i32) {
    %c0_i32 = arith.constant 0 : i32
    %c0_i32_0 = arith.constant 0 : i32
    return %arg0, %arg1, %c0_i32 : i32, i32, i32
  }
  func.func @transform_1(%arg0: i32, %arg1: i32) -> (i32, i32) {
    %c0_i32 = arith.constant 0 : i32
    %c0_i32_0 = arith.constant 0 : i32
    %c0_i32_1 = arith.constant 0 : i32
    return %c0_i32, %c0_i32_0 : i32, i32
  }
  func.func @transform_2(%arg0: i32, %arg1: i32) -> (i32, i32) {
    %c0_i32 = arith.constant 0 : i32
    %c0_i32_0 = arith.constant 0 : i32
    %c0_i32_1 = arith.constant 0 : i32
    return %c0_i32, %c0_i32_0 : i32, i32
  }
  func.func @transform_3(%arg0: i32, %arg1: i32) -> (i32, i32) {
    %c0_i32 = arith.constant 0 : i32
    %c0_i32_0 = arith.constant 0 : i32
    %c0_i32_1 = arith.constant 0 : i32
    return %c0_i32, %c0_i32_0 : i32, i32
  }
  func.func @transform_4(%arg0: i32, %arg1: i32) -> (i32, i32) {
    %c0_i32 = arith.constant 0 : i32
    %c0_i32_0 = arith.constant 0 : i32
    %c0_i32_1 = arith.constant 0 : i32
    return %c0_i32, %c0_i32_0 : i32, i32
  }
  func.func @transform_5(%arg0: i32, %arg1: i32) -> (i32, i32) {
    %c0_i32 = arith.constant 0 : i32
    %c0_i32_0 = arith.constant 0 : i32
    %c0_i32_1 = arith.constant 0 : i32
    return %c0_i32, %c0_i32_0 : i32, i32
  }
  func.func @transform_6(%arg0: i32, %arg1: i32) -> (i32, i32) {
    %c0_i32 = arith.constant 0 : i32
    %c0_i32_0 = arith.constant 0 : i32
    %c0_i32_1 = arith.constant 0 : i32
    return %c0_i32, %c0_i32_0 : i32, i32
  }
  func.func @transform_7(%arg0: i32, %arg1: i32) -> (i32, i32) {
    %c0_i32 = arith.constant 0 : i32
    %c0_i32_0 = arith.constant 0 : i32
    %c0_i32_1 = arith.constant 0 : i32
    return %c0_i32, %c0_i32_0 : i32, i32
  }
  func.func @transform_8(%arg0: i32, %arg1: i32) -> (i32, i32) {
    %c0_i32 = arith.constant 0 : i32
    %c0_i32_0 = arith.constant 0 : i32
    %c0_i32_1 = arith.constant 0 : i32
    return %c0_i32, %c0_i32_0 : i32, i32
  }
  func.func @transform_9(%arg0: i32, %arg1: i32) -> (i32, i32) {
    %c0_i32 = arith.constant 0 : i32
    %c0_i32_0 = arith.constant 0 : i32
    %c0_i32_1 = arith.constant 0 : i32
    return %c0_i32, %c0_i32_0 : i32, i32
  }
  func.func @transform_10(%arg0: i32, %arg1: i32) -> (i32, i32) {
    %c0_i32 = arith.constant 0 : i32
    %c0_i32_0 = arith.constant 0 : i32
    %c0_i32_1 = arith.constant 0 : i32
    return %c0_i32, %c0_i32_0 : i32, i32
  }
  func.func @transform_11(%arg0: i32, %arg1: i32) -> (i32, i32) {
    %c0_i32 = arith.constant 0 : i32
    %c0_i32_0 = arith.constant 0 : i32
    %c0_i32_1 = arith.constant 0 : i32
    return %c0_i32, %c0_i32_0 : i32, i32
  }
  func.func @transform_12(%arg0: i32, %arg1: i32) -> (i32, i32) {
    %c0_i32 = arith.constant 0 : i32
    %c0_i32_0 = arith.constant 0 : i32
    %c0_i32_1 = arith.constant 0 : i32
    return %c0_i32, %c0_i32_0 : i32, i32
  }
  func.func @transform_13(%arg0: i32, %arg1: i32) -> (i32, i32, i32) {
    %c0_i32 = arith.constant 0 : i32
    %c0_i32_0 = arith.constant 0 : i32
    %c0_i32_1 = arith.constant 0 : i32
    return %arg0, %c0_i32, %c0_i32_0 : i32, i32, i32
  }
}

module attributes {stable_mosaic.version = 11 : i64} {
  func.func @_feat_kernel(%arg0: i32, %arg1: i32, %arg2: memref<1x64x16xbf16, #tpu.memory_space<vmem>>, %arg3: memref<1x16x64xbf16, #tpu.memory_space<vmem>>, %arg4: memref<1x64xf32, #tpu.memory_space<vmem>>, %arg5: memref<64x128xbf16, #tpu.memory_space<vmem>>, %arg6: memref<1x128xf32, #tpu.memory_space<vmem>>, %arg7: memref<128x1024xbf16, #tpu.memory_space<vmem>>, %arg8: memref<1x1024xf32, #tpu.memory_space<vmem>>, %arg9: memref<1x1x1024xf32, #tpu.memory_space<vmem>>) attributes {dimension_semantics = [#tpu.dimension_semantics<parallel>, #tpu.dimension_semantics<arbitrary>], iteration_bounds = array<i64: 2, 1>, scalar_prefetch = 0 : i64, scratch_operands = 0 : i64, tpu.core_type = #tpu.core_type<tc>, window_params = [{transform_indices = @transform_0, window_bounds = array<i64: 1, 64, 16>}, {transform_indices = @transform_1, window_bounds = array<i64: 1, 16, 64>}, {pipeline_mode = #tpu.pipeline_mode<synchronous>, transform_indices = @transform_2, window_bounds = array<i64: 1, 64>}, {pipeline_mode = #tpu.pipeline_mode<synchronous>, transform_indices = @transform_3, window_bounds = array<i64: 64, 128>}, {pipeline_mode = #tpu.pipeline_mode<synchronous>, transform_indices = @transform_4, window_bounds = array<i64: 1, 128>}, {pipeline_mode = #tpu.pipeline_mode<synchronous>, transform_indices = @transform_5, window_bounds = array<i64: 128, 1024>}, {pipeline_mode = #tpu.pipeline_mode<synchronous>, transform_indices = @transform_6, window_bounds = array<i64: 1, 1024>}, {transform_indices = @transform_7, window_bounds = array<i64: 1, 1, 1024>}]} {
    %c0 = arith.constant 0 : index
    %c0_0 = arith.constant 0 : index
    %c0_1 = arith.constant 0 : index
    %0 = vector.load %arg2[%c0, %c0_0, %c0_1] : memref<1x64x16xbf16, #tpu.memory_space<vmem>>, vector<1x64x16xbf16>
    %1 = vector.shape_cast %0 : vector<1x64x16xbf16> to vector<64x16xbf16>
    %c0_2 = arith.constant 0 : index
    %c0_3 = arith.constant 0 : index
    %c0_4 = arith.constant 0 : index
    %2 = vector.load %arg3[%c0_2, %c0_3, %c0_4] : memref<1x16x64xbf16, #tpu.memory_space<vmem>>, vector<1x16x64xbf16>
    %3 = vector.shape_cast %2 : vector<1x16x64xbf16> to vector<16x64xbf16>
    %cst = arith.constant dense<0.000000e+00> : vector<64x64xf32>
    %4 = tpu.matmul %1, %3, %cst {dimension_numbers = #tpu.dot_dimension_numbers<[1], [0], [0], [1], [0, 0, 1, 1], [], []>} : vector<64x16xbf16>, vector<16x64xbf16>, vector<64x64xf32> -> vector<64x64xf32>
    %c0_5 = arith.constant 0 : index
    %c0_6 = arith.constant 0 : index
    %5 = vector.load %arg4[%c0_5, %c0_6] : memref<1x64xf32, #tpu.memory_space<vmem>>, vector<1x64xf32>
    %6 = vector.broadcast %5 : vector<1x64xf32> to vector<64x64xf32>
    %7 = arith.addf %4, %6 : vector<64x64xf32>
    %cst_7 = arith.constant 0.000000e+00 : f32
    %8 = vector.broadcast %cst_7 : f32 to vector<64x64xf32>
    %9 = arith.maximumf %7, %8 : vector<64x64xf32>
    %10 = arith.truncf %9 : vector<64x64xf32> to vector<64x64xbf16>
    %c0_8 = arith.constant 0 : index
    %c0_9 = arith.constant 0 : index
    %11 = vector.load %arg5[%c0_8, %c0_9] : memref<64x128xbf16, #tpu.memory_space<vmem>>, vector<64x128xbf16>
    %cst_10 = arith.constant dense<0.000000e+00> : vector<64x128xf32>
    %12 = tpu.matmul %10, %11, %cst_10 {dimension_numbers = #tpu.dot_dimension_numbers<[1], [0], [0], [1], [0, 0, 1, 1], [], []>} : vector<64x64xbf16>, vector<64x128xbf16>, vector<64x128xf32> -> vector<64x128xf32>
    %c0_11 = arith.constant 0 : index
    %c0_12 = arith.constant 0 : index
    %13 = vector.load %arg6[%c0_11, %c0_12] : memref<1x128xf32, #tpu.memory_space<vmem>>, vector<1x128xf32>
    %14 = vector.broadcast %13 : vector<1x128xf32> to vector<64x128xf32>
    %15 = arith.addf %12, %14 : vector<64x128xf32>
    %cst_13 = arith.constant 0.000000e+00 : f32
    %16 = vector.broadcast %cst_13 : f32 to vector<64x128xf32>
    %17 = arith.maximumf %15, %16 : vector<64x128xf32>
    %18 = arith.truncf %17 : vector<64x128xf32> to vector<64x128xbf16>
    %c0_14 = arith.constant 0 : index
    %c0_15 = arith.constant 0 : index
    %19 = vector.load %arg7[%c0_14, %c0_15] : memref<128x1024xbf16, #tpu.memory_space<vmem>>, vector<128x1024xbf16>
    %cst_16 = arith.constant dense<0.000000e+00> : vector<64x1024xf32>
    %20 = tpu.matmul %18, %19, %cst_16 {dimension_numbers = #tpu.dot_dimension_numbers<[1], [0], [0], [1], [0, 0, 1, 1], [], []>} : vector<64x128xbf16>, vector<128x1024xbf16>, vector<64x1024xf32> -> vector<64x1024xf32>
    %c0_17 = arith.constant 0 : index
    %c0_18 = arith.constant 0 : index
    %21 = vector.load %arg8[%c0_17, %c0_18] : memref<1x1024xf32, #tpu.memory_space<vmem>>, vector<1x1024xf32>
    %22 = vector.broadcast %21 : vector<1x1024xf32> to vector<64x1024xf32>
    %23 = arith.addf %20, %22 : vector<64x1024xf32>
    %cst_19 = arith.constant dense<0xFF800000> : vector<1024xf32>
    %24 = vector.multi_reduction <maximumf>, %23, %cst_19 [0] : vector<64x1024xf32> to vector<1024xf32>
    %25 = vector.shape_cast %24 : vector<1024xf32> to vector<1x1024xf32>
    %c0_i32 = arith.constant 0 : i32
    %26 = arith.cmpi eq, %arg1, %c0_i32 : i32
    %27 = arith.extui %26 : i1 to i32
    %c0_i32_20 = arith.constant 0 : i32
    %28 = arith.cmpi ne, %27, %c0_i32_20 : i32
    scf.if %28 {
      %c0_23 = arith.constant 0 : index
      %c0_24 = arith.constant 0 : index
      %c0_25 = arith.constant 0 : index
      %32 = vector.load %arg9[%c0_23, %c0_24, %c0_25] : memref<1x1x1024xf32, #tpu.memory_space<vmem>>, vector<1x1x1024xf32>
      %33 = vector.shape_cast %32 : vector<1x1x1024xf32> to vector<1x1024xf32>
      %34 = vector.shape_cast %25 : vector<1x1024xf32> to vector<1x1x1024xf32>
      tpu.vector_store %arg9[%c0_23, %c0_24, %c0_25], %34 {strides = array<i32>} : memref<1x1x1024xf32, #tpu.memory_space<vmem>>, vector<1x1x1024xf32>,
    } else {
    }
    %c0_i32_21 = arith.constant 0 : i32
    %29 = arith.cmpi sgt, %arg1, %c0_i32_21 : i32
    %30 = arith.extui %29 : i1 to i32
    %c0_i32_22 = arith.constant 0 : i32
    %31 = arith.cmpi ne, %30, %c0_i32_22 : i32
    scf.if %31 {
      %c0_23 = arith.constant 0 : index
      %c0_24 = arith.constant 0 : index
      %c0_25 = arith.constant 0 : index
      %32 = vector.load %arg9[%c0_23, %c0_24, %c0_25] : memref<1x1x1024xf32, #tpu.memory_space<vmem>>, vector<1x1x1024xf32>
      %33 = vector.shape_cast %32 : vector<1x1x1024xf32> to vector<1x1024xf32>
      %34 = arith.maximumf %33, %25 : vector<1x1024xf32>
      %c0_26 = arith.constant 0 : index
      %c0_27 = arith.constant 0 : index
      %c0_28 = arith.constant 0 : index
      %35 = vector.load %arg9[%c0_26, %c0_27, %c0_28] : memref<1x1x1024xf32, #tpu.memory_space<vmem>>, vector<1x1x1024xf32>
      %36 = vector.shape_cast %35 : vector<1x1x1024xf32> to vector<1x1024xf32>
      %37 = vector.shape_cast %34 : vector<1x1024xf32> to vector<1x1x1024xf32>
      tpu.vector_store %arg9[%c0_26, %c0_27, %c0_28], %37 {strides = array<i32>} : memref<1x1x1024xf32, #tpu.memory_space<vmem>>, vector<1x1x1024xf32>,
    } else {
    }
    return
  }
  func.func @transform_0(%arg0: i32, %arg1: i32) -> (i32, i32, i32) {
    %c0_i32 = arith.constant 0 : i32
    %c0_i32_0 = arith.constant 0 : i32
    return %arg0, %arg1, %c0_i32 : i32, i32, i32
  }
  func.func @transform_1(%arg0: i32, %arg1: i32) -> (i32, i32, i32) {
    %c0_i32 = arith.constant 0 : i32
    %c0_i32_0 = arith.constant 0 : i32
    %c0_i32_1 = arith.constant 0 : i32
    return %arg0, %c0_i32, %c0_i32_0 : i32, i32, i32
  }
  func.func @transform_2(%arg0: i32, %arg1: i32) -> (i32, i32) {
    %c0_i32 = arith.constant 0 : i32
    %c0_i32_0 = arith.constant 0 : i32
    %c0_i32_1 = arith.constant 0 : i32
    return %c0_i32, %c0_i32_0 : i32, i32
  }
  func.func @transform_3(%arg0: i32, %arg1: i32) -> (i32, i32) {
    %c0_i32 = arith.constant 0 : i32
    %c0_i32_0 = arith.constant 0 : i32
    %c0_i32_1 = arith.constant 0 : i32
    return %c0_i32, %c0_i32_0 : i32, i32
  }
  func.func @transform_4(%arg0: i32, %arg1: i32) -> (i32, i32) {
    %c0_i32 = arith.constant 0 : i32
    %c0_i32_0 = arith.constant 0 : i32
    %c0_i32_1 = arith.constant 0 : i32
    return %c0_i32, %c0_i32_0 : i32, i32
  }
  func.func @transform_5(%arg0: i32, %arg1: i32) -> (i32, i32) {
    %c0_i32 = arith.constant 0 : i32
    %c0_i32_0 = arith.constant 0 : i32
    %c0_i32_1 = arith.constant 0 : i32
    return %c0_i32, %c0_i32_0 : i32, i32
  }
  func.func @transform_6(%arg0: i32, %arg1: i32) -> (i32, i32) {
    %c0_i32 = arith.constant 0 : i32
    %c0_i32_0 = arith.constant 0 : i32
    %c0_i32_1 = arith.constant 0 : i32
    return %c0_i32, %c0_i32_0 : i32, i32
  }
  func.func @transform_7(%arg0: i32, %arg1: i32) -> (i32, i32, i32) {
    %c0_i32 = arith.constant 0 : i32
    %c0_i32_0 = arith.constant 0 : i32
    %c0_i32_1 = arith.constant 0 : i32
    return %arg0, %c0_i32, %c0_i32_0 : i32, i32, i32
  }
}

module attributes {stable_mosaic.version = 11 : i64} {
  func.func @_head_kernel(%arg0: i32, %arg1: i32, %arg2: memref<1x64x16xbf16, #tpu.memory_space<vmem>>, %arg3: memref<1x16x64xbf16, #tpu.memory_space<vmem>>, %arg4: memref<1x64xf32, #tpu.memory_space<vmem>>, %arg5: memref<1x1x1024xf32, #tpu.memory_space<vmem>>, %arg6: memref<1024x512xbf16, #tpu.memory_space<vmem>>, %arg7: memref<1x512xf32, #tpu.memory_space<vmem>>, %arg8: memref<64x512xbf16, #tpu.memory_space<vmem>>, %arg9: memref<512x256xbf16, #tpu.memory_space<vmem>>, %arg10: memref<1x256xf32, #tpu.memory_space<vmem>>, %arg11: memref<256x128xbf16, #tpu.memory_space<vmem>>, %arg12: memref<1x128xf32, #tpu.memory_space<vmem>>, %arg13: memref<128x128xbf16, #tpu.memory_space<vmem>>, %arg14: memref<1x128xf32, #tpu.memory_space<vmem>>, %arg15: memref<1x64x128xf32, #tpu.memory_space<vmem>>) attributes {dimension_semantics = [#tpu.dimension_semantics<parallel>, #tpu.dimension_semantics<parallel>], iteration_bounds = array<i64: 2, 1>, scalar_prefetch = 0 : i64, scratch_operands = 0 : i64, tpu.core_type = #tpu.core_type<tc>, window_params = [{transform_indices = @transform_0, window_bounds = array<i64: 1, 64, 16>}, {transform_indices = @transform_1, window_bounds = array<i64: 1, 16, 64>}, {pipeline_mode = #tpu.pipeline_mode<synchronous>, transform_indices = @transform_2, window_bounds = array<i64: 1, 64>}, {transform_indices = @transform_3, window_bounds = array<i64: 1, 1, 1024>}, {pipeline_mode = #tpu.pipeline_mode<synchronous>, transform_indices = @transform_4, window_bounds = array<i64: 1024, 512>}, {pipeline_mode = #tpu.pipeline_mode<synchronous>, transform_indices = @transform_5, window_bounds = array<i64: 1, 512>}, {pipeline_mode = #tpu.pipeline_mode<synchronous>, transform_indices = @transform_6, window_bounds = array<i64: 64, 512>}, {pipeline_mode = #tpu.pipeline_mode<synchronous>, transform_indices = @transform_7, window_bounds = array<i64: 512, 256>}, {pipeline_mode = #tpu.pipeline_mode<synchronous>, transform_indices = @transform_8, window_bounds = array<i64: 1, 256>}, {pipeline_mode = #tpu.pipeline_mode<synchronous>, transform_indices = @transform_9, window_bounds = array<i64: 256, 128>}, {pipeline_mode = #tpu.pipeline_mode<synchronous>, transform_indices = @transform_10, window_bounds = array<i64: 1, 128>}, {pipeline_mode = #tpu.pipeline_mode<synchronous>, transform_indices = @transform_11, window_bounds = array<i64: 128, 128>}, {pipeline_mode = #tpu.pipeline_mode<synchronous>, transform_indices = @transform_12, window_bounds = array<i64: 1, 128>}, {transform_indices = @transform_13, window_bounds = array<i64: 1, 64, 128>}]} {
    %c0 = arith.constant 0 : index
    %c0_0 = arith.constant 0 : index
    %c0_1 = arith.constant 0 : index
    %0 = vector.load %arg5[%c0, %c0_0, %c0_1] : memref<1x1x1024xf32, #tpu.memory_space<vmem>>, vector<1x1x1024xf32>
    %1 = vector.shape_cast %0 : vector<1x1x1024xf32> to vector<1x1024xf32>
    %2 = arith.truncf %1 : vector<1x1024xf32> to vector<1x1024xbf16>
    %c0_2 = arith.constant 0 : index
    %c0_3 = arith.constant 0 : index
    %3 = vector.load %arg6[%c0_2, %c0_3] : memref<1024x512xbf16, #tpu.memory_space<vmem>>, vector<1024x512xbf16>
    %cst = arith.constant dense<0.000000e+00> : vector<1x512xf32>
    %4 = tpu.matmul %2, %3, %cst {dimension_numbers = #tpu.dot_dimension_numbers<[1], [0], [0], [1], [0, 0, 1, 1], [], []>} : vector<1x1024xbf16>, vector<1024x512xbf16>, vector<1x512xf32> -> vector<1x512xf32>
    %c0_4 = arith.constant 0 : index
    %c0_5 = arith.constant 0 : index
    %5 = vector.load %arg7[%c0_4, %c0_5] : memref<1x512xf32, #tpu.memory_space<vmem>>, vector<1x512xf32>
    %6 = arith.addf %4, %5 : vector<1x512xf32>
    %c0_6 = arith.constant 0 : index
    %c0_7 = arith.constant 0 : index
    %c0_8 = arith.constant 0 : index
    %7 = vector.load %arg2[%c0_6, %c0_7, %c0_8] : memref<1x64x16xbf16, #tpu.memory_space<vmem>>, vector<1x64x16xbf16>
    %8 = vector.shape_cast %7 : vector<1x64x16xbf16> to vector<64x16xbf16>
    %c0_9 = arith.constant 0 : index
    %c0_10 = arith.constant 0 : index
    %c0_11 = arith.constant 0 : index
    %9 = vector.load %arg3[%c0_9, %c0_10, %c0_11] : memref<1x16x64xbf16, #tpu.memory_space<vmem>>, vector<1x16x64xbf16>
    %10 = vector.shape_cast %9 : vector<1x16x64xbf16> to vector<16x64xbf16>
    %cst_12 = arith.constant dense<0.000000e+00> : vector<64x64xf32>
    %11 = tpu.matmul %8, %10, %cst_12 {dimension_numbers = #tpu.dot_dimension_numbers<[1], [0], [0], [1], [0, 0, 1, 1], [], []>} : vector<64x16xbf16>, vector<16x64xbf16>, vector<64x64xf32> -> vector<64x64xf32>
    %c0_13 = arith.constant 0 : index
    %c0_14 = arith.constant 0 : index
    %12 = vector.load %arg4[%c0_13, %c0_14] : memref<1x64xf32, #tpu.memory_space<vmem>>, vector<1x64xf32>
    %13 = vector.broadcast %12 : vector<1x64xf32> to vector<64x64xf32>
    %14 = arith.addf %11, %13 : vector<64x64xf32>
    %cst_15 = arith.constant 0.000000e+00 : f32
    %15 = vector.broadcast %cst_15 : f32 to vector<64x64xf32>
    %16 = arith.maximumf %14, %15 : vector<64x64xf32>
    %17 = arith.truncf %16 : vector<64x64xf32> to vector<64x64xbf16>
    %c0_16 = arith.constant 0 : index
    %c0_17 = arith.constant 0 : index
    %18 = vector.load %arg8[%c0_16, %c0_17] : memref<64x512xbf16, #tpu.memory_space<vmem>>, vector<64x512xbf16>
    %cst_18 = arith.constant dense<0.000000e+00> : vector<64x512xf32>
    %19 = tpu.matmul %17, %18, %cst_18 {dimension_numbers = #tpu.dot_dimension_numbers<[1], [0], [0], [1], [0, 0, 1, 1], [], []>} : vector<64x64xbf16>, vector<64x512xbf16>, vector<64x512xf32> -> vector<64x512xf32>
    %20 = vector.broadcast %6 : vector<1x512xf32> to vector<64x512xf32>
    %21 = arith.addf %19, %20 : vector<64x512xf32>
    %cst_19 = arith.constant 0.000000e+00 : f32
    %22 = vector.broadcast %cst_19 : f32 to vector<64x512xf32>
    %23 = arith.maximumf %21, %22 : vector<64x512xf32>
    %24 = arith.truncf %23 : vector<64x512xf32> to vector<64x512xbf16>
    %c0_20 = arith.constant 0 : index
    %c0_21 = arith.constant 0 : index
    %25 = vector.load %arg9[%c0_20, %c0_21] : memref<512x256xbf16, #tpu.memory_space<vmem>>, vector<512x256xbf16>
    %cst_22 = arith.constant dense<0.000000e+00> : vector<64x256xf32>
    %26 = tpu.matmul %24, %25, %cst_22 {dimension_numbers = #tpu.dot_dimension_numbers<[1], [0], [0], [1], [0, 0, 1, 1], [], []>} : vector<64x512xbf16>, vector<512x256xbf16>, vector<64x256xf32> -> vector<64x256xf32>
    %c0_23 = arith.constant 0 : index
    %c0_24 = arith.constant 0 : index
    %27 = vector.load %arg10[%c0_23, %c0_24] : memref<1x256xf32, #tpu.memory_space<vmem>>, vector<1x256xf32>
    %28 = vector.broadcast %27 : vector<1x256xf32> to vector<64x256xf32>
    %29 = arith.addf %26, %28 : vector<64x256xf32>
    %cst_25 = arith.constant 0.000000e+00 : f32
    %30 = vector.broadcast %cst_25 : f32 to vector<64x256xf32>
    %31 = arith.maximumf %29, %30 : vector<64x256xf32>
    %32 = arith.truncf %31 : vector<64x256xf32> to vector<64x256xbf16>
    %c0_26 = arith.constant 0 : index
    %c0_27 = arith.constant 0 : index
    %33 = vector.load %arg11[%c0_26, %c0_27] : memref<256x128xbf16, #tpu.memory_space<vmem>>, vector<256x128xbf16>
    %cst_28 = arith.constant dense<0.000000e+00> : vector<64x128xf32>
    %34 = tpu.matmul %32, %33, %cst_28 {dimension_numbers = #tpu.dot_dimension_numbers<[1], [0], [0], [1], [0, 0, 1, 1], [], []>} : vector<64x256xbf16>, vector<256x128xbf16>, vector<64x128xf32> -> vector<64x128xf32>
    %c0_29 = arith.constant 0 : index
    %c0_30 = arith.constant 0 : index
    %35 = vector.load %arg12[%c0_29, %c0_30] : memref<1x128xf32, #tpu.memory_space<vmem>>, vector<1x128xf32>
    %36 = vector.broadcast %35 : vector<1x128xf32> to vector<64x128xf32>
    %37 = arith.addf %34, %36 : vector<64x128xf32>
    %cst_31 = arith.constant 0.000000e+00 : f32
    %38 = vector.broadcast %cst_31 : f32 to vector<64x128xf32>
    %39 = arith.maximumf %37, %38 : vector<64x128xf32>
    %40 = arith.truncf %39 : vector<64x128xf32> to vector<64x128xbf16>
    %c0_32 = arith.constant 0 : index
    %c0_33 = arith.constant 0 : index
    %41 = vector.load %arg13[%c0_32, %c0_33] : memref<128x128xbf16, #tpu.memory_space<vmem>>, vector<128x128xbf16>
    %cst_34 = arith.constant dense<0.000000e+00> : vector<64x128xf32>
    %42 = tpu.matmul %40, %41, %cst_34 {dimension_numbers = #tpu.dot_dimension_numbers<[1], [0], [0], [1], [0, 0, 1, 1], [], []>} : vector<64x128xbf16>, vector<128x128xbf16>, vector<64x128xf32> -> vector<64x128xf32>
    %c0_35 = arith.constant 0 : index
    %c0_36 = arith.constant 0 : index
    %43 = vector.load %arg14[%c0_35, %c0_36] : memref<1x128xf32, #tpu.memory_space<vmem>>, vector<1x128xf32>
    %44 = vector.broadcast %43 : vector<1x128xf32> to vector<64x128xf32>
    %45 = arith.addf %42, %44 : vector<64x128xf32>
    %cst_37 = arith.constant dense<0xFF800000> : vector<64xf32>
    %46 = vector.multi_reduction <maximumf>, %45, %cst_37 [1] : vector<64x128xf32> to vector<64xf32>
    %47 = vector.shape_cast %46 : vector<64xf32> to vector<64x1xf32>
    %48 = vector.broadcast %47 : vector<64x1xf32> to vector<64x128xf32>
    %49 = arith.subf %45, %48 : vector<64x128xf32>
    %50 = math.exp %49 : vector<64x128xf32>
    %51 = vector.broadcast %47 : vector<64x1xf32> to vector<64x128xf32>
    %52 = arith.subf %45, %51 : vector<64x128xf32>
    %cst_38 = arith.constant dense<0.000000e+00> : vector<64xf32>
    %53 = vector.multi_reduction <add>, %50, %cst_38 [1] : vector<64x128xf32> to vector<64xf32>
    %54 = vector.shape_cast %53 : vector<64xf32> to vector<64x1xf32>
    %55 = math.log %54 : vector<64x1xf32>
    %56 = vector.broadcast %55 : vector<64x1xf32> to vector<64x128xf32>
    %57 = arith.subf %52, %56 : vector<64x128xf32>
    %c0_39 = arith.constant 0 : index
    %c0_40 = arith.constant 0 : index
    %c0_41 = arith.constant 0 : index
    %58 = vector.load %arg15[%c0_39, %c0_40, %c0_41] : memref<1x64x128xf32, #tpu.memory_space<vmem>>, vector<1x64x128xf32>
    %59 = vector.shape_cast %58 : vector<1x64x128xf32> to vector<64x128xf32>
    %60 = vector.shape_cast %57 : vector<64x128xf32> to vector<1x64x128xf32>
    tpu.vector_store %arg15[%c0_39, %c0_40, %c0_41], %60 {strides = array<i32>} : memref<1x64x128xf32, #tpu.memory_space<vmem>>, vector<1x64x128xf32>,
    return
  }
  func.func @transform_0(%arg0: i32, %arg1: i32) -> (i32, i32, i32) {
    %c0_i32 = arith.constant 0 : i32
    %c0_i32_0 = arith.constant 0 : i32
    return %arg0, %arg1, %c0_i32 : i32, i32, i32
  }
  func.func @transform_1(%arg0: i32, %arg1: i32) -> (i32, i32, i32) {
    %c0_i32 = arith.constant 0 : i32
    %c0_i32_0 = arith.constant 0 : i32
    %c0_i32_1 = arith.constant 0 : i32
    return %arg0, %c0_i32, %c0_i32_0 : i32, i32, i32
  }
  func.func @transform_2(%arg0: i32, %arg1: i32) -> (i32, i32) {
    %c0_i32 = arith.constant 0 : i32
    %c0_i32_0 = arith.constant 0 : i32
    %c0_i32_1 = arith.constant 0 : i32
    return %c0_i32, %c0_i32_0 : i32, i32
  }
  func.func @transform_3(%arg0: i32, %arg1: i32) -> (i32, i32, i32) {
    %c0_i32 = arith.constant 0 : i32
    %c0_i32_0 = arith.constant 0 : i32
    %c0_i32_1 = arith.constant 0 : i32
    return %arg0, %c0_i32, %c0_i32_0 : i32, i32, i32
  }
  func.func @transform_4(%arg0: i32, %arg1: i32) -> (i32, i32) {
    %c0_i32 = arith.constant 0 : i32
    %c0_i32_0 = arith.constant 0 : i32
    %c0_i32_1 = arith.constant 0 : i32
    return %c0_i32, %c0_i32_0 : i32, i32
  }
  func.func @transform_5(%arg0: i32, %arg1: i32) -> (i32, i32) {
    %c0_i32 = arith.constant 0 : i32
    %c0_i32_0 = arith.constant 0 : i32
    %c0_i32_1 = arith.constant 0 : i32
    return %c0_i32, %c0_i32_0 : i32, i32
  }
  func.func @transform_6(%arg0: i32, %arg1: i32) -> (i32, i32) {
    %c0_i32 = arith.constant 0 : i32
    %c0_i32_0 = arith.constant 0 : i32
    %c0_i32_1 = arith.constant 0 : i32
    return %c0_i32, %c0_i32_0 : i32, i32
  }
  func.func @transform_7(%arg0: i32, %arg1: i32) -> (i32, i32) {
    %c0_i32 = arith.constant 0 : i32
    %c0_i32_0 = arith.constant 0 : i32
    %c0_i32_1 = arith.constant 0 : i32
    return %c0_i32, %c0_i32_0 : i32, i32
  }
  func.func @transform_8(%arg0: i32, %arg1: i32) -> (i32, i32) {
    %c0_i32 = arith.constant 0 : i32
    %c0_i32_0 = arith.constant 0 : i32
    %c0_i32_1 = arith.constant 0 : i32
    return %c0_i32, %c0_i32_0 : i32, i32
  }
  func.func @transform_9(%arg0: i32, %arg1: i32) -> (i32, i32) {
    %c0_i32 = arith.constant 0 : i32
    %c0_i32_0 = arith.constant 0 : i32
    %c0_i32_1 = arith.constant 0 : i32
    return %c0_i32, %c0_i32_0 : i32, i32
  }
  func.func @transform_10(%arg0: i32, %arg1: i32) -> (i32, i32) {
    %c0_i32 = arith.constant 0 : i32
    %c0_i32_0 = arith.constant 0 : i32
    %c0_i32_1 = arith.constant 0 : i32
    return %c0_i32, %c0_i32_0 : i32, i32
  }
  func.func @transform_11(%arg0: i32, %arg1: i32) -> (i32, i32) {
    %c0_i32 = arith.constant 0 : i32
    %c0_i32_0 = arith.constant 0 : i32
    %c0_i32_1 = arith.constant 0 : i32
    return %c0_i32, %c0_i32_0 : i32, i32
  }
  func.func @transform_12(%arg0: i32, %arg1: i32) -> (i32, i32) {
    %c0_i32 = arith.constant 0 : i32
    %c0_i32_0 = arith.constant 0 : i32
    %c0_i32_1 = arith.constant 0 : i32
    return %c0_i32, %c0_i32_0 : i32, i32
  }
  func.func @transform_13(%arg0: i32, %arg1: i32) -> (i32, i32, i32) {
    %c0_i32 = arith.constant 0 : i32
    %c0_i32_0 = arith.constant 0 : i32
    return %arg0, %arg1, %c0_i32 : i32, i32, i32
  }
}

</mosaic_0001>

<llo_original>
// kernel: squeeze.1
$region0: #{squeeze.1}
  %s0 = inlined_call_operand.vmem [shape: f32[2,9], index: 0, kind: input, shape index: {}]
  %s1 = inlined_call_operand.vmem [shape: f32[2,3,3], index: 1, kind: output, shape index: {}]
  $region1: #{squeeze.1} parent=0
    #allocation0 [shape = 'u8[8192]{0}', space=vmem, size = 0x2000, scoped, tag = 'scoped mem for output reshape']
    #allocation1 [shape = 'u8[4096]{0}', space=vmem, size = 0x1000, scoped, tag = 'scoped mem for input reshape']
    %s3 = sshllo.u32 0, 2
    %v4 = vld [vmem:[%s0] sm:%s3]
    %5 = vst [vmem:[#allocation1] sm:%s3] %v4
    %v6 = vld [vmem:[#allocation1] sm:$0x3]
    %vm7 = vcmask 23552
    %8 = vst.msk [vmem:[#allocation0] ss:$8 sm:$0x3] %vm7, %v6
    %v9 = vld [vmem:[#allocation1] sm:$0x3]
    %10 = vrot.lane.b32.xlu0 %v9, 125
    %v11 = vpop.permute.xlu0 %10
    %vm12 = vcmask 23552
    %s13 = scalar_lea.vmem [#allocation0], 1
    %14 = vst.msk [vmem:[%s13] ss:$8 sm:$0x3] %vm12, %v11
    %v15 = vld [vmem:[#allocation1] sm:$0x3]
    %16 = vrot.lane.b32.xlu0 %v15, 122
    %v17 = vpop.permute.xlu0 %16
    %vm18 = vcmask 23552
    %s19 = scalar_lea.vmem [#allocation0], 2
    %20 = vst.msk [vmem:[%s19] ss:$8 sm:$0x3] %vm18, %v17
    %s22 = sshllo.u32 0, 4
    %v24 = vld [vmem:[#allocation0] sm:%s22]
    %s25 = sshllo.u32 0, 4
    %26 = vst [vmem:[%s1] sm:%s25] %v24
    %s27 = scalar_lea.vmem [#allocation0], 8
    %v28 = vld [vmem:[%s27] sm:%s22]
    %s29 = sshllo.u32 0, 4
    %s30 = scalar_lea.vmem %s1, 4
    %31 = vst [vmem:[%s30] sm:%s29] %v28

// kernel: pointnet_densecls_forward.4
$region0: #{pointnet_densecls_forward.4}
  #allocation0 [shape = 'u32[]', space=smem, size = 0x4, offset = 0x4, fixed_abs, tag = 'smem constant byte address 0x4 - core index']
  #allocation1 [shape = 'u32[144,128]{1,0:T(1,128)}', space=vmem, size = 0x12000, scoped, tag = 'internal scratch']
  %s0 = inlined_call_operand.vmem [shape: bf16[2,64,16], index: 0, kind: input, shape index: {}]
  %s1 = inlined_call_operand.vmem [shape: bf16[2,16,64], index: 1, kind: input, shape index: {}]
  %s2 = inlined_call_operand.vmem [shape: f32[1,64], index: 2, kind: input, shape index: {}]
  %s3 = inlined_call_operand.vmem [shape: bf16[64,128], index: 3, kind: input, shape index: {}]
  %s4 = inlined_call_operand.vmem [shape: f32[1,128], index: 4, kind: input, shape index: {}]
  %s5 = inlined_call_operand.vmem [shape: bf16[128,1024], index: 5, kind: input, shape index: {}]
  %s6 = inlined_call_operand.vmem [shape: f32[1,1024], index: 6, kind: input, shape index: {}]
  %s7 = inlined_call_operand.vmem [shape: f32[2,1,1024], index: 7, kind: output, shape index: {}]
  %s8 = sld [smem:[#allocation0]]
  $region69: #{pointnet_densecls_forward.4} parent=0
    _
  %s10 = ssub.s32 1, %s8
  %s11 = scalar_select 0, %s10, %s8
  loop: start=0, step=1, limit=4
  $region2: #{pointnet_densecls_forward.4} parent=0 // loop_pre_header
    _
  $region3: #{pointnet_densecls_forward.4} parent=0 // loop_header
    %s13 = sphi 0, %s17
    %p14 = scmp.ge.s32.totalorder %s13, 4
    %s20 = sphi 0, %s32
    %s21 = sphi 0, %s28
    %s22 = sphi 0, %s20
    %s23 = sphi 0, %s21
    %s24 = sphi 0, %s22
    %s25 = sphi 0, %s23
    %s37 = sphi 0, %s39
    %s40 = sphi 0, %s37
    %s41 = sphi 0, %s40
    %s57 = sphi 0, %s41
    %s63 = sphi 0, %s65
    %s66 = sphi 0, %s63
    %s67 = sphi 0, %s66
    %s83 = sphi 0, %s67
    %s87 = sphi 0, %s87
    %s89 = sphi 0, %s87
    %s90 = sphi 0, %s89
    %s104 = sphi 0, %s90
    %s108 = sphi 0, %s108
    %s110 = sphi 0, %s108
    %s111 = sphi 0, %s110
    %s125 = sphi 0, %s111
    %s129 = sphi 0, %s129
    %s131 = sphi 0, %s129
    %s132 = sphi 0, %s131
    %s146 = sphi 0, %s132
    %s150 = sphi 0, %s150
    %s152 = sphi 0, %s150
    %s153 = sphi 0, %s152
    %s167 = sphi 0, %s153
    %s171 = sphi 0, %s171
    %s173 = sphi 0, %s171
    %s174 = sphi 0, %s173
    %s188 = sphi 0, %s174
    %s194 = sphi 0, %s196
    %s197 = sphi 0, %s194
    %s198 = sphi 0, %s197
    %s214 = sphi 0, %s198
  $region4: #{pointnet_densecls_forward.4} parent=0 // loop_header_branch
    %16 = sbr.rel (%p14) target = $region8
  $region5: #{pointnet_densecls_forward.4} parent=0 // loop_body
    %s18 = ssub.s32 %s13, 1
    %s19 = ssub.s32 %s13, 2
    %s26 = sadd.s32 1, %s21
    %p27 = scmp.ge.s32.totalorder %s26, 1
    %s28 = scalar_select %p27, 0, %s26
    %s29 = sadd.s32 1, %s20
    %s30 = scalar_select %p27, %s29, %s20
    %p31 = scmp.ge.s32.totalorder %s30, 2
    %s32 = scalar_select %p31, 0, %s30
    %s33 = ssub.s32 %s20, %s32
    %s34 = ssub.s32 %s21, %s28
    %s35 = sor.u32 %s33, %s34
    %p36 = scmp.eq.s32.totalorder %s35, 0
    %s38 = sadd.s32 %s37, 1
    %s39 = scalar_select %p36, %s37, %s38
    %p42 = pneg %p36
    %p43 = scmp.eq.s32.totalorder %s13, 1
    %p44 = por %p42, %p43
    %p45 = scmp.ne.s32.totalorder %s37, %s40
    %p46 = scmp.eq.s32.totalorder %s13, 0
    %p47 = por %p45, %p46
    %p48 = scmp.ne.s32.totalorder %s37, %s40
    %p49 = scmp.eq.s32.totalorder %s18, 1
    %p50 = por %p48, %p49
    %p51 = scmp.ne.s32.totalorder %s40, %s41
    %p52 = scmp.eq.s32.totalorder %s18, 0
    %p53 = por %p51, %p52
    %p54 = scmp.ne.s32.totalorder %s40, %s41
    %p55 = scmp.eq.s32.totalorder %s19, 1
    %p56 = por %p54, %p55
    %p58 = scmp.ne.s32.totalorder %s41, %s57
    %p59 = scmp.eq.s32.totalorder %s19, 0
    %p60 = por %p58, %p59
    %s61 = ssub.s32 %s20, %s32
    %p62 = scmp.eq.s32.totalorder %s61, 0
    %s64 = sadd.s32 %s63, 1
    %s65 = scalar_select %p62, %s63, %s64
    %p68 = pneg %p62
    %p69 = scmp.eq.s32.totalorder %s13, 1
    %p70 = por %p68, %p69
    %p71 = scmp.ne.s32.totalorder %s63, %s66
    %p72 = scmp.eq.s32.totalorder %s13, 0
    %p73 = por %p71, %p72
    %p74 = scmp.ne.s32.totalorder %s63, %s66
    %p75 = scmp.eq.s32.totalorder %s18, 1
    %p76 = por %p74, %p75
    %p77 = scmp.ne.s32.totalorder %s66, %s67
    %p78 = scmp.eq.s32.totalorder %s18, 0
    %p79 = por %p77, %p78
    %p80 = scmp.ne.s32.totalorder %s66, %s67
    %p81 = scmp.eq.s32.totalorder %s19, 1
    %p82 = por %p80, %p81
    %p84 = scmp.ne.s32.totalorder %s67, %s83
    %p85 = scmp.eq.s32.totalorder %s19, 0
    %p86 = por %p84, %p85
    %s88 = sadd.s32 %s87, 1
    %p91 = scmp.eq.s32.totalorder %s13, 1
    %p92 = scmp.ne.s32.totalorder %s87, %s89
    %p93 = scmp.eq.s32.totalorder %s13, 0
    %p94 = por %p92, %p93
    %p95 = scmp.ne.s32.totalorder %s87, %s89
    %p96 = scmp.eq.s32.totalorder %s18, 1
    %p97 = por %p95, %p96
    %p98 = scmp.ne.s32.totalorder %s89, %s90
    %p99 = scmp.eq.s32.totalorder %s18, 0
    %p100 = por %p98, %p99
    %p101 = scmp.ne.s32.totalorder %s89, %s90
    %p102 = scmp.eq.s32.totalorder %s19, 1
    %p103 = por %p101, %p102
    %p105 = scmp.ne.s32.totalorder %s90, %s104
    %p106 = scmp.eq.s32.totalorder %s19, 0
    %p107 = por %p105, %p106
    %s109 = sadd.s32 %s108, 1
    %p112 = scmp.eq.s32.totalorder %s13, 1
    %p113 = scmp.ne.s32.totalorder %s108, %s110
    %p114 = scmp.eq.s32.totalorder %s13, 0
    %p115 = por %p113, %p114
    %p116 = scmp.ne.s32.totalorder %s108, %s110
    %p117 = scmp.eq.s32.totalorder %s18, 1
    %p118 = por %p116, %p117
    %p119 = scmp.ne.s32.totalorder %s110, %s111
    %p120 = scmp.eq.s32.totalorder %s18, 0
    %p121 = por %p119, %p120
    %p122 = scmp.ne.s32.totalorder %s110, %s111
    %p123 = scmp.eq.s32.totalorder %s19, 1
    %p124 = por %p122, %p123
    %p126 = scmp.ne.s32.totalorder %s111, %s125
    %p127 = scmp.eq.s32.totalorder %s19, 0
    %p128 = por %p126, %p127
    %s130 = sadd.s32 %s129, 1
    %p133 = scmp.eq.s32.totalorder %s13, 1
    %p134 = scmp.ne.s32.totalorder %s129, %s131
    %p135 = scmp.eq.s32.totalorder %s13, 0
    %p136 = por %p134, %p135
    %p137 = scmp.ne.s32.totalorder %s129, %s131
    %p138 = scmp.eq.s32.totalorder %s18, 1
    %p139 = por %p137, %p138
    %p140 = scmp.ne.s32.totalorder %s131, %s132
    %p141 = scmp.eq.s32.totalorder %s18, 0
    %p142 = por %p140, %p141
    %p143 = scmp.ne.s32.totalorder %s131, %s132
    %p144 = scmp.eq.s32.totalorder %s19, 1
    %p145 = por %p143, %p144
    %p147 = scmp.ne.s32.totalorder %s132, %s146
    %p148 = scmp.eq.s32.totalorder %s19, 0
    %p149 = por %p147, %p148
    %s151 = sadd.s32 %s150, 1
    %p154 = scmp.eq.s32.totalorder %s13, 1
    %p155 = scmp.ne.s32.totalorder %s150, %s152
    %p156 = scmp.eq.s32.totalorder %s13, 0
    %p157 = por %p155, %p156
    %p158 = scmp.ne.s32.totalorder %s150, %s152
    %p159 = scmp.eq.s32.totalorder %s18, 1
    %p160 = por %p158, %p159
    %p161 = scmp.ne.s32.totalorder %s152, %s153
    %p162 = scmp.eq.s32.totalorder %s18, 0
    %p163 = por %p161, %p162
    %p164 = scmp.ne.s32.totalorder %s152, %s153
    %p165 = scmp.eq.s32.totalorder %s19, 1
    %p166 = por %p164, %p165
    %p168 = scmp.ne.s32.totalorder %s153, %s167
    %p169 = scmp.eq.s32.totalorder %s19, 0
    %p170 = por %p168, %p169
    %s172 = sadd.s32 %s171, 1
    %p175 = scmp.eq.s32.totalorder %s13, 1
    %p176 = scmp.ne.s32.totalorder %s171, %s173
    %p177 = scmp.eq.s32.totalorder %s13, 0
    %p178 = por %p176, %p177
    %p179 = scmp.ne.s32.totalorder %s171, %s173
    %p180 = scmp.eq.s32.totalorder %s18, 1
    %p181 = por %p179, %p180
    %p182 = scmp.ne.s32.totalorder %s173, %s174
    %p183 = scmp.eq.s32.totalorder %s18, 0
    %p184 = por %p182, %p183
    %p185 = scmp.ne.s32.totalorder %s173, %s174
    %p186 = scmp.eq.s32.totalorder %s19, 1
    %p187 = por %p185, %p186
    %p189 = scmp.ne.s32.totalorder %s174, %s188
    %p190 = scmp.eq.s32.totalorder %s19, 0
    %p191 = por %p189, %p190
    %s192 = ssub.s32 %s20, %s32
    %p193 = scmp.eq.s32.totalorder %s192, 0
    %s195 = sadd.s32 %s194, 1
    %s196 = scalar_select %p193, %s194, %s195
    %p199 = pneg %p193
    %p200 = scmp.eq.s32.totalorder %s13, 1
    %p201 = por %p199, %p200
    %p202 = scmp.ne.s32.totalorder %s194, %s197
    %p203 = scmp.eq.s32.totalorder %s13, 0
    %p204 = por %p202, %p203
    %p205 = scmp.ne.s32.totalorder %s194, %s197
    %p206 = scmp.eq.s32.totalorder %s18, 1
    %p207 = por %p205, %p206
    %p208 = scmp.ne.s32.totalorder %s197, %s198
    %p209 = scmp.eq.s32.totalorder %s18, 0
    %p210 = por %p208, %p209
    %p211 = scmp.ne.s32.totalorder %s197, %s198
    %p212 = scmp.eq.s32.totalorder %s19, 1
    %p213 = por %p211, %p212
    %p215 = scmp.ne.s32.totalorder %s198, %s214
    %p216 = scmp.eq.s32.totalorder %s19, 0
    %p217 = por %p215, %p216
    %p218 = scmp.le.s32.totalorder 1, %s13
    %p219 = scmp.lt.s32.totalorder %s13, 3
    %p220 = pnand %p218, %p219
    %p221 = pneg %p220
    // Predicated region
    $region9: #{pointnet_densecls_forward.4} parent=5 // pred_check
      _
    $region10: #{pointnet_densecls_forward.4} parent=5 // pred_check_branch
      %223 = sbr.rel (%p220) target = $region12
    $region11: #{pointnet_densecls_forward.4} parent=5 // pred_region
      %s224 = ssub.s32 %s13, 1
      // Predicated region
      $region13: #{pointnet_densecls_forward.4} parent=11 // pred_check
        %p225 = pneg %p100
      $region14: #{pointnet_densecls_forward.4} parent=11 // pred_check_branch
        %227 = sbr.rel (%p225) target = $region16
      $region15: #{pointnet_densecls_forward.4} parent=11 // pred_region
        _
      $region16: #{pointnet_densecls_forward.4} parent=11 // pred_fallthru
        _
      // Predicated region
      $region17: #{pointnet_densecls_forward.4} parent=11 // pred_check
        %p228 = pneg %p121
      $region18: #{pointnet_densecls_forward.4} parent=11 // pred_check_branch
        %230 = sbr.rel (%p228) target = $region20
      $region19: #{pointnet_densecls_forward.4} parent=11 // pred_region
        _
      $region20: #{pointnet_densecls_forward.4} parent=11 // pred_fallthru
        _
      // Predicated region
      $region21: #{pointnet_densecls_forward.4} parent=11 // pred_check
        %p231 = pneg %p142
      $region22: #{pointnet_densecls_forward.4} parent=11 // pred_check_branch
        %233 = sbr.rel (%p231) target = $region24
      $region23: #{pointnet_densecls_forward.4} parent=11 // pred_region
        _
      $region24: #{pointnet_densecls_forward.4} parent=11 // pred_fallthru
        _
      // Predicated region
      $region25: #{pointnet_densecls_forward.4} parent=11 // pred_check
        %p234 = pneg %p163
      $region26: #{pointnet_densecls_forward.4} parent=11 // pred_check_branch
        %236 = sbr.rel (%p234) target = $region28
      $region27: #{pointnet_densecls_forward.4} parent=11 // pred_region
        _
      $region28: #{pointnet_densecls_forward.4} parent=11 // pred_fallthru
        _
      // Predicated region
      $region29: #{pointnet_densecls_forward.4} parent=11 // pred_check
        %p237 = pneg %p184
      $region30: #{pointnet_densecls_forward.4} parent=11 // pred_check_branch
        %239 = sbr.rel (%p237) target = $region32
      $region31: #{pointnet_densecls_forward.4} parent=11 // pred_region
        _
      $region32: #{pointnet_densecls_forward.4} parent=11 // pred_fallthru
        _
    $region12: #{pointnet_densecls_forward.4} parent=5 // pred_fallthru
      _
    %p240 = scmp.lt.s32.totalorder %s13, 2
    // Predicated region
    $region33: #{pointnet_densecls_forward.4} parent=5 // pred_check
      %p241 = pneg %p240
    $region34: #{pointnet_densecls_forward.4} parent=5 // pred_check_branch
      %243 = sbr.rel (%p241) target = $region36
    $region35: #{pointnet_densecls_forward.4} parent=5 // pred_region
      // Predicated region
      $region37: #{pointnet_densecls_forward.4} parent=35 // pred_check
        %p244 = pneg %p47
      $region38: #{pointnet_densecls_forward.4} parent=35 // pred_check_branch
        %246 = sbr.rel (%p244) target = $region40
      $region39: #{pointnet_densecls_forward.4} parent=35 // pred_region
        %s247 = smul.u32 8, %s21
        %p248 = scmp.lt.s32.totalorder %s20, 1
        %s249 = scalar_select %p248, %s20, 1
        %p250 = scmp.lt.s32.totalorder %s247, 7
        %s251 = scalar_select %p250, %s247, 7
        %s252 = smul.addr %s249, 8
        %s253 = sadd.s32 %s251, %s252
        %s254 = smul.addr %s253, 4
        %s255 = scalar_lea.vmem %s0, %s254
        %s256 = smul.u32 8, %s21
      $region40: #{pointnet_densecls_forward.4} parent=35 // pred_fallthru
        _
      // Predicated region
      $region41: #{pointnet_densecls_forward.4} parent=35 // pred_check
        %p257 = pneg %p73
      $region42: #{pointnet_densecls_forward.4} parent=35 // pred_check_branch
        %259 = sbr.rel (%p257) target = $region44
      $region43: #{pointnet_densecls_forward.4} parent=35 // pred_region
        %p260 = scmp.lt.s32.totalorder %s20, 1
        %s261 = scalar_select %p260, %s20, 1
        %s262 = smul.addr %s261, 2
        %s263 = smul.addr %s262, 4
        %s264 = scalar_lea.vmem %s1, %s263
      $region44: #{pointnet_densecls_forward.4} parent=35 // pred_fallthru
        _
    $region36: #{pointnet_densecls_forward.4} parent=5 // pred_fallthru
      _
    %p265 = scmp.le.s32.totalorder 1, %s13
    %p266 = scmp.lt.s32.totalorder %s13, 3
    %p267 = pnand %p265, %p266
    %p268 = pneg %p267
    // Predicated region
    $region45: #{pointnet_densecls_forward.4} parent=5 // pred_check
      _
    $region46: #{pointnet_densecls_forward.4} parent=5 // pred_check_branch
      %270 = sbr.rel (%p267) target = $region48
    $region47: #{pointnet_densecls_forward.4} parent=5 // pred_region
      %s271 = ssub.s32 %s13, 1
      %s272 = smul.u32 8, %s23
      %p273 = scmp.lt.s32.totalorder %s22, 1
      %s274 = scalar_select %p273, %s22, 1
      %p275 = scmp.lt.s32.totalorder %s272, 7
      %s276 = scalar_select %p275, %s272, 7
      %s277 = smul.addr %s274, 8
      %s278 = sadd.s32 %s276, %s277
      %s279 = smul.addr %s278, 4
      %s280 = scalar_lea.vmem %s0, %s279
      %p281 = pneg %p53
      %p282 = pneg %p50
      %p283 = scmp.lt.s32.totalorder %s22, 1
      %s284 = scalar_select %p283, %s22, 1
      %s285 = smul.addr %s284, 2
      %s286 = smul.addr %s285, 4
      %s287 = scalar_lea.vmem %s1, %s286
      %p288 = pneg %p79
      %p289 = pneg %p76
      %p290 = pneg %p100
      %p291 = pneg %p97
      %p292 = pneg %p121
      %p293 = pneg %p118
      %p294 = pneg %p142
      %p295 = pneg %p139
      %p296 = pneg %p163
      %p297 = pneg %p160
      %p298 = pneg %p184
      %p299 = pneg %p181
      %p300 = pneg %p210
      %p301 = pneg %p207
      %p302 = scmp.lt.s32.totalorder %s22, 1
      %s303 = scalar_select %p302, %s22, 1
      %s304 = smul.addr %s303, 8
      %s305 = scalar_lea.vmem %s7, %s304
      %s306 = smul.u32 8, %s23
      %p307 = scmp.lt.s32.totalorder %s22, 1
      %s308 = scalar_select %p307, %s22, 1
      %p309 = scmp.lt.s32.totalorder %s306, 7
      %s310 = scalar_select %p309, %s306, 7
      %s311 = smul.addr %s308, 8
      %s312 = sadd.s32 %s310, %s311
      %s313 = smul.addr %s312, 4
      %s314 = scalar_lea.vmem %s0, %s313
      %s315 = smul.u32 8, %s23
      %p316 = scmp.lt.s32.totalorder %s22, 1
      %s317 = scalar_select %p316, %s22, 1
      %s318 = smul.addr %s317, 2
      %s319 = smul.addr %s318, 4
      %s320 = scalar_lea.vmem %s1, %s319
      %p321 = scmp.lt.s32.totalorder %s22, 1
      %s322 = scalar_select %p321, %s22, 1
      %s323 = smul.addr %s322, 8
      %s324 = scalar_lea.vmem %s7, %s323
      %v326 = vld [vmem:[%s314] sm:$0xf]
      %v327 = vld [vmem:[%s314 + $0x4] sm:$0xf]
      %v328 = vld [vmem:[%s314 + $0x8] sm:$0xf]
      %v329 = vld [vmem:[%s314 + $0xc] sm:$0xf]
      %v330 = vld [vmem:[%s314 + $0x10] sm:$0xf]
      %v331 = vld [vmem:[%s314 + $0x14] sm:$0xf]
      %v332 = vld [vmem:[%s314 + $0x18] sm:$0xf]
      %v333 = vld [vmem:[%s314 + $0x1c] sm:$0xf]
      %v334 = vld [vmem:[%s320] sm:$0xf]
      %v335 = vld [vmem:[%s320 + $0x4] sm:$0xf]
      %v336 = vld [vmem:[%s2] sm:$0x1]
      %v338 = vlaneseq
      %v339 = vshrl.u32 %v338, 7
      %v340 = vsub.s32 0, %v339
      %v341 = vrot.slane %v336, %v340
      %v351 = vunpack.c.l.b16 %v326
      %v352 = vunpack.c.l.b16 %v327
      %v353 = vunpack.c.l.b16 %v328
      %v354 = vunpack.c.l.b16 %v329
      %v355 = vunpack.c.l.b16 %v330
      %v356 = vunpack.c.l.b16 %v331
      %v357 = vunpack.c.l.b16 %v332
      %v358 = vunpack.c.l.b16 %v333
      %v359 = vpack.c.b16 %v352, %v351
      %v360 = vpack.c.b16 %v354, %v353
      %v361 = vpack.c.b16 %v356, %v355
      %v362 = vpack.c.b16 %v358, %v357
      %v365 = vunpack.c.l.b16 %v334
      %v366 = vunpack.c.l.b16 %v335
      %v367 = vpack.c.b16 %v366, %v365
      %vm369 = vcmask 130048
      %v371 = vsel %vm369, %v359, 0
      %v374 = vsel %vm369, %v360, 0
      %v377 = vsel %vm369, %v361, 0
      %v380 = vsel %vm369, %v362, 0
      %382 = vmatprep.subr.bf16.mxu0 0
      %383 = vmatpush1.bf16.msra.mxu0 %v367
      %384 = vmatprep.subr.bf16.mxu0 0
      %385 = vmatpush1.bf16.msra.mxu0 0
      %386 = vmatprep.subr.bf16.mxu0 0
      %387 = vmatpush1.bf16.msra.mxu0 0
      %388 = vmatprep.subr.bf16.mxu0 0
      %389 = vmatpush1.bf16.msra.mxu0 0
      %390 = vmatprep.subr.bf16.mxu0 0
      %391 = vmatpush1.bf16.msra.mxu0 0
      %392 = vmatprep.subr.bf16.mxu0 0
      %393 = vmatpush1.bf16.msra.mxu0 0
      %394 = vmatprep.subr.bf16.mxu0 0
      %395 = vmatpush1.bf16.msra.mxu0 0
      %396 = vmatprep.subr.bf16.mxu0 0
      %397 = vmatpush1.bf16.msra.mxu0 0
      %398 = vmatprep.subr.bf16.mxu0 0
      %399 = vmatpush1.bf16.msra.mxu0 0
      %400 = vmatprep.subr.bf16.mxu0 0
      %401 = vmatpush1.bf16.msra.mxu0 0
      %402 = vmatprep.subr.bf16.mxu0 0
      %403 = vmatpush1.bf16.msra.mxu0 0
      %404 = vmatprep.subr.bf16.mxu0 0
      %405 = vmatpush1.bf16.msra.mxu0 0
      %406 = vmatprep.subr.bf16.mxu0 0
      %407 = vmatpush1.bf16.msra.mxu0 0
      %408 = vmatprep.subr.bf16.mxu0 0
      %409 = vmatpush1.bf16.msra.mxu0 0
      %410 = vmatprep.subr.bf16.mxu0 0
      %411 = vmatpush1.bf16.msra.mxu0 0
      %412 = vmatprep.subr.bf16.mxu0 0
      %413 = vmatpush1.bf16.msra.mxu0 0
      %414 = vmatprep.mubr.bf16.mxu0 0
      %415 = vmatmul.mubr.bf16.gmra.mrb[0].mxu0 %v371
      %v416 = vpop.f32.mrb[0].mxu0
      %v417 = vadd.f32 %v341, %v416
      %v418 = vpop.f32.mrb[0].mxu0
      %v419 = vpop.f32.mrb[0].mxu0
      %v420 = vadd.f32 %v341, %v419
      %v421 = vpop.f32.mrb[0].mxu0
      %422 = vmatprep.mubr.bf16.mxu0 0
      %423 = vmatmul.mubr.bf16.gmra.mrb[0].mxu0 %v374
      %v424 = vpop.f32.mrb[0].mxu0
      %v425 = vadd.f32 %v341, %v424
      %v426 = vpop.f32.mrb[0].mxu0
      %v427 = vpop.f32.mrb[0].mxu0
      %v428 = vadd.f32 %v341, %v427
      %v429 = vpop.f32.mrb[0].mxu0
      %430 = vmatprep.mubr.bf16.mxu0 0
      %431 = vmatmul.mubr.bf16.gmra.mrb[0].mxu0 %v377
      %v432 = vpop.f32.mrb[0].mxu0
      %v433 = vadd.f32 %v341, %v432
      %v434 = vpop.f32.mrb[0].mxu0
      %v435 = vpop.f32.mrb[0].mxu0
      %v436 = vadd.f32 %v341, %v435
      %v437 = vpop.f32.mrb[0].mxu0
      %438 = vmatprep.mubr.bf16.mxu0 0
      %439 = vmatmul.mubr.bf16.gmra.mrb[0].mxu0 %v380
      %v440 = vpop.f32.mrb[0].mxu0
      %v441 = vadd.f32 %v341, %v440
      %v442 = vpop.f32.mrb[0].mxu0
      %v443 = vpop.f32.mrb[0].mxu0
      %v444 = vadd.f32 %v341, %v443
      %v445 = vpop.f32.mrb[0].mxu0
      %446 = vdwg.mxu0
      %v447 = vmax.f32 %v417, 0.0
      %v448 = vmax.f32 %v420, 0.0
      %v449 = vmax.f32 %v425, 0.0
      %v450 = vmax.f32 %v428, 0.0
      %v451 = vmax.f32 %v433, 0.0
      %v452 = vmax.f32 %v436, 0.0
      %v453 = vmax.f32 %v441, 0.0
      %v454 = vmax.f32 %v444, 0.0
      %v455 = vpack.c.bf16 %v448, %v447
      %v456 = vpack.c.bf16 %v450, %v449
      %v457 = vpack.c.bf16 %v452, %v451
      %v458 = vpack.c.bf16 %v454, %v453
      %v459 = vld [vmem:[%s3] sm:$0xf]
      %v460 = vld [vmem:[%s3 + $0x4] sm:$0xf]
      %v461 = vld [vmem:[%s3 + $0x8] sm:$0xf]
      %v462 = vld [vmem:[%s3 + $0xc] sm:$0xf]
      %v463 = vld [vmem:[%s3 + $0x10] sm:$0xf]
      %v464 = vld [vmem:[%s3 + $0x14] sm:$0xf]
      %v465 = vld [vmem:[%s3 + $0x18] sm:$0xf]
      %v466 = vld [vmem:[%s3 + $0x1c] sm:$0xf]
      %v467 = vld [vmem:[%s4] sm:$0x1]
      %v469 = vlaneseq
      %v470 = vshrl.u32 %v469, 7
      %v471 = vsub.s32 0, %v470
      %v472 = vrot.slane %v467, %v471
      %v482 = vunpack.c.l.b16 %v459
      %v483 = vunpack.c.l.b16 %v460
      %v484 = vunpack.c.l.b16 %v461
      %v485 = vunpack.c.l.b16 %v462
      %v486 = vunpack.c.l.b16 %v463
      %v487 = vunpack.c.l.b16 %v464
      %v488 = vunpack.c.l.b16 %v465
      %v489 = vunpack.c.l.b16 %v466
      %v490 = vpack.c.b16 %v483, %v482
      %v491 = vpack.c.b16 %v485, %v484
      %v492 = vpack.c.b16 %v487, %v486
      %v493 = vpack.c.b16 %v489, %v488
      %vm498 = vcmask 523264
      %v500 = vsel %vm498, %v455, 0
      %v503 = vsel %vm498, %v456, 0
      %v506 = vsel %vm498, %v457, 0
      %v509 = vsel %vm498, %v458, 0
      %511 = vmatprep.subr.bf16.mxu0 0
      %512 = vmatpush1.bf16.msra.mxu0 %v490
      %513 = vmatprep.subr.bf16.mxu0 0
      %514 = vmatpush1.bf16.msra.mxu0 %v491
      %515 = vmatprep.subr.bf16.mxu0 0
      %516 = vmatpush1.bf16.msra.mxu0 %v492
      %517 = vmatprep.subr.bf16.mxu0 0
      %518 = vmatpush1.bf16.msra.mxu0 %v493
      %519 = vmatprep.subr.bf16.mxu0 0
      %520 = vmatpush1.bf16.msra.mxu0 0
      %521 = vmatprep.subr.bf16.mxu0 0
      %522 = vmatpush1.bf16.msra.mxu0 0
      %523 = vmatprep.subr.bf16.mxu0 0
      %524 = vmatpush1.bf16.msra.mxu0 0
      %525 = vmatprep.subr.bf16.mxu0 0
      %526 = vmatpush1.bf16.msra.mxu0 0
      %527 = vmatprep.subr.bf16.mxu0 0
      %528 = vmatpush1.bf16.msra.mxu0 0
      %529 = vmatprep.subr.bf16.mxu0 0
      %530 = vmatpush1.bf16.msra.mxu0 0
      %531 = vmatprep.subr.bf16.mxu0 0
      %532 = vmatpush1.bf16.msra.mxu0 0
      %533 = vmatprep.subr.bf16.mxu0 0
      %534 = vmatpush1.bf16.msra.mxu0 0
      %535 = vmatprep.subr.bf16.mxu0 0
      %536 = vmatpush1.bf16.msra.mxu0 0
      %537 = vmatprep.subr.bf16.mxu0 0
      %538 = vmatpush1.bf16.msra.mxu0 0
      %539 = vmatprep.subr.bf16.mxu0 0
      %540 = vmatpush1.bf16.msra.mxu0 0
      %541 = vmatprep.subr.bf16.mxu0 0
      %542 = vmatpush1.bf16.msra.mxu0 0
      %543 = vmatprep.mubr.bf16.mxu0 0
      %544 = vmatmul.mubr.bf16.gmra.mrb[0].mxu0 %v500
      %v545 = vpop.f32.mrb[0].mxu0
      %v546 = vadd.f32 %v472, %v545
      %v547 = vpop.f32.mrb[0].mxu0
      %v548 = vpop.f32.mrb[0].mxu0
      %v549 = vadd.f32 %v472, %v548
      %v550 = vpop.f32.mrb[0].mxu0
      %551 = vmatprep.mubr.bf16.mxu0 0
      %552 = vmatmul.mubr.bf16.gmra.mrb[0].mxu0 %v503
      %v553 = vpop.f32.mrb[0].mxu0
      %v554 = vadd.f32 %v472, %v553
      %v555 = vpop.f32.mrb[0].mxu0
      %v556 = vpop.f32.mrb[0].mxu0
      %v557 = vadd.f32 %v472, %v556
      %v558 = vpop.f32.mrb[0].mxu0
      %559 = vmatprep.mubr.bf16.mxu0 0
      %560 = vmatmul.mubr.bf16.gmra.mrb[0].mxu0 %v506
      %v561 = vpop.f32.mrb[0].mxu0
      %v562 = vadd.f32 %v472, %v561
      %v563 = vpop.f32.mrb[0].mxu0
      %v564 = vpop.f32.mrb[0].mxu0
      %v565 = vadd.f32 %v472, %v564
      %v566 = vpop.f32.mrb[0].mxu0
      %567 = vmatprep.mubr.bf16.mxu0 0
      %568 = vmatmul.mubr.bf16.gmra.mrb[0].mxu0 %v509
      %v569 = vpop.f32.mrb[0].mxu0
      %v570 = vadd.f32 %v472, %v569
      %v571 = vpop.f32.mrb[0].mxu0
      %v572 = vpop.f32.mrb[0].mxu0
      %v573 = vadd.f32 %v472, %v572
      %v574 = vpop.f32.mrb[0].mxu0
      %575 = vdwg.mxu0
      %v576 = vmax.f32 %v546, 0.0
      %v577 = vmax.f32 %v549, 0.0
      %v578 = vmax.f32 %v554, 0.0
      %v579 = vmax.f32 %v557, 0.0
      %v580 = vmax.f32 %v562, 0.0
      %v581 = vmax.f32 %v565, 0.0
      %v582 = vmax.f32 %v570, 0.0
      %v583 = vmax.f32 %v573, 0.0
      %v584 = vpack.c.bf16 %v577, %v576
      %v585 = vpack.c.bf16 %v579, %v578
      %v586 = vpack.c.bf16 %v581, %v580
      %v587 = vpack.c.bf16 %v583, %v582
      %v588 = vld [vmem:[%s5] sm:$0xff]
      %v589 = vld [vmem:[%s5 + $0x8] sm:$0xff]
      %v590 = vld [vmem:[%s5 + $0x10] sm:$0xff]
      %v591 = vld [vmem:[%s5 + $0x18] sm:$0xff]
      %v592 = vld [vmem:[%s5 + $0x20] sm:$0xff]
      %v593 = vld [vmem:[%s5 + $0x28] sm:$0xff]
      %v594 = vld [vmem:[%s5 + $0x30] sm:$0xff]
      %v595 = vld [vmem:[%s5 + $0x38] sm:$0xff]
      %v596 = vld [vmem:[%s5 + $0x40] sm:$0xff]
      %v597 = vld [vmem:[%s5 + $0x48] sm:$0xff]
      %v598 = vld [vmem:[%s5 + $0x50] sm:$0xff]
      %v599 = vld [vmem:[%s5 + $0x58] sm:$0xff]
      %v600 = vld [vmem:[%s5 + $0x60] sm:$0xff]
      %v601 = vld [vmem:[%s5 + $0x68] sm:$0xff]
      %v602 = vld [vmem:[%s5 + $0x70] sm:$0xff]
      %v603 = vld [vmem:[%s5 + $0x78] sm:$0xff]
      %v604 = vld [vmem:[%s5 + $0x80] sm:$0xff]
      %v605 = vld [vmem:[%s5 + $0x88] sm:$0xff]
      %v606 = vld [vmem:[%s5 + $0x90] sm:$0xff]
      %v607 = vld [vmem:[%s5 + $0x98] sm:$0xff]
      %v608 = vld [vmem:[%s5 + $0xa0] sm:$0xff]
      %v609 = vld [vmem:[%s5 + $0xa8] sm:$0xff]
      %v610 = vld [vmem:[%s5 + $0xb0] sm:$0xff]
      %v611 = vld [vmem:[%s5 + $0xb8] sm:$0xff]
      %v612 = vld [vmem:[%s5 + $0xc0] sm:$0xff]
      %v613 = vld [vmem:[%s5 + $0xc8] sm:$0xff]
      %v614 = vld [vmem:[%s5 + $0xd0] sm:$0xff]
      %v615 = vld [vmem:[%s5 + $0xd8] sm:$0xff]
      %v616 = vld [vmem:[%s5 + $0xe0] sm:$0xff]
      %v617 = vld [vmem:[%s5 + $0xe8] sm:$0xff]
      %v618 = vld [vmem:[%s5 + $0xf0] sm:$0xff]
      %v619 = vld [vmem:[%s5 + $0xf8] sm:$0xff]
      %v620 = vld [vmem:[%s5 + $0x100] sm:$0xff]
      %v621 = vld [vmem:[%s5 + $0x108] sm:$0xff]
      %v622 = vld [vmem:[%s5 + $0x110] sm:$0xff]
      %v623 = vld [vmem:[%s5 + $0x118] sm:$0xff]
      %v624 = vld [vmem:[%s5 + $0x120] sm:$0xff]
      %v625 = vld [vmem:[%s5 + $0x128] sm:$0xff]
      %v626 = vld [vmem:[%s5 + $0x130] sm:$0xff]
      %v627 = vld [vmem:[%s5 + $0x138] sm:$0xff]
      %v628 = vld [vmem:[%s5 + $0x140] sm:$0xff]
      %v629 = vld [vmem:[%s5 + $0x148] sm:$0xff]
      %v630 = vld [vmem:[%s5 + $0x150] sm:$0xff]
      %v631 = vld [vmem:[%s5 + $0x158] sm:$0xff]
      %v632 = vld [vmem:[%s5 + $0x160] sm:$0xff]
      %v633 = vld [vmem:[%s5 + $0x168] sm:$0xff]
      %v634 = vld [vmem:[%s5 + $0x170] sm:$0xff]
      %v635 = vld [vmem:[%s5 + $0x178] sm:$0xff]
      %v636 = vld [vmem:[%s5 + $0x180] sm:$0xff]
      %v637 = vld [vmem:[%s5 + $0x188] sm:$0xff]
      %v638 = vld [vmem:[%s5 + $0x190] sm:$0xff]
      %v639 = vld [vmem:[%s5 + $0x198] sm:$0xff]
      %v640 = vld [vmem:[%s5 + $0x1a0] sm:$0xff]
      %v641 = vld [vmem:[%s5 + $0x1a8] sm:$0xff]
      %v642 = vld [vmem:[%s5 + $0x1b0] sm:$0xff]
      %v643 = vld [vmem:[%s5 + $0x1b8] sm:$0xff]
      %v644 = vld [vmem:[%s5 + $0x1c0] sm:$0xff]
      %v645 = vld [vmem:[%s5 + $0x1c8] sm:$0xff]
      %v646 = vld [vmem:[%s5 + $0x1d0] sm:$0xff]
      %v647 = vld [vmem:[%s5 + $0x1d8] sm:$0xff]
      %v648 = vld [vmem:[%s5 + $0x1e0] sm:$0xff]
      %v649 = vld [vmem:[%s5 + $0x1e8] sm:$0xff]
      %v650 = vld [vmem:[%s5 + $0x1f0] sm:$0xff]
      %v651 = vld [vmem:[%s5 + $0x1f8] sm:$0xff]
      %v652 = vld [vmem:[%s6] sm:$0xff]
      %v654 = vlaneseq
      %v655 = vshrl.u32 %v654, 7
      %v656 = vsub.s32 0, %v655
      %v657 = vrot.slane %v652, %v656
      %v658 = vlaneseq
      %v659 = vshrl.u32 %v658, 7
      %v660 = vsub.s32 1, %v659
      %v661 = vrot.slane %v652, %v660
      %v662 = vlaneseq
      %v663 = vshrl.u32 %v662, 7
      %v664 = vsub.s32 2, %v663
      %v665 = vrot.slane %v652, %v664
      %v666 = vlaneseq
      %v667 = vshrl.u32 %v666, 7
      %v668 = vsub.s32 3, %v667
      %v669 = vrot.slane %v652, %v668
      %v670 = vlaneseq
      %v671 = vshrl.u32 %v670, 7
      %v672 = vsub.s32 4, %v671
      %v673 = vrot.slane %v652, %v672
      %v674 = vlaneseq
      %v675 = vshrl.u32 %v674, 7
      %v676 = vsub.s32 5, %v675
      %v677 = vrot.slane %v652, %v676
      %v678 = vlaneseq
      %v679 = vshrl.u32 %v678, 7
      %v680 = vsub.s32 6, %v679
      %v681 = vrot.slane %v652, %v680
      %v682 = vlaneseq
      %v683 = vshrl.u32 %v682, 7
      %v684 = vsub.s32 7, %v683
      %v685 = vrot.slane %v652, %v684
      %v758 = vunpack.c.l.b16 %v588
      %v759 = vunpack.c.h.b16 %v588
      %v760 = vunpack.c.l.b16 %v589
      %v761 = vunpack.c.h.b16 %v589
      %v762 = vunpack.c.l.b16 %v590
      %v763 = vunpack.c.h.b16 %v590
      %v764 = vunpack.c.l.b16 %v591
      %v765 = vunpack.c.h.b16 %v591
      %v766 = vunpack.c.l.b16 %v592
      %v767 = vunpack.c.h.b16 %v592
      %v768 = vunpack.c.l.b16 %v593
      %v769 = vunpack.c.h.b16 %v593
      %v770 = vunpack.c.l.b16 %v594
      %v771 = vunpack.c.h.b16 %v594
      %v772 = vunpack.c.l.b16 %v595
      %v773 = vunpack.c.h.b16 %v595
      %v774 = vunpack.c.l.b16 %v596
      %v775 = vunpack.c.h.b16 %v596
      %v776 = vunpack.c.l.b16 %v597
      %v777 = vunpack.c.h.b16 %v597
      %v778 = vunpack.c.l.b16 %v598
      %v779 = vunpack.c.h.b16 %v598
      %v780 = vunpack.c.l.b16 %v599
      %v781 = vunpack.c.h.b16 %v599
      %v782 = vunpack.c.l.b16 %v600
      %v783 = vunpack.c.h.b16 %v600
      %v784 = vunpack.c.l.b16 %v601
      %v785 = vunpack.c.h.b16 %v601
      %v786 = vunpack.c.l.b16 %v602
      %v787 = vunpack.c.h.b16 %v602
      %v788 = vunpack.c.l.b16 %v603
      %v789 = vunpack.c.h.b16 %v603
      %v790 = vunpack.c.l.b16 %v604
      %v791 = vunpack.c.h.b16 %v604
      %v792 = vunpack.c.l.b16 %v605
      %v793 = vunpack.c.h.b16 %v605
      %v794 = vunpack.c.l.b16 %v606
      %v795 = vunpack.c.h.b16 %v606
      %v796 = vunpack.c.l.b16 %v607
      %v797 = vunpack.c.h.b16 %v607
      %v798 = vunpack.c.l.b16 %v608
      %v799 = vunpack.c.h.b16 %v608
      %v800 = vunpack.c.l.b16 %v609
      %v801 = vunpack.c.h.b16 %v609
      %v802 = vunpack.c.l.b16 %v610
      %v803 = vunpack.c.h.b16 %v610
      %v804 = vunpack.c.l.b16 %v611
      %v805 = vunpack.c.h.b16 %v611
      %v806 = vunpack.c.l.b16 %v612
      %v807 = vunpack.c.h.b16 %v612
      %v808 = vunpack.c.l.b16 %v613
      %v809 = vunpack.c.h.b16 %v613
      %v810 = vunpack.c.l.b16 %v614
      %v811 = vunpack.c.h.b16 %v614
      %v812 = vunpack.c.l.b16 %v615
      %v813 = vunpack.c.h.b16 %v615
      %v814 = vunpack.c.l.b16 %v616
      %v815 = vunpack.c.h.b16 %v616
      %v816 = vunpack.c.l.b16 %v617
      %v817 = vunpack.c.h.b16 %v617
      %v818 = vunpack.c.l.b16 %v618
      %v819 = vunpack.c.h.b16 %v618
      %v820 = vunpack.c.l.b16 %v619
      %v821 = vunpack.c.h.b16 %v619
      %v822 = vunpack.c.l.b16 %v620
      %v823 = vunpack.c.h.b16 %v620
      %v824 = vunpack.c.l.b16 %v621
      %v825 = vunpack.c.h.b16 %v621
      %v826 = vunpack.c.l.b16 %v622
      %v827 = vunpack.c.h.b16 %v622
      %v828 = vunpack.c.l.b16 %v623
      %v829 = vunpack.c.h.b16 %v623
      %v830 = vunpack.c.l.b16 %v624
      %v831 = vunpack.c.h.b16 %v624
      %v832 = vunpack.c.l.b16 %v625
      %v833 = vunpack.c.h.b16 %v625
      %v834 = vunpack.c.l.b16 %v626
      %v835 = vunpack.c.h.b16 %v626
      %v836 = vunpack.c.l.b16 %v627
      %v837 = vunpack.c.h.b16 %v627
      %v838 = vunpack.c.l.b16 %v628
      %v839 = vunpack.c.h.b16 %v628
      %v840 = vunpack.c.l.b16 %v629
      %v841 = vunpack.c.h.b16 %v629
      %v842 = vunpack.c.l.b16 %v630
      %v843 = vunpack.c.h.b16 %v630
      %v844 = vunpack.c.l.b16 %v631
      %v845 = vunpack.c.h.b16 %v631
      %v846 = vunpack.c.l.b16 %v632
      %v847 = vunpack.c.h.b16 %v632
      %v848 = vunpack.c.l.b16 %v633
      %v849 = vunpack.c.h.b16 %v633
      %v850 = vunpack.c.l.b16 %v634
      %v851 = vunpack.c.h.b16 %v634
      %v852 = vunpack.c.l.b16 %v635
      %v853 = vunpack.c.h.b16 %v635
      %v854 = vunpack.c.l.b16 %v636
      %v855 = vunpack.c.h.b16 %v636
      %v856 = vunpack.c.l.b16 %v637
      %v857 = vunpack.c.h.b16 %v637
      %v858 = vunpack.c.l.b16 %v638
      %v859 = vunpack.c.h.b16 %v638
      %v860 = vunpack.c.l.b16 %v639
      %v861 = vunpack.c.h.b16 %v639
      %v862 = vunpack.c.l.b16 %v640
      %v863 = vunpack.c.h.b16 %v640
      %v864 = vunpack.c.l.b16 %v641
      %v865 = vunpack.c.h.b16 %v641
      %v866 = vunpack.c.l.b16 %v642
      %v867 = vunpack.c.h.b16 %v642
      %v868 = vunpack.c.l.b16 %v643
      %v869 = vunpack.c.h.b16 %v643
      %v870 = vunpack.c.l.b16 %v644
      %v871 = vunpack.c.h.b16 %v644
      %v872 = vunpack.c.l.b16 %v645
      %v873 = vunpack.c.h.b16 %v645
      %v874 = vunpack.c.l.b16 %v646
      %v875 = vunpack.c.h.b16 %v646
      %v876 = vunpack.c.l.b16 %v647
      %v877 = vunpack.c.h.b16 %v647
      %v878 = vunpack.c.l.b16 %v648
      %v879 = vunpack.c.h.b16 %v648
      %v880 = vunpack.c.l.b16 %v649
      %v881 = vunpack.c.h.b16 %v649
      %v882 = vunpack.c.l.b16 %v650
      %v883 = vunpack.c.h.b16 %v650
      %v884 = vunpack.c.l.b16 %v651
      %v885 = vunpack.c.h.b16 %v651
      %v886 = vpack.c.b16 %v766, %v758
      %v887 = vpack.c.b16 %v767, %v759
      %v888 = vpack.c.b16 %v768, %v760
      %v889 = vpack.c.b16 %v769, %v761
      %v890 = vpack.c.b16 %v770, %v762
      %v891 = vpack.c.b16 %v771, %v763
      %v892 = vpack.c.b16 %v772, %v764
      %v893 = vpack.c.b16 %v773, %v765
      %v894 = vpack.c.b16 %v782, %v774
      %v895 = vpack.c.b16 %v783, %v775
      %v896 = vpack.c.b16 %v784, %v776
      %v897 = vpack.c.b16 %v785, %v777
      %v898 = vpack.c.b16 %v786, %v778
      %v899 = vpack.c.b16 %v787, %v779
      %v900 = vpack.c.b16 %v788, %v780
      %v901 = vpack.c.b16 %v789, %v781
      %v902 = vpack.c.b16 %v798, %v790
      %v903 = vpack.c.b16 %v799, %v791
      %v904 = vpack.c.b16 %v800, %v792
      %v905 = vpack.c.b16 %v801, %v793
      %v906 = vpack.c.b16 %v802, %v794
      %v907 = vpack.c.b16 %v803, %v795
      %v908 = vpack.c.b16 %v804, %v796
      %v909 = vpack.c.b16 %v805, %v797
      %v910 = vpack.c.b16 %v814, %v806
      %v911 = vpack.c.b16 %v815, %v807
      %v912 = vpack.c.b16 %v816, %v808
      %v913 = vpack.c.b16 %v817, %v809
      %v914 = vpack.c.b16 %v818, %v810
      %v915 = vpack.c.b16 %v819, %v811
      %v916 = vpack.c.b16 %v820, %v812
      %v917 = vpack.c.b16 %v821, %v813
      %v918 = vpack.c.b16 %v830, %v822
      %v919 = vpack.c.b16 %v831, %v823
      %v920 = vpack.c.b16 %v832, %v824
      %v921 = vpack.c.b16 %v833, %v825
      %v922 = vpack.c.b16 %v834, %v826
      %v923 = vpack.c.b16 %v835, %v827
      %v924 = vpack.c.b16 %v836, %v828
      %v925 = vpack.c.b16 %v837, %v829
      %v926 = vpack.c.b16 %v846, %v838
      %v927 = vpack.c.b16 %v847, %v839
      %v928 = vpack.c.b16 %v848, %v840
      %v929 = vpack.c.b16 %v849, %v841
      %v930 = vpack.c.b16 %v850, %v842
      %v931 = vpack.c.b16 %v851, %v843
      %v932 = vpack.c.b16 %v852, %v844
      %v933 = vpack.c.b16 %v853, %v845
      %v934 = vpack.c.b16 %v862, %v854
      %v935 = vpack.c.b16 %v863, %v855
      %v936 = vpack.c.b16 %v864, %v856
      %v937 = vpack.c.b16 %v865, %v857
      %v938 = vpack.c.b16 %v866, %v858
      %v939 = vpack.c.b16 %v867, %v859
      %v940 = vpack.c.b16 %v868, %v860
      %v941 = vpack.c.b16 %v869, %v861
      %v942 = vpack.c.b16 %v878, %v870
      %v943 = vpack.c.b16 %v879, %v871
      %v944 = vpack.c.b16 %v880, %v872
      %v945 = vpack.c.b16 %v881, %v873
      %v946 = vpack.c.b16 %v882, %v874
      %v947 = vpack.c.b16 %v883, %v875
      %v948 = vpack.c.b16 %v884, %v876
      %v949 = vpack.c.b16 %v885, %v877
      %1014 = vmatprep.subr.bf16.mxu0 %v887
      %1015 = vmatpush1.bf16.msra.mxu0 %v886
      %1016 = vmatprep.subr.bf16.mxu0 %v895
      %1017 = vmatpush1.bf16.msra.mxu0 %v894
      %1018 = vmatprep.subr.bf16.mxu0 %v903
      %1019 = vmatpush1.bf16.msra.mxu0 %v902
      %1020 = vmatprep.subr.bf16.mxu0 %v911
      %1021 = vmatpush1.bf16.msra.mxu0 %v910
      %1022 = vmatprep.subr.bf16.mxu0 %v919
      %1023 = vmatpush1.bf16.msra.mxu0 %v918
      %1024 = vmatprep.subr.bf16.mxu0 %v927
      %1025 = vmatpush1.bf16.msra.mxu0 %v926
      %1026 = vmatprep.subr.bf16.mxu0 %v935
      %1027 = vmatpush1.bf16.msra.mxu0 %v934
      %1028 = vmatprep.subr.bf16.mxu0 %v943
      %1029 = vmatpush1.bf16.msra.mxu0 %v942
      %1030 = vmatprep.subr.bf16.mxu0 0
      %1031 = vmatpush1.bf16.msra.mxu0 0
      %1032 = vmatprep.subr.bf16.mxu0 0
      %1033 = vmatpush1.bf16.msra.mxu0 0
      %1034 = vmatprep.subr.bf16.mxu0 0
      %1035 = vmatpush1.bf16.msra.mxu0 0
      %1036 = vmatprep.subr.bf16.mxu0 0
      %1037 = vmatpush1.bf16.msra.mxu0 0
      %1038 = vmatprep.subr.bf16.mxu0 0
      %1039 = vmatpush1.bf16.msra.mxu0 0
      %1040 = vmatprep.subr.bf16.mxu0 0
      %1041 = vmatpush1.bf16.msra.mxu0 0
      %1042 = vmatprep.subr.bf16.mxu0 0
      %1043 = vmatpush1.bf16.msra.mxu0 0
      %1044 = vmatprep.subr.bf16.mxu0 0
      %1045 = vmatpush1.bf16.msra.mxu0 0
      %1046 = vmatprep.mubr.bf16.mxu0 0
      %1047 = vmatmul.mubr.bf16.gmra.mrb[0].mxu0 %v584
      %v1048 = vpop.f32.mrb[0].mxu0
      %v1049 = vadd.f32 %v657, %v1048
      %v1050 = vpop.f32.mrb[0].mxu0
      %v1051 = vadd.f32 %v661, %v1050
      %v1052 = vpop.f32.mrb[0].mxu0
      %v1053 = vadd.f32 %v657, %v1052
      %v1054 = vpop.f32.mrb[0].mxu0
      %v1055 = vadd.f32 %v661, %v1054
      %1056 = vmatprep.mubr.bf16.mxu0 0
      %1057 = vmatmul.mubr.bf16.gmra.mrb[0].mxu0 %v585
      %v1058 = vpop.f32.mrb[0].mxu0
      %v1059 = vadd.f32 %v657, %v1058
      %v1060 = vpop.f32.mrb[0].mxu0
      %v1061 = vadd.f32 %v661, %v1060
      %v1062 = vpop.f32.mrb[0].mxu0
      %v1063 = vadd.f32 %v657, %v1062
      %v1064 = vpop.f32.mrb[0].mxu0
      %v1065 = vadd.f32 %v661, %v1064
      %1066 = vmatprep.mubr.bf16.mxu0 0
      %1067 = vmatmul.mubr.bf16.gmra.mrb[0].mxu0 %v586
      %v1068 = vpop.f32.mrb[0].mxu0
      %v1069 = vadd.f32 %v657, %v1068
      %v1070 = vpop.f32.mrb[0].mxu0
      %v1071 = vadd.f32 %v661, %v1070
      %v1072 = vpop.f32.mrb[0].mxu0
      %v1073 = vadd.f32 %v657, %v1072
      %v1074 = vpop.f32.mrb[0].mxu0
      %v1075 = vadd.f32 %v661, %v1074
      %1076 = vmatprep.mubr.bf16.mxu0 0
      %1077 = vmatmul.mubr.bf16.gmra.mrb[0].mxu0 %v587
      %v1078 = vpop.f32.mrb[0].mxu0
      %v1079 = vadd.f32 %v657, %v1078
      %v1080 = vpop.f32.mrb[0].mxu0
      %v1081 = vadd.f32 %v661, %v1080
      %v1082 = vpop.f32.mrb[0].mxu0
      %v1083 = vadd.f32 %v657, %v1082
      %v1084 = vpop.f32.mrb[0].mxu0
      %v1085 = vadd.f32 %v661, %v1084
      %1086 = vdwg.mxu0
      %1087 = vmatprep.subr.bf16.mxu0 %v889
      %1088 = vmatpush1.bf16.msra.mxu0 %v888
      %1089 = vmatprep.subr.bf16.mxu0 %v897
      %1090 = vmatpush1.bf16.msra.mxu0 %v896
      %1091 = vmatprep.subr.bf16.mxu0 %v905
      %1092 = vmatpush1.bf16.msra.mxu0 %v904
      %1093 = vmatprep.subr.bf16.mxu0 %v913
      %1094 = vmatpush1.bf16.msra.mxu0 %v912
      %1095 = vmatprep.subr.bf16.mxu0 %v921
      %1096 = vmatpush1.bf16.msra.mxu0 %v920
      %1097 = vmatprep.subr.bf16.mxu0 %v929
      %1098 = vmatpush1.bf16.msra.mxu0 %v928
      %1099 = vmatprep.subr.bf16.mxu0 %v937
      %1100 = vmatpush1.bf16.msra.mxu0 %v936
      %1101 = vmatprep.subr.bf16.mxu0 %v945
      %1102 = vmatpush1.bf16.msra.mxu0 %v944
      %1103 = vmatprep.subr.bf16.mxu0 0
      %1104 = vmatpush1.bf16.msra.mxu0 0
      %1105 = vmatprep.subr.bf16.mxu0 0
      %1106 = vmatpush1.bf16.msra.mxu0 0
      %1107 = vmatprep.subr.bf16.mxu0 0
      %1108 = vmatpush1.bf16.msra.mxu0 0
      %1109 = vmatprep.subr.bf16.mxu0 0
      %1110 = vmatpush1.bf16.msra.mxu0 0
      %1111 = vmatprep.subr.bf16.mxu0 0
      %1112 = vmatpush1.bf16.msra.mxu0 0
      %1113 = vmatprep.subr.bf16.mxu0 0
      %1114 = vmatpush1.bf16.msra.mxu0 0
      %1115 = vmatprep.subr.bf16.mxu0 0
      %1116 = vmatpush1.bf16.msra.mxu0 0
      %1117 = vmatprep.subr.bf16.mxu0 0
      %1118 = vmatpush1.bf16.msra.mxu0 0
      %1119 = vmatprep.mubr.bf16.mxu0 0
      %1120 = vmatmul.mubr.bf16.gmra.mrb[0].mxu0 %v584
      %v1121 = vpop.f32.mrb[0].mxu0
      %v1122 = vadd.f32 %v665, %v1121
      %v1123 = vpop.f32.mrb[0].mxu0
      %v1124 = vadd.f32 %v669, %v1123
      %v1125 = vpop.f32.mrb[0].mxu0
      %v1126 = vadd.f32 %v665, %v1125
      %v1127 = vpop.f32.mrb[0].mxu0
      %v1128 = vadd.f32 %v669, %v1127
      %1129 = vmatprep.mubr.bf16.mxu0 0
      %1130 = vmatmul.mubr.bf16.gmra.mrb[0].mxu0 %v585
      %v1131 = vpop.f32.mrb[0].mxu0
      %v1132 = vadd.f32 %v665, %v1131
      %v1133 = vpop.f32.mrb[0].mxu0
      %v1134 = vadd.f32 %v669, %v1133
      %v1135 = vpop.f32.mrb[0].mxu0
      %v1136 = vadd.f32 %v665, %v1135
      %v1137 = vpop.f32.mrb[0].mxu0
      %v1138 = vadd.f32 %v669, %v1137
      %1139 = vmatprep.mubr.bf16.mxu0 0
      %1140 = vmatmul.mubr.bf16.gmra.mrb[0].mxu0 %v586
      %v1141 = vpop.f32.mrb[0].mxu0
      %v1142 = vadd.f32 %v665, %v1141
      %v1143 = vpop.f32.mrb[0].mxu0
      %v1144 = vadd.f32 %v669, %v1143
      %v1145 = vpop.f32.mrb[0].mxu0
      %v1146 = vadd.f32 %v665, %v1145
      %v1147 = vpop.f32.mrb[0].mxu0
      %v1148 = vadd.f32 %v669, %v1147
      %1149 = vmatprep.mubr.bf16.mxu0 0
      %1150 = vmatmul.mubr.bf16.gmra.mrb[0].mxu0 %v587
      %v1151 = vpop.f32.mrb[0].mxu0
      %v1152 = vadd.f32 %v665, %v1151
      %v1153 = vpop.f32.mrb[0].mxu0
      %v1154 = vadd.f32 %v669, %v1153
      %v1155 = vpop.f32.mrb[0].mxu0
      %v1156 = vadd.f32 %v665, %v1155
      %v1157 = vpop.f32.mrb[0].mxu0
      %v1158 = vadd.f32 %v669, %v1157
      %1159 = vdwg.mxu0
      %1160 = vmatprep.subr.bf16.mxu0 %v891
      %1161 = vmatpush1.bf16.msra.mxu0 %v890
      %1162 = vmatprep.subr.bf16.mxu0 %v899
      %1163 = vmatpush1.bf16.msra.mxu0 %v898
      %1164 = vmatprep.subr.bf16.mxu0 %v907
      %1165 = vmatpush1.bf16.msra.mxu0 %v906
      %1166 = vmatprep.subr.bf16.mxu0 %v915
      %1167 = vmatpush1.bf16.msra.mxu0 %v914
      %1168 = vmatprep.subr.bf16.mxu0 %v923
      %1169 = vmatpush1.bf16.msra.mxu0 %v922
      %1170 = vmatprep.subr.bf16.mxu0 %v931
      %1171 = vmatpush1.bf16.msra.mxu0 %v930
      %1172 = vmatprep.subr.bf16.mxu0 %v939
      %1173 = vmatpush1.bf16.msra.mxu0 %v938
      %1174 = vmatprep.subr.bf16.mxu0 %v947
      %1175 = vmatpush1.bf16.msra.mxu0 %v946
      %1176 = vmatprep.subr.bf16.mxu0 0
      %1177 = vmatpush1.bf16.msra.mxu0 0
      %1178 = vmatprep.subr.bf16.mxu0 0
      %1179 = vmatpush1.bf16.msra.mxu0 0
      %1180 = vmatprep.subr.bf16.mxu0 0
      %1181 = vmatpush1.bf16.msra.mxu0 0
      %1182 = vmatprep.subr.bf16.mxu0 0
      %1183 = vmatpush1.bf16.msra.mxu0 0
      %1184 = vmatprep.subr.bf16.mxu0 0
      %1185 = vmatpush1.bf16.msra.mxu0 0
      %1186 = vmatprep.subr.bf16.mxu0 0
      %1187 = vmatpush1.bf16.msra.mxu0 0
      %1188 = vmatprep.subr.bf16.mxu0 0
      %1189 = vmatpush1.bf16.msra.mxu0 0
      %1190 = vmatprep.subr.bf16.mxu0 0
      %1191 = vmatpush1.bf16.msra.mxu0 0
      %1192 = vmatprep.mubr.bf16.mxu0 0
      %1193 = vmatmul.mubr.bf16.gmra.mrb[0].mxu0 %v584
      %v1194 = vpop.f32.mrb[0].mxu0
      %v1195 = vadd.f32 %v673, %v1194
      %v1196 = vpop.f32.mrb[0].mxu0
      %v1197 = vadd.f32 %v677, %v1196
      %v1198 = vpop.f32.mrb[0].mxu0
      %v1199 = vadd.f32 %v673, %v1198
      %v1200 = vpop.f32.mrb[0].mxu0
      %v1201 = vadd.f32 %v677, %v1200
      %1202 = vmatprep.mubr.bf16.mxu0 0
      %1203 = vmatmul.mubr.bf16.gmra.mrb[0].mxu0 %v585
      %v1204 = vpop.f32.mrb[0].mxu0
      %v1205 = vadd.f32 %v673, %v1204
      %v1206 = vpop.f32.mrb[0].mxu0
      %v1207 = vadd.f32 %v677, %v1206
      %v1208 = vpop.f32.mrb[0].mxu0
      %v1209 = vadd.f32 %v673, %v1208
      %v1210 = vpop.f32.mrb[0].mxu0
      %v1211 = vadd.f32 %v677, %v1210
      %1212 = vmatprep.mubr.bf16.mxu0 0
      %1213 = vmatmul.mubr.bf16.gmra.mrb[0].mxu0 %v586
      %v1214 = vpop.f32.mrb[0].mxu0
      %v1215 = vadd.f32 %v673, %v1214
      %v1216 = vpop.f32.mrb[0].mxu0
      %v1217 = vadd.f32 %v677, %v1216
      %v1218 = vpop.f32.mrb[0].mxu0
      %v1219 = vadd.f32 %v673, %v1218
      %v1220 = vpop.f32.mrb[0].mxu0
      %v1221 = vadd.f32 %v677, %v1220
      %1222 = vmatprep.mubr.bf16.mxu0 0
      %1223 = vmatmul.mubr.bf16.gmra.mrb[0].mxu0 %v587
      %v1224 = vpop.f32.mrb[0].mxu0
      %v1225 = vadd.f32 %v673, %v1224
      %v1226 = vpop.f32.mrb[0].mxu0
      %v1227 = vadd.f32 %v677, %v1226
      %v1228 = vpop.f32.mrb[0].mxu0
      %v1229 = vadd.f32 %v673, %v1228
      %v1230 = vpop.f32.mrb[0].mxu0
      %v1231 = vadd.f32 %v677, %v1230
      %1232 = vdwg.mxu0
      %1233 = vmatprep.subr.bf16.mxu0 %v893
      %1234 = vmatpush1.bf16.msra.mxu0 %v892
      %1235 = vmatprep.subr.bf16.mxu0 %v901
      %1236 = vmatpush1.bf16.msra.mxu0 %v900
      %1237 = vmatprep.subr.bf16.mxu0 %v909
      %1238 = vmatpush1.bf16.msra.mxu0 %v908
      %1239 = vmatprep.subr.bf16.mxu0 %v917
      %1240 = vmatpush1.bf16.msra.mxu0 %v916
      %1241 = vmatprep.subr.bf16.mxu0 %v925
      %1242 = vmatpush1.bf16.msra.mxu0 %v924
      %1243 = vmatprep.subr.bf16.mxu0 %v933
      %1244 = vmatpush1.bf16.msra.mxu0 %v932
      %1245 = vmatprep.subr.bf16.mxu0 %v941
      %1246 = vmatpush1.bf16.msra.mxu0 %v940
      %1247 = vmatprep.subr.bf16.mxu0 %v949
      %1248 = vmatpush1.bf16.msra.mxu0 %v948
      %1249 = vmatprep.subr.bf16.mxu0 0
      %1250 = vmatpush1.bf16.msra.mxu0 0
      %1251 = vmatprep.subr.bf16.mxu0 0
      %1252 = vmatpush1.bf16.msra.mxu0 0
      %1253 = vmatprep.subr.bf16.mxu0 0
      %1254 = vmatpush1.bf16.msra.mxu0 0
      %1255 = vmatprep.subr.bf16.mxu0 0
      %1256 = vmatpush1.bf16.msra.mxu0 0
      %1257 = vmatprep.subr.bf16.mxu0 0
      %1258 = vmatpush1.bf16.msra.mxu0 0
      %1259 = vmatprep.subr.bf16.mxu0 0
      %1260 = vmatpush1.bf16.msra.mxu0 0
      %1261 = vmatprep.subr.bf16.mxu0 0
      %1262 = vmatpush1.bf16.msra.mxu0 0
      %1263 = vmatprep.subr.bf16.mxu0 0
      %1264 = vmatpush1.bf16.msra.mxu0 0
      %1265 = vmatprep.mubr.bf16.mxu0 0
      %1266 = vmatmul.mubr.bf16.gmra.mrb[0].mxu0 %v584
      %v1267 = vpop.f32.mrb[0].mxu0
      %v1268 = vadd.f32 %v681, %v1267
      %v1269 = vpop.f32.mrb[0].mxu0
      %v1270 = vadd.f32 %v685, %v1269
      %v1271 = vpop.f32.mrb[0].mxu0
      %v1272 = vadd.f32 %v681, %v1271
      %v1273 = vpop.f32.mrb[0].mxu0
      %v1274 = vadd.f32 %v685, %v1273
      %1275 = vmatprep.mubr.bf16.mxu0 0
      %1276 = vmatmul.mubr.bf16.gmra.mrb[0].mxu0 %v585
      %v1277 = vpop.f32.mrb[0].mxu0
      %v1278 = vadd.f32 %v681, %v1277
      %v1279 = vpop.f32.mrb[0].mxu0
      %v1280 = vadd.f32 %v685, %v1279
      %v1281 = vpop.f32.mrb[0].mxu0
      %v1282 = vadd.f32 %v681, %v1281
      %v1283 = vpop.f32.mrb[0].mxu0
      %v1284 = vadd.f32 %v685, %v1283
      %1285 = vmatprep.mubr.bf16.mxu0 0
      %1286 = vmatmul.mubr.bf16.gmra.mrb[0].mxu0 %v586
      %v1287 = vpop.f32.mrb[0].mxu0
      %v1288 = vadd.f32 %v681, %v1287
      %v1289 = vpop.f32.mrb[0].mxu0
      %v1290 = vadd.f32 %v685, %v1289
      %v1291 = vpop.f32.mrb[0].mxu0
      %v1292 = vadd.f32 %v681, %v1291
      %v1293 = vpop.f32.mrb[0].mxu0
      %v1294 = vadd.f32 %v685, %v1293
      %1295 = vmatprep.mubr.bf16.mxu0 0
      %1296 = vmatmul.mubr.bf16.gmra.mrb[0].mxu0 %v587
      %v1297 = vpop.f32.mrb[0].mxu0
      %v1298 = vadd.f32 %v681, %v1297
      %v1299 = vpop.f32.mrb[0].mxu0
      %v1300 = vadd.f32 %v685, %v1299
      %v1301 = vpop.f32.mrb[0].mxu0
      %v1302 = vadd.f32 %v681, %v1301
      %v1303 = vpop.f32.mrb[0].mxu0
      %v1304 = vadd.f32 %v685, %v1303
      %1305 = vdwg.mxu0
      %v1306 = vmax.f32 %v1049, %v1053
      %v1307 = vmax.f32 %v1306, %v1059
      %v1308 = vmax.f32 %v1307, %v1063
      %v1309 = vmax.f32 %v1308, %v1069
      %v1310 = vmax.f32 %v1309, %v1073
      %v1311 = vmax.f32 %v1310, %v1079
      %v1312 = vmax.f32 %v1311, %v1083
      %v1313 = vrot.slane %v1312, 4
      %v1314 = vmax.f32 %v1312, %v1313
      %v1315 = vrot.slane %v1314, 2
      %v1316 = vmax.f32 %v1314, %v1315
      %v1317 = vrot.slane %v1316, 1
      %v1318 = vmax.f32 %v1316, %v1317
      %v1319 = vmax.f32 %v1051, %v1055
      %v1320 = vmax.f32 %v1319, %v1061
      %v1321 = vmax.f32 %v1320, %v1065
      %v1322 = vmax.f32 %v1321, %v1071
      %v1323 = vmax.f32 %v1322, %v1075
      %v1324 = vmax.f32 %v1323, %v1081
      %v1325 = vmax.f32 %v1324, %v1085
      %v1326 = vrot.slane %v1325, 4
      %v1327 = vmax.f32 %v1325, %v1326
      %v1328 = vrot.slane %v1327, 2
      %v1329 = vmax.f32 %v1327, %v1328
      %v1330 = vrot.slane %v1329, 1
      %v1331 = vmax.f32 %v1329, %v1330
      %v1332 = vmax.f32 %v1122, %v1126
      %v1333 = vmax.f32 %v1332, %v1132
      %v1334 = vmax.f32 %v1333, %v1136
      %v1335 = vmax.f32 %v1334, %v1142
      %v1336 = vmax.f32 %v1335, %v1146
      %v1337 = vmax.f32 %v1336, %v1152
      %v1338 = vmax.f32 %v1337, %v1156
      %v1339 = vrot.slane %v1338, 4
      %v1340 = vmax.f32 %v1338, %v1339
      %v1341 = vrot.slane %v1340, 2
      %v1342 = vmax.f32 %v1340, %v1341
      %v1343 = vrot.slane %v1342, 1
      %v1344 = vmax.f32 %v1342, %v1343
      %v1345 = vmax.f32 %v1124, %v1128
      %v1346 = vmax.f32 %v1345, %v1134
      %v1347 = vmax.f32 %v1346, %v1138
      %v1348 = vmax.f32 %v1347, %v1144
      %v1349 = vmax.f32 %v1348, %v1148
      %v1350 = vmax.f32 %v1349, %v1154
      %v1351 = vmax.f32 %v1350, %v1158
      %v1352 = vrot.slane %v1351, 4
      %v1353 = vmax.f32 %v1351, %v1352
      %v1354 = vrot.slane %v1353, 2
      %v1355 = vmax.f32 %v1353, %v1354
      %v1356 = vrot.slane %v1355, 1
      %v1357 = vmax.f32 %v1355, %v1356
      %v1358 = vmax.f32 %v1195, %v1199
      %v1359 = vmax.f32 %v1358, %v1205
      %v1360 = vmax.f32 %v1359, %v1209
      %v1361 = vmax.f32 %v1360, %v1215
      %v1362 = vmax.f32 %v1361, %v1219
      %v1363 = vmax.f32 %v1362, %v1225
      %v1364 = vmax.f32 %v1363, %v1229
      %v1365 = vrot.slane %v1364, 4
      %v1366 = vmax.f32 %v1364, %v1365
      %v1367 = vrot.slane %v1366, 2
      %v1368 = vmax.f32 %v1366, %v1367
      %v1369 = vrot.slane %v1368, 1
      %v1370 = vmax.f32 %v1368, %v1369
      %v1371 = vmax.f32 %v1197, %v1201
      %v1372 = vmax.f32 %v1371, %v1207
      %v1373 = vmax.f32 %v1372, %v1211
      %v1374 = vmax.f32 %v1373, %v1217
      %v1375 = vmax.f32 %v1374, %v1221
      %v1376 = vmax.f32 %v1375, %v1227
      %v1377 = vmax.f32 %v1376, %v1231
      %v1378 = vrot.slane %v1377, 4
      %v1379 = vmax.f32 %v1377, %v1378
      %v1380 = vrot.slane %v1379, 2
      %v1381 = vmax.f32 %v1379, %v1380
      %v1382 = vrot.slane %v1381, 1
      %v1383 = vmax.f32 %v1381, %v1382
      %v1384 = vmax.f32 %v1268, %v1272
      %v1385 = vmax.f32 %v1384, %v1278
      %v1386 = vmax.f32 %v1385, %v1282
      %v1387 = vmax.f32 %v1386, %v1288
      %v1388 = vmax.f32 %v1387, %v1292
      %v1389 = vmax.f32 %v1388, %v1298
      %v1390 = vmax.f32 %v1389, %v1302
      %v1391 = vrot.slane %v1390, 4
      %v1392 = vmax.f32 %v1390, %v1391
      %v1393 = vrot.slane %v1392, 2
      %v1394 = vmax.f32 %v1392, %v1393
      %v1395 = vrot.slane %v1394, 1
      %v1396 = vmax.f32 %v1394, %v1395
      %v1397 = vmax.f32 %v1270, %v1274
      %v1398 = vmax.f32 %v1397, %v1280
      %v1399 = vmax.f32 %v1398, %v1284
      %v1400 = vmax.f32 %v1399, %v1290
      %v1401 = vmax.f32 %v1400, %v1294
      %v1402 = vmax.f32 %v1401, %v1300
      %v1403 = vmax.f32 %v1402, %v1304
      %v1404 = vrot.slane %v1403, 4
      %v1405 = vmax.f32 %v1403, %v1404
      %v1406 = vrot.slane %v1405, 2
      %v1407 = vmax.f32 %v1405, %v1406
      %v1408 = vrot.slane %v1407, 1
      %v1409 = vmax.f32 %v1407, %v1408
      %p1410 = scmp.eq.s32.totalorder %s23, 0
      // Predicated region
      $region49: #{pointnet_densecls_forward.4} parent=47 // pred_check
        %p1411 = pneg %p1410
      $region50: #{pointnet_densecls_forward.4} parent=47 // pred_check_branch
        %1413 = sbr.rel (%p1411) target = $region52
      $region51: #{pointnet_densecls_forward.4} parent=47 // pred_region
        %v1422 = vcombine.low %v1318, %v1331
        %v1423 = vcombine.low %v1344, %v1357
        %v1424 = vcombine.low %v1370, %v1383
        %v1425 = vcombine.low %v1396, %v1409
        %v1427 = vunpack.c.l.s4 1966171168
        %v1428 = vunpack.c.0.s8 %v1427
        %v1429 = vlaneseq
        %v1430 = vshrl.u32 %v1429, 7
        %v1431 = vsub.s32 %v1428, %v1430
        %v1432 = vrot.slane %v1422, %v1431
        %v1434 = vunpack.c.l.s4 1966171168
        %v1435 = vunpack.c.0.s8 %v1434
        %v1436 = vlaneseq
        %v1437 = vshrl.u32 %v1436, 7
        %v1438 = vsub.s32 %v1435, %v1437
        %v1439 = vrot.slane %v1423, %v1438
        %v1441 = vunpack.c.l.s4 1966171168
        %v1442 = vunpack.c.0.s8 %v1441
        %v1443 = vlaneseq
        %v1444 = vshrl.u32 %v1443, 7
        %v1445 = vsub.s32 %v1442, %v1444
        %v1446 = vrot.slane %v1424, %v1445
        %v1448 = vunpack.c.l.s4 1966171168
        %v1449 = vunpack.c.0.s8 %v1448
        %v1450 = vlaneseq
        %v1451 = vshrl.u32 %v1450, 7
        %v1452 = vsub.s32 %v1449, %v1451
        %v1453 = vrot.slane %v1425, %v1452
        %v1454 = vcombine.low %v1432, %v1439
        %v1455 = vcombine.low %v1446, %v1453
        %v1457 = vunpack.c.l.s4 1966171168
        %v1458 = vunpack.c.0.s8 %v1457
        %v1459 = vlaneseq
        %v1460 = vshrl.u32 %v1459, 7
        %v1461 = vsub.s32 %v1458, %v1460
        %v1462 = vrot.slane %v1454, %v1461
        %v1464 = vunpack.c.l.s4 1966171168
        %v1465 = vunpack.c.0.s8 %v1464
        %v1466 = vlaneseq
        %v1467 = vshrl.u32 %v1466, 7
        %v1468 = vsub.s32 %v1465, %v1467
        %v1469 = vrot.slane %v1455, %v1468
        %v1470 = vcombine.low %v1462, %v1469
        %1472 = vst [vmem:[%s324] sm:$0xff] %v1470
      $region52: #{pointnet_densecls_forward.4} parent=47 // pred_fallthru
        _
      %p1473 = scmp.gt.s32.totalorder %s23, 0
      // Predicated region
      $region53: #{pointnet_densecls_forward.4} parent=47 // pred_check
        %p1474 = pneg %p1473
      $region54: #{pointnet_densecls_forward.4} parent=47 // pred_check_branch
        %1476 = sbr.rel (%p1474) target = $region56
      $region55: #{pointnet_densecls_forward.4} parent=47 // pred_region
        %v1477 = vld [vmem:[%s324] sm:$0xff]
        %v1486 = vcombine.low %v1318, %v1331
        %v1487 = vcombine.low %v1344, %v1357
        %v1488 = vcombine.low %v1370, %v1383
        %v1489 = vcombine.low %v1396, %v1409
        %v1491 = vunpack.c.l.s4 1966171168
        %v1492 = vunpack.c.0.s8 %v1491
        %v1493 = vlaneseq
        %v1494 = vshrl.u32 %v1493, 7
        %v1495 = vsub.s32 %v1492, %v1494
        %v1496 = vrot.slane %v1486, %v1495
        %v1498 = vunpack.c.l.s4 1966171168
        %v1499 = vunpack.c.0.s8 %v1498
        %v1500 = vlaneseq
        %v1501 = vshrl.u32 %v1500, 7
        %v1502 = vsub.s32 %v1499, %v1501
        %v1503 = vrot.slane %v1487, %v1502
        %v1505 = vunpack.c.l.s4 1966171168
        %v1506 = vunpack.c.0.s8 %v1505
        %v1507 = vlaneseq
        %v1508 = vshrl.u32 %v1507, 7
        %v1509 = vsub.s32 %v1506, %v1508
        %v1510 = vrot.slane %v1488, %v1509
        %v1512 = vunpack.c.l.s4 1966171168
        %v1513 = vunpack.c.0.s8 %v1512
        %v1514 = vlaneseq
        %v1515 = vshrl.u32 %v1514, 7
        %v1516 = vsub.s32 %v1513, %v1515
        %v1517 = vrot.slane %v1489, %v1516
        %v1518 = vcombine.low %v1496, %v1503
        %v1519 = vcombine.low %v1510, %v1517
        %v1521 = vunpack.c.l.s4 1966171168
        %v1522 = vunpack.c.0.s8 %v1521
        %v1523 = vlaneseq
        %v1524 = vshrl.u32 %v1523, 7
        %v1525 = vsub.s32 %v1522, %v1524
        %v1526 = vrot.slane %v1518, %v1525
        %v1528 = vunpack.c.l.s4 1966171168
        %v1529 = vunpack.c.0.s8 %v1528
        %v1530 = vlaneseq
        %v1531 = vshrl.u32 %v1530, 7
        %v1532 = vsub.s32 %v1529, %v1531
        %v1533 = vrot.slane %v1519, %v1532
        %v1534 = vcombine.low %v1526, %v1533
        %v1536 = vmax.f32 %v1477, %v1534
        %1537 = vst [vmem:[%s324] sm:$0xff] %v1536
      $region56: #{pointnet_densecls_forward.4} parent=47 // pred_fallthru
        _
      %p1538 = scmp.lt.s32.totalorder %s22, 1
      %s1539 = scalar_select %p1538, %s22, 1
      %s1540 = smul.addr %s1539, 8
      %s1541 = scalar_lea.vmem %s7, %s1540
      // Predicated region
      $region57: #{pointnet_densecls_forward.4} parent=47 // pred_check
        %p1542 = pneg %p207
      $region58: #{pointnet_densecls_forward.4} parent=47 // pred_check_branch
        %1544 = sbr.rel (%p1542) target = $region60
      $region59: #{pointnet_densecls_forward.4} parent=47 // pred_region
        _
      $region60: #{pointnet_densecls_forward.4} parent=47 // pred_fallthru
        _
    $region48: #{pointnet_densecls_forward.4} parent=5 // pred_fallthru
      _
    %p1545 = scmp.le.s32.totalorder 2, %s13
    // Predicated region
    $region61: #{pointnet_densecls_forward.4} parent=5 // pred_check
      %p1546 = pneg %p1545
    $region62: #{pointnet_densecls_forward.4} parent=5 // pred_check_branch
      %1548 = sbr.rel (%p1546) target = $region64
    $region63: #{pointnet_densecls_forward.4} parent=5 // pred_region
      %s1549 = ssub.s32 %s13, 2
      // Predicated region
      $region65: #{pointnet_densecls_forward.4} parent=63 // pred_check
        %p1550 = pneg %p213
      $region66: #{pointnet_densecls_forward.4} parent=63 // pred_check_branch
        %1552 = sbr.rel (%p1550) target = $region68
      $region67: #{pointnet_densecls_forward.4} parent=63 // pred_region
        %p1553 = scmp.lt.s32.totalorder %s24, 1
        %s1554 = scalar_select %p1553, %s24, 1
        %s1555 = smul.addr %s1554, 8
        %s1556 = scalar_lea.vmem %s7, %s1555
      $region68: #{pointnet_densecls_forward.4} parent=63 // pred_fallthru
        _
    $region64: #{pointnet_densecls_forward.4} parent=5 // pred_fallthru
      _
  $region6: #{pointnet_densecls_forward.4} parent=0 // loop_footer
    %s17 = sadd.s32 1, %s13
  $region7: #{pointnet_densecls_forward.4} parent=0 // loop_footer_branch
    %12 = sbr.rel target = $region3
  $region8: #{pointnet_densecls_forward.4} parent=0 // loop_exit
    _

// kernel: pointnet_densecls_forward.3
$region0: #{pointnet_densecls_forward.3}
  #allocation0 [shape = 'u32[]', space=smem, size = 0x4, offset = 0x4, fixed_abs, tag = 'smem constant byte address 0x4 - core index']
  #allocation1 [shape = 'u32[144,128]{1,0:T(1,128)}', space=vmem, size = 0x12000, scoped, tag = 'internal scratch']
  #allocation2 [shape = 'f32[1,1024]{1,0:T(1,128)}', space=vmem, size = 0x1000, scoped, tag = 'scratch operand']
  %s0 = inlined_call_operand.vmem [shape: bf16[2,64,16], index: 0, kind: input, shape index: {}]
  %s1 = inlined_call_operand.vmem [shape: bf16[16,64], index: 1, kind: input, shape index: {}]
  %s2 = inlined_call_operand.vmem [shape: f32[1,64], index: 2, kind: input, shape index: {}]
  %s3 = inlined_call_operand.vmem [shape: bf16[64,128], index: 3, kind: input, shape index: {}]
  %s4 = inlined_call_operand.vmem [shape: f32[1,128], index: 4, kind: input, shape index: {}]
  %s5 = inlined_call_operand.vmem [shape: bf16[128,1024], index: 5, kind: input, shape index: {}]
  %s6 = inlined_call_operand.vmem [shape: f32[1,1024], index: 6, kind: input, shape index: {}]
  %s7 = inlined_call_operand.vmem [shape: bf16[1024,512], index: 7, kind: input, shape index: {}]
  %s8 = inlined_call_operand.vmem [shape: f32[1,512], index: 8, kind: input, shape index: {}]
  %s9 = inlined_call_operand.vmem [shape: bf16[512,256], index: 9, kind: input, shape index: {}]
  %s10 = inlined_call_operand.vmem [shape: f32[1,256], index: 10, kind: input, shape index: {}]
  %s11 = inlined_call_operand.vmem [shape: bf16[256,16], index: 11, kind: input, shape index: {}]
  %s12 = inlined_call_operand.vmem [shape: f32[1,16], index: 12, kind: input, shape index: {}]
  %s13 = inlined_call_operand.vmem [shape: f32[2,1,16], index: 13, kind: output, shape index: {}]
  %s14 = sld [smem:[#allocation0]]
  $region97: #{pointnet_densecls_forward.3} parent=0
    _
  %s16 = ssub.s32 1, %s14
  %s17 = scalar_select 0, %s16, %s14
  loop: start=0, step=1, limit=4
  $region2: #{pointnet_densecls_forward.3} parent=0 // loop_pre_header
    _
  $region3: #{pointnet_densecls_forward.3} parent=0 // loop_header
    %s19 = sphi 0, %s23
    %p20 = scmp.ge.s32.totalorder %s19, 4
    %s26 = sphi 0, %s38
    %s27 = sphi 0, %s34
    %s28 = sphi 0, %s26
    %s29 = sphi 0, %s27
    %s30 = sphi 0, %s28
    %s31 = sphi 0, %s29
    %s43 = sphi 0, %s45
    %s46 = sphi 0, %s43
    %s47 = sphi 0, %s46
    %s63 = sphi 0, %s47
    %s67 = sphi 0, %s67
    %s69 = sphi 0, %s67
    %s70 = sphi 0, %s69
    %s84 = sphi 0, %s70
    %s88 = sphi 0, %s88
    %s90 = sphi 0, %s88
    %s91 = sphi 0, %s90
    %s105 = sphi 0, %s91
    %s109 = sphi 0, %s109
    %s111 = sphi 0, %s109
    %s112 = sphi 0, %s111
    %s126 = sphi 0, %s112
    %s130 = sphi 0, %s130
    %s132 = sphi 0, %s130
    %s133 = sphi 0, %s132
    %s147 = sphi 0, %s133
    %s151 = sphi 0, %s151
    %s153 = sphi 0, %s151
    %s154 = sphi 0, %s153
    %s168 = sphi 0, %s154
    %s172 = sphi 0, %s172
    %s174 = sphi 0, %s172
    %s175 = sphi 0, %s174
    %s189 = sphi 0, %s175
    %s193 = sphi 0, %s193
    %s195 = sphi 0, %s193
    %s196 = sphi 0, %s195
    %s210 = sphi 0, %s196
    %s214 = sphi 0, %s214
    %s216 = sphi 0, %s214
    %s217 = sphi 0, %s216
    %s231 = sphi 0, %s217
    %s235 = sphi 0, %s235
    %s237 = sphi 0, %s235
    %s238 = sphi 0, %s237
    %s252 = sphi 0, %s238
    %s256 = sphi 0, %s256
    %s258 = sphi 0, %s256
    %s259 = sphi 0, %s258
    %s273 = sphi 0, %s259
    %s277 = sphi 0, %s277
    %s279 = sphi 0, %s277
    %s280 = sphi 0, %s279
    %s294 = sphi 0, %s280
    %s298 = sphi 0, %s298
    %s300 = sphi 0, %s298
    %s301 = sphi 0, %s300
    %s315 = sphi 0, %s301
    %s321 = sphi 0, %s323
    %s324 = sphi 0, %s321
    %s325 = sphi 0, %s324
    %s341 = sphi 0, %s325
  $region4: #{pointnet_densecls_forward.3} parent=0 // loop_header_branch
    %22 = sbr.rel (%p20) target = $region8
  $region5: #{pointnet_densecls_forward.3} parent=0 // loop_body
    %s24 = ssub.s32 %s19, 1
    %s25 = ssub.s32 %s19, 2
    %s32 = sadd.s32 1, %s27
    %p33 = scmp.ge.s32.totalorder %s32, 1
    %s34 = scalar_select %p33, 0, %s32
    %s35 = sadd.s32 1, %s26
    %s36 = scalar_select %p33, %s35, %s26
    %p37 = scmp.ge.s32.totalorder %s36, 2
    %s38 = scalar_select %p37, 0, %s36
    %s39 = ssub.s32 %s26, %s38
    %s40 = ssub.s32 %s27, %s34
    %s41 = sor.u32 %s39, %s40
    %p42 = scmp.eq.s32.totalorder %s41, 0
    %s44 = sadd.s32 %s43, 1
    %s45 = scalar_select %p42, %s43, %s44
    %p48 = pneg %p42
    %p49 = scmp.eq.s32.totalorder %s19, 1
    %p50 = por %p48, %p49
    %p51 = scmp.ne.s32.totalorder %s43, %s46
    %p52 = scmp.eq.s32.totalorder %s19, 0
    %p53 = por %p51, %p52
    %p54 = scmp.ne.s32.totalorder %s43, %s46
    %p55 = scmp.eq.s32.totalorder %s24, 1
    %p56 = por %p54, %p55
    %p57 = scmp.ne.s32.totalorder %s46, %s47
    %p58 = scmp.eq.s32.totalorder %s24, 0
    %p59 = por %p57, %p58
    %p60 = scmp.ne.s32.totalorder %s46, %s47
    %p61 = scmp.eq.s32.totalorder %s25, 1
    %p62 = por %p60, %p61
    %p64 = scmp.ne.s32.totalorder %s47, %s63
    %p65 = scmp.eq.s32.totalorder %s25, 0
    %p66 = por %p64, %p65
    %s68 = sadd.s32 %s67, 1
    %p71 = scmp.eq.s32.totalorder %s19, 1
    %p72 = scmp.ne.s32.totalorder %s67, %s69
    %p73 = scmp.eq.s32.totalorder %s19, 0
    %p74 = por %p72, %p73
    %p75 = scmp.ne.s32.totalorder %s67, %s69
    %p76 = scmp.eq.s32.totalorder %s24, 1
    %p77 = por %p75, %p76
    %p78 = scmp.ne.s32.totalorder %s69, %s70
    %p79 = scmp.eq.s32.totalorder %s24, 0
    %p80 = por %p78, %p79
    %p81 = scmp.ne.s32.totalorder %s69, %s70
    %p82 = scmp.eq.s32.totalorder %s25, 1
    %p83 = por %p81, %p82
    %p85 = scmp.ne.s32.totalorder %s70, %s84
    %p86 = scmp.eq.s32.totalorder %s25, 0
    %p87 = por %p85, %p86
    %s89 = sadd.s32 %s88, 1
    %p92 = scmp.eq.s32.totalorder %s19, 1
    %p93 = scmp.ne.s32.totalorder %s88, %s90
    %p94 = scmp.eq.s32.totalorder %s19, 0
    %p95 = por %p93, %p94
    %p96 = scmp.ne.s32.totalorder %s88, %s90
    %p97 = scmp.eq.s32.totalorder %s24, 1
    %p98 = por %p96, %p97
    %p99 = scmp.ne.s32.totalorder %s90, %s91
    %p100 = scmp.eq.s32.totalorder %s24, 0
    %p101 = por %p99, %p100
    %p102 = scmp.ne.s32.totalorder %s90, %s91
    %p103 = scmp.eq.s32.totalorder %s25, 1
    %p104 = por %p102, %p103
    %p106 = scmp.ne.s32.totalorder %s91, %s105
    %p107 = scmp.eq.s32.totalorder %s25, 0
    %p108 = por %p106, %p107
    %s110 = sadd.s32 %s109, 1
    %p113 = scmp.eq.s32.totalorder %s19, 1
    %p114 = scmp.ne.s32.totalorder %s109, %s111
    %p115 = scmp.eq.s32.totalorder %s19, 0
    %p116 = por %p114, %p115
    %p117 = scmp.ne.s32.totalorder %s109, %s111
    %p118 = scmp.eq.s32.totalorder %s24, 1
    %p119 = por %p117, %p118
    %p120 = scmp.ne.s32.totalorder %s111, %s112
    %p121 = scmp.eq.s32.totalorder %s24, 0
    %p122 = por %p120, %p121
    %p123 = scmp.ne.s32.totalorder %s111, %s112
    %p124 = scmp.eq.s32.totalorder %s25, 1
    %p125 = por %p123, %p124
    %p127 = scmp.ne.s32.totalorder %s112, %s126
    %p128 = scmp.eq.s32.totalorder %s25, 0
    %p129 = por %p127, %p128
    %s131 = sadd.s32 %s130, 1
    %p134 = scmp.eq.s32.totalorder %s19, 1
    %p135 = scmp.ne.s32.totalorder %s130, %s132
    %p136 = scmp.eq.s32.totalorder %s19, 0
    %p137 = por %p135, %p136
    %p138 = scmp.ne.s32.totalorder %s130, %s132
    %p139 = scmp.eq.s32.totalorder %s24, 1
    %p140 = por %p138, %p139
    %p141 = scmp.ne.s32.totalorder %s132, %s133
    %p142 = scmp.eq.s32.totalorder %s24, 0
    %p143 = por %p141, %p142
    %p144 = scmp.ne.s32.totalorder %s132, %s133
    %p145 = scmp.eq.s32.totalorder %s25, 1
    %p146 = por %p144, %p145
    %p148 = scmp.ne.s32.totalorder %s133, %s147
    %p149 = scmp.eq.s32.totalorder %s25, 0
    %p150 = por %p148, %p149
    %s152 = sadd.s32 %s151, 1
    %p155 = scmp.eq.s32.totalorder %s19, 1
    %p156 = scmp.ne.s32.totalorder %s151, %s153
    %p157 = scmp.eq.s32.totalorder %s19, 0
    %p158 = por %p156, %p157
    %p159 = scmp.ne.s32.totalorder %s151, %s153
    %p160 = scmp.eq.s32.totalorder %s24, 1
    %p161 = por %p159, %p160
    %p162 = scmp.ne.s32.totalorder %s153, %s154
    %p163 = scmp.eq.s32.totalorder %s24, 0
    %p164 = por %p162, %p163
    %p165 = scmp.ne.s32.totalorder %s153, %s154
    %p166 = scmp.eq.s32.totalorder %s25, 1
    %p167 = por %p165, %p166
    %p169 = scmp.ne.s32.totalorder %s154, %s168
    %p170 = scmp.eq.s32.totalorder %s25, 0
    %p171 = por %p169, %p170
    %s173 = sadd.s32 %s172, 1
    %p176 = scmp.eq.s32.totalorder %s19, 1
    %p177 = scmp.ne.s32.totalorder %s172, %s174
    %p178 = scmp.eq.s32.totalorder %s19, 0
    %p179 = por %p177, %p178
    %p180 = scmp.ne.s32.totalorder %s172, %s174
    %p181 = scmp.eq.s32.totalorder %s24, 1
    %p182 = por %p180, %p181
    %p183 = scmp.ne.s32.totalorder %s174, %s175
    %p184 = scmp.eq.s32.totalorder %s24, 0
    %p185 = por %p183, %p184
    %p186 = scmp.ne.s32.totalorder %s174, %s175
    %p187 = scmp.eq.s32.totalorder %s25, 1
    %p188 = por %p186, %p187
    %p190 = scmp.ne.s32.totalorder %s175, %s189
    %p191 = scmp.eq.s32.totalorder %s25, 0
    %p192 = por %p190, %p191
    %s194 = sadd.s32 %s193, 1
    %p197 = scmp.eq.s32.totalorder %s19, 1
    %p198 = scmp.ne.s32.totalorder %s193, %s195
    %p199 = scmp.eq.s32.totalorder %s19, 0
    %p200 = por %p198, %p199
    %p201 = scmp.ne.s32.totalorder %s193, %s195
    %p202 = scmp.eq.s32.totalorder %s24, 1
    %p203 = por %p201, %p202
    %p204 = scmp.ne.s32.totalorder %s195, %s196
    %p205 = scmp.eq.s32.totalorder %s24, 0
    %p206 = por %p204, %p205
    %p207 = scmp.ne.s32.totalorder %s195, %s196
    %p208 = scmp.eq.s32.totalorder %s25, 1
    %p209 = por %p207, %p208
    %p211 = scmp.ne.s32.totalorder %s196, %s210
    %p212 = scmp.eq.s32.totalorder %s25, 0
    %p213 = por %p211, %p212
    %s215 = sadd.s32 %s214, 1
    %p218 = scmp.eq.s32.totalorder %s19, 1
    %p219 = scmp.ne.s32.totalorder %s214, %s216
    %p220 = scmp.eq.s32.totalorder %s19, 0
    %p221 = por %p219, %p220
    %p222 = scmp.ne.s32.totalorder %s214, %s216
    %p223 = scmp.eq.s32.totalorder %s24, 1
    %p224 = por %p222, %p223
    %p225 = scmp.ne.s32.totalorder %s216, %s217
    %p226 = scmp.eq.s32.totalorder %s24, 0
    %p227 = por %p225, %p226
    %p228 = scmp.ne.s32.totalorder %s216, %s217
    %p229 = scmp.eq.s32.totalorder %s25, 1
    %p230 = por %p228, %p229
    %p232 = scmp.ne.s32.totalorder %s217, %s231
    %p233 = scmp.eq.s32.totalorder %s25, 0
    %p234 = por %p232, %p233
    %s236 = sadd.s32 %s235, 1
    %p239 = scmp.eq.s32.totalorder %s19, 1
    %p240 = scmp.ne.s32.totalorder %s235, %s237
    %p241 = scmp.eq.s32.totalorder %s19, 0
    %p242 = por %p240, %p241
    %p243 = scmp.ne.s32.totalorder %s235, %s237
    %p244 = scmp.eq.s32.totalorder %s24, 1
    %p245 = por %p243, %p244
    %p246 = scmp.ne.s32.totalorder %s237, %s238
    %p247 = scmp.eq.s32.totalorder %s24, 0
    %p248 = por %p246, %p247
    %p249 = scmp.ne.s32.totalorder %s237, %s238
    %p250 = scmp.eq.s32.totalorder %s25, 1
    %p251 = por %p249, %p250
    %p253 = scmp.ne.s32.totalorder %s238, %s252
    %p254 = scmp.eq.s32.totalorder %s25, 0
    %p255 = por %p253, %p254
    %s257 = sadd.s32 %s256, 1
    %p260 = scmp.eq.s32.totalorder %s19, 1
    %p261 = scmp.ne.s32.totalorder %s256, %s258
    %p262 = scmp.eq.s32.totalorder %s19, 0
    %p263 = por %p261, %p262
    %p264 = scmp.ne.s32.totalorder %s256, %s258
    %p265 = scmp.eq.s32.totalorder %s24, 1
    %p266 = por %p264, %p265
    %p267 = scmp.ne.s32.totalorder %s258, %s259
    %p268 = scmp.eq.s32.totalorder %s24, 0
    %p269 = por %p267, %p268
    %p270 = scmp.ne.s32.totalorder %s258, %s259
    %p271 = scmp.eq.s32.totalorder %s25, 1
    %p272 = por %p270, %p271
    %p274 = scmp.ne.s32.totalorder %s259, %s273
    %p275 = scmp.eq.s32.totalorder %s25, 0
    %p276 = por %p274, %p275
    %s278 = sadd.s32 %s277, 1
    %p281 = scmp.eq.s32.totalorder %s19, 1
    %p282 = scmp.ne.s32.totalorder %s277, %s279
    %p283 = scmp.eq.s32.totalorder %s19, 0
    %p284 = por %p282, %p283
    %p285 = scmp.ne.s32.totalorder %s277, %s279
    %p286 = scmp.eq.s32.totalorder %s24, 1
    %p287 = por %p285, %p286
    %p288 = scmp.ne.s32.totalorder %s279, %s280
    %p289 = scmp.eq.s32.totalorder %s24, 0
    %p290 = por %p288, %p289
    %p291 = scmp.ne.s32.totalorder %s279, %s280
    %p292 = scmp.eq.s32.totalorder %s25, 1
    %p293 = por %p291, %p292
    %p295 = scmp.ne.s32.totalorder %s280, %s294
    %p296 = scmp.eq.s32.totalorder %s25, 0
    %p297 = por %p295, %p296
    %s299 = sadd.s32 %s298, 1
    %p302 = scmp.eq.s32.totalorder %s19, 1
    %p303 = scmp.ne.s32.totalorder %s298, %s300
    %p304 = scmp.eq.s32.totalorder %s19, 0
    %p305 = por %p303, %p304
    %p306 = scmp.ne.s32.totalorder %s298, %s300
    %p307 = scmp.eq.s32.totalorder %s24, 1
    %p308 = por %p306, %p307
    %p309 = scmp.ne.s32.totalorder %s300, %s301
    %p310 = scmp.eq.s32.totalorder %s24, 0
    %p311 = por %p309, %p310
    %p312 = scmp.ne.s32.totalorder %s300, %s301
    %p313 = scmp.eq.s32.totalorder %s25, 1
    %p314 = por %p312, %p313
    %p316 = scmp.ne.s32.totalorder %s301, %s315
    %p317 = scmp.eq.s32.totalorder %s25, 0
    %p318 = por %p316, %p317
    %s319 = ssub.s32 %s26, %s38
    %p320 = scmp.eq.s32.totalorder %s319, 0
    %s322 = sadd.s32 %s321, 1
    %s323 = scalar_select %p320, %s321, %s322
    %p326 = pneg %p320
    %p327 = scmp.eq.s32.totalorder %s19, 1
    %p328 = por %p326, %p327
    %p329 = scmp.ne.s32.totalorder %s321, %s324
    %p330 = scmp.eq.s32.totalorder %s19, 0
    %p331 = por %p329, %p330
    %p332 = scmp.ne.s32.totalorder %s321, %s324
    %p333 = scmp.eq.s32.totalorder %s24, 1
    %p334 = por %p332, %p333
    %p335 = scmp.ne.s32.totalorder %s324, %s325
    %p336 = scmp.eq.s32.totalorder %s24, 0
    %p337 = por %p335, %p336
    %p338 = scmp.ne.s32.totalorder %s324, %s325
    %p339 = scmp.eq.s32.totalorder %s25, 1
    %p340 = por %p338, %p339
    %p342 = scmp.ne.s32.totalorder %s325, %s341
    %p343 = scmp.eq.s32.totalorder %s25, 0
    %p344 = por %p342, %p343
    %p345 = scmp.le.s32.totalorder 1, %s19
    %p346 = scmp.lt.s32.totalorder %s19, 3
    %p347 = pnand %p345, %p346
    %p348 = pneg %p347
    // Predicated region
    $region9: #{pointnet_densecls_forward.3} parent=5 // pred_check
      _
    $region10: #{pointnet_densecls_forward.3} parent=5 // pred_check_branch
      %350 = sbr.rel (%p347) target = $region12
    $region11: #{pointnet_densecls_forward.3} parent=5 // pred_region
      %s351 = ssub.s32 %s19, 1
      // Predicated region
      $region13: #{pointnet_densecls_forward.3} parent=11 // pred_check
        %p352 = pneg %p80
      $region14: #{pointnet_densecls_forward.3} parent=11 // pred_check_branch
        %354 = sbr.rel (%p352) target = $region16
      $region15: #{pointnet_densecls_forward.3} parent=11 // pred_region
        _
      $region16: #{pointnet_densecls_forward.3} parent=11 // pred_fallthru
        _
      // Predicated region
      $region17: #{pointnet_densecls_forward.3} parent=11 // pred_check
        %p355 = pneg %p101
      $region18: #{pointnet_densecls_forward.3} parent=11 // pred_check_branch
        %357 = sbr.rel (%p355) target = $region20
      $region19: #{pointnet_densecls_forward.3} parent=11 // pred_region
        _
      $region20: #{pointnet_densecls_forward.3} parent=11 // pred_fallthru
        _
      // Predicated region
      $region21: #{pointnet_densecls_forward.3} parent=11 // pred_check
        %p358 = pneg %p122
      $region22: #{pointnet_densecls_forward.3} parent=11 // pred_check_branch
        %360 = sbr.rel (%p358) target = $region24
      $region23: #{pointnet_densecls_forward.3} parent=11 // pred_region
        _
      $region24: #{pointnet_densecls_forward.3} parent=11 // pred_fallthru
        _
      // Predicated region
      $region25: #{pointnet_densecls_forward.3} parent=11 // pred_check
        %p361 = pneg %p143
      $region26: #{pointnet_densecls_forward.3} parent=11 // pred_check_branch
        %363 = sbr.rel (%p361) target = $region28
      $region27: #{pointnet_densecls_forward.3} parent=11 // pred_region
        _
      $region28: #{pointnet_densecls_forward.3} parent=11 // pred_fallthru
        _
      // Predicated region
      $region29: #{pointnet_densecls_forward.3} parent=11 // pred_check
        %p364 = pneg %p164
      $region30: #{pointnet_densecls_forward.3} parent=11 // pred_check_branch
        %366 = sbr.rel (%p364) target = $region32
      $region31: #{pointnet_densecls_forward.3} parent=11 // pred_region
        _
      $region32: #{pointnet_densecls_forward.3} parent=11 // pred_fallthru
        _
      // Predicated region
      $region33: #{pointnet_densecls_forward.3} parent=11 // pred_check
        %p367 = pneg %p185
      $region34: #{pointnet_densecls_forward.3} parent=11 // pred_check_branch
        %369 = sbr.rel (%p367) target = $region36
      $region35: #{pointnet_densecls_forward.3} parent=11 // pred_region
        _
      $region36: #{pointnet_densecls_forward.3} parent=11 // pred_fallthru
        _
      // Predicated region
      $region37: #{pointnet_densecls_forward.3} parent=11 // pred_check
        %p370 = pneg %p206
      $region38: #{pointnet_densecls_forward.3} parent=11 // pred_check_branch
        %372 = sbr.rel (%p370) target = $region40
      $region39: #{pointnet_densecls_forward.3} parent=11 // pred_region
        _
      $region40: #{pointnet_densecls_forward.3} parent=11 // pred_fallthru
        _
      // Predicated region
      $region41: #{pointnet_densecls_forward.3} parent=11 // pred_check
        %p373 = pneg %p227
      $region42: #{pointnet_densecls_forward.3} parent=11 // pred_check_branch
        %375 = sbr.rel (%p373) target = $region44
      $region43: #{pointnet_densecls_forward.3} parent=11 // pred_region
        _
      $region44: #{pointnet_densecls_forward.3} parent=11 // pred_fallthru
        _
      // Predicated region
      $region45: #{pointnet_densecls_forward.3} parent=11 // pred_check
        %p376 = pneg %p248
      $region46: #{pointnet_densecls_forward.3} parent=11 // pred_check_branch
        %378 = sbr.rel (%p376) target = $region48
      $region47: #{pointnet_densecls_forward.3} parent=11 // pred_region
        _
      $region48: #{pointnet_densecls_forward.3} parent=11 // pred_fallthru
        _
      // Predicated region
      $region49: #{pointnet_densecls_forward.3} parent=11 // pred_check
        %p379 = pneg %p269
      $region50: #{pointnet_densecls_forward.3} parent=11 // pred_check_branch
        %381 = sbr.rel (%p379) target = $region52
      $region51: #{pointnet_densecls_forward.3} parent=11 // pred_region
        _
      $region52: #{pointnet_densecls_forward.3} parent=11 // pred_fallthru
        _
      // Predicated region
      $region53: #{pointnet_densecls_forward.3} parent=11 // pred_check
        %p382 = pneg %p290
      $region54: #{pointnet_densecls_forward.3} parent=11 // pred_check_branch
        %384 = sbr.rel (%p382) target = $region56
      $region55: #{pointnet_densecls_forward.3} parent=11 // pred_region
        _
      $region56: #{pointnet_densecls_forward.3} parent=11 // pred_fallthru
        _
      // Predicated region
      $region57: #{pointnet_densecls_forward.3} parent=11 // pred_check
        %p385 = pneg %p311
      $region58: #{pointnet_densecls_forward.3} parent=11 // pred_check_branch
        %387 = sbr.rel (%p385) target = $region60
      $region59: #{pointnet_densecls_forward.3} parent=11 // pred_region
        _
      $region60: #{pointnet_densecls_forward.3} parent=11 // pred_fallthru
        _
    $region12: #{pointnet_densecls_forward.3} parent=5 // pred_fallthru
      _
    %p388 = scmp.lt.s32.totalorder %s19, 2
    // Predicated region
    $region61: #{pointnet_densecls_forward.3} parent=5 // pred_check
      %p389 = pneg %p388
    $region62: #{pointnet_densecls_forward.3} parent=5 // pred_check_branch
      %391 = sbr.rel (%p389) target = $region64
    $region63: #{pointnet_densecls_forward.3} parent=5 // pred_region
      // Predicated region
      $region65: #{pointnet_densecls_forward.3} parent=63 // pred_check
        %p392 = pneg %p53
      $region66: #{pointnet_densecls_forward.3} parent=63 // pred_check_branch
        %394 = sbr.rel (%p392) target = $region68
      $region67: #{pointnet_densecls_forward.3} parent=63 // pred_region
        %s395 = smul.u32 8, %s27
        %p396 = scmp.lt.s32.totalorder %s26, 1
        %s397 = scalar_select %p396, %s26, 1
        %p398 = scmp.lt.s32.totalorder %s395, 7
        %s399 = scalar_select %p398, %s395, 7
        %s400 = smul.addr %s397, 8
        %s401 = sadd.s32 %s399, %s400
        %s402 = smul.addr %s401, 4
        %s403 = scalar_lea.vmem %s0, %s402
        %s404 = smul.u32 8, %s27
      $region68: #{pointnet_densecls_forward.3} parent=63 // pred_fallthru
        _
    $region64: #{pointnet_densecls_forward.3} parent=5 // pred_fallthru
      _
    %p405 = scmp.le.s32.totalorder 1, %s19
    %p406 = scmp.lt.s32.totalorder %s19, 3
    %p407 = pnand %p405, %p406
    %p408 = pneg %p407
    // Predicated region
    $region69: #{pointnet_densecls_forward.3} parent=5 // pred_check
      _
    $region70: #{pointnet_densecls_forward.3} parent=5 // pred_check_branch
      %410 = sbr.rel (%p407) target = $region72
    $region71: #{pointnet_densecls_forward.3} parent=5 // pred_region
      %s411 = ssub.s32 %s19, 1
      %s412 = smul.u32 8, %s29
      %p413 = scmp.lt.s32.totalorder %s28, 1
      %s414 = scalar_select %p413, %s28, 1
      %p415 = scmp.lt.s32.totalorder %s412, 7
      %s416 = scalar_select %p415, %s412, 7
      %s417 = smul.addr %s414, 8
      %s418 = sadd.s32 %s416, %s417
      %s419 = smul.addr %s418, 4
      %s420 = scalar_lea.vmem %s0, %s419
      %p421 = pneg %p59
      %p422 = pneg %p56
      %p423 = pneg %p80
      %p424 = pneg %p77
      %p425 = pneg %p101
      %p426 = pneg %p98
      %p427 = pneg %p122
      %p428 = pneg %p119
      %p429 = pneg %p143
      %p430 = pneg %p140
      %p431 = pneg %p164
      %p432 = pneg %p161
      %p433 = pneg %p185
      %p434 = pneg %p182
      %p435 = pneg %p206
      %p436 = pneg %p203
      %p437 = pneg %p227
      %p438 = pneg %p224
      %p439 = pneg %p248
      %p440 = pneg %p245
      %p441 = pneg %p269
      %p442 = pneg %p266
      %p443 = pneg %p290
      %p444 = pneg %p287
      %p445 = pneg %p311
      %p446 = pneg %p308
      %p447 = pneg %p337
      %p448 = pneg %p334
      %p449 = scmp.lt.s32.totalorder %s28, 1
      %s450 = scalar_select %p449, %s28, 1
      %s451 = scalar_lea.vmem %s13, %s450
      %s452 = smul.u32 8, %s29
      %p453 = scmp.lt.s32.totalorder %s28, 1
      %s454 = scalar_select %p453, %s28, 1
      %p455 = scmp.lt.s32.totalorder %s452, 7
      %s456 = scalar_select %p455, %s452, 7
      %s457 = smul.addr %s454, 8
      %s458 = sadd.s32 %s456, %s457
      %s459 = smul.addr %s458, 4
      %s460 = scalar_lea.vmem %s0, %s459
      %s461 = smul.u32 8, %s29
      %p462 = scmp.lt.s32.totalorder %s28, 1
      %s463 = scalar_select %p462, %s28, 1
      %s464 = scalar_lea.vmem %s13, %s463
      %v466 = vld [vmem:[%s460] sm:$0xf]
      %v467 = vld [vmem:[%s460 + $0x4] sm:$0xf]
      %v468 = vld [vmem:[%s460 + $0x8] sm:$0xf]
      %v469 = vld [vmem:[%s460 + $0xc] sm:$0xf]
      %v470 = vld [vmem:[%s460 + $0x10] sm:$0xf]
      %v471 = vld [vmem:[%s460 + $0x14] sm:$0xf]
      %v472 = vld [vmem:[%s460 + $0x18] sm:$0xf]
      %v473 = vld [vmem:[%s460 + $0x1c] sm:$0xf]
      %v474 = vld [vmem:[%s1] sm:$0xf]
      %v475 = vld [vmem:[%s1 + $0x4] sm:$0xf]
      %v476 = vld [vmem:[%s2] sm:$0x1]
      %v478 = vlaneseq
      %v479 = vshrl.u32 %v478, 7
      %v480 = vsub.s32 0, %v479
      %v481 = vrot.slane %v476, %v480
      %v491 = vunpack.c.l.b16 %v466
      %v492 = vunpack.c.l.b16 %v467
      %v493 = vunpack.c.l.b16 %v468
      %v494 = vunpack.c.l.b16 %v469
      %v495 = vunpack.c.l.b16 %v470
      %v496 = vunpack.c.l.b16 %v471
      %v497 = vunpack.c.l.b16 %v472
      %v498 = vunpack.c.l.b16 %v473
      %v499 = vpack.c.b16 %v492, %v491
      %v500 = vpack.c.b16 %v494, %v493
      %v501 = vpack.c.b16 %v496, %v495
      %v502 = vpack.c.b16 %v498, %v497
      %v505 = vunpack.c.l.b16 %v474
      %v506 = vunpack.c.l.b16 %v475
      %v507 = vpack.c.b16 %v506, %v505
      %vm509 = vcmask 130048
      %v511 = vsel %vm509, %v499, 0
      %v514 = vsel %vm509, %v500, 0
      %v517 = vsel %vm509, %v501, 0
      %v520 = vsel %vm509, %v502, 0
      %522 = vmatprep.subr.bf16.mxu0 0
      %523 = vmatpush1.bf16.msra.mxu0 %v507
      %524 = vmatprep.subr.bf16.mxu0 0
      %525 = vmatpush1.bf16.msra.mxu0 0
      %526 = vmatprep.subr.bf16.mxu0 0
      %527 = vmatpush1.bf16.msra.mxu0 0
      %528 = vmatprep.subr.bf16.mxu0 0
      %529 = vmatpush1.bf16.msra.mxu0 0
      %530 = vmatprep.subr.bf16.mxu0 0
      %531 = vmatpush1.bf16.msra.mxu0 0
      %532 = vmatprep.subr.bf16.mxu0 0
      %533 = vmatpush1.bf16.msra.mxu0 0
      %534 = vmatprep.subr.bf16.mxu0 0
      %535 = vmatpush1.bf16.msra.mxu0 0
      %536 = vmatprep.subr.bf16.mxu0 0
      %537 = vmatpush1.bf16.msra.mxu0 0
      %538 = vmatprep.subr.bf16.mxu0 0
      %539 = vmatpush1.bf16.msra.mxu0 0
      %540 = vmatprep.subr.bf16.mxu0 0
      %541 = vmatpush1.bf16.msra.mxu0 0
      %542 = vmatprep.subr.bf16.mxu0 0
      %543 = vmatpush1.bf16.msra.mxu0 0
      %544 = vmatprep.subr.bf16.mxu0 0
      %545 = vmatpush1.bf16.msra.mxu0 0
      %546 = vmatprep.subr.bf16.mxu0 0
      %547 = vmatpush1.bf16.msra.mxu0 0
      %548 = vmatprep.subr.bf16.mxu0 0
      %549 = vmatpush1.bf16.msra.mxu0 0
      %550 = vmatprep.subr.bf16.mxu0 0
      %551 = vmatpush1.bf16.msra.mxu0 0
      %552 = vmatprep.subr.bf16.mxu0 0
      %553 = vmatpush1.bf16.msra.mxu0 0
      %554 = vmatprep.mubr.bf16.mxu0 0
      %555 = vmatmul.mubr.bf16.gmra.mrb[0].mxu0 %v511
      %v556 = vpop.f32.mrb[0].mxu0
      %v557 = vadd.f32 %v481, %v556
      %v558 = vpop.f32.mrb[0].mxu0
      %v559 = vpop.f32.mrb[0].mxu0
      %v560 = vadd.f32 %v481, %v559
      %v561 = vpop.f32.mrb[0].mxu0
      %562 = vmatprep.mubr.bf16.mxu0 0
      %563 = vmatmul.mubr.bf16.gmra.mrb[0].mxu0 %v514
      %v564 = vpop.f32.mrb[0].mxu0
      %v565 = vadd.f32 %v481, %v564
      %v566 = vpop.f32.mrb[0].mxu0
      %v567 = vpop.f32.mrb[0].mxu0
      %v568 = vadd.f32 %v481, %v567
      %v569 = vpop.f32.mrb[0].mxu0
      %570 = vmatprep.mubr.bf16.mxu0 0
      %571 = vmatmul.mubr.bf16.gmra.mrb[0].mxu0 %v517
      %v572 = vpop.f32.mrb[0].mxu0
      %v573 = vadd.f32 %v481, %v572
      %v574 = vpop.f32.mrb[0].mxu0
      %v575 = vpop.f32.mrb[0].mxu0
      %v576 = vadd.f32 %v481, %v575
      %v577 = vpop.f32.mrb[0].mxu0
      %578 = vmatprep.mubr.bf16.mxu0 0
      %579 = vmatmul.mubr.bf16.gmra.mrb[0].mxu0 %v520
      %v580 = vpop.f32.mrb[0].mxu0
      %v581 = vadd.f32 %v481, %v580
      %v582 = vpop.f32.mrb[0].mxu0
      %v583 = vpop.f32.mrb[0].mxu0
      %v584 = vadd.f32 %v481, %v583
      %v585 = vpop.f32.mrb[0].mxu0
      %586 = vdwg.mxu0
      %v587 = vmax.f32 %v557, 0.0
      %v588 = vmax.f32 %v560, 0.0
      %v589 = vmax.f32 %v565, 0.0
      %v590 = vmax.f32 %v568, 0.0
      %v591 = vmax.f32 %v573, 0.0
      %v592 = vmax.f32 %v576, 0.0
      %v593 = vmax.f32 %v581, 0.0
      %v594 = vmax.f32 %v584, 0.0
      %v595 = vpack.c.bf16 %v588, %v587
      %v596 = vpack.c.bf16 %v590, %v589
      %v597 = vpack.c.bf16 %v592, %v591
      %v598 = vpack.c.bf16 %v594, %v593
      %v599 = vld [vmem:[%s3] sm:$0xf]
      %v600 = vld [vmem:[%s3 + $0x4] sm:$0xf]
      %v601 = vld [vmem:[%s3 + $0x8] sm:$0xf]
      %v602 = vld [vmem:[%s3 + $0xc] sm:$0xf]
      %v603 = vld [vmem:[%s3 + $0x10] sm:$0xf]
      %v604 = vld [vmem:[%s3 + $0x14] sm:$0xf]
      %v605 = vld [vmem:[%s3 + $0x18] sm:$0xf]
      %v606 = vld [vmem:[%s3 + $0x1c] sm:$0xf]
      %v607 = vld [vmem:[%s4] sm:$0x1]
      %v609 = vlaneseq
      %v610 = vshrl.u32 %v609, 7
      %v611 = vsub.s32 0, %v610
      %v612 = vrot.slane %v607, %v611
      %v622 = vunpack.c.l.b16 %v599
      %v623 = vunpack.c.l.b16 %v600
      %v624 = vunpack.c.l.b16 %v601
      %v625 = vunpack.c.l.b16 %v602
      %v626 = vunpack.c.l.b16 %v603
      %v627 = vunpack.c.l.b16 %v604
      %v628 = vunpack.c.l.b16 %v605
      %v629 = vunpack.c.l.b16 %v606
      %v630 = vpack.c.b16 %v623, %v622
      %v631 = vpack.c.b16 %v625, %v624
      %v632 = vpack.c.b16 %v627, %v626
      %v633 = vpack.c.b16 %v629, %v628
      %vm638 = vcmask 523264
      %v640 = vsel %vm638, %v595, 0
      %v643 = vsel %vm638, %v596, 0
      %v646 = vsel %vm638, %v597, 0
      %v649 = vsel %vm638, %v598, 0
      %651 = vmatprep.subr.bf16.mxu0 0
      %652 = vmatpush1.bf16.msra.mxu0 %v630
      %653 = vmatprep.subr.bf16.mxu0 0
      %654 = vmatpush1.bf16.msra.mxu0 %v631
      %655 = vmatprep.subr.bf16.mxu0 0
      %656 = vmatpush1.bf16.msra.mxu0 %v632
      %657 = vmatprep.subr.bf16.mxu0 0
      %658 = vmatpush1.bf16.msra.mxu0 %v633
      %659 = vmatprep.subr.bf16.mxu0 0
      %660 = vmatpush1.bf16.msra.mxu0 0
      %661 = vmatprep.subr.bf16.mxu0 0
      %662 = vmatpush1.bf16.msra.mxu0 0
      %663 = vmatprep.subr.bf16.mxu0 0
      %664 = vmatpush1.bf16.msra.mxu0 0
      %665 = vmatprep.subr.bf16.mxu0 0
      %666 = vmatpush1.bf16.msra.mxu0 0
      %667 = vmatprep.subr.bf16.mxu0 0
      %668 = vmatpush1.bf16.msra.mxu0 0
      %669 = vmatprep.subr.bf16.mxu0 0
      %670 = vmatpush1.bf16.msra.mxu0 0
      %671 = vmatprep.subr.bf16.mxu0 0
      %672 = vmatpush1.bf16.msra.mxu0 0
      %673 = vmatprep.subr.bf16.mxu0 0
      %674 = vmatpush1.bf16.msra.mxu0 0
      %675 = vmatprep.subr.bf16.mxu0 0
      %676 = vmatpush1.bf16.msra.mxu0 0
      %677 = vmatprep.subr.bf16.mxu0 0
      %678 = vmatpush1.bf16.msra.mxu0 0
      %679 = vmatprep.subr.bf16.mxu0 0
      %680 = vmatpush1.bf16.msra.mxu0 0
      %681 = vmatprep.subr.bf16.mxu0 0
      %682 = vmatpush1.bf16.msra.mxu0 0
      %683 = vmatprep.mubr.bf16.mxu0 0
      %684 = vmatmul.mubr.bf16.gmra.mrb[0].mxu0 %v640
      %v685 = vpop.f32.mrb[0].mxu0
      %v686 = vadd.f32 %v612, %v685
      %v687 = vpop.f32.mrb[0].mxu0
      %v688 = vpop.f32.mrb[0].mxu0
      %v689 = vadd.f32 %v612, %v688
      %v690 = vpop.f32.mrb[0].mxu0
      %691 = vmatprep.mubr.bf16.mxu0 0
      %692 = vmatmul.mubr.bf16.gmra.mrb[0].mxu0 %v643
      %v693 = vpop.f32.mrb[0].mxu0
      %v694 = vadd.f32 %v612, %v693
      %v695 = vpop.f32.mrb[0].mxu0
      %v696 = vpop.f32.mrb[0].mxu0
      %v697 = vadd.f32 %v612, %v696
      %v698 = vpop.f32.mrb[0].mxu0
      %699 = vmatprep.mubr.bf16.mxu0 0
      %700 = vmatmul.mubr.bf16.gmra.mrb[0].mxu0 %v646
      %v701 = vpop.f32.mrb[0].mxu0
      %v702 = vadd.f32 %v612, %v701
      %v703 = vpop.f32.mrb[0].mxu0
      %v704 = vpop.f32.mrb[0].mxu0
      %v705 = vadd.f32 %v612, %v704
      %v706 = vpop.f32.mrb[0].mxu0
      %707 = vmatprep.mubr.bf16.mxu0 0
      %708 = vmatmul.mubr.bf16.gmra.mrb[0].mxu0 %v649
      %v709 = vpop.f32.mrb[0].mxu0
      %v710 = vadd.f32 %v612, %v709
      %v711 = vpop.f32.mrb[0].mxu0
      %v712 = vpop.f32.mrb[0].mxu0
      %v713 = vadd.f32 %v612, %v712
      %v714 = vpop.f32.mrb[0].mxu0
      %715 = vdwg.mxu0
      %v716 = vmax.f32 %v686, 0.0
      %v717 = vmax.f32 %v689, 0.0
      %v718 = vmax.f32 %v694, 0.0
      %v719 = vmax.f32 %v697, 0.0
      %v720 = vmax.f32 %v702, 0.0
      %v721 = vmax.f32 %v705, 0.0
      %v722 = vmax.f32 %v710, 0.0
      %v723 = vmax.f32 %v713, 0.0
      %v724 = vpack.c.bf16 %v717, %v716
      %v725 = vpack.c.bf16 %v719, %v718
      %v726 = vpack.c.bf16 %v721, %v720
      %v727 = vpack.c.bf16 %v723, %v722
      %v728 = vld [vmem:[%s5] sm:$0xff]
      %v729 = vld [vmem:[%s5 + $0x8] sm:$0xff]
      %v730 = vld [vmem:[%s5 + $0x10] sm:$0xff]
      %v731 = vld [vmem:[%s5 + $0x18] sm:$0xff]
      %v732 = vld [vmem:[%s5 + $0x20] sm:$0xff]
      %v733 = vld [vmem:[%s5 + $0x28] sm:$0xff]
      %v734 = vld [vmem:[%s5 + $0x30] sm:$0xff]
      %v735 = vld [vmem:[%s5 + $0x38] sm:$0xff]
      %v736 = vld [vmem:[%s5 + $0x40] sm:$0xff]
      %v737 = vld [vmem:[%s5 + $0x48] sm:$0xff]
      %v738 = vld [vmem:[%s5 + $0x50] sm:$0xff]
      %v739 = vld [vmem:[%s5 + $0x58] sm:$0xff]
      %v740 = vld [vmem:[%s5 + $0x60] sm:$0xff]
      %v741 = vld [vmem:[%s5 + $0x68] sm:$0xff]
      %v742 = vld [vmem:[%s5 + $0x70] sm:$0xff]
      %v743 = vld [vmem:[%s5 + $0x78] sm:$0xff]
      %v744 = vld [vmem:[%s5 + $0x80] sm:$0xff]
      %v745 = vld [vmem:[%s5 + $0x88] sm:$0xff]
      %v746 = vld [vmem:[%s5 + $0x90] sm:$0xff]
      %v747 = vld [vmem:[%s5 + $0x98] sm:$0xff]
      %v748 = vld [vmem:[%s5 + $0xa0] sm:$0xff]
      %v749 = vld [vmem:[%s5 + $0xa8] sm:$0xff]
      %v750 = vld [vmem:[%s5 + $0xb0] sm:$0xff]
      %v751 = vld [vmem:[%s5 + $0xb8] sm:$0xff]
      %v752 = vld [vmem:[%s5 + $0xc0] sm:$0xff]
      %v753 = vld [vmem:[%s5 + $0xc8] sm:$0xff]
      %v754 = vld [vmem:[%s5 + $0xd0] sm:$0xff]
      %v755 = vld [vmem:[%s5 + $0xd8] sm:$0xff]
      %v756 = vld [vmem:[%s5 + $0xe0] sm:$0xff]
      %v757 = vld [vmem:[%s5 + $0xe8] sm:$0xff]
      %v758 = vld [vmem:[%s5 + $0xf0] sm:$0xff]
      %v759 = vld [vmem:[%s5 + $0xf8] sm:$0xff]
      %v760 = vld [vmem:[%s5 + $0x100] sm:$0xff]
      %v761 = vld [vmem:[%s5 + $0x108] sm:$0xff]
      %v762 = vld [vmem:[%s5 + $0x110] sm:$0xff]
      %v763 = vld [vmem:[%s5 + $0x118] sm:$0xff]
      %v764 = vld [vmem:[%s5 + $0x120] sm:$0xff]
      %v765 = vld [vmem:[%s5 + $0x128] sm:$0xff]
      %v766 = vld [vmem:[%s5 + $0x130] sm:$0xff]
      %v767 = vld [vmem:[%s5 + $0x138] sm:$0xff]
      %v768 = vld [vmem:[%s5 + $0x140] sm:$0xff]
      %v769 = vld [vmem:[%s5 + $0x148] sm:$0xff]
      %v770 = vld [vmem:[%s5 + $0x150] sm:$0xff]
      %v771 = vld [vmem:[%s5 + $0x158] sm:$0xff]
      %v772 = vld [vmem:[%s5 + $0x160] sm:$0xff]
      %v773 = vld [vmem:[%s5 + $0x168] sm:$0xff]
      %v774 = vld [vmem:[%s5 + $0x170] sm:$0xff]
      %v775 = vld [vmem:[%s5 + $0x178] sm:$0xff]
      %v776 = vld [vmem:[%s5 + $0x180] sm:$0xff]
      %v777 = vld [vmem:[%s5 + $0x188] sm:$0xff]
      %v778 = vld [vmem:[%s5 + $0x190] sm:$0xff]
      %v779 = vld [vmem:[%s5 + $0x198] sm:$0xff]
      %v780 = vld [vmem:[%s5 + $0x1a0] sm:$0xff]
      %v781 = vld [vmem:[%s5 + $0x1a8] sm:$0xff]
      %v782 = vld [vmem:[%s5 + $0x1b0] sm:$0xff]
      %v783 = vld [vmem:[%s5 + $0x1b8] sm:$0xff]
      %v784 = vld [vmem:[%s5 + $0x1c0] sm:$0xff]
      %v785 = vld [vmem:[%s5 + $0x1c8] sm:$0xff]
      %v786 = vld [vmem:[%s5 + $0x1d0] sm:$0xff]
      %v787 = vld [vmem:[%s5 + $0x1d8] sm:$0xff]
      %v788 = vld [vmem:[%s5 + $0x1e0] sm:$0xff]
      %v789 = vld [vmem:[%s5 + $0x1e8] sm:$0xff]
      %v790 = vld [vmem:[%s5 + $0x1f0] sm:$0xff]
      %v791 = vld [vmem:[%s5 + $0x1f8] sm:$0xff]
      %v792 = vld [vmem:[%s6] sm:$0xff]
      %v794 = vlaneseq
      %v795 = vshrl.u32 %v794, 7
      %v796 = vsub.s32 0, %v795
      %v797 = vrot.slane %v792, %v796
      %v798 = vlaneseq
      %v799 = vshrl.u32 %v798, 7
      %v800 = vsub.s32 1, %v799
      %v801 = vrot.slane %v792, %v800
      %v802 = vlaneseq
      %v803 = vshrl.u32 %v802, 7
      %v804 = vsub.s32 2, %v803
      %v805 = vrot.slane %v792, %v804
      %v806 = vlaneseq
      %v807 = vshrl.u32 %v806, 7
      %v808 = vsub.s32 3, %v807
      %v809 = vrot.slane %v792, %v808
      %v810 = vlaneseq
      %v811 = vshrl.u32 %v810, 7
      %v812 = vsub.s32 4, %v811
      %v813 = vrot.slane %v792, %v812
      %v814 = vlaneseq
      %v815 = vshrl.u32 %v814, 7
      %v816 = vsub.s32 5, %v815
      %v817 = vrot.slane %v792, %v816
      %v818 = vlaneseq
      %v819 = vshrl.u32 %v818, 7
      %v820 = vsub.s32 6, %v819
      %v821 = vrot.slane %v792, %v820
      %v822 = vlaneseq
      %v823 = vshrl.u32 %v822, 7
      %v824 = vsub.s32 7, %v823
      %v825 = vrot.slane %v792, %v824
      %v898 = vunpack.c.l.b16 %v728
      %v899 = vunpack.c.h.b16 %v728
      %v900 = vunpack.c.l.b16 %v729
      %v901 = vunpack.c.h.b16 %v729
      %v902 = vunpack.c.l.b16 %v730
      %v903 = vunpack.c.h.b16 %v730
      %v904 = vunpack.c.l.b16 %v731
      %v905 = vunpack.c.h.b16 %v731
      %v906 = vunpack.c.l.b16 %v732
      %v907 = vunpack.c.h.b16 %v732
      %v908 = vunpack.c.l.b16 %v733
      %v909 = vunpack.c.h.b16 %v733
      %v910 = vunpack.c.l.b16 %v734
      %v911 = vunpack.c.h.b16 %v734
      %v912 = vunpack.c.l.b16 %v735
      %v913 = vunpack.c.h.b16 %v735
      %v914 = vunpack.c.l.b16 %v736
      %v915 = vunpack.c.h.b16 %v736
      %v916 = vunpack.c.l.b16 %v737
      %v917 = vunpack.c.h.b16 %v737
      %v918 = vunpack.c.l.b16 %v738
      %v919 = vunpack.c.h.b16 %v738
      %v920 = vunpack.c.l.b16 %v739
      %v921 = vunpack.c.h.b16 %v739
      %v922 = vunpack.c.l.b16 %v740
      %v923 = vunpack.c.h.b16 %v740
      %v924 = vunpack.c.l.b16 %v741
      %v925 = vunpack.c.h.b16 %v741
      %v926 = vunpack.c.l.b16 %v742
      %v927 = vunpack.c.h.b16 %v742
      %v928 = vunpack.c.l.b16 %v743
      %v929 = vunpack.c.h.b16 %v743
      %v930 = vunpack.c.l.b16 %v744
      %v931 = vunpack.c.h.b16 %v744
      %v932 = vunpack.c.l.b16 %v745
      %v933 = vunpack.c.h.b16 %v745
      %v934 = vunpack.c.l.b16 %v746
      %v935 = vunpack.c.h.b16 %v746
      %v936 = vunpack.c.l.b16 %v747
      %v937 = vunpack.c.h.b16 %v747
      %v938 = vunpack.c.l.b16 %v748
      %v939 = vunpack.c.h.b16 %v748
      %v940 = vunpack.c.l.b16 %v749
      %v941 = vunpack.c.h.b16 %v749
      %v942 = vunpack.c.l.b16 %v750
      %v943 = vunpack.c.h.b16 %v750
      %v944 = vunpack.c.l.b16 %v751
      %v945 = vunpack.c.h.b16 %v751
      %v946 = vunpack.c.l.b16 %v752
      %v947 = vunpack.c.h.b16 %v752
      %v948 = vunpack.c.l.b16 %v753
      %v949 = vunpack.c.h.b16 %v753
      %v950 = vunpack.c.l.b16 %v754
      %v951 = vunpack.c.h.b16 %v754
      %v952 = vunpack.c.l.b16 %v755
      %v953 = vunpack.c.h.b16 %v755
      %v954 = vunpack.c.l.b16 %v756
      %v955 = vunpack.c.h.b16 %v756
      %v956 = vunpack.c.l.b16 %v757
      %v957 = vunpack.c.h.b16 %v757
      %v958 = vunpack.c.l.b16 %v758
      %v959 = vunpack.c.h.b16 %v758
      %v960 = vunpack.c.l.b16 %v759
      %v961 = vunpack.c.h.b16 %v759
      %v962 = vunpack.c.l.b16 %v760
      %v963 = vunpack.c.h.b16 %v760
      %v964 = vunpack.c.l.b16 %v761
      %v965 = vunpack.c.h.b16 %v761
      %v966 = vunpack.c.l.b16 %v762
      %v967 = vunpack.c.h.b16 %v762
      %v968 = vunpack.c.l.b16 %v763
      %v969 = vunpack.c.h.b16 %v763
      %v970 = vunpack.c.l.b16 %v764
      %v971 = vunpack.c.h.b16 %v764
      %v972 = vunpack.c.l.b16 %v765
      %v973 = vunpack.c.h.b16 %v765
      %v974 = vunpack.c.l.b16 %v766
      %v975 = vunpack.c.h.b16 %v766
      %v976 = vunpack.c.l.b16 %v767
      %v977 = vunpack.c.h.b16 %v767
      %v978 = vunpack.c.l.b16 %v768
      %v979 = vunpack.c.h.b16 %v768
      %v980 = vunpack.c.l.b16 %v769
      %v981 = vunpack.c.h.b16 %v769
      %v982 = vunpack.c.l.b16 %v770
      %v983 = vunpack.c.h.b16 %v770
      %v984 = vunpack.c.l.b16 %v771
      %v985 = vunpack.c.h.b16 %v771
      %v986 = vunpack.c.l.b16 %v772
      %v987 = vunpack.c.h.b16 %v772
      %v988 = vunpack.c.l.b16 %v773
      %v989 = vunpack.c.h.b16 %v773
      %v990 = vunpack.c.l.b16 %v774
      %v991 = vunpack.c.h.b16 %v774
      %v992 = vunpack.c.l.b16 %v775
      %v993 = vunpack.c.h.b16 %v775
      %v994 = vunpack.c.l.b16 %v776
      %v995 = vunpack.c.h.b16 %v776
      %v996 = vunpack.c.l.b16 %v777
      %v997 = vunpack.c.h.b16 %v777
      %v998 = vunpack.c.l.b16 %v778
      %v999 = vunpack.c.h.b16 %v778
      %v1000 = vunpack.c.l.b16 %v779
      %v1001 = vunpack.c.h.b16 %v779
      %v1002 = vunpack.c.l.b16 %v780
      %v1003 = vunpack.c.h.b16 %v780
      %v1004 = vunpack.c.l.b16 %v781
      %v1005 = vunpack.c.h.b16 %v781
      %v1006 = vunpack.c.l.b16 %v782
      %v1007 = vunpack.c.h.b16 %v782
      %v1008 = vunpack.c.l.b16 %v783
      %v1009 = vunpack.c.h.b16 %v783
      %v1010 = vunpack.c.l.b16 %v784
      %v1011 = vunpack.c.h.b16 %v784
      %v1012 = vunpack.c.l.b16 %v785
      %v1013 = vunpack.c.h.b16 %v785
      %v1014 = vunpack.c.l.b16 %v786
      %v1015 = vunpack.c.h.b16 %v786
      %v1016 = vunpack.c.l.b16 %v787
      %v1017 = vunpack.c.h.b16 %v787
      %v1018 = vunpack.c.l.b16 %v788
      %v1019 = vunpack.c.h.b16 %v788
      %v1020 = vunpack.c.l.b16 %v789
      %v1021 = vunpack.c.h.b16 %v789
      %v1022 = vunpack.c.l.b16 %v790
      %v1023 = vunpack.c.h.b16 %v790
      %v1024 = vunpack.c.l.b16 %v791
      %v1025 = vunpack.c.h.b16 %v791
      %v1026 = vpack.c.b16 %v906, %v898
      %v1027 = vpack.c.b16 %v907, %v899
      %v1028 = vpack.c.b16 %v908, %v900
      %v1029 = vpack.c.b16 %v909, %v901
      %v1030 = vpack.c.b16 %v910, %v902
      %v1031 = vpack.c.b16 %v911, %v903
      %v1032 = vpack.c.b16 %v912, %v904
      %v1033 = vpack.c.b16 %v913, %v905
      %v1034 = vpack.c.b16 %v922, %v914
      %v1035 = vpack.c.b16 %v923, %v915
      %v1036 = vpack.c.b16 %v924, %v916
      %v1037 = vpack.c.b16 %v925, %v917
      %v1038 = vpack.c.b16 %v926, %v918
      %v1039 = vpack.c.b16 %v927, %v919
      %v1040 = vpack.c.b16 %v928, %v920
      %v1041 = vpack.c.b16 %v929, %v921
      %v1042 = vpack.c.b16 %v938, %v930
      %v1043 = vpack.c.b16 %v939, %v931
      %v1044 = vpack.c.b16 %v940, %v932
      %v1045 = vpack.c.b16 %v941, %v933
      %v1046 = vpack.c.b16 %v942, %v934
      %v1047 = vpack.c.b16 %v943, %v935
      %v1048 = vpack.c.b16 %v944, %v936
      %v1049 = vpack.c.b16 %v945, %v937
      %v1050 = vpack.c.b16 %v954, %v946
      %v1051 = vpack.c.b16 %v955, %v947
      %v1052 = vpack.c.b16 %v956, %v948
      %v1053 = vpack.c.b16 %v957, %v949
      %v1054 = vpack.c.b16 %v958, %v950
      %v1055 = vpack.c.b16 %v959, %v951
      %v1056 = vpack.c.b16 %v960, %v952
      %v1057 = vpack.c.b16 %v961, %v953
      %v1058 = vpack.c.b16 %v970, %v962
      %v1059 = vpack.c.b16 %v971, %v963
      %v1060 = vpack.c.b16 %v972, %v964
      %v1061 = vpack.c.b16 %v973, %v965
      %v1062 = vpack.c.b16 %v974, %v966
      %v1063 = vpack.c.b16 %v975, %v967
      %v1064 = vpack.c.b16 %v976, %v968
      %v1065 = vpack.c.b16 %v977, %v969
      %v1066 = vpack.c.b16 %v986, %v978
      %v1067 = vpack.c.b16 %v987, %v979
      %v1068 = vpack.c.b16 %v988, %v980
      %v1069 = vpack.c.b16 %v989, %v981
      %v1070 = vpack.c.b16 %v990, %v982
      %v1071 = vpack.c.b16 %v991, %v983
      %v1072 = vpack.c.b16 %v992, %v984
      %v1073 = vpack.c.b16 %v993, %v985
      %v1074 = vpack.c.b16 %v1002, %v994
      %v1075 = vpack.c.b16 %v1003, %v995
      %v1076 = vpack.c.b16 %v1004, %v996
      %v1077 = vpack.c.b16 %v1005, %v997
      %v1078 = vpack.c.b16 %v1006, %v998
      %v1079 = vpack.c.b16 %v1007, %v999
      %v1080 = vpack.c.b16 %v1008, %v1000
      %v1081 = vpack.c.b16 %v1009, %v1001
      %v1082 = vpack.c.b16 %v1018, %v1010
      %v1083 = vpack.c.b16 %v1019, %v1011
      %v1084 = vpack.c.b16 %v1020, %v1012
      %v1085 = vpack.c.b16 %v1021, %v1013
      %v1086 = vpack.c.b16 %v1022, %v1014
      %v1087 = vpack.c.b16 %v1023, %v1015
      %v1088 = vpack.c.b16 %v1024, %v1016
      %v1089 = vpack.c.b16 %v1025, %v1017
      %1154 = vmatprep.subr.bf16.mxu0 %v1027
      %1155 = vmatpush1.bf16.msra.mxu0 %v1026
      %1156 = vmatprep.subr.bf16.mxu0 %v1035
      %1157 = vmatpush1.bf16.msra.mxu0 %v1034
      %1158 = vmatprep.subr.bf16.mxu0 %v1043
      %1159 = vmatpush1.bf16.msra.mxu0 %v1042
      %1160 = vmatprep.subr.bf16.mxu0 %v1051
      %1161 = vmatpush1.bf16.msra.mxu0 %v1050
      %1162 = vmatprep.subr.bf16.mxu0 %v1059
      %1163 = vmatpush1.bf16.msra.mxu0 %v1058
      %1164 = vmatprep.subr.bf16.mxu0 %v1067
      %1165 = vmatpush1.bf16.msra.mxu0 %v1066
      %1166 = vmatprep.subr.bf16.mxu0 %v1075
      %1167 = vmatpush1.bf16.msra.mxu0 %v1074
      %1168 = vmatprep.subr.bf16.mxu0 %v1083
      %1169 = vmatpush1.bf16.msra.mxu0 %v1082
      %1170 = vmatprep.subr.bf16.mxu0 0
      %1171 = vmatpush1.bf16.msra.mxu0 0
      %1172 = vmatprep.subr.bf16.mxu0 0
      %1173 = vmatpush1.bf16.msra.mxu0 0
      %1174 = vmatprep.subr.bf16.mxu0 0
      %1175 = vmatpush1.bf16.msra.mxu0 0
      %1176 = vmatprep.subr.bf16.mxu0 0
      %1177 = vmatpush1.bf16.msra.mxu0 0
      %1178 = vmatprep.subr.bf16.mxu0 0
      %1179 = vmatpush1.bf16.msra.mxu0 0
      %1180 = vmatprep.subr.bf16.mxu0 0
      %1181 = vmatpush1.bf16.msra.mxu0 0
      %1182 = vmatprep.subr.bf16.mxu0 0
      %1183 = vmatpush1.bf16.msra.mxu0 0
      %1184 = vmatprep.subr.bf16.mxu0 0
      %1185 = vmatpush1.bf16.msra.mxu0 0
      %1186 = vmatprep.mubr.bf16.mxu0 0
      %1187 = vmatmul.mubr.bf16.gmra.mrb[0].mxu0 %v724
      %v1188 = vpop.f32.mrb[0].mxu0
      %v1189 = vadd.f32 %v797, %v1188
      %v1190 = vpop.f32.mrb[0].mxu0
      %v1191 = vadd.f32 %v801, %v1190
      %v1192 = vpop.f32.mrb[0].mxu0
      %v1193 = vadd.f32 %v797, %v1192
      %v1194 = vpop.f32.mrb[0].mxu0
      %v1195 = vadd.f32 %v801, %v1194
      %1196 = vmatprep.mubr.bf16.mxu0 0
      %1197 = vmatmul.mubr.bf16.gmra.mrb[0].mxu0 %v725
      %v1198 = vpop.f32.mrb[0].mxu0
      %v1199 = vadd.f32 %v797, %v1198
      %v1200 = vpop.f32.mrb[0].mxu0
      %v1201 = vadd.f32 %v801, %v1200
      %v1202 = vpop.f32.mrb[0].mxu0
      %v1203 = vadd.f32 %v797, %v1202
      %v1204 = vpop.f32.mrb[0].mxu0
      %v1205 = vadd.f32 %v801, %v1204
      %1206 = vmatprep.mubr.bf16.mxu0 0
      %1207 = vmatmul.mubr.bf16.gmra.mrb[0].mxu0 %v726
      %v1208 = vpop.f32.mrb[0].mxu0
      %v1209 = vadd.f32 %v797, %v1208
      %v1210 = vpop.f32.mrb[0].mxu0
      %v1211 = vadd.f32 %v801, %v1210
      %v1212 = vpop.f32.mrb[0].mxu0
      %v1213 = vadd.f32 %v797, %v1212
      %v1214 = vpop.f32.mrb[0].mxu0
      %v1215 = vadd.f32 %v801, %v1214
      %1216 = vmatprep.mubr.bf16.mxu0 0
      %1217 = vmatmul.mubr.bf16.gmra.mrb[0].mxu0 %v727
      %v1218 = vpop.f32.mrb[0].mxu0
      %v1219 = vadd.f32 %v797, %v1218
      %v1220 = vpop.f32.mrb[0].mxu0
      %v1221 = vadd.f32 %v801, %v1220
      %v1222 = vpop.f32.mrb[0].mxu0
      %v1223 = vadd.f32 %v797, %v1222
      %v1224 = vpop.f32.mrb[0].mxu0
      %v1225 = vadd.f32 %v801, %v1224
      %1226 = vdwg.mxu0
      %1227 = vmatprep.subr.bf16.mxu0 %v1029
      %1228 = vmatpush1.bf16.msra.mxu0 %v1028
      %1229 = vmatprep.subr.bf16.mxu0 %v1037
      %1230 = vmatpush1.bf16.msra.mxu0 %v1036
      %1231 = vmatprep.subr.bf16.mxu0 %v1045
      %1232 = vmatpush1.bf16.msra.mxu0 %v1044
      %1233 = vmatprep.subr.bf16.mxu0 %v1053
      %1234 = vmatpush1.bf16.msra.mxu0 %v1052
      %1235 = vmatprep.subr.bf16.mxu0 %v1061
      %1236 = vmatpush1.bf16.msra.mxu0 %v1060
      %1237 = vmatprep.subr.bf16.mxu0 %v1069
      %1238 = vmatpush1.bf16.msra.mxu0 %v1068
      %1239 = vmatprep.subr.bf16.mxu0 %v1077
      %1240 = vmatpush1.bf16.msra.mxu0 %v1076
      %1241 = vmatprep.subr.bf16.mxu0 %v1085
      %1242 = vmatpush1.bf16.msra.mxu0 %v1084
      %1243 = vmatprep.subr.bf16.mxu0 0
      %1244 = vmatpush1.bf16.msra.mxu0 0
      %1245 = vmatprep.subr.bf16.mxu0 0
      %1246 = vmatpush1.bf16.msra.mxu0 0
      %1247 = vmatprep.subr.bf16.mxu0 0
      %1248 = vmatpush1.bf16.msra.mxu0 0
      %1249 = vmatprep.subr.bf16.mxu0 0
      %1250 = vmatpush1.bf16.msra.mxu0 0
      %1251 = vmatprep.subr.bf16.mxu0 0
      %1252 = vmatpush1.bf16.msra.mxu0 0
      %1253 = vmatprep.subr.bf16.mxu0 0
      %1254 = vmatpush1.bf16.msra.mxu0 0
      %1255 = vmatprep.subr.bf16.mxu0 0
      %1256 = vmatpush1.bf16.msra.mxu0 0
      %1257 = vmatprep.subr.bf16.mxu0 0
      %1258 = vmatpush1.bf16.msra.mxu0 0
      %1259 = vmatprep.mubr.bf16.mxu0 0
      %1260 = vmatmul.mubr.bf16.gmra.mrb[0].mxu0 %v724
      %v1261 = vpop.f32.mrb[0].mxu0
      %v1262 = vadd.f32 %v805, %v1261
      %v1263 = vpop.f32.mrb[0].mxu0
      %v1264 = vadd.f32 %v809, %v1263
      %v1265 = vpop.f32.mrb[0].mxu0
      %v1266 = vadd.f32 %v805, %v1265
      %v1267 = vpop.f32.mrb[0].mxu0
      %v1268 = vadd.f32 %v809, %v1267
      %1269 = vmatprep.mubr.bf16.mxu0 0
      %1270 = vmatmul.mubr.bf16.gmra.mrb[0].mxu0 %v725
      %v1271 = vpop.f32.mrb[0].mxu0
      %v1272 = vadd.f32 %v805, %v1271
      %v1273 = vpop.f32.mrb[0].mxu0
      %v1274 = vadd.f32 %v809, %v1273
      %v1275 = vpop.f32.mrb[0].mxu0
      %v1276 = vadd.f32 %v805, %v1275
      %v1277 = vpop.f32.mrb[0].mxu0
      %v1278 = vadd.f32 %v809, %v1277
      %1279 = vmatprep.mubr.bf16.mxu0 0
      %1280 = vmatmul.mubr.bf16.gmra.mrb[0].mxu0 %v726
      %v1281 = vpop.f32.mrb[0].mxu0
      %v1282 = vadd.f32 %v805, %v1281
      %v1283 = vpop.f32.mrb[0].mxu0
      %v1284 = vadd.f32 %v809, %v1283
      %v1285 = vpop.f32.mrb[0].mxu0
      %v1286 = vadd.f32 %v805, %v1285
      %v1287 = vpop.f32.mrb[0].mxu0
      %v1288 = vadd.f32 %v809, %v1287
      %1289 = vmatprep.mubr.bf16.mxu0 0
      %1290 = vmatmul.mubr.bf16.gmra.mrb[0].mxu0 %v727
      %v1291 = vpop.f32.mrb[0].mxu0
      %v1292 = vadd.f32 %v805, %v1291
      %v1293 = vpop.f32.mrb[0].mxu0
      %v1294 = vadd.f32 %v809, %v1293
      %v1295 = vpop.f32.mrb[0].mxu0
      %v1296 = vadd.f32 %v805, %v1295
      %v1297 = vpop.f32.mrb[0].mxu0
      %v1298 = vadd.f32 %v809, %v1297
      %1299 = vdwg.mxu0
      %1300 = vmatprep.subr.bf16.mxu0 %v1031
      %1301 = vmatpush1.bf16.msra.mxu0 %v1030
      %1302 = vmatprep.subr.bf16.mxu0 %v1039
      %1303 = vmatpush1.bf16.msra.mxu0 %v1038
      %1304 = vmatprep.subr.bf16.mxu0 %v1047
      %1305 = vmatpush1.bf16.msra.mxu0 %v1046
      %1306 = vmatprep.subr.bf16.mxu0 %v1055
      %1307 = vmatpush1.bf16.msra.mxu0 %v1054
      %1308 = vmatprep.subr.bf16.mxu0 %v1063
      %1309 = vmatpush1.bf16.msra.mxu0 %v1062
      %1310 = vmatprep.subr.bf16.mxu0 %v1071
      %1311 = vmatpush1.bf16.msra.mxu0 %v1070
      %1312 = vmatprep.subr.bf16.mxu0 %v1079
      %1313 = vmatpush1.bf16.msra.mxu0 %v1078
      %1314 = vmatprep.subr.bf16.mxu0 %v1087
      %1315 = vmatpush1.bf16.msra.mxu0 %v1086
      %1316 = vmatprep.subr.bf16.mxu0 0
      %1317 = vmatpush1.bf16.msra.mxu0 0
      %1318 = vmatprep.subr.bf16.mxu0 0
      %1319 = vmatpush1.bf16.msra.mxu0 0
      %1320 = vmatprep.subr.bf16.mxu0 0
      %1321 = vmatpush1.bf16.msra.mxu0 0
      %1322 = vmatprep.subr.bf16.mxu0 0
      %1323 = vmatpush1.bf16.msra.mxu0 0
      %1324 = vmatprep.subr.bf16.mxu0 0
      %1325 = vmatpush1.bf16.msra.mxu0 0
      %1326 = vmatprep.subr.bf16.mxu0 0
      %1327 = vmatpush1.bf16.msra.mxu0 0
      %1328 = vmatprep.subr.bf16.mxu0 0
      %1329 = vmatpush1.bf16.msra.mxu0 0
      %1330 = vmatprep.subr.bf16.mxu0 0
      %1331 = vmatpush1.bf16.msra.mxu0 0
      %1332 = vmatprep.mubr.bf16.mxu0 0
      %1333 = vmatmul.mubr.bf16.gmra.mrb[0].mxu0 %v724
      %v1334 = vpop.f32.mrb[0].mxu0
      %v1335 = vadd.f32 %v813, %v1334
      %v1336 = vpop.f32.mrb[0].mxu0
      %v1337 = vadd.f32 %v817, %v1336
      %v1338 = vpop.f32.mrb[0].mxu0
      %v1339 = vadd.f32 %v813, %v1338
      %v1340 = vpop.f32.mrb[0].mxu0
      %v1341 = vadd.f32 %v817, %v1340
      %1342 = vmatprep.mubr.bf16.mxu0 0
      %1343 = vmatmul.mubr.bf16.gmra.mrb[0].mxu0 %v725
      %v1344 = vpop.f32.mrb[0].mxu0
      %v1345 = vadd.f32 %v813, %v1344
      %v1346 = vpop.f32.mrb[0].mxu0
      %v1347 = vadd.f32 %v817, %v1346
      %v1348 = vpop.f32.mrb[0].mxu0
      %v1349 = vadd.f32 %v813, %v1348
      %v1350 = vpop.f32.mrb[0].mxu0
      %v1351 = vadd.f32 %v817, %v1350
      %1352 = vmatprep.mubr.bf16.mxu0 0
      %1353 = vmatmul.mubr.bf16.gmra.mrb[0].mxu0 %v726
      %v1354 = vpop.f32.mrb[0].mxu0
      %v1355 = vadd.f32 %v813, %v1354
      %v1356 = vpop.f32.mrb[0].mxu0
      %v1357 = vadd.f32 %v817, %v1356
      %v1358 = vpop.f32.mrb[0].mxu0
      %v1359 = vadd.f32 %v813, %v1358
      %v1360 = vpop.f32.mrb[0].mxu0
      %v1361 = vadd.f32 %v817, %v1360
      %1362 = vmatprep.mubr.bf16.mxu0 0
      %1363 = vmatmul.mubr.bf16.gmra.mrb[0].mxu0 %v727
      %v1364 = vpop.f32.mrb[0].mxu0
      %v1365 = vadd.f32 %v813, %v1364
      %v1366 = vpop.f32.mrb[0].mxu0
      %v1367 = vadd.f32 %v817, %v1366
      %v1368 = vpop.f32.mrb[0].mxu0
      %v1369 = vadd.f32 %v813, %v1368
      %v1370 = vpop.f32.mrb[0].mxu0
      %v1371 = vadd.f32 %v817, %v1370
      %1372 = vdwg.mxu0
      %1373 = vmatprep.subr.bf16.mxu0 %v1033
      %1374 = vmatpush1.bf16.msra.mxu0 %v1032
      %1375 = vmatprep.subr.bf16.mxu0 %v1041
      %1376 = vmatpush1.bf16.msra.mxu0 %v1040
      %1377 = vmatprep.subr.bf16.mxu0 %v1049
      %1378 = vmatpush1.bf16.msra.mxu0 %v1048
      %1379 = vmatprep.subr.bf16.mxu0 %v1057
      %1380 = vmatpush1.bf16.msra.mxu0 %v1056
      %1381 = vmatprep.subr.bf16.mxu0 %v1065
      %1382 = vmatpush1.bf16.msra.mxu0 %v1064
      %1383 = vmatprep.subr.bf16.mxu0 %v1073
      %1384 = vmatpush1.bf16.msra.mxu0 %v1072
      %1385 = vmatprep.subr.bf16.mxu0 %v1081
      %1386 = vmatpush1.bf16.msra.mxu0 %v1080
      %1387 = vmatprep.subr.bf16.mxu0 %v1089
      %1388 = vmatpush1.bf16.msra.mxu0 %v1088
      %1389 = vmatprep.subr.bf16.mxu0 0
      %1390 = vmatpush1.bf16.msra.mxu0 0
      %1391 = vmatprep.subr.bf16.mxu0 0
      %1392 = vmatpush1.bf16.msra.mxu0 0
      %1393 = vmatprep.subr.bf16.mxu0 0
      %1394 = vmatpush1.bf16.msra.mxu0 0
      %1395 = vmatprep.subr.bf16.mxu0 0
      %1396 = vmatpush1.bf16.msra.mxu0 0
      %1397 = vmatprep.subr.bf16.mxu0 0
      %1398 = vmatpush1.bf16.msra.mxu0 0
      %1399 = vmatprep.subr.bf16.mxu0 0
      %1400 = vmatpush1.bf16.msra.mxu0 0
      %1401 = vmatprep.subr.bf16.mxu0 0
      %1402 = vmatpush1.bf16.msra.mxu0 0
      %1403 = vmatprep.subr.bf16.mxu0 0
      %1404 = vmatpush1.bf16.msra.mxu0 0
      %1405 = vmatprep.mubr.bf16.mxu0 0
      %1406 = vmatmul.mubr.bf16.gmra.mrb[0].mxu0 %v724
      %v1407 = vpop.f32.mrb[0].mxu0
      %v1408 = vadd.f32 %v821, %v1407
      %v1409 = vpop.f32.mrb[0].mxu0
      %v1410 = vadd.f32 %v825, %v1409
      %v1411 = vpop.f32.mrb[0].mxu0
      %v1412 = vadd.f32 %v821, %v1411
      %v1413 = vpop.f32.mrb[0].mxu0
      %v1414 = vadd.f32 %v825, %v1413
      %1415 = vmatprep.mubr.bf16.mxu0 0
      %1416 = vmatmul.mubr.bf16.gmra.mrb[0].mxu0 %v725
      %v1417 = vpop.f32.mrb[0].mxu0
      %v1418 = vadd.f32 %v821, %v1417
      %v1419 = vpop.f32.mrb[0].mxu0
      %v1420 = vadd.f32 %v825, %v1419
      %v1421 = vpop.f32.mrb[0].mxu0
      %v1422 = vadd.f32 %v821, %v1421
      %v1423 = vpop.f32.mrb[0].mxu0
      %v1424 = vadd.f32 %v825, %v1423
      %1425 = vmatprep.mubr.bf16.mxu0 0
      %1426 = vmatmul.mubr.bf16.gmra.mrb[0].mxu0 %v726
      %v1427 = vpop.f32.mrb[0].mxu0
      %v1428 = vadd.f32 %v821, %v1427
      %v1429 = vpop.f32.mrb[0].mxu0
      %v1430 = vadd.f32 %v825, %v1429
      %v1431 = vpop.f32.mrb[0].mxu0
      %v1432 = vadd.f32 %v821, %v1431
      %v1433 = vpop.f32.mrb[0].mxu0
      %v1434 = vadd.f32 %v825, %v1433
      %1435 = vmatprep.mubr.bf16.mxu0 0
      %1436 = vmatmul.mubr.bf16.gmra.mrb[0].mxu0 %v727
      %v1437 = vpop.f32.mrb[0].mxu0
      %v1438 = vadd.f32 %v821, %v1437
      %v1439 = vpop.f32.mrb[0].mxu0
      %v1440 = vadd.f32 %v825, %v1439
      %v1441 = vpop.f32.mrb[0].mxu0
      %v1442 = vadd.f32 %v821, %v1441
      %v1443 = vpop.f32.mrb[0].mxu0
      %v1444 = vadd.f32 %v825, %v1443
      %1445 = vdwg.mxu0
      %v1446 = vmax.f32 %v1189, 0.0
      %v1447 = vmax.f32 %v1191, 0.0
      %v1448 = vmax.f32 %v1262, 0.0
      %v1449 = vmax.f32 %v1264, 0.0
      %v1450 = vmax.f32 %v1335, 0.0
      %v1451 = vmax.f32 %v1337, 0.0
      %v1452 = vmax.f32 %v1408, 0.0
      %v1453 = vmax.f32 %v1410, 0.0
      %v1454 = vmax.f32 %v1193, 0.0
      %v1455 = vmax.f32 %v1195, 0.0
      %v1456 = vmax.f32 %v1266, 0.0
      %v1457 = vmax.f32 %v1268, 0.0
      %v1458 = vmax.f32 %v1339, 0.0
      %v1459 = vmax.f32 %v1341, 0.0
      %v1460 = vmax.f32 %v1412, 0.0
      %v1461 = vmax.f32 %v1414, 0.0
      %v1462 = vmax.f32 %v1199, 0.0
      %v1463 = vmax.f32 %v1201, 0.0
      %v1464 = vmax.f32 %v1272, 0.0
      %v1465 = vmax.f32 %v1274, 0.0
      %v1466 = vmax.f32 %v1345, 0.0
      %v1467 = vmax.f32 %v1347, 0.0
      %v1468 = vmax.f32 %v1418, 0.0
      %v1469 = vmax.f32 %v1420, 0.0
      %v1470 = vmax.f32 %v1203, 0.0
      %v1471 = vmax.f32 %v1205, 0.0
      %v1472 = vmax.f32 %v1276, 0.0
      %v1473 = vmax.f32 %v1278, 0.0
      %v1474 = vmax.f32 %v1349, 0.0
      %v1475 = vmax.f32 %v1351, 0.0
      %v1476 = vmax.f32 %v1422, 0.0
      %v1477 = vmax.f32 %v1424, 0.0
      %v1478 = vmax.f32 %v1209, 0.0
      %v1479 = vmax.f32 %v1211, 0.0
      %v1480 = vmax.f32 %v1282, 0.0
      %v1481 = vmax.f32 %v1284, 0.0
      %v1482 = vmax.f32 %v1355, 0.0
      %v1483 = vmax.f32 %v1357, 0.0
      %v1484 = vmax.f32 %v1428, 0.0
      %v1485 = vmax.f32 %v1430, 0.0
      %v1486 = vmax.f32 %v1213, 0.0
      %v1487 = vmax.f32 %v1215, 0.0
      %v1488 = vmax.f32 %v1286, 0.0
      %v1489 = vmax.f32 %v1288, 0.0
      %v1490 = vmax.f32 %v1359, 0.0
      %v1491 = vmax.f32 %v1361, 0.0
      %v1492 = vmax.f32 %v1432, 0.0
      %v1493 = vmax.f32 %v1434, 0.0
      %v1494 = vmax.f32 %v1219, 0.0
      %v1495 = vmax.f32 %v1221, 0.0
      %v1496 = vmax.f32 %v1292, 0.0
      %v1497 = vmax.f32 %v1294, 0.0
      %v1498 = vmax.f32 %v1365, 0.0
      %v1499 = vmax.f32 %v1367, 0.0
      %v1500 = vmax.f32 %v1438, 0.0
      %v1501 = vmax.f32 %v1440, 0.0
      %v1502 = vmax.f32 %v1223, 0.0
      %v1503 = vmax.f32 %v1225, 0.0
      %v1504 = vmax.f32 %v1296, 0.0
      %v1505 = vmax.f32 %v1298, 0.0
      %v1506 = vmax.f32 %v1369, 0.0
      %v1507 = vmax.f32 %v1371, 0.0
      %v1508 = vmax.f32 %v1442, 0.0
      %v1509 = vmax.f32 %v1444, 0.0
      %v1510 = vmax.f32 %v1446, %v1454
      %v1511 = vmax.f32 %v1510, %v1462
      %v1512 = vmax.f32 %v1511, %v1470
      %v1513 = vmax.f32 %v1512, %v1478
      %v1514 = vmax.f32 %v1513, %v1486
      %v1515 = vmax.f32 %v1514, %v1494
      %v1516 = vmax.f32 %v1515, %v1502
      %v1517 = vrot.slane %v1516, 4
      %v1518 = vmax.f32 %v1516, %v1517
      %v1519 = vrot.slane %v1518, 2
      %v1520 = vmax.f32 %v1518, %v1519
      %v1521 = vrot.slane %v1520, 1
      %v1522 = vmax.f32 %v1520, %v1521
      %v1523 = vmax.f32 %v1447, %v1455
      %v1524 = vmax.f32 %v1523, %v1463
      %v1525 = vmax.f32 %v1524, %v1471
      %v1526 = vmax.f32 %v1525, %v1479
      %v1527 = vmax.f32 %v1526, %v1487
      %v1528 = vmax.f32 %v1527, %v1495
      %v1529 = vmax.f32 %v1528, %v1503
      %v1530 = vrot.slane %v1529, 4
      %v1531 = vmax.f32 %v1529, %v1530
      %v1532 = vrot.slane %v1531, 2
      %v1533 = vmax.f32 %v1531, %v1532
      %v1534 = vrot.slane %v1533, 1
      %v1535 = vmax.f32 %v1533, %v1534
      %v1536 = vmax.f32 %v1448, %v1456
      %v1537 = vmax.f32 %v1536, %v1464
      %v1538 = vmax.f32 %v1537, %v1472
      %v1539 = vmax.f32 %v1538, %v1480
      %v1540 = vmax.f32 %v1539, %v1488
      %v1541 = vmax.f32 %v1540, %v1496
      %v1542 = vmax.f32 %v1541, %v1504
      %v1543 = vrot.slane %v1542, 4
      %v1544 = vmax.f32 %v1542, %v1543
      %v1545 = vrot.slane %v1544, 2
      %v1546 = vmax.f32 %v1544, %v1545
      %v1547 = vrot.slane %v1546, 1
      %v1548 = vmax.f32 %v1546, %v1547
      %v1549 = vmax.f32 %v1449, %v1457
      %v1550 = vmax.f32 %v1549, %v1465
      %v1551 = vmax.f32 %v1550, %v1473
      %v1552 = vmax.f32 %v1551, %v1481
      %v1553 = vmax.f32 %v1552, %v1489
      %v1554 = vmax.f32 %v1553, %v1497
      %v1555 = vmax.f32 %v1554, %v1505
      %v1556 = vrot.slane %v1555, 4
      %v1557 = vmax.f32 %v1555, %v1556
      %v1558 = vrot.slane %v1557, 2
      %v1559 = vmax.f32 %v1557, %v1558
      %v1560 = vrot.slane %v1559, 1
      %v1561 = vmax.f32 %v1559, %v1560
      %v1562 = vmax.f32 %v1450, %v1458
      %v1563 = vmax.f32 %v1562, %v1466
      %v1564 = vmax.f32 %v1563, %v1474
      %v1565 = vmax.f32 %v1564, %v1482
      %v1566 = vmax.f32 %v1565, %v1490
      %v1567 = vmax.f32 %v1566, %v1498
      %v1568 = vmax.f32 %v1567, %v1506
      %v1569 = vrot.slane %v1568, 4
      %v1570 = vmax.f32 %v1568, %v1569
      %v1571 = vrot.slane %v1570, 2
      %v1572 = vmax.f32 %v1570, %v1571
      %v1573 = vrot.slane %v1572, 1
      %v1574 = vmax.f32 %v1572, %v1573
      %v1575 = vmax.f32 %v1451, %v1459
      %v1576 = vmax.f32 %v1575, %v1467
      %v1577 = vmax.f32 %v1576, %v1475
      %v1578 = vmax.f32 %v1577, %v1483
      %v1579 = vmax.f32 %v1578, %v1491
      %v1580 = vmax.f32 %v1579, %v1499
      %v1581 = vmax.f32 %v1580, %v1507
      %v1582 = vrot.slane %v1581, 4
      %v1583 = vmax.f32 %v1581, %v1582
      %v1584 = vrot.slane %v1583, 2
      %v1585 = vmax.f32 %v1583, %v1584
      %v1586 = vrot.slane %v1585, 1
      %v1587 = vmax.f32 %v1585, %v1586
      %v1588 = vmax.f32 %v1452, %v1460
      %v1589 = vmax.f32 %v1588, %v1468
      %v1590 = vmax.f32 %v1589, %v1476
      %v1591 = vmax.f32 %v1590, %v1484
      %v1592 = vmax.f32 %v1591, %v1492
      %v1593 = vmax.f32 %v1592, %v1500
      %v1594 = vmax.f32 %v1593, %v1508
      %v1595 = vrot.slane %v1594, 4
      %v1596 = vmax.f32 %v1594, %v1595
      %v1597 = vrot.slane %v1596, 2
      %v1598 = vmax.f32 %v1596, %v1597
      %v1599 = vrot.slane %v1598, 1
      %v1600 = vmax.f32 %v1598, %v1599
      %v1601 = vmax.f32 %v1453, %v1461
      %v1602 = vmax.f32 %v1601, %v1469
      %v1603 = vmax.f32 %v1602, %v1477
      %v1604 = vmax.f32 %v1603, %v1485
      %v1605 = vmax.f32 %v1604, %v1493
      %v1606 = vmax.f32 %v1605, %v1501
      %v1607 = vmax.f32 %v1606, %v1509
      %v1608 = vrot.slane %v1607, 4
      %v1609 = vmax.f32 %v1607, %v1608
      %v1610 = vrot.slane %v1609, 2
      %v1611 = vmax.f32 %v1609, %v1610
      %v1612 = vrot.slane %v1611, 1
      %v1613 = vmax.f32 %v1611, %v1612
      %p1614 = scmp.eq.s32.totalorder %s29, 0
      // Predicated region
      $region73: #{pointnet_densecls_forward.3} parent=71 // pred_check
        %p1615 = pneg %p1614
      $region74: #{pointnet_densecls_forward.3} parent=71 // pred_check_branch
        %1617 = sbr.rel (%p1615) target = $region76
      $region75: #{pointnet_densecls_forward.3} parent=71 // pred_region
        %v1626 = vcombine.low %v1522, %v1535
        %v1627 = vcombine.low %v1548, %v1561
        %v1628 = vcombine.low %v1574, %v1587
        %v1629 = vcombine.low %v1600, %v1613
        %v1631 = vunpack.c.l.s4 1966171168
        %v1632 = vunpack.c.0.s8 %v1631
        %v1633 = vlaneseq
        %v1634 = vshrl.u32 %v1633, 7
        %v1635 = vsub.s32 %v1632, %v1634
        %v1636 = vrot.slane %v1626, %v1635
        %v1638 = vunpack.c.l.s4 1966171168
        %v1639 = vunpack.c.0.s8 %v1638
        %v1640 = vlaneseq
        %v1641 = vshrl.u32 %v1640, 7
        %v1642 = vsub.s32 %v1639, %v1641
        %v1643 = vrot.slane %v1627, %v1642
        %v1645 = vunpack.c.l.s4 1966171168
        %v1646 = vunpack.c.0.s8 %v1645
        %v1647 = vlaneseq
        %v1648 = vshrl.u32 %v1647, 7
        %v1649 = vsub.s32 %v1646, %v1648
        %v1650 = vrot.slane %v1628, %v1649
        %v1652 = vunpack.c.l.s4 1966171168
        %v1653 = vunpack.c.0.s8 %v1652
        %v1654 = vlaneseq
        %v1655 = vshrl.u32 %v1654, 7
        %v1656 = vsub.s32 %v1653, %v1655
        %v1657 = vrot.slane %v1629, %v1656
        %v1658 = vcombine.low %v1636, %v1643
        %v1659 = vcombine.low %v1650, %v1657
        %v1661 = vunpack.c.l.s4 1966171168
        %v1662 = vunpack.c.0.s8 %v1661
        %v1663 = vlaneseq
        %v1664 = vshrl.u32 %v1663, 7
        %v1665 = vsub.s32 %v1662, %v1664
        %v1666 = vrot.slane %v1658, %v1665
        %v1668 = vunpack.c.l.s4 1966171168
        %v1669 = vunpack.c.0.s8 %v1668
        %v1670 = vlaneseq
        %v1671 = vshrl.u32 %v1670, 7
        %v1672 = vsub.s32 %v1669, %v1671
        %v1673 = vrot.slane %v1659, %v1672
        %v1674 = vcombine.low %v1666, %v1673
        %1676 = vst [vmem:[#allocation2] sm:$0xff] %v1674
      $region76: #{pointnet_densecls_forward.3} parent=71 // pred_fallthru
        _
      %p1677 = scmp.gt.s32.totalorder %s29, 0
      // Predicated region
      $region77: #{pointnet_densecls_forward.3} parent=71 // pred_check
        %p1678 = pneg %p1677
      $region78: #{pointnet_densecls_forward.3} parent=71 // pred_check_branch
        %1680 = sbr.rel (%p1678) target = $region80
      $region79: #{pointnet_densecls_forward.3} parent=71 // pred_region
        %v1681 = vld [vmem:[#allocation2] sm:$0xff]
        %v1690 = vcombine.low %v1522, %v1535
        %v1691 = vcombine.low %v1548, %v1561
        %v1692 = vcombine.low %v1574, %v1587
        %v1693 = vcombine.low %v1600, %v1613
        %v1695 = vunpack.c.l.s4 1966171168
        %v1696 = vunpack.c.0.s8 %v1695
        %v1697 = vlaneseq
        %v1698 = vshrl.u32 %v1697, 7
        %v1699 = vsub.s32 %v1696, %v1698
        %v1700 = vrot.slane %v1690, %v1699
        %v1702 = vunpack.c.l.s4 1966171168
        %v1703 = vunpack.c.0.s8 %v1702
        %v1704 = vlaneseq
        %v1705 = vshrl.u32 %v1704, 7
        %v1706 = vsub.s32 %v1703, %v1705
        %v1707 = vrot.slane %v1691, %v1706
        %v1709 = vunpack.c.l.s4 1966171168
        %v1710 = vunpack.c.0.s8 %v1709
        %v1711 = vlaneseq
        %v1712 = vshrl.u32 %v1711, 7
        %v1713 = vsub.s32 %v1710, %v1712
        %v1714 = vrot.slane %v1692, %v1713
        %v1716 = vunpack.c.l.s4 1966171168
        %v1717 = vunpack.c.0.s8 %v1716
        %v1718 = vlaneseq
        %v1719 = vshrl.u32 %v1718, 7
        %v1720 = vsub.s32 %v1717, %v1719
        %v1721 = vrot.slane %v1693, %v1720
        %v1722 = vcombine.low %v1700, %v1707
        %v1723 = vcombine.low %v1714, %v1721
        %v1725 = vunpack.c.l.s4 1966171168
        %v1726 = vunpack.c.0.s8 %v1725
        %v1727 = vlaneseq
        %v1728 = vshrl.u32 %v1727, 7
        %v1729 = vsub.s32 %v1726, %v1728
        %v1730 = vrot.slane %v1722, %v1729
        %v1732 = vunpack.c.l.s4 1966171168
        %v1733 = vunpack.c.0.s8 %v1732
        %v1734 = vlaneseq
        %v1735 = vshrl.u32 %v1734, 7
        %v1736 = vsub.s32 %v1733, %v1735
        %v1737 = vrot.slane %v1723, %v1736
        %v1738 = vcombine.low %v1730, %v1737
        %v1740 = vmax.f32 %v1681, %v1738
        %1741 = vst [vmem:[#allocation2] sm:$0xff] %v1740
      $region80: #{pointnet_densecls_forward.3} parent=71 // pred_fallthru
        _
      // Predicated region
      $region81: #{pointnet_densecls_forward.3} parent=71 // pred_check
        %p1742 = pneg %p1614
      $region82: #{pointnet_densecls_forward.3} parent=71 // pred_check_branch
        %1744 = sbr.rel (%p1742) target = $region84
      $region83: #{pointnet_densecls_forward.3} parent=71 // pred_region
        %v1745 = vld [vmem:[#allocation2] sm:$0xff]
        %v1747 = vlaneseq
        %v1748 = vshrl.u32 %v1747, 7
        %v1749 = vsub.s32 0, %v1748
        %v1750 = vrot.slane %v1745, %v1749
        %v1751 = vlaneseq
        %v1752 = vshrl.u32 %v1751, 7
        %v1753 = vsub.s32 1, %v1752
        %v1754 = vrot.slane %v1745, %v1753
        %v1755 = vlaneseq
        %v1756 = vshrl.u32 %v1755, 7
        %v1757 = vsub.s32 2, %v1756
        %v1758 = vrot.slane %v1745, %v1757
        %v1759 = vlaneseq
        %v1760 = vshrl.u32 %v1759, 7
        %v1761 = vsub.s32 3, %v1760
        %v1762 = vrot.slane %v1745, %v1761
        %v1763 = vlaneseq
        %v1764 = vshrl.u32 %v1763, 7
        %v1765 = vsub.s32 4, %v1764
        %v1766 = vrot.slane %v1745, %v1765
        %v1767 = vlaneseq
        %v1768 = vshrl.u32 %v1767, 7
        %v1769 = vsub.s32 5, %v1768
        %v1770 = vrot.slane %v1745, %v1769
        %v1771 = vlaneseq
        %v1772 = vshrl.u32 %v1771, 7
        %v1773 = vsub.s32 6, %v1772
        %v1774 = vrot.slane %v1745, %v1773
        %v1775 = vlaneseq
        %v1776 = vshrl.u32 %v1775, 7
        %v1777 = vsub.s32 7, %v1776
        %v1778 = vrot.slane %v1745, %v1777
        %v1787 = vpack.c.bf16 %v1750, %v1750
        %v1788 = vpack.c.bf16 %v1754, %v1754
        %v1789 = vpack.c.bf16 %v1758, %v1758
        %v1790 = vpack.c.bf16 %v1762, %v1762
        %v1791 = vpack.c.bf16 %v1766, %v1766
        %v1792 = vpack.c.bf16 %v1770, %v1770
        %v1793 = vpack.c.bf16 %v1774, %v1774
        %v1794 = vpack.c.bf16 %v1778, %v1778
        %v1795 = vld [vmem:[%s7] sm:$0xff]
        %v1796 = vld [vmem:[%s7 + $0x8] sm:$0xff]
        %v1797 = vld [vmem:[%s7 + $0x10] sm:$0xff]
        %v1798 = vld [vmem:[%s7 + $0x18] sm:$0xff]
        %v1799 = vld [vmem:[%s7 + $0x20] sm:$0xff]
        %v1800 = vld [vmem:[%s7 + $0x28] sm:$0xff]
        %v1801 = vld [vmem:[%s7 + $0x30] sm:$0xff]
        %v1802 = vld [vmem:[%s7 + $0x38] sm:$0xff]
        %v1803 = vld [vmem:[%s7 + $0x40] sm:$0xff]
        %v1804 = vld [vmem:[%s7 + $0x48] sm:$0xff]
        %v1805 = vld [vmem:[%s7 + $0x50] sm:$0xff]
        %v1806 = vld [vmem:[%s7 + $0x58] sm:$0xff]
        %v1807 = vld [vmem:[%s7 + $0x60] sm:$0xff]
        %v1808 = vld [vmem:[%s7 + $0x68] sm:$0xff]
        %v1809 = vld [vmem:[%s7 + $0x70] sm:$0xff]
        %v1810 = vld [vmem:[%s7 + $0x78] sm:$0xff]
        %v1811 = vld [vmem:[%s7 + $0x80] sm:$0xff]
        %v1812 = vld [vmem:[%s7 + $0x88] sm:$0xff]
        %v1813 = vld [vmem:[%s7 + $0x90] sm:$0xff]
        %v1814 = vld [vmem:[%s7 + $0x98] sm:$0xff]
        %v1815 = vld [vmem:[%s7 + $0xa0] sm:$0xff]
        %v1816 = vld [vmem:[%s7 + $0xa8] sm:$0xff]
        %v1817 = vld [vmem:[%s7 + $0xb0] sm:$0xff]
        %v1818 = vld [vmem:[%s7 + $0xb8] sm:$0xff]
        %v1819 = vld [vmem:[%s7 + $0xc0] sm:$0xff]
        %v1820 = vld [vmem:[%s7 + $0xc8] sm:$0xff]
        %v1821 = vld [vmem:[%s7 + $0xd0] sm:$0xff]
        %v1822 = vld [vmem:[%s7 + $0xd8] sm:$0xff]
        %v1823 = vld [vmem:[%s7 + $0xe0] sm:$0xff]
        %v1824 = vld [vmem:[%s7 + $0xe8] sm:$0xff]
        %v1825 = vld [vmem:[%s7 + $0xf0] sm:$0xff]
        %v1826 = vld [vmem:[%s7 + $0xf8] sm:$0xff]
        %v1827 = vld [vmem:[%s7 + $0x100] sm:$0xff]
        %v1828 = vld [vmem:[%s7 + $0x108] sm:$0xff]
        %v1829 = vld [vmem:[%s7 + $0x110] sm:$0xff]
        %v1830 = vld [vmem:[%s7 + $0x118] sm:$0xff]
        %v1831 = vld [vmem:[%s7 + $0x120] sm:$0xff]
        %v1832 = vld [vmem:[%s7 + $0x128] sm:$0xff]
        %v1833 = vld [vmem:[%s7 + $0x130] sm:$0xff]
        %v1834 = vld [vmem:[%s7 + $0x138] sm:$0xff]
        %v1835 = vld [vmem:[%s7 + $0x140] sm:$0xff]
        %v1836 = vld [vmem:[%s7 + $0x148] sm:$0xff]
        %v1837 = vld [vmem:[%s7 + $0x150] sm:$0xff]
        %v1838 = vld [vmem:[%s7 + $0x158] sm:$0xff]
        %v1839 = vld [vmem:[%s7 + $0x160] sm:$0xff]
        %v1840 = vld [vmem:[%s7 + $0x168] sm:$0xff]
        %v1841 = vld [vmem:[%s7 + $0x170] sm:$0xff]
        %v1842 = vld [vmem:[%s7 + $0x178] sm:$0xff]
        %v1843 = vld [vmem:[%s7 + $0x180] sm:$0xff]
        %v1844 = vld [vmem:[%s7 + $0x188] sm:$0xff]
        %v1845 = vld [vmem:[%s7 + $0x190] sm:$0xff]
        %v1846 = vld [vmem:[%s7 + $0x198] sm:$0xff]
        %v1847 = vld [vmem:[%s7 + $0x1a0] sm:$0xff]
        %v1848 = vld [vmem:[%s7 + $0x1a8] sm:$0xff]
        %v1849 = vld [vmem:[%s7 + $0x1b0] sm:$0xff]
        %v1850 = vld [vmem:[%s7 + $0x1b8] sm:$0xff]
        %v1851 = vld [vmem:[%s7 + $0x1c0] sm:$0xff]
        %v1852 = vld [vmem:[%s7 + $0x1c8] sm:$0xff]
        %v1853 = vld [vmem:[%s7 + $0x1d0] sm:$0xff]
        %v1854 = vld [vmem:[%s7 + $0x1d8] sm:$0xff]
        %v1855 = vld [vmem:[%s7 + $0x1e0] sm:$0xff]
        %v1856 = vld [vmem:[%s7 + $0x1e8] sm:$0xff]
        %v1857 = vld [vmem:[%s7 + $0x1f0] sm:$0xff]
        %v1858 = vld [vmem:[%s7 + $0x1f8] sm:$0xff]
        %v1859 = vld [vmem:[%s7 + $0x200] sm:$0xff]
        %v1860 = vld [vmem:[%s7 + $0x208] sm:$0xff]
        %v1861 = vld [vmem:[%s7 + $0x210] sm:$0xff]
        %v1862 = vld [vmem:[%s7 + $0x218] sm:$0xff]
        %v1863 = vld [vmem:[%s7 + $0x220] sm:$0xff]
        %v1864 = vld [vmem:[%s7 + $0x228] sm:$0xff]
        %v1865 = vld [vmem:[%s7 + $0x230] sm:$0xff]
        %v1866 = vld [vmem:[%s7 + $0x238] sm:$0xff]
        %v1867 = vld [vmem:[%s7 + $0x240] sm:$0xff]
        %v1868 = vld [vmem:[%s7 + $0x248] sm:$0xff]
        %v1869 = vld [vmem:[%s7 + $0x250] sm:$0xff]
        %v1870 = vld [vmem:[%s7 + $0x258] sm:$0xff]
        %v1871 = vld [vmem:[%s7 + $0x260] sm:$0xff]
        %v1872 = vld [vmem:[%s7 + $0x268] sm:$0xff]
        %v1873 = vld [vmem:[%s7 + $0x270] sm:$0xff]
        %v1874 = vld [vmem:[%s7 + $0x278] sm:$0xff]
        %v1875 = vld [vmem:[%s7 + $0x280] sm:$0xff]
        %v1876 = vld [vmem:[%s7 + $0x288] sm:$0xff]
        %v1877 = vld [vmem:[%s7 + $0x290] sm:$0xff]
        %v1878 = vld [vmem:[%s7 + $0x298] sm:$0xff]
        %v1879 = vld [vmem:[%s7 + $0x2a0] sm:$0xff]
        %v1880 = vld [vmem:[%s7 + $0x2a8] sm:$0xff]
        %v1881 = vld [vmem:[%s7 + $0x2b0] sm:$0xff]
        %v1882 = vld [vmem:[%s7 + $0x2b8] sm:$0xff]
        %v1883 = vld [vmem:[%s7 + $0x2c0] sm:$0xff]
        %v1884 = vld [vmem:[%s7 + $0x2c8] sm:$0xff]
        %v1885 = vld [vmem:[%s7 + $0x2d0] sm:$0xff]
        %v1886 = vld [vmem:[%s7 + $0x2d8] sm:$0xff]
        %v1887 = vld [vmem:[%s7 + $0x2e0] sm:$0xff]
        %v1888 = vld [vmem:[%s7 + $0x2e8] sm:$0xff]
        %v1889 = vld [vmem:[%s7 + $0x2f0] sm:$0xff]
        %v1890 = vld [vmem:[%s7 + $0x2f8] sm:$0xff]
        %v1891 = vld [vmem:[%s7 + $0x300] sm:$0xff]
        %v1892 = vld [vmem:[%s7 + $0x308] sm:$0xff]
        %v1893 = vld [vmem:[%s7 + $0x310] sm:$0xff]
        %v1894 = vld [vmem:[%s7 + $0x318] sm:$0xff]
        %v1895 = vld [vmem:[%s7 + $0x320] sm:$0xff]
        %v1896 = vld [vmem:[%s7 + $0x328] sm:$0xff]
        %v1897 = vld [vmem:[%s7 + $0x330] sm:$0xff]
        %v1898 = vld [vmem:[%s7 + $0x338] sm:$0xff]
        %v1899 = vld [vmem:[%s7 + $0x340] sm:$0xff]
        %v1900 = vld [vmem:[%s7 + $0x348] sm:$0xff]
        %v1901 = vld [vmem:[%s7 + $0x350] sm:$0xff]
        %v1902 = vld [vmem:[%s7 + $0x358] sm:$0xff]
        %v1903 = vld [vmem:[%s7 + $0x360] sm:$0xff]
        %v1904 = vld [vmem:[%s7 + $0x368] sm:$0xff]
        %v1905 = vld [vmem:[%s7 + $0x370] sm:$0xff]
        %v1906 = vld [vmem:[%s7 + $0x378] sm:$0xff]
        %v1907 = vld [vmem:[%s7 + $0x380] sm:$0xff]
        %v1908 = vld [vmem:[%s7 + $0x388] sm:$0xff]
        %v1909 = vld [vmem:[%s7 + $0x390] sm:$0xff]
        %v1910 = vld [vmem:[%s7 + $0x398] sm:$0xff]
        %v1911 = vld [vmem:[%s7 + $0x3a0] sm:$0xff]
        %v1912 = vld [vmem:[%s7 + $0x3a8] sm:$0xff]
        %v1913 = vld [vmem:[%s7 + $0x3b0] sm:$0xff]
        %v1914 = vld [vmem:[%s7 + $0x3b8] sm:$0xff]
        %v1915 = vld [vmem:[%s7 + $0x3c0] sm:$0xff]
        %v1916 = vld [vmem:[%s7 + $0x3c8] sm:$0xff]
        %v1917 = vld [vmem:[%s7 + $0x3d0] sm:$0xff]
        %v1918 = vld [vmem:[%s7 + $0x3d8] sm:$0xff]
        %v1919 = vld [vmem:[%s7 + $0x3e0] sm:$0xff]
        %v1920 = vld [vmem:[%s7 + $0x3e8] sm:$0xff]
        %v1921 = vld [vmem:[%s7 + $0x3f0] sm:$0xff]
        %v1922 = vld [vmem:[%s7 + $0x3f8] sm:$0xff]
        %v1923 = vld [vmem:[%s7 + $0x400] sm:$0xff]
        %v1924 = vld [vmem:[%s7 + $0x408] sm:$0xff]
        %v1925 = vld [vmem:[%s7 + $0x410] sm:$0xff]
        %v1926 = vld [vmem:[%s7 + $0x418] sm:$0xff]
        %v1927 = vld [vmem:[%s7 + $0x420] sm:$0xff]
        %v1928 = vld [vmem:[%s7 + $0x428] sm:$0xff]
        %v1929 = vld [vmem:[%s7 + $0x430] sm:$0xff]
        %v1930 = vld [vmem:[%s7 + $0x438] sm:$0xff]
        %v1931 = vld [vmem:[%s7 + $0x440] sm:$0xff]
        %v1932 = vld [vmem:[%s7 + $0x448] sm:$0xff]
        %v1933 = vld [vmem:[%s7 + $0x450] sm:$0xff]
        %v1934 = vld [vmem:[%s7 + $0x458] sm:$0xff]
        %v1935 = vld [vmem:[%s7 + $0x460] sm:$0xff]
        %v1936 = vld [vmem:[%s7 + $0x468] sm:$0xff]
        %v1937 = vld [vmem:[%s7 + $0x470] sm:$0xff]
        %v1938 = vld [vmem:[%s7 + $0x478] sm:$0xff]
        %v1939 = vld [vmem:[%s7 + $0x480] sm:$0xff]
        %v1940 = vld [vmem:[%s7 + $0x488] sm:$0xff]
        %v1941 = vld [vmem:[%s7 + $0x490] sm:$0xff]
        %v1942 = vld [vmem:[%s7 + $0x498] sm:$0xff]
        %v1943 = vld [vmem:[%s7 + $0x4a0] sm:$0xff]
        %v1944 = vld [vmem:[%s7 + $0x4a8] sm:$0xff]
        %v1945 = vld [vmem:[%s7 + $0x4b0] sm:$0xff]
        %v1946 = vld [vmem:[%s7 + $0x4b8] sm:$0xff]
        %v1947 = vld [vmem:[%s7 + $0x4c0] sm:$0xff]
        %v1948 = vld [vmem:[%s7 + $0x4c8] sm:$0xff]
        %v1949 = vld [vmem:[%s7 + $0x4d0] sm:$0xff]
        %v1950 = vld [vmem:[%s7 + $0x4d8] sm:$0xff]
        %v1951 = vld [vmem:[%s7 + $0x4e0] sm:$0xff]
        %v1952 = vld [vmem:[%s7 + $0x4e8] sm:$0xff]
        %v1953 = vld [vmem:[%s7 + $0x4f0] sm:$0xff]
        %v1954 = vld [vmem:[%s7 + $0x4f8] sm:$0xff]
        %v1955 = vld [vmem:[%s7 + $0x500] sm:$0xff]
        %v1956 = vld [vmem:[%s7 + $0x508] sm:$0xff]
        %v1957 = vld [vmem:[%s7 + $0x510] sm:$0xff]
        %v1958 = vld [vmem:[%s7 + $0x518] sm:$0xff]
        %v1959 = vld [vmem:[%s7 + $0x520] sm:$0xff]
        %v1960 = vld [vmem:[%s7 + $0x528] sm:$0xff]
        %v1961 = vld [vmem:[%s7 + $0x530] sm:$0xff]
        %v1962 = vld [vmem:[%s7 + $0x538] sm:$0xff]
        %v1963 = vld [vmem:[%s7 + $0x540] sm:$0xff]
        %v1964 = vld [vmem:[%s7 + $0x548] sm:$0xff]
        %v1965 = vld [vmem:[%s7 + $0x550] sm:$0xff]
        %v1966 = vld [vmem:[%s7 + $0x558] sm:$0xff]
        %v1967 = vld [vmem:[%s7 + $0x560] sm:$0xff]
        %v1968 = vld [vmem:[%s7 + $0x568] sm:$0xff]
        %v1969 = vld [vmem:[%s7 + $0x570] sm:$0xff]
        %v1970 = vld [vmem:[%s7 + $0x578] sm:$0xff]
        %v1971 = vld [vmem:[%s7 + $0x580] sm:$0xff]
        %v1972 = vld [vmem:[%s7 + $0x588] sm:$0xff]
        %v1973 = vld [vmem:[%s7 + $0x590] sm:$0xff]
        %v1974 = vld [vmem:[%s7 + $0x598] sm:$0xff]
        %v1975 = vld [vmem:[%s7 + $0x5a0] sm:$0xff]
        %v1976 = vld [vmem:[%s7 + $0x5a8] sm:$0xff]
        %v1977 = vld [vmem:[%s7 + $0x5b0] sm:$0xff]
        %v1978 = vld [vmem:[%s7 + $0x5b8] sm:$0xff]
        %v1979 = vld [vmem:[%s7 + $0x5c0] sm:$0xff]
        %v1980 = vld [vmem:[%s7 + $0x5c8] sm:$0xff]
        %v1981 = vld [vmem:[%s7 + $0x5d0] sm:$0xff]
        %v1982 = vld [vmem:[%s7 + $0x5d8] sm:$0xff]
        %v1983 = vld [vmem:[%s7 + $0x5e0] sm:$0xff]
        %v1984 = vld [vmem:[%s7 + $0x5e8] sm:$0xff]
        %v1985 = vld [vmem:[%s7 + $0x5f0] sm:$0xff]
        %v1986 = vld [vmem:[%s7 + $0x5f8] sm:$0xff]
        %v1987 = vld [vmem:[%s7 + $0x600] sm:$0xff]
        %v1988 = vld [vmem:[%s7 + $0x608] sm:$0xff]
        %v1989 = vld [vmem:[%s7 + $0x610] sm:$0xff]
        %v1990 = vld [vmem:[%s7 + $0x618] sm:$0xff]
        %v1991 = vld [vmem:[%s7 + $0x620] sm:$0xff]
        %v1992 = vld [vmem:[%s7 + $0x628] sm:$0xff]
        %v1993 = vld [vmem:[%s7 + $0x630] sm:$0xff]
        %v1994 = vld [vmem:[%s7 + $0x638] sm:$0xff]
        %v1995 = vld [vmem:[%s7 + $0x640] sm:$0xff]
        %v1996 = vld [vmem:[%s7 + $0x648] sm:$0xff]
        %v1997 = vld [vmem:[%s7 + $0x650] sm:$0xff]
        %v1998 = vld [vmem:[%s7 + $0x658] sm:$0xff]
        %v1999 = vld [vmem:[%s7 + $0x660] sm:$0xff]
        %v2000 = vld [vmem:[%s7 + $0x668] sm:$0xff]
        %v2001 = vld [vmem:[%s7 + $0x670] sm:$0xff]
        %v2002 = vld [vmem:[%s7 + $0x678] sm:$0xff]
        %v2003 = vld [vmem:[%s7 + $0x680] sm:$0xff]
        %v2004 = vld [vmem:[%s7 + $0x688] sm:$0xff]
        %v2005 = vld [vmem:[%s7 + $0x690] sm:$0xff]
        %v2006 = vld [vmem:[%s7 + $0x698] sm:$0xff]
        %v2007 = vld [vmem:[%s7 + $0x6a0] sm:$0xff]
        %v2008 = vld [vmem:[%s7 + $0x6a8] sm:$0xff]
        %v2009 = vld [vmem:[%s7 + $0x6b0] sm:$0xff]
        %v2010 = vld [vmem:[%s7 + $0x6b8] sm:$0xff]
        %v2011 = vld [vmem:[%s7 + $0x6c0] sm:$0xff]
        %v2012 = vld [vmem:[%s7 + $0x6c8] sm:$0xff]
        %v2013 = vld [vmem:[%s7 + $0x6d0] sm:$0xff]
        %v2014 = vld [vmem:[%s7 + $0x6d8] sm:$0xff]
        %v2015 = vld [vmem:[%s7 + $0x6e0] sm:$0xff]
        %v2016 = vld [vmem:[%s7 + $0x6e8] sm:$0xff]
        %v2017 = vld [vmem:[%s7 + $0x6f0] sm:$0xff]
        %v2018 = vld [vmem:[%s7 + $0x6f8] sm:$0xff]
        %v2019 = vld [vmem:[%s7 + $0x700] sm:$0xff]
        %v2020 = vld [vmem:[%s7 + $0x708] sm:$0xff]
        %v2021 = vld [vmem:[%s7 + $0x710] sm:$0xff]
        %v2022 = vld [vmem:[%s7 + $0x718] sm:$0xff]
        %v2023 = vld [vmem:[%s7 + $0x720] sm:$0xff]
        %v2024 = vld [vmem:[%s7 + $0x728] sm:$0xff]
        %v2025 = vld [vmem:[%s7 + $0x730] sm:$0xff]
        %v2026 = vld [vmem:[%s7 + $0x738] sm:$0xff]
        %v2027 = vld [vmem:[%s7 + $0x740] sm:$0xff]
        %v2028 = vld [vmem:[%s7 + $0x748] sm:$0xff]
        %v2029 = vld [vmem:[%s7 + $0x750] sm:$0xff]
        %v2030 = vld [vmem:[%s7 + $0x758] sm:$0xff]
        %v2031 = vld [vmem:[%s7 + $0x760] sm:$0xff]
        %v2032 = vld [vmem:[%s7 + $0x768] sm:$0xff]
        %v2033 = vld [vmem:[%s7 + $0x770] sm:$0xff]
        %v2034 = vld [vmem:[%s7 + $0x778] sm:$0xff]
        %v2035 = vld [vmem:[%s7 + $0x780] sm:$0xff]
        %v2036 = vld [vmem:[%s7 + $0x788] sm:$0xff]
        %v2037 = vld [vmem:[%s7 + $0x790] sm:$0xff]
        %v2038 = vld [vmem:[%s7 + $0x798] sm:$0xff]
        %v2039 = vld [vmem:[%s7 + $0x7a0] sm:$0xff]
        %v2040 = vld [vmem:[%s7 + $0x7a8] sm:$0xff]
        %v2041 = vld [vmem:[%s7 + $0x7b0] sm:$0xff]
        %v2042 = vld [vmem:[%s7 + $0x7b8] sm:$0xff]
        %v2043 = vld [vmem:[%s7 + $0x7c0] sm:$0xff]
        %v2044 = vld [vmem:[%s7 + $0x7c8] sm:$0xff]
        %v2045 = vld [vmem:[%s7 + $0x7d0] sm:$0xff]
        %v2046 = vld [vmem:[%s7 + $0x7d8] sm:$0xff]
        %v2047 = vld [vmem:[%s7 + $0x7e0] sm:$0xff]
        %v2048 = vld [vmem:[%s7 + $0x7e8] sm:$0xff]
        %v2049 = vld [vmem:[%s7 + $0x7f0] sm:$0xff]
        %v2050 = vld [vmem:[%s7 + $0x7f8] sm:$0xff]
        %v2051 = vld [vmem:[%s8] sm:$0xf]
        %v2308 = vunpack.c.l.b16 %v1795
        %v2309 = vunpack.c.h.b16 %v1795
        %v2310 = vunpack.c.l.b16 %v1796
        %v2311 = vunpack.c.h.b16 %v1796
        %v2312 = vunpack.c.l.b16 %v1797
        %v2313 = vunpack.c.h.b16 %v1797
        %v2314 = vunpack.c.l.b16 %v1798
        %v2315 = vunpack.c.h.b16 %v1798
        %v2316 = vunpack.c.l.b16 %v1799
        %v2317 = vunpack.c.h.b16 %v1799
        %v2318 = vunpack.c.l.b16 %v1800
        %v2319 = vunpack.c.h.b16 %v1800
        %v2320 = vunpack.c.l.b16 %v1801
        %v2321 = vunpack.c.h.b16 %v1801
        %v2322 = vunpack.c.l.b16 %v1802
        %v2323 = vunpack.c.h.b16 %v1802
        %v2324 = vunpack.c.l.b16 %v1803
        %v2325 = vunpack.c.h.b16 %v1803
        %v2326 = vunpack.c.l.b16 %v1804
        %v2327 = vunpack.c.h.b16 %v1804
        %v2328 = vunpack.c.l.b16 %v1805
        %v2329 = vunpack.c.h.b16 %v1805
        %v2330 = vunpack.c.l.b16 %v1806
        %v2331 = vunpack.c.h.b16 %v1806
        %v2332 = vunpack.c.l.b16 %v1807
        %v2333 = vunpack.c.h.b16 %v1807
        %v2334 = vunpack.c.l.b16 %v1808
        %v2335 = vunpack.c.h.b16 %v1808
        %v2336 = vunpack.c.l.b16 %v1809
        %v2337 = vunpack.c.h.b16 %v1809
        %v2338 = vunpack.c.l.b16 %v1810
        %v2339 = vunpack.c.h.b16 %v1810
        %v2340 = vunpack.c.l.b16 %v1811
        %v2341 = vunpack.c.h.b16 %v1811
        %v2342 = vunpack.c.l.b16 %v1812
        %v2343 = vunpack.c.h.b16 %v1812
        %v2344 = vunpack.c.l.b16 %v1813
        %v2345 = vunpack.c.h.b16 %v1813
        %v2346 = vunpack.c.l.b16 %v1814
        %v2347 = vunpack.c.h.b16 %v1814
        %v2348 = vunpack.c.l.b16 %v1815
        %v2349 = vunpack.c.h.b16 %v1815
        %v2350 = vunpack.c.l.b16 %v1816
        %v2351 = vunpack.c.h.b16 %v1816
        %v2352 = vunpack.c.l.b16 %v1817
        %v2353 = vunpack.c.h.b16 %v1817
        %v2354 = vunpack.c.l.b16 %v1818
        %v2355 = vunpack.c.h.b16 %v1818
        %v2356 = vunpack.c.l.b16 %v1819
        %v2357 = vunpack.c.h.b16 %v1819
        %v2358 = vunpack.c.l.b16 %v1820
        %v2359 = vunpack.c.h.b16 %v1820
        %v2360 = vunpack.c.l.b16 %v1821
        %v2361 = vunpack.c.h.b16 %v1821
        %v2362 = vunpack.c.l.b16 %v1822
        %v2363 = vunpack.c.h.b16 %v1822
        %v2364 = vunpack.c.l.b16 %v1823
        %v2365 = vunpack.c.h.b16 %v1823
        %v2366 = vunpack.c.l.b16 %v1824
        %v2367 = vunpack.c.h.b16 %v1824
        %v2368 = vunpack.c.l.b16 %v1825
        %v2369 = vunpack.c.h.b16 %v1825
        %v2370 = vunpack.c.l.b16 %v1826
        %v2371 = vunpack.c.h.b16 %v1826
        %v2372 = vunpack.c.l.b16 %v1827
        %v2373 = vunpack.c.h.b16 %v1827
        %v2374 = vunpack.c.l.b16 %v1828
        %v2375 = vunpack.c.h.b16 %v1828
        %v2376 = vunpack.c.l.b16 %v1829
        %v2377 = vunpack.c.h.b16 %v1829
        %v2378 = vunpack.c.l.b16 %v1830
        %v2379 = vunpack.c.h.b16 %v1830
        %v2380 = vunpack.c.l.b16 %v1831
        %v2381 = vunpack.c.h.b16 %v1831
        %v2382 = vunpack.c.l.b16 %v1832
        %v2383 = vunpack.c.h.b16 %v1832
        %v2384 = vunpack.c.l.b16 %v1833
        %v2385 = vunpack.c.h.b16 %v1833
        %v2386 = vunpack.c.l.b16 %v1834
        %v2387 = vunpack.c.h.b16 %v1834
        %v2388 = vunpack.c.l.b16 %v1835
        %v2389 = vunpack.c.h.b16 %v1835
        %v2390 = vunpack.c.l.b16 %v1836
        %v2391 = vunpack.c.h.b16 %v1836
        %v2392 = vunpack.c.l.b16 %v1837
        %v2393 = vunpack.c.h.b16 %v1837
        %v2394 = vunpack.c.l.b16 %v1838
        %v2395 = vunpack.c.h.b16 %v1838
        %v2396 = vunpack.c.l.b16 %v1839
        %v2397 = vunpack.c.h.b16 %v1839
        %v2398 = vunpack.c.l.b16 %v1840
        %v2399 = vunpack.c.h.b16 %v1840
        %v2400 = vunpack.c.l.b16 %v1841
        %v2401 = vunpack.c.h.b16 %v1841
        %v2402 = vunpack.c.l.b16 %v1842
        %v2403 = vunpack.c.h.b16 %v1842
        %v2404 = vunpack.c.l.b16 %v1843
        %v2405 = vunpack.c.h.b16 %v1843
        %v2406 = vunpack.c.l.b16 %v1844
        %v2407 = vunpack.c.h.b16 %v1844
        %v2408 = vunpack.c.l.b16 %v1845
        %v2409 = vunpack.c.h.b16 %v1845
        %v2410 = vunpack.c.l.b16 %v1846
        %v2411 = vunpack.c.h.b16 %v1846
        %v2412 = vunpack.c.l.b16 %v1847
        %v2413 = vunpack.c.h.b16 %v1847
        %v2414 = vunpack.c.l.b16 %v1848
        %v2415 = vunpack.c.h.b16 %v1848
        %v2416 = vunpack.c.l.b16 %v1849
        %v2417 = vunpack.c.h.b16 %v1849
        %v2418 = vunpack.c.l.b16 %v1850
        %v2419 = vunpack.c.h.b16 %v1850
        %v2420 = vunpack.c.l.b16 %v1851
        %v2421 = vunpack.c.h.b16 %v1851
        %v2422 = vunpack.c.l.b16 %v1852
        %v2423 = vunpack.c.h.b16 %v1852
        %v2424 = vunpack.c.l.b16 %v1853
        %v2425 = vunpack.c.h.b16 %v1853
        %v2426 = vunpack.c.l.b16 %v1854
        %v2427 = vunpack.c.h.b16 %v1854
        %v2428 = vunpack.c.l.b16 %v1855
        %v2429 = vunpack.c.h.b16 %v1855
        %v2430 = vunpack.c.l.b16 %v1856
        %v2431 = vunpack.c.h.b16 %v1856
        %v2432 = vunpack.c.l.b16 %v1857
        %v2433 = vunpack.c.h.b16 %v1857
        %v2434 = vunpack.c.l.b16 %v1858
        %v2435 = vunpack.c.h.b16 %v1858
        %v2436 = vunpack.c.l.b16 %v1859
        %v2437 = vunpack.c.h.b16 %v1859
        %v2438 = vunpack.c.l.b16 %v1860
        %v2439 = vunpack.c.h.b16 %v1860
        %v2440 = vunpack.c.l.b16 %v1861
        %v2441 = vunpack.c.h.b16 %v1861
        %v2442 = vunpack.c.l.b16 %v1862
        %v2443 = vunpack.c.h.b16 %v1862
        %v2444 = vunpack.c.l.b16 %v1863
        %v2445 = vunpack.c.h.b16 %v1863
        %v2446 = vunpack.c.l.b16 %v1864
        %v2447 = vunpack.c.h.b16 %v1864
        %v2448 = vunpack.c.l.b16 %v1865
        %v2449 = vunpack.c.h.b16 %v1865
        %v2450 = vunpack.c.l.b16 %v1866
        %v2451 = vunpack.c.h.b16 %v1866
        %v2452 = vunpack.c.l.b16 %v1867
        %v2453 = vunpack.c.h.b16 %v1867
        %v2454 = vunpack.c.l.b16 %v1868
        %v2455 = vunpack.c.h.b16 %v1868
        %v2456 = vunpack.c.l.b16 %v1869
        %v2457 = vunpack.c.h.b16 %v1869
        %v2458 = vunpack.c.l.b16 %v1870
        %v2459 = vunpack.c.h.b16 %v1870
        %v2460 = vunpack.c.l.b16 %v1871
        %v2461 = vunpack.c.h.b16 %v1871
        %v2462 = vunpack.c.l.b16 %v1872
        %v2463 = vunpack.c.h.b16 %v1872
        %v2464 = vunpack.c.l.b16 %v1873
        %v2465 = vunpack.c.h.b16 %v1873
        %v2466 = vunpack.c.l.b16 %v1874
        %v2467 = vunpack.c.h.b16 %v1874
        %v2468 = vunpack.c.l.b16 %v1875
        %v2469 = vunpack.c.h.b16 %v1875
        %v2470 = vunpack.c.l.b16 %v1876
        %v2471 = vunpack.c.h.b16 %v1876
        %v2472 = vunpack.c.l.b16 %v1877
        %v2473 = vunpack.c.h.b16 %v1877
        %v2474 = vunpack.c.l.b16 %v1878
        %v2475 = vunpack.c.h.b16 %v1878
        %v2476 = vunpack.c.l.b16 %v1879
        %v2477 = vunpack.c.h.b16 %v1879
        %v2478 = vunpack.c.l.b16 %v1880
        %v2479 = vunpack.c.h.b16 %v1880
        %v2480 = vunpack.c.l.b16 %v1881
        %v2481 = vunpack.c.h.b16 %v1881
        %v2482 = vunpack.c.l.b16 %v1882
        %v2483 = vunpack.c.h.b16 %v1882
        %v2484 = vunpack.c.l.b16 %v1883
        %v2485 = vunpack.c.h.b16 %v1883
        %v2486 = vunpack.c.l.b16 %v1884
        %v2487 = vunpack.c.h.b16 %v1884
        %v2488 = vunpack.c.l.b16 %v1885
        %v2489 = vunpack.c.h.b16 %v1885
        %v2490 = vunpack.c.l.b16 %v1886
        %v2491 = vunpack.c.h.b16 %v1886
        %v2492 = vunpack.c.l.b16 %v1887
        %v2493 = vunpack.c.h.b16 %v1887
        %v2494 = vunpack.c.l.b16 %v1888
        %v2495 = vunpack.c.h.b16 %v1888
        %v2496 = vunpack.c.l.b16 %v1889
        %v2497 = vunpack.c.h.b16 %v1889
        %v2498 = vunpack.c.l.b16 %v1890
        %v2499 = vunpack.c.h.b16 %v1890
        %v2500 = vunpack.c.l.b16 %v1891
        %v2501 = vunpack.c.h.b16 %v1891
        %v2502 = vunpack.c.l.b16 %v1892
        %v2503 = vunpack.c.h.b16 %v1892
        %v2504 = vunpack.c.l.b16 %v1893
        %v2505 = vunpack.c.h.b16 %v1893
        %v2506 = vunpack.c.l.b16 %v1894
        %v2507 = vunpack.c.h.b16 %v1894
        %v2508 = vunpack.c.l.b16 %v1895
        %v2509 = vunpack.c.h.b16 %v1895
        %v2510 = vunpack.c.l.b16 %v1896
        %v2511 = vunpack.c.h.b16 %v1896
        %v2512 = vunpack.c.l.b16 %v1897
        %v2513 = vunpack.c.h.b16 %v1897
        %v2514 = vunpack.c.l.b16 %v1898
        %v2515 = vunpack.c.h.b16 %v1898
        %v2516 = vunpack.c.l.b16 %v1899
        %v2517 = vunpack.c.h.b16 %v1899
        %v2518 = vunpack.c.l.b16 %v1900
        %v2519 = vunpack.c.h.b16 %v1900
        %v2520 = vunpack.c.l.b16 %v1901
        %v2521 = vunpack.c.h.b16 %v1901
        %v2522 = vunpack.c.l.b16 %v1902
        %v2523 = vunpack.c.h.b16 %v1902
        %v2524 = vunpack.c.l.b16 %v1903
        %v2525 = vunpack.c.h.b16 %v1903
        %v2526 = vunpack.c.l.b16 %v1904
        %v2527 = vunpack.c.h.b16 %v1904
        %v2528 = vunpack.c.l.b16 %v1905
        %v2529 = vunpack.c.h.b16 %v1905
        %v2530 = vunpack.c.l.b16 %v1906
        %v2531 = vunpack.c.h.b16 %v1906
        %v2532 = vunpack.c.l.b16 %v1907
        %v2533 = vunpack.c.h.b16 %v1907
        %v2534 = vunpack.c.l.b16 %v1908
        %v2535 = vunpack.c.h.b16 %v1908
        %v2536 = vunpack.c.l.b16 %v1909
        %v2537 = vunpack.c.h.b16 %v1909
        %v2538 = vunpack.c.l.b16 %v1910
        %v2539 = vunpack.c.h.b16 %v1910
        %v2540 = vunpack.c.l.b16 %v1911
        %v2541 = vunpack.c.h.b16 %v1911
        %v2542 = vunpack.c.l.b16 %v1912
        %v2543 = vunpack.c.h.b16 %v1912
        %v2544 = vunpack.c.l.b16 %v1913
        %v2545 = vunpack.c.h.b16 %v1913
        %v2546 = vunpack.c.l.b16 %v1914
        %v2547 = vunpack.c.h.b16 %v1914
        %v2548 = vunpack.c.l.b16 %v1915
        %v2549 = vunpack.c.h.b16 %v1915
        %v2550 = vunpack.c.l.b16 %v1916
        %v2551 = vunpack.c.h.b16 %v1916
        %v2552 = vunpack.c.l.b16 %v1917
        %v2553 = vunpack.c.h.b16 %v1917
        %v2554 = vunpack.c.l.b16 %v1918
        %v2555 = vunpack.c.h.b16 %v1918
        %v2556 = vunpack.c.l.b16 %v1919
        %v2557 = vunpack.c.h.b16 %v1919
        %v2558 = vunpack.c.l.b16 %v1920
        %v2559 = vunpack.c.h.b16 %v1920
        %v2560 = vunpack.c.l.b16 %v1921
        %v2561 = vunpack.c.h.b16 %v1921
        %v2562 = vunpack.c.l.b16 %v1922
        %v2563 = vunpack.c.h.b16 %v1922
        %v2564 = vunpack.c.l.b16 %v1923
        %v2565 = vunpack.c.h.b16 %v1923
        %v2566 = vunpack.c.l.b16 %v1924
        %v2567 = vunpack.c.h.b16 %v1924
        %v2568 = vunpack.c.l.b16 %v1925
        %v2569 = vunpack.c.h.b16 %v1925
        %v2570 = vunpack.c.l.b16 %v1926
        %v2571 = vunpack.c.h.b16 %v1926
        %v2572 = vunpack.c.l.b16 %v1927
        %v2573 = vunpack.c.h.b16 %v1927
        %v2574 = vunpack.c.l.b16 %v1928
        %v2575 = vunpack.c.h.b16 %v1928
        %v2576 = vunpack.c.l.b16 %v1929
        %v2577 = vunpack.c.h.b16 %v1929
        %v2578 = vunpack.c.l.b16 %v1930
        %v2579 = vunpack.c.h.b16 %v1930
        %v2580 = vunpack.c.l.b16 %v1931
        %v2581 = vunpack.c.h.b16 %v1931
        %v2582 = vunpack.c.l.b16 %v1932
        %v2583 = vunpack.c.h.b16 %v1932
        %v2584 = vunpack.c.l.b16 %v1933
        %v2585 = vunpack.c.h.b16 %v1933
        %v2586 = vunpack.c.l.b16 %v1934
        %v2587 = vunpack.c.h.b16 %v1934
        %v2588 = vunpack.c.l.b16 %v1935
        %v2589 = vunpack.c.h.b16 %v1935
        %v2590 = vunpack.c.l.b16 %v1936
        %v2591 = vunpack.c.h.b16 %v1936
        %v2592 = vunpack.c.l.b16 %v1937
        %v2593 = vunpack.c.h.b16 %v1937
        %v2594 = vunpack.c.l.b16 %v1938
        %v2595 = vunpack.c.h.b16 %v1938
        %v2596 = vunpack.c.l.b16 %v1939
        %v2597 = vunpack.c.h.b16 %v1939
        %v2598 = vunpack.c.l.b16 %v1940
        %v2599 = vunpack.c.h.b16 %v1940
        %v2600 = vunpack.c.l.b16 %v1941
        %v2601 = vunpack.c.h.b16 %v1941
        %v2602 = vunpack.c.l.b16 %v1942
        %v2603 = vunpack.c.h.b16 %v1942
        %v2604 = vunpack.c.l.b16 %v1943
        %v2605 = vunpack.c.h.b16 %v1943
        %v2606 = vunpack.c.l.b16 %v1944
        %v2607 = vunpack.c.h.b16 %v1944
        %v2608 = vunpack.c.l.b16 %v1945
        %v2609 = vunpack.c.h.b16 %v1945
        %v2610 = vunpack.c.l.b16 %v1946
        %v2611 = vunpack.c.h.b16 %v1946
        %v2612 = vunpack.c.l.b16 %v1947
        %v2613 = vunpack.c.h.b16 %v1947
        %v2614 = vunpack.c.l.b16 %v1948
        %v2615 = vunpack.c.h.b16 %v1948
        %v2616 = vunpack.c.l.b16 %v1949
        %v2617 = vunpack.c.h.b16 %v1949
        %v2618 = vunpack.c.l.b16 %v1950
        %v2619 = vunpack.c.h.b16 %v1950
        %v2620 = vunpack.c.l.b16 %v1951
        %v2621 = vunpack.c.h.b16 %v1951
        %v2622 = vunpack.c.l.b16 %v1952
        %v2623 = vunpack.c.h.b16 %v1952
        %v2624 = vunpack.c.l.b16 %v1953
        %v2625 = vunpack.c.h.b16 %v1953
        %v2626 = vunpack.c.l.b16 %v1954
        %v2627 = vunpack.c.h.b16 %v1954
        %v2628 = vunpack.c.l.b16 %v1955
        %v2629 = vunpack.c.h.b16 %v1955
        %v2630 = vunpack.c.l.b16 %v1956
        %v2631 = vunpack.c.h.b16 %v1956
        %v2632 = vunpack.c.l.b16 %v1957
        %v2633 = vunpack.c.h.b16 %v1957
        %v2634 = vunpack.c.l.b16 %v1958
        %v2635 = vunpack.c.h.b16 %v1958
        %v2636 = vunpack.c.l.b16 %v1959
        %v2637 = vunpack.c.h.b16 %v1959
        %v2638 = vunpack.c.l.b16 %v1960
        %v2639 = vunpack.c.h.b16 %v1960
        %v2640 = vunpack.c.l.b16 %v1961
        %v2641 = vunpack.c.h.b16 %v1961
        %v2642 = vunpack.c.l.b16 %v1962
        %v2643 = vunpack.c.h.b16 %v1962
        %v2644 = vunpack.c.l.b16 %v1963
        %v2645 = vunpack.c.h.b16 %v1963
        %v2646 = vunpack.c.l.b16 %v1964
        %v2647 = vunpack.c.h.b16 %v1964
        %v2648 = vunpack.c.l.b16 %v1965
        %v2649 = vunpack.c.h.b16 %v1965
        %v2650 = vunpack.c.l.b16 %v1966
        %v2651 = vunpack.c.h.b16 %v1966
        %v2652 = vunpack.c.l.b16 %v1967
        %v2653 = vunpack.c.h.b16 %v1967
        %v2654 = vunpack.c.l.b16 %v1968
        %v2655 = vunpack.c.h.b16 %v1968
        %v2656 = vunpack.c.l.b16 %v1969
        %v2657 = vunpack.c.h.b16 %v1969
        %v2658 = vunpack.c.l.b16 %v1970
        %v2659 = vunpack.c.h.b16 %v1970
        %v2660 = vunpack.c.l.b16 %v1971
        %v2661 = vunpack.c.h.b16 %v1971
        %v2662 = vunpack.c.l.b16 %v1972
        %v2663 = vunpack.c.h.b16 %v1972
        %v2664 = vunpack.c.l.b16 %v1973
        %v2665 = vunpack.c.h.b16 %v1973
        %v2666 = vunpack.c.l.b16 %v1974
        %v2667 = vunpack.c.h.b16 %v1974
        %v2668 = vunpack.c.l.b16 %v1975
        %v2669 = vunpack.c.h.b16 %v1975
        %v2670 = vunpack.c.l.b16 %v1976
        %v2671 = vunpack.c.h.b16 %v1976
        %v2672 = vunpack.c.l.b16 %v1977
        %v2673 = vunpack.c.h.b16 %v1977
        %v2674 = vunpack.c.l.b16 %v1978
        %v2675 = vunpack.c.h.b16 %v1978
        %v2676 = vunpack.c.l.b16 %v1979
        %v2677 = vunpack.c.h.b16 %v1979
        %v2678 = vunpack.c.l.b16 %v1980
        %v2679 = vunpack.c.h.b16 %v1980
        %v2680 = vunpack.c.l.b16 %v1981
        %v2681 = vunpack.c.h.b16 %v1981
        %v2682 = vunpack.c.l.b16 %v1982
        %v2683 = vunpack.c.h.b16 %v1982
        %v2684 = vunpack.c.l.b16 %v1983
        %v2685 = vunpack.c.h.b16 %v1983
        %v2686 = vunpack.c.l.b16 %v1984
        %v2687 = vunpack.c.h.b16 %v1984
        %v2688 = vunpack.c.l.b16 %v1985
        %v2689 = vunpack.c.h.b16 %v1985
        %v2690 = vunpack.c.l.b16 %v1986
        %v2691 = vunpack.c.h.b16 %v1986
        %v2692 = vunpack.c.l.b16 %v1987
        %v2693 = vunpack.c.h.b16 %v1987
        %v2694 = vunpack.c.l.b16 %v1988
        %v2695 = vunpack.c.h.b16 %v1988
        %v2696 = vunpack.c.l.b16 %v1989
        %v2697 = vunpack.c.h.b16 %v1989
        %v2698 = vunpack.c.l.b16 %v1990
        %v2699 = vunpack.c.h.b16 %v1990
        %v2700 = vunpack.c.l.b16 %v1991
        %v2701 = vunpack.c.h.b16 %v1991
        %v2702 = vunpack.c.l.b16 %v1992
        %v2703 = vunpack.c.h.b16 %v1992
        %v2704 = vunpack.c.l.b16 %v1993
        %v2705 = vunpack.c.h.b16 %v1993
        %v2706 = vunpack.c.l.b16 %v1994
        %v2707 = vunpack.c.h.b16 %v1994
        %v2708 = vunpack.c.l.b16 %v1995
        %v2709 = vunpack.c.h.b16 %v1995
        %v2710 = vunpack.c.l.b16 %v1996
        %v2711 = vunpack.c.h.b16 %v1996
        %v2712 = vunpack.c.l.b16 %v1997
        %v2713 = vunpack.c.h.b16 %v1997
        %v2714 = vunpack.c.l.b16 %v1998
        %v2715 = vunpack.c.h.b16 %v1998
        %v2716 = vunpack.c.l.b16 %v1999
        %v2717 = vunpack.c.h.b16 %v1999
        %v2718 = vunpack.c.l.b16 %v2000
        %v2719 = vunpack.c.h.b16 %v2000
        %v2720 = vunpack.c.l.b16 %v2001
        %v2721 = vunpack.c.h.b16 %v2001
        %v2722 = vunpack.c.l.b16 %v2002
        %v2723 = vunpack.c.h.b16 %v2002
        %v2724 = vunpack.c.l.b16 %v2003
        %v2725 = vunpack.c.h.b16 %v2003
        %v2726 = vunpack.c.l.b16 %v2004
        %v2727 = vunpack.c.h.b16 %v2004
        %v2728 = vunpack.c.l.b16 %v2005
        %v2729 = vunpack.c.h.b16 %v2005
        %v2730 = vunpack.c.l.b16 %v2006
        %v2731 = vunpack.c.h.b16 %v2006
        %v2732 = vunpack.c.l.b16 %v2007
        %v2733 = vunpack.c.h.b16 %v2007
        %v2734 = vunpack.c.l.b16 %v2008
        %v2735 = vunpack.c.h.b16 %v2008
        %v2736 = vunpack.c.l.b16 %v2009
        %v2737 = vunpack.c.h.b16 %v2009
        %v2738 = vunpack.c.l.b16 %v2010
        %v2739 = vunpack.c.h.b16 %v2010
        %v2740 = vunpack.c.l.b16 %v2011
        %v2741 = vunpack.c.h.b16 %v2011
        %v2742 = vunpack.c.l.b16 %v2012
        %v2743 = vunpack.c.h.b16 %v2012
        %v2744 = vunpack.c.l.b16 %v2013
        %v2745 = vunpack.c.h.b16 %v2013
        %v2746 = vunpack.c.l.b16 %v2014
        %v2747 = vunpack.c.h.b16 %v2014
        %v2748 = vunpack.c.l.b16 %v2015
        %v2749 = vunpack.c.h.b16 %v2015
        %v2750 = vunpack.c.l.b16 %v2016
        %v2751 = vunpack.c.h.b16 %v2016
        %v2752 = vunpack.c.l.b16 %v2017
        %v2753 = vunpack.c.h.b16 %v2017
        %v2754 = vunpack.c.l.b16 %v2018
        %v2755 = vunpack.c.h.b16 %v2018
        %v2756 = vunpack.c.l.b16 %v2019
        %v2757 = vunpack.c.h.b16 %v2019
        %v2758 = vunpack.c.l.b16 %v2020
        %v2759 = vunpack.c.h.b16 %v2020
        %v2760 = vunpack.c.l.b16 %v2021
        %v2761 = vunpack.c.h.b16 %v2021
        %v2762 = vunpack.c.l.b16 %v2022
        %v2763 = vunpack.c.h.b16 %v2022
        %v2764 = vunpack.c.l.b16 %v2023
        %v2765 = vunpack.c.h.b16 %v2023
        %v2766 = vunpack.c.l.b16 %v2024
        %v2767 = vunpack.c.h.b16 %v2024
        %v2768 = vunpack.c.l.b16 %v2025
        %v2769 = vunpack.c.h.b16 %v2025
        %v2770 = vunpack.c.l.b16 %v2026
        %v2771 = vunpack.c.h.b16 %v2026
        %v2772 = vunpack.c.l.b16 %v2027
        %v2773 = vunpack.c.h.b16 %v2027
        %v2774 = vunpack.c.l.b16 %v2028
        %v2775 = vunpack.c.h.b16 %v2028
        %v2776 = vunpack.c.l.b16 %v2029
        %v2777 = vunpack.c.h.b16 %v2029
        %v2778 = vunpack.c.l.b16 %v2030
        %v2779 = vunpack.c.h.b16 %v2030
        %v2780 = vunpack.c.l.b16 %v2031
        %v2781 = vunpack.c.h.b16 %v2031
        %v2782 = vunpack.c.l.b16 %v2032
        %v2783 = vunpack.c.h.b16 %v2032
        %v2784 = vunpack.c.l.b16 %v2033
        %v2785 = vunpack.c.h.b16 %v2033
        %v2786 = vunpack.c.l.b16 %v2034
        %v2787 = vunpack.c.h.b16 %v2034
        %v2788 = vunpack.c.l.b16 %v2035
        %v2789 = vunpack.c.h.b16 %v2035
        %v2790 = vunpack.c.l.b16 %v2036
        %v2791 = vunpack.c.h.b16 %v2036
        %v2792 = vunpack.c.l.b16 %v2037
        %v2793 = vunpack.c.h.b16 %v2037
        %v2794 = vunpack.c.l.b16 %v2038
        %v2795 = vunpack.c.h.b16 %v2038
        %v2796 = vunpack.c.l.b16 %v2039
        %v2797 = vunpack.c.h.b16 %v2039
        %v2798 = vunpack.c.l.b16 %v2040
        %v2799 = vunpack.c.h.b16 %v2040
        %v2800 = vunpack.c.l.b16 %v2041
        %v2801 = vunpack.c.h.b16 %v2041
        %v2802 = vunpack.c.l.b16 %v2042
        %v2803 = vunpack.c.h.b16 %v2042
        %v2804 = vunpack.c.l.b16 %v2043
        %v2805 = vunpack.c.h.b16 %v2043
        %v2806 = vunpack.c.l.b16 %v2044
        %v2807 = vunpack.c.h.b16 %v2044
        %v2808 = vunpack.c.l.b16 %v2045
        %v2809 = vunpack.c.h.b16 %v2045
        %v2810 = vunpack.c.l.b16 %v2046
        %v2811 = vunpack.c.h.b16 %v2046
        %v2812 = vunpack.c.l.b16 %v2047
        %v2813 = vunpack.c.h.b16 %v2047
        %v2814 = vunpack.c.l.b16 %v2048
        %v2815 = vunpack.c.h.b16 %v2048
        %v2816 = vunpack.c.l.b16 %v2049
        %v2817 = vunpack.c.h.b16 %v2049
        %v2818 = vunpack.c.l.b16 %v2050
        %v2819 = vunpack.c.h.b16 %v2050
        %v2820 = vpack.c.b16 %v2312, %v2308
        %v2821 = vpack.c.b16 %v2313, %v2309
        %v2822 = vpack.c.b16 %v2314, %v2310
        %v2823 = vpack.c.b16 %v2315, %v2311
        %v2824 = vpack.c.b16 %v2320, %v2316
        %v2825 = vpack.c.b16 %v2321, %v2317
        %v2826 = vpack.c.b16 %v2322, %v2318
        %v2827 = vpack.c.b16 %v2323, %v2319
        %v2828 = vpack.c.b16 %v2328, %v2324
        %v2829 = vpack.c.b16 %v2329, %v2325
        %v2830 = vpack.c.b16 %v2330, %v2326
        %v2831 = vpack.c.b16 %v2331, %v2327
        %v2832 = vpack.c.b16 %v2336, %v2332
        %v2833 = vpack.c.b16 %v2337, %v2333
        %v2834 = vpack.c.b16 %v2338, %v2334
        %v2835 = vpack.c.b16 %v2339, %v2335
        %v2836 = vpack.c.b16 %v2344, %v2340
        %v2837 = vpack.c.b16 %v2345, %v2341
        %v2838 = vpack.c.b16 %v2346, %v2342
        %v2839 = vpack.c.b16 %v2347, %v2343
        %v2840 = vpack.c.b16 %v2352, %v2348
        %v2841 = vpack.c.b16 %v2353, %v2349
        %v2842 = vpack.c.b16 %v2354, %v2350
        %v2843 = vpack.c.b16 %v2355, %v2351
        %v2844 = vpack.c.b16 %v2360, %v2356
        %v2845 = vpack.c.b16 %v2361, %v2357
        %v2846 = vpack.c.b16 %v2362, %v2358
        %v2847 = vpack.c.b16 %v2363, %v2359
        %v2848 = vpack.c.b16 %v2368, %v2364
        %v2849 = vpack.c.b16 %v2369, %v2365
        %v2850 = vpack.c.b16 %v2370, %v2366
        %v2851 = vpack.c.b16 %v2371, %v2367
        %v2852 = vpack.c.b16 %v2376, %v2372
        %v2853 = vpack.c.b16 %v2377, %v2373
        %v2854 = vpack.c.b16 %v2378, %v2374
        %v2855 = vpack.c.b16 %v2379, %v2375
        %v2856 = vpack.c.b16 %v2384, %v2380
        %v2857 = vpack.c.b16 %v2385, %v2381
        %v2858 = vpack.c.b16 %v2386, %v2382
        %v2859 = vpack.c.b16 %v2387, %v2383
        %v2860 = vpack.c.b16 %v2392, %v2388
        %v2861 = vpack.c.b16 %v2393, %v2389
        %v2862 = vpack.c.b16 %v2394, %v2390
        %v2863 = vpack.c.b16 %v2395, %v2391
        %v2864 = vpack.c.b16 %v2400, %v2396
        %v2865 = vpack.c.b16 %v2401, %v2397
        %v2866 = vpack.c.b16 %v2402, %v2398
        %v2867 = vpack.c.b16 %v2403, %v2399
        %v2868 = vpack.c.b16 %v2408, %v2404
        %v2869 = vpack.c.b16 %v2409, %v2405
        %v2870 = vpack.c.b16 %v2410, %v2406
        %v2871 = vpack.c.b16 %v2411, %v2407
        %v2872 = vpack.c.b16 %v2416, %v2412
        %v2873 = vpack.c.b16 %v2417, %v2413
        %v2874 = vpack.c.b16 %v2418, %v2414
        %v2875 = vpack.c.b16 %v2419, %v2415
        %v2876 = vpack.c.b16 %v2424, %v2420
        %v2877 = vpack.c.b16 %v2425, %v2421
        %v2878 = vpack.c.b16 %v2426, %v2422
        %v2879 = vpack.c.b16 %v2427, %v2423
        %v2880 = vpack.c.b16 %v2432, %v2428
        %v2881 = vpack.c.b16 %v2433, %v2429
        %v2882 = vpack.c.b16 %v2434, %v2430
        %v2883 = vpack.c.b16 %v2435, %v2431
        %v2884 = vpack.c.b16 %v2440, %v2436
        %v2885 = vpack.c.b16 %v2441, %v2437
        %v2886 = vpack.c.b16 %v2442, %v2438
        %v2887 = vpack.c.b16 %v2443, %v2439
        %v2888 = vpack.c.b16 %v2448, %v2444
        %v2889 = vpack.c.b16 %v2449, %v2445
        %v2890 = vpack.c.b16 %v2450, %v2446
        %v2891 = vpack.c.b16 %v2451, %v2447
        %v2892 = vpack.c.b16 %v2456, %v2452
        %v2893 = vpack.c.b16 %v2457, %v2453
        %v2894 = vpack.c.b16 %v2458, %v2454
        %v2895 = vpack.c.b16 %v2459, %v2455
        %v2896 = vpack.c.b16 %v2464, %v2460
        %v2897 = vpack.c.b16 %v2465, %v2461
        %v2898 = vpack.c.b16 %v2466, %v2462
        %v2899 = vpack.c.b16 %v2467, %v2463
        %v2900 = vpack.c.b16 %v2472, %v2468
        %v2901 = vpack.c.b16 %v2473, %v2469
        %v2902 = vpack.c.b16 %v2474, %v2470
        %v2903 = vpack.c.b16 %v2475, %v2471
        %v2904 = vpack.c.b16 %v2480, %v2476
        %v2905 = vpack.c.b16 %v2481, %v2477
        %v2906 = vpack.c.b16 %v2482, %v2478
        %v2907 = vpack.c.b16 %v2483, %v2479
        %v2908 = vpack.c.b16 %v2488, %v2484
        %v2909 = vpack.c.b16 %v2489, %v2485
        %v2910 = vpack.c.b16 %v2490, %v2486
        %v2911 = vpack.c.b16 %v2491, %v2487
        %v2912 = vpack.c.b16 %v2496, %v2492
        %v2913 = vpack.c.b16 %v2497, %v2493
        %v2914 = vpack.c.b16 %v2498, %v2494
        %v2915 = vpack.c.b16 %v2499, %v2495
        %v2916 = vpack.c.b16 %v2504, %v2500
        %v2917 = vpack.c.b16 %v2505, %v2501
        %v2918 = vpack.c.b16 %v2506, %v2502
        %v2919 = vpack.c.b16 %v2507, %v2503
        %v2920 = vpack.c.b16 %v2512, %v2508
        %v2921 = vpack.c.b16 %v2513, %v2509
        %v2922 = vpack.c.b16 %v2514, %v2510
        %v2923 = vpack.c.b16 %v2515, %v2511
        %v2924 = vpack.c.b16 %v2520, %v2516
        %v2925 = vpack.c.b16 %v2521, %v2517
        %v2926 = vpack.c.b16 %v2522, %v2518
        %v2927 = vpack.c.b16 %v2523, %v2519
        %v2928 = vpack.c.b16 %v2528, %v2524
        %v2929 = vpack.c.b16 %v2529, %v2525
        %v2930 = vpack.c.b16 %v2530, %v2526
        %v2931 = vpack.c.b16 %v2531, %v2527
        %v2932 = vpack.c.b16 %v2536, %v2532
        %v2933 = vpack.c.b16 %v2537, %v2533
        %v2934 = vpack.c.b16 %v2538, %v2534
        %v2935 = vpack.c.b16 %v2539, %v2535
        %v2936 = vpack.c.b16 %v2544, %v2540
        %v2937 = vpack.c.b16 %v2545, %v2541
        %v2938 = vpack.c.b16 %v2546, %v2542
        %v2939 = vpack.c.b16 %v2547, %v2543
        %v2940 = vpack.c.b16 %v2552, %v2548
        %v2941 = vpack.c.b16 %v2553, %v2549
        %v2942 = vpack.c.b16 %v2554, %v2550
        %v2943 = vpack.c.b16 %v2555, %v2551
        %v2944 = vpack.c.b16 %v2560, %v2556
        %v2945 = vpack.c.b16 %v2561, %v2557
        %v2946 = vpack.c.b16 %v2562, %v2558
        %v2947 = vpack.c.b16 %v2563, %v2559
        %v2948 = vpack.c.b16 %v2568, %v2564
        %v2949 = vpack.c.b16 %v2569, %v2565
        %v2950 = vpack.c.b16 %v2570, %v2566
        %v2951 = vpack.c.b16 %v2571, %v2567
        %v2952 = vpack.c.b16 %v2576, %v2572
        %v2953 = vpack.c.b16 %v2577, %v2573
        %v2954 = vpack.c.b16 %v2578, %v2574
        %v2955 = vpack.c.b16 %v2579, %v2575
        %v2956 = vpack.c.b16 %v2584, %v2580
        %v2957 = vpack.c.b16 %v2585, %v2581
        %v2958 = vpack.c.b16 %v2586, %v2582
        %v2959 = vpack.c.b16 %v2587, %v2583
        %v2960 = vpack.c.b16 %v2592, %v2588
        %v2961 = vpack.c.b16 %v2593, %v2589
        %v2962 = vpack.c.b16 %v2594, %v2590
        %v2963 = vpack.c.b16 %v2595, %v2591
        %v2964 = vpack.c.b16 %v2600, %v2596
        %v2965 = vpack.c.b16 %v2601, %v2597
        %v2966 = vpack.c.b16 %v2602, %v2598
        %v2967 = vpack.c.b16 %v2603, %v2599
        %v2968 = vpack.c.b16 %v2608, %v2604
        %v2969 = vpack.c.b16 %v2609, %v2605
        %v2970 = vpack.c.b16 %v2610, %v2606
        %v2971 = vpack.c.b16 %v2611, %v2607
        %v2972 = vpack.c.b16 %v2616, %v2612
        %v2973 = vpack.c.b16 %v2617, %v2613
        %v2974 = vpack.c.b16 %v2618, %v2614
        %v2975 = vpack.c.b16 %v2619, %v2615
        %v2976 = vpack.c.b16 %v2624, %v2620
        %v2977 = vpack.c.b16 %v2625, %v2621
        %v2978 = vpack.c.b16 %v2626, %v2622
        %v2979 = vpack.c.b16 %v2627, %v2623
        %v2980 = vpack.c.b16 %v2632, %v2628
        %v2981 = vpack.c.b16 %v2633, %v2629
        %v2982 = vpack.c.b16 %v2634, %v2630
        %v2983 = vpack.c.b16 %v2635, %v2631
        %v2984 = vpack.c.b16 %v2640, %v2636
        %v2985 = vpack.c.b16 %v2641, %v2637
        %v2986 = vpack.c.b16 %v2642, %v2638
        %v2987 = vpack.c.b16 %v2643, %v2639
        %v2988 = vpack.c.b16 %v2648, %v2644
        %v2989 = vpack.c.b16 %v2649, %v2645
        %v2990 = vpack.c.b16 %v2650, %v2646
        %v2991 = vpack.c.b16 %v2651, %v2647
        %v2992 = vpack.c.b16 %v2656, %v2652
        %v2993 = vpack.c.b16 %v2657, %v2653
        %v2994 = vpack.c.b16 %v2658, %v2654
        %v2995 = vpack.c.b16 %v2659, %v2655
        %v2996 = vpack.c.b16 %v2664, %v2660
        %v2997 = vpack.c.b16 %v2665, %v2661
        %v2998 = vpack.c.b16 %v2666, %v2662
        %v2999 = vpack.c.b16 %v2667, %v2663
        %v3000 = vpack.c.b16 %v2672, %v2668
        %v3001 = vpack.c.b16 %v2673, %v2669
        %v3002 = vpack.c.b16 %v2674, %v2670
        %v3003 = vpack.c.b16 %v2675, %v2671
        %v3004 = vpack.c.b16 %v2680, %v2676
        %v3005 = vpack.c.b16 %v2681, %v2677
        %v3006 = vpack.c.b16 %v2682, %v2678
        %v3007 = vpack.c.b16 %v2683, %v2679
        %v3008 = vpack.c.b16 %v2688, %v2684
        %v3009 = vpack.c.b16 %v2689, %v2685
        %v3010 = vpack.c.b16 %v2690, %v2686
        %v3011 = vpack.c.b16 %v2691, %v2687
        %v3012 = vpack.c.b16 %v2696, %v2692
        %v3013 = vpack.c.b16 %v2697, %v2693
        %v3014 = vpack.c.b16 %v2698, %v2694
        %v3015 = vpack.c.b16 %v2699, %v2695
        %v3016 = vpack.c.b16 %v2704, %v2700
        %v3017 = vpack.c.b16 %v2705, %v2701
        %v3018 = vpack.c.b16 %v2706, %v2702
        %v3019 = vpack.c.b16 %v2707, %v2703
        %v3020 = vpack.c.b16 %v2712, %v2708
        %v3021 = vpack.c.b16 %v2713, %v2709
        %v3022 = vpack.c.b16 %v2714, %v2710
        %v3023 = vpack.c.b16 %v2715, %v2711
        %v3024 = vpack.c.b16 %v2720, %v2716
        %v3025 = vpack.c.b16 %v2721, %v2717
        %v3026 = vpack.c.b16 %v2722, %v2718
        %v3027 = vpack.c.b16 %v2723, %v2719
        %v3028 = vpack.c.b16 %v2728, %v2724
        %v3029 = vpack.c.b16 %v2729, %v2725
        %v3030 = vpack.c.b16 %v2730, %v2726
        %v3031 = vpack.c.b16 %v2731, %v2727
        %v3032 = vpack.c.b16 %v2736, %v2732
        %v3033 = vpack.c.b16 %v2737, %v2733
        %v3034 = vpack.c.b16 %v2738, %v2734
        %v3035 = vpack.c.b16 %v2739, %v2735
        %v3036 = vpack.c.b16 %v2744, %v2740
        %v3037 = vpack.c.b16 %v2745, %v2741
        %v3038 = vpack.c.b16 %v2746, %v2742
        %v3039 = vpack.c.b16 %v2747, %v2743
        %v3040 = vpack.c.b16 %v2752, %v2748
        %v3041 = vpack.c.b16 %v2753, %v2749
        %v3042 = vpack.c.b16 %v2754, %v2750
        %v3043 = vpack.c.b16 %v2755, %v2751
        %v3044 = vpack.c.b16 %v2760, %v2756
        %v3045 = vpack.c.b16 %v2761, %v2757
        %v3046 = vpack.c.b16 %v2762, %v2758
        %v3047 = vpack.c.b16 %v2763, %v2759
        %v3048 = vpack.c.b16 %v2768, %v2764
        %v3049 = vpack.c.b16 %v2769, %v2765
        %v3050 = vpack.c.b16 %v2770, %v2766
        %v3051 = vpack.c.b16 %v2771, %v2767
        %v3052 = vpack.c.b16 %v2776, %v2772
        %v3053 = vpack.c.b16 %v2777, %v2773
        %v3054 = vpack.c.b16 %v2778, %v2774
        %v3055 = vpack.c.b16 %v2779, %v2775
        %v3056 = vpack.c.b16 %v2784, %v2780
        %v3057 = vpack.c.b16 %v2785, %v2781
        %v3058 = vpack.c.b16 %v2786, %v2782
        %v3059 = vpack.c.b16 %v2787, %v2783
        %v3060 = vpack.c.b16 %v2792, %v2788
        %v3061 = vpack.c.b16 %v2793, %v2789
        %v3062 = vpack.c.b16 %v2794, %v2790
        %v3063 = vpack.c.b16 %v2795, %v2791
        %v3064 = vpack.c.b16 %v2800, %v2796
        %v3065 = vpack.c.b16 %v2801, %v2797
        %v3066 = vpack.c.b16 %v2802, %v2798
        %v3067 = vpack.c.b16 %v2803, %v2799
        %v3068 = vpack.c.b16 %v2808, %v2804
        %v3069 = vpack.c.b16 %v2809, %v2805
        %v3070 = vpack.c.b16 %v2810, %v2806
        %v3071 = vpack.c.b16 %v2811, %v2807
        %v3072 = vpack.c.b16 %v2816, %v2812
        %v3073 = vpack.c.b16 %v2817, %v2813
        %v3074 = vpack.c.b16 %v2818, %v2814
        %v3075 = vpack.c.b16 %v2819, %v2815
        %v3333 = vlaneseq
        %v3334 = vshrl.u32 %v3333, 7
        %v3335 = vsub.s32 0, %v3334
        %v3336 = vrot.slane %v2051, %v3335
        %v3337 = vlaneseq
        %v3338 = vshrl.u32 %v3337, 7
        %v3339 = vsub.s32 1, %v3338
        %v3340 = vrot.slane %v2051, %v3339
        %v3341 = vlaneseq
        %v3342 = vshrl.u32 %v3341, 7
        %v3343 = vsub.s32 2, %v3342
        %v3344 = vrot.slane %v2051, %v3343
        %v3345 = vlaneseq
        %v3346 = vshrl.u32 %v3345, 7
        %v3347 = vsub.s32 3, %v3346
        %v3348 = vrot.slane %v2051, %v3347
        %3353 = vmatprep.subr.bf16.mxu0 %v2821
        %3354 = vmatpush1.bf16.msra.mxu0 %v2820
        %3355 = vmatprep.subr.bf16.mxu0 %v2825
        %3356 = vmatpush1.bf16.msra.mxu0 %v2824
        %3357 = vmatprep.subr.bf16.mxu0 %v2829
        %3358 = vmatpush1.bf16.msra.mxu0 %v2828
        %3359 = vmatprep.subr.bf16.mxu0 %v2833
        %3360 = vmatpush1.bf16.msra.mxu0 %v2832
        %3361 = vmatprep.subr.bf16.mxu0 %v2837
        %3362 = vmatpush1.bf16.msra.mxu0 %v2836
        %3363 = vmatprep.subr.bf16.mxu0 %v2841
        %3364 = vmatpush1.bf16.msra.mxu0 %v2840
        %3365 = vmatprep.subr.bf16.mxu0 %v2845
        %3366 = vmatpush1.bf16.msra.mxu0 %v2844
        %3367 = vmatprep.subr.bf16.mxu0 %v2849
        %3368 = vmatpush1.bf16.msra.mxu0 %v2848
        %3369 = vmatprep.subr.bf16.mxu0 %v2853
        %3370 = vmatpush1.bf16.msra.mxu0 %v2852
        %3371 = vmatprep.subr.bf16.mxu0 %v2857
        %3372 = vmatpush1.bf16.msra.mxu0 %v2856
        %3373 = vmatprep.subr.bf16.mxu0 %v2861
        %3374 = vmatpush1.bf16.msra.mxu0 %v2860
        %3375 = vmatprep.subr.bf16.mxu0 %v2865
        %3376 = vmatpush1.bf16.msra.mxu0 %v2864
        %3377 = vmatprep.subr.bf16.mxu0 %v2869
        %3378 = vmatpush1.bf16.msra.mxu0 %v2868
        %3379 = vmatprep.subr.bf16.mxu0 %v2873
        %3380 = vmatpush1.bf16.msra.mxu0 %v2872
        %3381 = vmatprep.subr.bf16.mxu0 %v2877
        %3382 = vmatpush1.bf16.msra.mxu0 %v2876
        %3383 = vmatprep.subr.bf16.mxu0 %v2881
        %3384 = vmatpush1.bf16.msra.mxu0 %v2880
        %3385 = vmatprep.mubr.bf16.mxu0 %v1788
        %3386 = vmatmul.mubr.bf16.gmra.mrb[0].mxu0 %v1787
        %v3387 = vpop.f32.mrb[0].mxu0
        %v3388 = vadd.f32 %v3336, %v3387
        %v3389 = vpop.f32.mrb[0].mxu0
        %v3390 = vadd.f32 %v3340, %v3389
        %v3391 = vpop.f32.mrb[0].mxu0
        %v3392 = vpop.f32.mrb[0].mxu0
        %3393 = vdwg.mxu0
        %3394 = vmatprep.subr.bf16.mxu0 %v2885
        %3395 = vmatpush1.bf16.msra.mxu0 %v2884
        %3396 = vmatprep.subr.bf16.mxu0 %v2889
        %3397 = vmatpush1.bf16.msra.mxu0 %v2888
        %3398 = vmatprep.subr.bf16.mxu0 %v2893
        %3399 = vmatpush1.bf16.msra.mxu0 %v2892
        %3400 = vmatprep.subr.bf16.mxu0 %v2897
        %3401 = vmatpush1.bf16.msra.mxu0 %v2896
        %3402 = vmatprep.subr.bf16.mxu0 %v2901
        %3403 = vmatpush1.bf16.msra.mxu0 %v2900
        %3404 = vmatprep.subr.bf16.mxu0 %v2905
        %3405 = vmatpush1.bf16.msra.mxu0 %v2904
        %3406 = vmatprep.subr.bf16.mxu0 %v2909
        %3407 = vmatpush1.bf16.msra.mxu0 %v2908
        %3408 = vmatprep.subr.bf16.mxu0 %v2913
        %3409 = vmatpush1.bf16.msra.mxu0 %v2912
        %3410 = vmatprep.subr.bf16.mxu0 %v2917
        %3411 = vmatpush1.bf16.msra.mxu0 %v2916
        %3412 = vmatprep.subr.bf16.mxu0 %v2921
        %3413 = vmatpush1.bf16.msra.mxu0 %v2920
        %3414 = vmatprep.subr.bf16.mxu0 %v2925
        %3415 = vmatpush1.bf16.msra.mxu0 %v2924
        %3416 = vmatprep.subr.bf16.mxu0 %v2929
        %3417 = vmatpush1.bf16.msra.mxu0 %v2928
        %3418 = vmatprep.subr.bf16.mxu0 %v2933
        %3419 = vmatpush1.bf16.msra.mxu0 %v2932
        %3420 = vmatprep.subr.bf16.mxu0 %v2937
        %3421 = vmatpush1.bf16.msra.mxu0 %v2936
        %3422 = vmatprep.subr.bf16.mxu0 %v2941
        %3423 = vmatpush1.bf16.msra.mxu0 %v2940
        %3424 = vmatprep.subr.bf16.mxu0 %v2945
        %3425 = vmatpush1.bf16.msra.mxu0 %v2944
        %3426 = vmatprep.mubr.bf16.mxu0 %v1790
        %3427 = vmatmul.mubr.bf16.gmra.mrb[0].mxu0 %v1789
        %v3428 = vpop.f32.mrb[0].mxu0
        %v3429 = vadd.f32 %v3388, %v3428
        %v3430 = vpop.f32.mrb[0].mxu0
        %v3431 = vadd.f32 %v3390, %v3430
        %v3432 = vpop.f32.mrb[0].mxu0
        %v3433 = vpop.f32.mrb[0].mxu0
        %3434 = vdwg.mxu0
        %3435 = vmatprep.subr.bf16.mxu0 %v2949
        %3436 = vmatpush1.bf16.msra.mxu0 %v2948
        %3437 = vmatprep.subr.bf16.mxu0 %v2953
        %3438 = vmatpush1.bf16.msra.mxu0 %v2952
        %3439 = vmatprep.subr.bf16.mxu0 %v2957
        %3440 = vmatpush1.bf16.msra.mxu0 %v2956
        %3441 = vmatprep.subr.bf16.mxu0 %v2961
        %3442 = vmatpush1.bf16.msra.mxu0 %v2960
        %3443 = vmatprep.subr.bf16.mxu0 %v2965
        %3444 = vmatpush1.bf16.msra.mxu0 %v2964
        %3445 = vmatprep.subr.bf16.mxu0 %v2969
        %3446 = vmatpush1.bf16.msra.mxu0 %v2968
        %3447 = vmatprep.subr.bf16.mxu0 %v2973
        %3448 = vmatpush1.bf16.msra.mxu0 %v2972
        %3449 = vmatprep.subr.bf16.mxu0 %v2977
        %3450 = vmatpush1.bf16.msra.mxu0 %v2976
        %3451 = vmatprep.subr.bf16.mxu0 %v2981
        %3452 = vmatpush1.bf16.msra.mxu0 %v2980
        %3453 = vmatprep.subr.bf16.mxu0 %v2985
        %3454 = vmatpush1.bf16.msra.mxu0 %v2984
        %3455 = vmatprep.subr.bf16.mxu0 %v2989
        %3456 = vmatpush1.bf16.msra.mxu0 %v2988
        %3457 = vmatprep.subr.bf16.mxu0 %v2993
        %3458 = vmatpush1.bf16.msra.mxu0 %v2992
        %3459 = vmatprep.subr.bf16.mxu0 %v2997
        %3460 = vmatpush1.bf16.msra.mxu0 %v2996
        %3461 = vmatprep.subr.bf16.mxu0 %v3001
        %3462 = vmatpush1.bf16.msra.mxu0 %v3000
        %3463 = vmatprep.subr.bf16.mxu0 %v3005
        %3464 = vmatpush1.bf16.msra.mxu0 %v3004
        %3465 = vmatprep.subr.bf16.mxu0 %v3009
        %3466 = vmatpush1.bf16.msra.mxu0 %v3008
        %3467 = vmatprep.mubr.bf16.mxu0 %v1792
        %3468 = vmatmul.mubr.bf16.gmra.mrb[0].mxu0 %v1791
        %v3469 = vpop.f32.mrb[0].mxu0
        %v3470 = vadd.f32 %v3429, %v3469
        %v3471 = vpop.f32.mrb[0].mxu0
        %v3472 = vadd.f32 %v3431, %v3471
        %v3473 = vpop.f32.mrb[0].mxu0
        %v3474 = vpop.f32.mrb[0].mxu0
        %3475 = vdwg.mxu0
        %3476 = vmatprep.subr.bf16.mxu0 %v3013
        %3477 = vmatpush1.bf16.msra.mxu0 %v3012
        %3478 = vmatprep.subr.bf16.mxu0 %v3017
        %3479 = vmatpush1.bf16.msra.mxu0 %v3016
        %3480 = vmatprep.subr.bf16.mxu0 %v3021
        %3481 = vmatpush1.bf16.msra.mxu0 %v3020
        %3482 = vmatprep.subr.bf16.mxu0 %v3025
        %3483 = vmatpush1.bf16.msra.mxu0 %v3024
        %3484 = vmatprep.subr.bf16.mxu0 %v3029
        %3485 = vmatpush1.bf16.msra.mxu0 %v3028
        %3486 = vmatprep.subr.bf16.mxu0 %v3033
        %3487 = vmatpush1.bf16.msra.mxu0 %v3032
        %3488 = vmatprep.subr.bf16.mxu0 %v3037
        %3489 = vmatpush1.bf16.msra.mxu0 %v3036
        %3490 = vmatprep.subr.bf16.mxu0 %v3041
        %3491 = vmatpush1.bf16.msra.mxu0 %v3040
        %3492 = vmatprep.subr.bf16.mxu0 %v3045
        %3493 = vmatpush1.bf16.msra.mxu0 %v3044
        %3494 = vmatprep.subr.bf16.mxu0 %v3049
        %3495 = vmatpush1.bf16.msra.mxu0 %v3048
        %3496 = vmatprep.subr.bf16.mxu0 %v3053
        %3497 = vmatpush1.bf16.msra.mxu0 %v3052
        %3498 = vmatprep.subr.bf16.mxu0 %v3057
        %3499 = vmatpush1.bf16.msra.mxu0 %v3056
        %3500 = vmatprep.subr.bf16.mxu0 %v3061
        %3501 = vmatpush1.bf16.msra.mxu0 %v3060
        %3502 = vmatprep.subr.bf16.mxu0 %v3065
        %3503 = vmatpush1.bf16.msra.mxu0 %v3064
        %3504 = vmatprep.subr.bf16.mxu0 %v3069
        %3505 = vmatpush1.bf16.msra.mxu0 %v3068
        %3506 = vmatprep.subr.bf16.mxu0 %v3073
        %3507 = vmatpush1.bf16.msra.mxu0 %v3072
        %3508 = vmatprep.mubr.bf16.mxu0 %v1794
        %3509 = vmatmul.mubr.bf16.gmra.mrb[0].mxu0 %v1793
        %v3510 = vpop.f32.mrb[0].mxu0
        %v3511 = vadd.f32 %v3470, %v3510
        %v3512 = vpop.f32.mrb[0].mxu0
        %v3513 = vadd.f32 %v3472, %v3512
        %v3514 = vpop.f32.mrb[0].mxu0
        %v3515 = vpop.f32.mrb[0].mxu0
        %3516 = vdwg.mxu0
        %3517 = vmatprep.subr.bf16.mxu0 %v2823
        %3518 = vmatpush1.bf16.msra.mxu0 %v2822
        %3519 = vmatprep.subr.bf16.mxu0 %v2827
        %3520 = vmatpush1.bf16.msra.mxu0 %v2826
        %3521 = vmatprep.subr.bf16.mxu0 %v2831
        %3522 = vmatpush1.bf16.msra.mxu0 %v2830
        %3523 = vmatprep.subr.bf16.mxu0 %v2835
        %3524 = vmatpush1.bf16.msra.mxu0 %v2834
        %3525 = vmatprep.subr.bf16.mxu0 %v2839
        %3526 = vmatpush1.bf16.msra.mxu0 %v2838
        %3527 = vmatprep.subr.bf16.mxu0 %v2843
        %3528 = vmatpush1.bf16.msra.mxu0 %v2842
        %3529 = vmatprep.subr.bf16.mxu0 %v2847
        %3530 = vmatpush1.bf16.msra.mxu0 %v2846
        %3531 = vmatprep.subr.bf16.mxu0 %v2851
        %3532 = vmatpush1.bf16.msra.mxu0 %v2850
        %3533 = vmatprep.subr.bf16.mxu0 %v2855
        %3534 = vmatpush1.bf16.msra.mxu0 %v2854
        %3535 = vmatprep.subr.bf16.mxu0 %v2859
        %3536 = vmatpush1.bf16.msra.mxu0 %v2858
        %3537 = vmatprep.subr.bf16.mxu0 %v2863
        %3538 = vmatpush1.bf16.msra.mxu0 %v2862
        %3539 = vmatprep.subr.bf16.mxu0 %v2867
        %3540 = vmatpush1.bf16.msra.mxu0 %v2866
        %3541 = vmatprep.subr.bf16.mxu0 %v2871
        %3542 = vmatpush1.bf16.msra.mxu0 %v2870
        %3543 = vmatprep.subr.bf16.mxu0 %v2875
        %3544 = vmatpush1.bf16.msra.mxu0 %v2874
        %3545 = vmatprep.subr.bf16.mxu0 %v2879
        %3546 = vmatpush1.bf16.msra.mxu0 %v2878
        %3547 = vmatprep.subr.bf16.mxu0 %v2883
        %3548 = vmatpush1.bf16.msra.mxu0 %v2882
        %3549 = vmatprep.mubr.bf16.mxu0 %v1788
        %3550 = vmatmul.mubr.bf16.gmra.mrb[0].mxu0 %v1787
        %v3551 = vpop.f32.mrb[0].mxu0
        %v3552 = vadd.f32 %v3344, %v3551
        %v3553 = vpop.f32.mrb[0].mxu0
        %v3554 = vadd.f32 %v3348, %v3553
        %v3555 = vpop.f32.mrb[0].mxu0
        %v3556 = vpop.f32.mrb[0].mxu0
        %3557 = vdwg.mxu0
        %3558 = vmatprep.subr.bf16.mxu0 %v2887
        %3559 = vmatpush1.bf16.msra.mxu0 %v2886
        %3560 = vmatprep.subr.bf16.mxu0 %v2891
        %3561 = vmatpush1.bf16.msra.mxu0 %v2890
        %3562 = vmatprep.subr.bf16.mxu0 %v2895
        %3563 = vmatpush1.bf16.msra.mxu0 %v2894
        %3564 = vmatprep.subr.bf16.mxu0 %v2899
        %3565 = vmatpush1.bf16.msra.mxu0 %v2898
        %3566 = vmatprep.subr.bf16.mxu0 %v2903
        %3567 = vmatpush1.bf16.msra.mxu0 %v2902
        %3568 = vmatprep.subr.bf16.mxu0 %v2907
        %3569 = vmatpush1.bf16.msra.mxu0 %v2906
        %3570 = vmatprep.subr.bf16.mxu0 %v2911
        %3571 = vmatpush1.bf16.msra.mxu0 %v2910
        %3572 = vmatprep.subr.bf16.mxu0 %v2915
        %3573 = vmatpush1.bf16.msra.mxu0 %v2914
        %3574 = vmatprep.subr.bf16.mxu0 %v2919
        %3575 = vmatpush1.bf16.msra.mxu0 %v2918
        %3576 = vmatprep.subr.bf16.mxu0 %v2923
        %3577 = vmatpush1.bf16.msra.mxu0 %v2922
        %3578 = vmatprep.subr.bf16.mxu0 %v2927
        %3579 = vmatpush1.bf16.msra.mxu0 %v2926
        %3580 = vmatprep.subr.bf16.mxu0 %v2931
        %3581 = vmatpush1.bf16.msra.mxu0 %v2930
        %3582 = vmatprep.subr.bf16.mxu0 %v2935
        %3583 = vmatpush1.bf16.msra.mxu0 %v2934
        %3584 = vmatprep.subr.bf16.mxu0 %v2939
        %3585 = vmatpush1.bf16.msra.mxu0 %v2938
        %3586 = vmatprep.subr.bf16.mxu0 %v2943
        %3587 = vmatpush1.bf16.msra.mxu0 %v2942
        %3588 = vmatprep.subr.bf16.mxu0 %v2947
        %3589 = vmatpush1.bf16.msra.mxu0 %v2946
        %3590 = vmatprep.mubr.bf16.mxu0 %v1790
        %3591 = vmatmul.mubr.bf16.gmra.mrb[0].mxu0 %v1789
        %v3592 = vpop.f32.mrb[0].mxu0
        %v3593 = vadd.f32 %v3552, %v3592
        %v3594 = vpop.f32.mrb[0].mxu0
        %v3595 = vadd.f32 %v3554, %v3594
        %v3596 = vpop.f32.mrb[0].mxu0
        %v3597 = vpop.f32.mrb[0].mxu0
        %3598 = vdwg.mxu0
        %3599 = vmatprep.subr.bf16.mxu0 %v2951
        %3600 = vmatpush1.bf16.msra.mxu0 %v2950
        %3601 = vmatprep.subr.bf16.mxu0 %v2955
        %3602 = vmatpush1.bf16.msra.mxu0 %v2954
        %3603 = vmatprep.subr.bf16.mxu0 %v2959
        %3604 = vmatpush1.bf16.msra.mxu0 %v2958
        %3605 = vmatprep.subr.bf16.mxu0 %v2963
        %3606 = vmatpush1.bf16.msra.mxu0 %v2962
        %3607 = vmatprep.subr.bf16.mxu0 %v2967
        %3608 = vmatpush1.bf16.msra.mxu0 %v2966
        %3609 = vmatprep.subr.bf16.mxu0 %v2971
        %3610 = vmatpush1.bf16.msra.mxu0 %v2970
        %3611 = vmatprep.subr.bf16.mxu0 %v2975
        %3612 = vmatpush1.bf16.msra.mxu0 %v2974
        %3613 = vmatprep.subr.bf16.mxu0 %v2979
        %3614 = vmatpush1.bf16.msra.mxu0 %v2978
        %3615 = vmatprep.subr.bf16.mxu0 %v2983
        %3616 = vmatpush1.bf16.msra.mxu0 %v2982
        %3617 = vmatprep.subr.bf16.mxu0 %v2987
        %3618 = vmatpush1.bf16.msra.mxu0 %v2986
        %3619 = vmatprep.subr.bf16.mxu0 %v2991
        %3620 = vmatpush1.bf16.msra.mxu0 %v2990
        %3621 = vmatprep.subr.bf16.mxu0 %v2995
        %3622 = vmatpush1.bf16.msra.mxu0 %v2994
        %3623 = vmatprep.subr.bf16.mxu0 %v2999
        %3624 = vmatpush1.bf16.msra.mxu0 %v2998
        %3625 = vmatprep.subr.bf16.mxu0 %v3003
        %3626 = vmatpush1.bf16.msra.mxu0 %v3002
        %3627 = vmatprep.subr.bf16.mxu0 %v3007
        %3628 = vmatpush1.bf16.msra.mxu0 %v3006
        %3629 = vmatprep.subr.bf16.mxu0 %v3011
        %3630 = vmatpush1.bf16.msra.mxu0 %v3010
        %3631 = vmatprep.mubr.bf16.mxu0 %v1792
        %3632 = vmatmul.mubr.bf16.gmra.mrb[0].mxu0 %v1791
        %v3633 = vpop.f32.mrb[0].mxu0
        %v3634 = vadd.f32 %v3593, %v3633
        %v3635 = vpop.f32.mrb[0].mxu0
        %v3636 = vadd.f32 %v3595, %v3635
        %v3637 = vpop.f32.mrb[0].mxu0
        %v3638 = vpop.f32.mrb[0].mxu0
        %3639 = vdwg.mxu0
        %3640 = vmatprep.subr.bf16.mxu0 %v3015
        %3641 = vmatpush1.bf16.msra.mxu0 %v3014
        %3642 = vmatprep.subr.bf16.mxu0 %v3019
        %3643 = vmatpush1.bf16.msra.mxu0 %v3018
        %3644 = vmatprep.subr.bf16.mxu0 %v3023
        %3645 = vmatpush1.bf16.msra.mxu0 %v3022
        %3646 = vmatprep.subr.bf16.mxu0 %v3027
        %3647 = vmatpush1.bf16.msra.mxu0 %v3026
        %3648 = vmatprep.subr.bf16.mxu0 %v3031
        %3649 = vmatpush1.bf16.msra.mxu0 %v3030
        %3650 = vmatprep.subr.bf16.mxu0 %v3035
        %3651 = vmatpush1.bf16.msra.mxu0 %v3034
        %3652 = vmatprep.subr.bf16.mxu0 %v3039
        %3653 = vmatpush1.bf16.msra.mxu0 %v3038
        %3654 = vmatprep.subr.bf16.mxu0 %v3043
        %3655 = vmatpush1.bf16.msra.mxu0 %v3042
        %3656 = vmatprep.subr.bf16.mxu0 %v3047
        %3657 = vmatpush1.bf16.msra.mxu0 %v3046
        %3658 = vmatprep.subr.bf16.mxu0 %v3051
        %3659 = vmatpush1.bf16.msra.mxu0 %v3050
        %3660 = vmatprep.subr.bf16.mxu0 %v3055
        %3661 = vmatpush1.bf16.msra.mxu0 %v3054
        %3662 = vmatprep.subr.bf16.mxu0 %v3059
        %3663 = vmatpush1.bf16.msra.mxu0 %v3058
        %3664 = vmatprep.subr.bf16.mxu0 %v3063
        %3665 = vmatpush1.bf16.msra.mxu0 %v3062
        %3666 = vmatprep.subr.bf16.mxu0 %v3067
        %3667 = vmatpush1.bf16.msra.mxu0 %v3066
        %3668 = vmatprep.subr.bf16.mxu0 %v3071
        %3669 = vmatpush1.bf16.msra.mxu0 %v3070
        %3670 = vmatprep.subr.bf16.mxu0 %v3075
        %3671 = vmatpush1.bf16.msra.mxu0 %v3074
        %3672 = vmatprep.mubr.bf16.mxu0 %v1794
        %3673 = vmatmul.mubr.bf16.gmra.mrb[0].mxu0 %v1793
        %v3674 = vpop.f32.mrb[0].mxu0
        %v3675 = vadd.f32 %v3634, %v3674
        %v3676 = vpop.f32.mrb[0].mxu0
        %v3677 = vadd.f32 %v3636, %v3676
        %v3678 = vpop.f32.mrb[0].mxu0
        %v3679 = vpop.f32.mrb[0].mxu0
        %3680 = vdwg.mxu0
        %v3681 = vmax.f32 %v3511, 0.0
        %v3682 = vmax.f32 %v3513, 0.0
        %v3683 = vmax.f32 %v3675, 0.0
        %v3684 = vmax.f32 %v3677, 0.0
        %v3685 = vpack.c.bf16 %v3681, %v3681
        %v3686 = vpack.c.bf16 %v3682, %v3682
        %v3687 = vpack.c.bf16 %v3683, %v3683
        %v3688 = vpack.c.bf16 %v3684, %v3684
        %v3689 = vld [vmem:[%s9] sm:$0xff]
        %v3690 = vld [vmem:[%s9 + $0x8] sm:$0xff]
        %v3691 = vld [vmem:[%s9 + $0x10] sm:$0xff]
        %v3692 = vld [vmem:[%s9 + $0x18] sm:$0xff]
        %v3693 = vld [vmem:[%s9 + $0x20] sm:$0xff]
        %v3694 = vld [vmem:[%s9 + $0x28] sm:$0xff]
        %v3695 = vld [vmem:[%s9 + $0x30] sm:$0xff]
        %v3696 = vld [vmem:[%s9 + $0x38] sm:$0xff]
        %v3697 = vld [vmem:[%s9 + $0x40] sm:$0xff]
        %v3698 = vld [vmem:[%s9 + $0x48] sm:$0xff]
        %v3699 = vld [vmem:[%s9 + $0x50] sm:$0xff]
        %v3700 = vld [vmem:[%s9 + $0x58] sm:$0xff]
        %v3701 = vld [vmem:[%s9 + $0x60] sm:$0xff]
        %v3702 = vld [vmem:[%s9 + $0x68] sm:$0xff]
        %v3703 = vld [vmem:[%s9 + $0x70] sm:$0xff]
        %v3704 = vld [vmem:[%s9 + $0x78] sm:$0xff]
        %v3705 = vld [vmem:[%s9 + $0x80] sm:$0xff]
        %v3706 = vld [vmem:[%s9 + $0x88] sm:$0xff]
        %v3707 = vld [vmem:[%s9 + $0x90] sm:$0xff]
        %v3708 = vld [vmem:[%s9 + $0x98] sm:$0xff]
        %v3709 = vld [vmem:[%s9 + $0xa0] sm:$0xff]
        %v3710 = vld [vmem:[%s9 + $0xa8] sm:$0xff]
        %v3711 = vld [vmem:[%s9 + $0xb0] sm:$0xff]
        %v3712 = vld [vmem:[%s9 + $0xb8] sm:$0xff]
        %v3713 = vld [vmem:[%s9 + $0xc0] sm:$0xff]
        %v3714 = vld [vmem:[%s9 + $0xc8] sm:$0xff]
        %v3715 = vld [vmem:[%s9 + $0xd0] sm:$0xff]
        %v3716 = vld [vmem:[%s9 + $0xd8] sm:$0xff]
        %v3717 = vld [vmem:[%s9 + $0xe0] sm:$0xff]
        %v3718 = vld [vmem:[%s9 + $0xe8] sm:$0xff]
        %v3719 = vld [vmem:[%s9 + $0xf0] sm:$0xff]
        %v3720 = vld [vmem:[%s9 + $0xf8] sm:$0xff]
        %v3721 = vld [vmem:[%s9 + $0x100] sm:$0xff]
        %v3722 = vld [vmem:[%s9 + $0x108] sm:$0xff]
        %v3723 = vld [vmem:[%s9 + $0x110] sm:$0xff]
        %v3724 = vld [vmem:[%s9 + $0x118] sm:$0xff]
        %v3725 = vld [vmem:[%s9 + $0x120] sm:$0xff]
        %v3726 = vld [vmem:[%s9 + $0x128] sm:$0xff]
        %v3727 = vld [vmem:[%s9 + $0x130] sm:$0xff]
        %v3728 = vld [vmem:[%s9 + $0x138] sm:$0xff]
        %v3729 = vld [vmem:[%s9 + $0x140] sm:$0xff]
        %v3730 = vld [vmem:[%s9 + $0x148] sm:$0xff]
        %v3731 = vld [vmem:[%s9 + $0x150] sm:$0xff]
        %v3732 = vld [vmem:[%s9 + $0x158] sm:$0xff]
        %v3733 = vld [vmem:[%s9 + $0x160] sm:$0xff]
        %v3734 = vld [vmem:[%s9 + $0x168] sm:$0xff]
        %v3735 = vld [vmem:[%s9 + $0x170] sm:$0xff]
        %v3736 = vld [vmem:[%s9 + $0x178] sm:$0xff]
        %v3737 = vld [vmem:[%s9 + $0x180] sm:$0xff]
        %v3738 = vld [vmem:[%s9 + $0x188] sm:$0xff]
        %v3739 = vld [vmem:[%s9 + $0x190] sm:$0xff]
        %v3740 = vld [vmem:[%s9 + $0x198] sm:$0xff]
        %v3741 = vld [vmem:[%s9 + $0x1a0] sm:$0xff]
        %v3742 = vld [vmem:[%s9 + $0x1a8] sm:$0xff]
        %v3743 = vld [vmem:[%s9 + $0x1b0] sm:$0xff]
        %v3744 = vld [vmem:[%s9 + $0x1b8] sm:$0xff]
        %v3745 = vld [vmem:[%s9 + $0x1c0] sm:$0xff]
        %v3746 = vld [vmem:[%s9 + $0x1c8] sm:$0xff]
        %v3747 = vld [vmem:[%s9 + $0x1d0] sm:$0xff]
        %v3748 = vld [vmem:[%s9 + $0x1d8] sm:$0xff]
        %v3749 = vld [vmem:[%s9 + $0x1e0] sm:$0xff]
        %v3750 = vld [vmem:[%s9 + $0x1e8] sm:$0xff]
        %v3751 = vld [vmem:[%s9 + $0x1f0] sm:$0xff]
        %v3752 = vld [vmem:[%s9 + $0x1f8] sm:$0xff]
        %v3753 = vld [vmem:[%s10] sm:$0x3]
        %v3818 = vunpack.c.l.b16 %v3689
        %v3819 = vunpack.c.h.b16 %v3689
        %v3820 = vunpack.c.l.b16 %v3690
        %v3821 = vunpack.c.h.b16 %v3690
        %v3822 = vunpack.c.l.b16 %v3691
        %v3823 = vunpack.c.h.b16 %v3691
        %v3824 = vunpack.c.l.b16 %v3692
        %v3825 = vunpack.c.h.b16 %v3692
        %v3826 = vunpack.c.l.b16 %v3693
        %v3827 = vunpack.c.h.b16 %v3693
        %v3828 = vunpack.c.l.b16 %v3694
        %v3829 = vunpack.c.h.b16 %v3694
        %v3830 = vunpack.c.l.b16 %v3695
        %v3831 = vunpack.c.h.b16 %v3695
        %v3832 = vunpack.c.l.b16 %v3696
        %v3833 = vunpack.c.h.b16 %v3696
        %v3834 = vunpack.c.l.b16 %v3697
        %v3835 = vunpack.c.h.b16 %v3697
        %v3836 = vunpack.c.l.b16 %v3698
        %v3837 = vunpack.c.h.b16 %v3698
        %v3838 = vunpack.c.l.b16 %v3699
        %v3839 = vunpack.c.h.b16 %v3699
        %v3840 = vunpack.c.l.b16 %v3700
        %v3841 = vunpack.c.h.b16 %v3700
        %v3842 = vunpack.c.l.b16 %v3701
        %v3843 = vunpack.c.h.b16 %v3701
        %v3844 = vunpack.c.l.b16 %v3702
        %v3845 = vunpack.c.h.b16 %v3702
        %v3846 = vunpack.c.l.b16 %v3703
        %v3847 = vunpack.c.h.b16 %v3703
        %v3848 = vunpack.c.l.b16 %v3704
        %v3849 = vunpack.c.h.b16 %v3704
        %v3850 = vunpack.c.l.b16 %v3705
        %v3851 = vunpack.c.h.b16 %v3705
        %v3852 = vunpack.c.l.b16 %v3706
        %v3853 = vunpack.c.h.b16 %v3706
        %v3854 = vunpack.c.l.b16 %v3707
        %v3855 = vunpack.c.h.b16 %v3707
        %v3856 = vunpack.c.l.b16 %v3708
        %v3857 = vunpack.c.h.b16 %v3708
        %v3858 = vunpack.c.l.b16 %v3709
        %v3859 = vunpack.c.h.b16 %v3709
        %v3860 = vunpack.c.l.b16 %v3710
        %v3861 = vunpack.c.h.b16 %v3710
        %v3862 = vunpack.c.l.b16 %v3711
        %v3863 = vunpack.c.h.b16 %v3711
        %v3864 = vunpack.c.l.b16 %v3712
        %v3865 = vunpack.c.h.b16 %v3712
        %v3866 = vunpack.c.l.b16 %v3713
        %v3867 = vunpack.c.h.b16 %v3713
        %v3868 = vunpack.c.l.b16 %v3714
        %v3869 = vunpack.c.h.b16 %v3714
        %v3870 = vunpack.c.l.b16 %v3715
        %v3871 = vunpack.c.h.b16 %v3715
        %v3872 = vunpack.c.l.b16 %v3716
        %v3873 = vunpack.c.h.b16 %v3716
        %v3874 = vunpack.c.l.b16 %v3717
        %v3875 = vunpack.c.h.b16 %v3717
        %v3876 = vunpack.c.l.b16 %v3718
        %v3877 = vunpack.c.h.b16 %v3718
        %v3878 = vunpack.c.l.b16 %v3719
        %v3879 = vunpack.c.h.b16 %v3719
        %v3880 = vunpack.c.l.b16 %v3720
        %v3881 = vunpack.c.h.b16 %v3720
        %v3882 = vunpack.c.l.b16 %v3721
        %v3883 = vunpack.c.h.b16 %v3721
        %v3884 = vunpack.c.l.b16 %v3722
        %v3885 = vunpack.c.h.b16 %v3722
        %v3886 = vunpack.c.l.b16 %v3723
        %v3887 = vunpack.c.h.b16 %v3723
        %v3888 = vunpack.c.l.b16 %v3724
        %v3889 = vunpack.c.h.b16 %v3724
        %v3890 = vunpack.c.l.b16 %v3725
        %v3891 = vunpack.c.h.b16 %v3725
        %v3892 = vunpack.c.l.b16 %v3726
        %v3893 = vunpack.c.h.b16 %v3726
        %v3894 = vunpack.c.l.b16 %v3727
        %v3895 = vunpack.c.h.b16 %v3727
        %v3896 = vunpack.c.l.b16 %v3728
        %v3897 = vunpack.c.h.b16 %v3728
        %v3898 = vunpack.c.l.b16 %v3729
        %v3899 = vunpack.c.h.b16 %v3729
        %v3900 = vunpack.c.l.b16 %v3730
        %v3901 = vunpack.c.h.b16 %v3730
        %v3902 = vunpack.c.l.b16 %v3731
        %v3903 = vunpack.c.h.b16 %v3731
        %v3904 = vunpack.c.l.b16 %v3732
        %v3905 = vunpack.c.h.b16 %v3732
        %v3906 = vunpack.c.l.b16 %v3733
        %v3907 = vunpack.c.h.b16 %v3733
        %v3908 = vunpack.c.l.b16 %v3734
        %v3909 = vunpack.c.h.b16 %v3734
        %v3910 = vunpack.c.l.b16 %v3735
        %v3911 = vunpack.c.h.b16 %v3735
        %v3912 = vunpack.c.l.b16 %v3736
        %v3913 = vunpack.c.h.b16 %v3736
        %v3914 = vunpack.c.l.b16 %v3737
        %v3915 = vunpack.c.h.b16 %v3737
        %v3916 = vunpack.c.l.b16 %v3738
        %v3917 = vunpack.c.h.b16 %v3738
        %v3918 = vunpack.c.l.b16 %v3739
        %v3919 = vunpack.c.h.b16 %v3739
        %v3920 = vunpack.c.l.b16 %v3740
        %v3921 = vunpack.c.h.b16 %v3740
        %v3922 = vunpack.c.l.b16 %v3741
        %v3923 = vunpack.c.h.b16 %v3741
        %v3924 = vunpack.c.l.b16 %v3742
        %v3925 = vunpack.c.h.b16 %v3742
        %v3926 = vunpack.c.l.b16 %v3743
        %v3927 = vunpack.c.h.b16 %v3743
        %v3928 = vunpack.c.l.b16 %v3744
        %v3929 = vunpack.c.h.b16 %v3744
        %v3930 = vunpack.c.l.b16 %v3745
        %v3931 = vunpack.c.h.b16 %v3745
        %v3932 = vunpack.c.l.b16 %v3746
        %v3933 = vunpack.c.h.b16 %v3746
        %v3934 = vunpack.c.l.b16 %v3747
        %v3935 = vunpack.c.h.b16 %v3747
        %v3936 = vunpack.c.l.b16 %v3748
        %v3937 = vunpack.c.h.b16 %v3748
        %v3938 = vunpack.c.l.b16 %v3749
        %v3939 = vunpack.c.h.b16 %v3749
        %v3940 = vunpack.c.l.b16 %v3750
        %v3941 = vunpack.c.h.b16 %v3750
        %v3942 = vunpack.c.l.b16 %v3751
        %v3943 = vunpack.c.h.b16 %v3751
        %v3944 = vunpack.c.l.b16 %v3752
        %v3945 = vunpack.c.h.b16 %v3752
        %v3946 = vpack.c.b16 %v3820, %v3818
        %v3947 = vpack.c.b16 %v3821, %v3819
        %v3948 = vpack.c.b16 %v3824, %v3822
        %v3949 = vpack.c.b16 %v3825, %v3823
        %v3950 = vpack.c.b16 %v3828, %v3826
        %v3951 = vpack.c.b16 %v3829, %v3827
        %v3952 = vpack.c.b16 %v3832, %v3830
        %v3953 = vpack.c.b16 %v3833, %v3831
        %v3954 = vpack.c.b16 %v3836, %v3834
        %v3955 = vpack.c.b16 %v3837, %v3835
        %v3956 = vpack.c.b16 %v3840, %v3838
        %v3957 = vpack.c.b16 %v3841, %v3839
        %v3958 = vpack.c.b16 %v3844, %v3842
        %v3959 = vpack.c.b16 %v3845, %v3843
        %v3960 = vpack.c.b16 %v3848, %v3846
        %v3961 = vpack.c.b16 %v3849, %v3847
        %v3962 = vpack.c.b16 %v3852, %v3850
        %v3963 = vpack.c.b16 %v3853, %v3851
        %v3964 = vpack.c.b16 %v3856, %v3854
        %v3965 = vpack.c.b16 %v3857, %v3855
        %v3966 = vpack.c.b16 %v3860, %v3858
        %v3967 = vpack.c.b16 %v3861, %v3859
        %v3968 = vpack.c.b16 %v3864, %v3862
        %v3969 = vpack.c.b16 %v3865, %v3863
        %v3970 = vpack.c.b16 %v3868, %v3866
        %v3971 = vpack.c.b16 %v3869, %v3867
        %v3972 = vpack.c.b16 %v3872, %v3870
        %v3973 = vpack.c.b16 %v3873, %v3871
        %v3974 = vpack.c.b16 %v3876, %v3874
        %v3975 = vpack.c.b16 %v3877, %v3875
        %v3976 = vpack.c.b16 %v3880, %v3878
        %v3977 = vpack.c.b16 %v3881, %v3879
        %v3978 = vpack.c.b16 %v3884, %v3882
        %v3979 = vpack.c.b16 %v3885, %v3883
        %v3980 = vpack.c.b16 %v3888, %v3886
        %v3981 = vpack.c.b16 %v3889, %v3887
        %v3982 = vpack.c.b16 %v3892, %v3890
        %v3983 = vpack.c.b16 %v3893, %v3891
        %v3984 = vpack.c.b16 %v3896, %v3894
        %v3985 = vpack.c.b16 %v3897, %v3895
        %v3986 = vpack.c.b16 %v3900, %v3898
        %v3987 = vpack.c.b16 %v3901, %v3899
        %v3988 = vpack.c.b16 %v3904, %v3902
        %v3989 = vpack.c.b16 %v3905, %v3903
        %v3990 = vpack.c.b16 %v3908, %v3906
        %v3991 = vpack.c.b16 %v3909, %v3907
        %v3992 = vpack.c.b16 %v3912, %v3910
        %v3993 = vpack.c.b16 %v3913, %v3911
        %v3994 = vpack.c.b16 %v3916, %v3914
        %v3995 = vpack.c.b16 %v3917, %v3915
        %v3996 = vpack.c.b16 %v3920, %v3918
        %v3997 = vpack.c.b16 %v3921, %v3919
        %v3998 = vpack.c.b16 %v3924, %v3922
        %v3999 = vpack.c.b16 %v3925, %v3923
        %v4000 = vpack.c.b16 %v3928, %v3926
        %v4001 = vpack.c.b16 %v3929, %v3927
        %v4002 = vpack.c.b16 %v3932, %v3930
        %v4003 = vpack.c.b16 %v3933, %v3931
        %v4004 = vpack.c.b16 %v3936, %v3934
        %v4005 = vpack.c.b16 %v3937, %v3935
        %v4006 = vpack.c.b16 %v3940, %v3938
        %v4007 = vpack.c.b16 %v3941, %v3939
        %v4008 = vpack.c.b16 %v3944, %v3942
        %v4009 = vpack.c.b16 %v3945, %v3943
        %v4075 = vlaneseq
        %v4076 = vshrl.u32 %v4075, 7
        %v4077 = vsub.s32 0, %v4076
        %v4078 = vrot.slane %v3753, %v4077
        %v4079 = vlaneseq
        %v4080 = vshrl.u32 %v4079, 7
        %v4081 = vsub.s32 1, %v4080
        %v4082 = vrot.slane %v3753, %v4081
        %4085 = vmatprep.subr.bf16.mxu0 %v3947
        %4086 = vmatpush1.bf16.msra.mxu0 %v3946
        %4087 = vmatprep.subr.bf16.mxu0 %v3949
        %4088 = vmatpush1.bf16.msra.mxu0 %v3948
        %4089 = vmatprep.subr.bf16.mxu0 %v3951
        %4090 = vmatpush1.bf16.msra.mxu0 %v3950
        %4091 = vmatprep.subr.bf16.mxu0 %v3953
        %4092 = vmatpush1.bf16.msra.mxu0 %v3952
        %4093 = vmatprep.subr.bf16.mxu0 %v3955
        %4094 = vmatpush1.bf16.msra.mxu0 %v3954
        %4095 = vmatprep.subr.bf16.mxu0 %v3957
        %4096 = vmatpush1.bf16.msra.mxu0 %v3956
        %4097 = vmatprep.subr.bf16.mxu0 %v3959
        %4098 = vmatpush1.bf16.msra.mxu0 %v3958
        %4099 = vmatprep.subr.bf16.mxu0 %v3961
        %4100 = vmatpush1.bf16.msra.mxu0 %v3960
        %4101 = vmatprep.subr.bf16.mxu0 %v3963
        %4102 = vmatpush1.bf16.msra.mxu0 %v3962
        %4103 = vmatprep.subr.bf16.mxu0 %v3965
        %4104 = vmatpush1.bf16.msra.mxu0 %v3964
        %4105 = vmatprep.subr.bf16.mxu0 %v3967
        %4106 = vmatpush1.bf16.msra.mxu0 %v3966
        %4107 = vmatprep.subr.bf16.mxu0 %v3969
        %4108 = vmatpush1.bf16.msra.mxu0 %v3968
        %4109 = vmatprep.subr.bf16.mxu0 %v3971
        %4110 = vmatpush1.bf16.msra.mxu0 %v3970
        %4111 = vmatprep.subr.bf16.mxu0 %v3973
        %4112 = vmatpush1.bf16.msra.mxu0 %v3972
        %4113 = vmatprep.subr.bf16.mxu0 %v3975
        %4114 = vmatpush1.bf16.msra.mxu0 %v3974
        %4115 = vmatprep.subr.bf16.mxu0 %v3977
        %4116 = vmatpush1.bf16.msra.mxu0 %v3976
        %4117 = vmatprep.mubr.bf16.mxu0 %v3686
        %4118 = vmatmul.mubr.bf16.gmra.mrb[0].mxu0 %v3685
        %v4119 = vpop.f32.mrb[0].mxu0
        %v4120 = vadd.f32 %v4078, %v4119
        %v4121 = vpop.f32.mrb[0].mxu0
        %v4122 = vadd.f32 %v4082, %v4121
        %v4123 = vpop.f32.mrb[0].mxu0
        %v4124 = vpop.f32.mrb[0].mxu0
        %4125 = vdwg.mxu0
        %4126 = vmatprep.subr.bf16.mxu0 %v3979
        %4127 = vmatpush1.bf16.msra.mxu0 %v3978
        %4128 = vmatprep.subr.bf16.mxu0 %v3981
        %4129 = vmatpush1.bf16.msra.mxu0 %v3980
        %4130 = vmatprep.subr.bf16.mxu0 %v3983
        %4131 = vmatpush1.bf16.msra.mxu0 %v3982
        %4132 = vmatprep.subr.bf16.mxu0 %v3985
        %4133 = vmatpush1.bf16.msra.mxu0 %v3984
        %4134 = vmatprep.subr.bf16.mxu0 %v3987
        %4135 = vmatpush1.bf16.msra.mxu0 %v3986
        %4136 = vmatprep.subr.bf16.mxu0 %v3989
        %4137 = vmatpush1.bf16.msra.mxu0 %v3988
        %4138 = vmatprep.subr.bf16.mxu0 %v3991
        %4139 = vmatpush1.bf16.msra.mxu0 %v3990
        %4140 = vmatprep.subr.bf16.mxu0 %v3993
        %4141 = vmatpush1.bf16.msra.mxu0 %v3992
        %4142 = vmatprep.subr.bf16.mxu0 %v3995
        %4143 = vmatpush1.bf16.msra.mxu0 %v3994
        %4144 = vmatprep.subr.bf16.mxu0 %v3997
        %4145 = vmatpush1.bf16.msra.mxu0 %v3996
        %4146 = vmatprep.subr.bf16.mxu0 %v3999
        %4147 = vmatpush1.bf16.msra.mxu0 %v3998
        %4148 = vmatprep.subr.bf16.mxu0 %v4001
        %4149 = vmatpush1.bf16.msra.mxu0 %v4000
        %4150 = vmatprep.subr.bf16.mxu0 %v4003
        %4151 = vmatpush1.bf16.msra.mxu0 %v4002
        %4152 = vmatprep.subr.bf16.mxu0 %v4005
        %4153 = vmatpush1.bf16.msra.mxu0 %v4004
        %4154 = vmatprep.subr.bf16.mxu0 %v4007
        %4155 = vmatpush1.bf16.msra.mxu0 %v4006
        %4156 = vmatprep.subr.bf16.mxu0 %v4009
        %4157 = vmatpush1.bf16.msra.mxu0 %v4008
        %4158 = vmatprep.mubr.bf16.mxu0 %v3688
        %4159 = vmatmul.mubr.bf16.gmra.mrb[0].mxu0 %v3687
        %v4160 = vpop.f32.mrb[0].mxu0
        %v4161 = vadd.f32 %v4120, %v4160
        %v4162 = vpop.f32.mrb[0].mxu0
        %v4163 = vadd.f32 %v4122, %v4162
        %v4164 = vpop.f32.mrb[0].mxu0
        %v4165 = vpop.f32.mrb[0].mxu0
        %4166 = vdwg.mxu0
        %v4167 = vmax.f32 %v4161, 0.0
        %v4168 = vmax.f32 %v4163, 0.0
        %v4169 = vpack.c.bf16 %v4167, %v4167
        %v4170 = vpack.c.bf16 %v4168, %v4168
        %v4171 = vld [vmem:[%s11] sm:$0xf]
        %v4172 = vld [vmem:[%s11 + $0x4] sm:$0xf]
        %v4173 = vld [vmem:[%s11 + $0x8] sm:$0xf]
        %v4174 = vld [vmem:[%s11 + $0xc] sm:$0xf]
        %v4175 = vld [vmem:[%s11 + $0x10] sm:$0xf]
        %v4176 = vld [vmem:[%s11 + $0x14] sm:$0xf]
        %v4177 = vld [vmem:[%s11 + $0x18] sm:$0xf]
        %v4178 = vld [vmem:[%s11 + $0x1c] sm:$0xf]
        %v4179 = vld [vmem:[%s11 + $0x20] sm:$0xf]
        %v4180 = vld [vmem:[%s11 + $0x24] sm:$0xf]
        %v4181 = vld [vmem:[%s11 + $0x28] sm:$0xf]
        %v4182 = vld [vmem:[%s11 + $0x2c] sm:$0xf]
        %v4183 = vld [vmem:[%s11 + $0x30] sm:$0xf]
        %v4184 = vld [vmem:[%s11 + $0x34] sm:$0xf]
        %v4185 = vld [vmem:[%s11 + $0x38] sm:$0xf]
        %v4186 = vld [vmem:[%s11 + $0x3c] sm:$0xf]
        %v4187 = vld [vmem:[%s11 + $0x40] sm:$0xf]
        %v4188 = vld [vmem:[%s11 + $0x44] sm:$0xf]
        %v4189 = vld [vmem:[%s11 + $0x48] sm:$0xf]
        %v4190 = vld [vmem:[%s11 + $0x4c] sm:$0xf]
        %v4191 = vld [vmem:[%s11 + $0x50] sm:$0xf]
        %v4192 = vld [vmem:[%s11 + $0x54] sm:$0xf]
        %v4193 = vld [vmem:[%s11 + $0x58] sm:$0xf]
        %v4194 = vld [vmem:[%s11 + $0x5c] sm:$0xf]
        %v4195 = vld [vmem:[%s11 + $0x60] sm:$0xf]
        %v4196 = vld [vmem:[%s11 + $0x64] sm:$0xf]
        %v4197 = vld [vmem:[%s11 + $0x68] sm:$0xf]
        %v4198 = vld [vmem:[%s11 + $0x6c] sm:$0xf]
        %v4199 = vld [vmem:[%s11 + $0x70] sm:$0xf]
        %v4200 = vld [vmem:[%s11 + $0x74] sm:$0xf]
        %v4201 = vld [vmem:[%s11 + $0x78] sm:$0xf]
        %v4202 = vld [vmem:[%s11 + $0x7c] sm:$0xf]
        %v4203 = vld [vmem:[%s12] sm:$0x1]
        %v4236 = vunpack.c.l.b16 %v4171
        %v4237 = vunpack.c.l.b16 %v4172
        %v4238 = vunpack.c.l.b16 %v4173
        %v4239 = vunpack.c.l.b16 %v4174
        %v4240 = vunpack.c.l.b16 %v4175
        %v4241 = vunpack.c.l.b16 %v4176
        %v4242 = vunpack.c.l.b16 %v4177
        %v4243 = vunpack.c.l.b16 %v4178
        %v4244 = vunpack.c.l.b16 %v4179
        %v4245 = vunpack.c.l.b16 %v4180
        %v4246 = vunpack.c.l.b16 %v4181
        %v4247 = vunpack.c.l.b16 %v4182
        %v4248 = vunpack.c.l.b16 %v4183
        %v4249 = vunpack.c.l.b16 %v4184
        %v4250 = vunpack.c.l.b16 %v4185
        %v4251 = vunpack.c.l.b16 %v4186
        %v4252 = vunpack.c.l.b16 %v4187
        %v4253 = vunpack.c.l.b16 %v4188
        %v4254 = vunpack.c.l.b16 %v4189
        %v4255 = vunpack.c.l.b16 %v4190
        %v4256 = vunpack.c.l.b16 %v4191
        %v4257 = vunpack.c.l.b16 %v4192
        %v4258 = vunpack.c.l.b16 %v4193
        %v4259 = vunpack.c.l.b16 %v4194
        %v4260 = vunpack.c.l.b16 %v4195
        %v4261 = vunpack.c.l.b16 %v4196
        %v4262 = vunpack.c.l.b16 %v4197
        %v4263 = vunpack.c.l.b16 %v4198
        %v4264 = vunpack.c.l.b16 %v4199
        %v4265 = vunpack.c.l.b16 %v4200
        %v4266 = vunpack.c.l.b16 %v4201
        %v4267 = vunpack.c.l.b16 %v4202
        %v4268 = vpack.c.b16 %v4237, %v4236
        %v4269 = vpack.c.b16 %v4239, %v4238
        %v4270 = vpack.c.b16 %v4241, %v4240
        %v4271 = vpack.c.b16 %v4243, %v4242
        %v4272 = vpack.c.b16 %v4245, %v4244
        %v4273 = vpack.c.b16 %v4247, %v4246
        %v4274 = vpack.c.b16 %v4249, %v4248
        %v4275 = vpack.c.b16 %v4251, %v4250
        %v4276 = vpack.c.b16 %v4253, %v4252
        %v4277 = vpack.c.b16 %v4255, %v4254
        %v4278 = vpack.c.b16 %v4257, %v4256
        %v4279 = vpack.c.b16 %v4259, %v4258
        %v4280 = vpack.c.b16 %v4261, %v4260
        %v4281 = vpack.c.b16 %v4263, %v4262
        %v4282 = vpack.c.b16 %v4265, %v4264
        %v4283 = vpack.c.b16 %v4267, %v4266
        %4300 = vmatprep.subr.bf16.mxu0 0
        %4301 = vmatpush1.bf16.msra.mxu0 %v4268
        %4302 = vmatprep.subr.bf16.mxu0 0
        %4303 = vmatpush1.bf16.msra.mxu0 %v4269
        %4304 = vmatprep.subr.bf16.mxu0 0
        %4305 = vmatpush1.bf16.msra.mxu0 %v4270
        %4306 = vmatprep.subr.bf16.mxu0 0
        %4307 = vmatpush1.bf16.msra.mxu0 %v4271
        %4308 = vmatprep.subr.bf16.mxu0 0
        %4309 = vmatpush1.bf16.msra.mxu0 %v4272
        %4310 = vmatprep.subr.bf16.mxu0 0
        %4311 = vmatpush1.bf16.msra.mxu0 %v4273
        %4312 = vmatprep.subr.bf16.mxu0 0
        %4313 = vmatpush1.bf16.msra.mxu0 %v4274
        %4314 = vmatprep.subr.bf16.mxu0 0
        %4315 = vmatpush1.bf16.msra.mxu0 %v4275
        %4316 = vmatprep.subr.bf16.mxu0 0
        %4317 = vmatpush1.bf16.msra.mxu0 %v4276
        %4318 = vmatprep.subr.bf16.mxu0 0
        %4319 = vmatpush1.bf16.msra.mxu0 %v4277
        %4320 = vmatprep.subr.bf16.mxu0 0
        %4321 = vmatpush1.bf16.msra.mxu0 %v4278
        %4322 = vmatprep.subr.bf16.mxu0 0
        %4323 = vmatpush1.bf16.msra.mxu0 %v4279
        %4324 = vmatprep.subr.bf16.mxu0 0
        %4325 = vmatpush1.bf16.msra.mxu0 %v4280
        %4326 = vmatprep.subr.bf16.mxu0 0
        %4327 = vmatpush1.bf16.msra.mxu0 %v4281
        %4328 = vmatprep.subr.bf16.mxu0 0
        %4329 = vmatpush1.bf16.msra.mxu0 %v4282
        %4330 = vmatprep.subr.bf16.mxu0 0
        %4331 = vmatpush1.bf16.msra.mxu0 %v4283
        %4332 = vmatprep.mubr.bf16.mxu0 %v4170
        %4333 = vmatmul.mubr.bf16.gmra.mrb[0].mxu0 %v4169
        %v4334 = vpop.f32.mrb[0].mxu0
        %v4335 = vadd.f32 %v4203, %v4334
        %v4336 = vpop.f32.mrb[0].mxu0
        %v4337 = vpop.f32.mrb[0].mxu0
        %v4338 = vpop.f32.mrb[0].mxu0
        %4339 = vdwg.mxu0
        %vm4340 = vcmask 122880
        %4341 = vst.msk [vmem:[%s464] sm:$0x1] %vm4340, %v4335
      $region84: #{pointnet_densecls_forward.3} parent=71 // pred_fallthru
        _
      %p4342 = scmp.lt.s32.totalorder %s28, 1
      %s4343 = scalar_select %p4342, %s28, 1
      %s4344 = scalar_lea.vmem %s13, %s4343
      // Predicated region
      $region85: #{pointnet_densecls_forward.3} parent=71 // pred_check
        %p4345 = pneg %p334
      $region86: #{pointnet_densecls_forward.3} parent=71 // pred_check_branch
        %4347 = sbr.rel (%p4345) target = $region88
      $region87: #{pointnet_densecls_forward.3} parent=71 // pred_region
        _
      $region88: #{pointnet_densecls_forward.3} parent=71 // pred_fallthru
        _
    $region72: #{pointnet_densecls_forward.3} parent=5 // pred_fallthru
      _
    %p4348 = scmp.le.s32.totalorder 2, %s19
    // Predicated region
    $region89: #{pointnet_densecls_forward.3} parent=5 // pred_check
      %p4349 = pneg %p4348
    $region90: #{pointnet_densecls_forward.3} parent=5 // pred_check_branch
      %4351 = sbr.rel (%p4349) target = $region92
    $region91: #{pointnet_densecls_forward.3} parent=5 // pred_region
      %s4352 = ssub.s32 %s19, 2
      // Predicated region
      $region93: #{pointnet_densecls_forward.3} parent=91 // pred_check
        %p4353 = pneg %p340
      $region94: #{pointnet_densecls_forward.3} parent=91 // pred_check_branch
        %4355 = sbr.rel (%p4353) target = $region96
      $region95: #{pointnet_densecls_forward.3} parent=91 // pred_region
        %p4356 = scmp.lt.s32.totalorder %s30, 1
        %s4357 = scalar_select %p4356, %s30, 1
        %s4358 = scalar_lea.vmem %s13, %s4357
      $region96: #{pointnet_densecls_forward.3} parent=91 // pred_fallthru
        _
    $region92: #{pointnet_densecls_forward.3} parent=5 // pred_fallthru
      _
  $region6: #{pointnet_densecls_forward.3} parent=0 // loop_footer
    %s23 = sadd.s32 1, %s19
  $region7: #{pointnet_densecls_forward.3} parent=0 // loop_footer_branch
    %18 = sbr.rel target = $region3
  $region8: #{pointnet_densecls_forward.3} parent=0 // loop_exit
    _

// kernel: pointnet_densecls_forward.5
$region0: #{pointnet_densecls_forward.5}
  #allocation0 [shape = 'u32[]', space=smem, size = 0x4, offset = 0x4, fixed_abs, tag = 'smem constant byte address 0x4 - core index']
  #allocation1 [shape = 'u32[144,128]{1,0:T(1,128)}', space=vmem, size = 0x12000, scoped, tag = 'internal scratch']
  %s0 = inlined_call_operand.vmem [shape: bf16[2,64,16], index: 0, kind: input, shape index: {}]
  %s1 = inlined_call_operand.vmem [shape: bf16[2,16,64], index: 1, kind: input, shape index: {}]
  %s2 = inlined_call_operand.vmem [shape: f32[1,64], index: 2, kind: input, shape index: {}]
  %s3 = inlined_call_operand.vmem [shape: f32[2,1,1024], index: 3, kind: input, shape index: {}]
  %s4 = inlined_call_operand.vmem [shape: bf16[1024,512], index: 4, kind: input, shape index: {}]
  %s5 = inlined_call_operand.vmem [shape: f32[1,512], index: 5, kind: input, shape index: {}]
  %s6 = inlined_call_operand.vmem [shape: bf16[64,512], index: 6, kind: input, shape index: {}]
  %s7 = inlined_call_operand.vmem [shape: bf16[512,256], index: 7, kind: input, shape index: {}]
  %s8 = inlined_call_operand.vmem [shape: f32[1,256], index: 8, kind: input, shape index: {}]
  %s9 = inlined_call_operand.vmem [shape: bf16[256,128], index: 9, kind: input, shape index: {}]
  %s10 = inlined_call_operand.vmem [shape: f32[1,128], index: 10, kind: input, shape index: {}]
  %s11 = inlined_call_operand.vmem [shape: bf16[128,128], index: 11, kind: input, shape index: {}]
  %s12 = inlined_call_operand.vmem [shape: f32[1,128], index: 12, kind: input, shape index: {}]
  %s13 = inlined_call_operand.vmem [shape: f32[2,64,128], index: 13, kind: output, shape index: {}]
  %s14 = sld [smem:[#allocation0]]
  $region85: #{pointnet_densecls_forward.5} parent=0
    _
  %s16 = ssub.s32 1, %s14
  %s17 = scalar_select 0, %s16, %s14
  loop: start=0, step=1, limit=4
  $region2: #{pointnet_densecls_forward.5} parent=0 // loop_pre_header
    _
  $region3: #{pointnet_densecls_forward.5} parent=0 // loop_header
    %s19 = sphi 0, %s23
    %p20 = scmp.ge.s32.totalorder %s19, 4
    %s26 = sphi 0, %s38
    %s27 = sphi 0, %s34
    %s28 = sphi 0, %s26
    %s29 = sphi 0, %s27
    %s30 = sphi 0, %s28
    %s31 = sphi 0, %s29
    %s43 = sphi 0, %s45
    %s46 = sphi 0, %s43
    %s47 = sphi 0, %s46
    %s63 = sphi 0, %s47
    %s69 = sphi 0, %s71
    %s72 = sphi 0, %s69
    %s73 = sphi 0, %s72
    %s89 = sphi 0, %s73
    %s93 = sphi 0, %s93
    %s95 = sphi 0, %s93
    %s96 = sphi 0, %s95
    %s110 = sphi 0, %s96
    %s116 = sphi 0, %s118
    %s119 = sphi 0, %s116
    %s120 = sphi 0, %s119
    %s136 = sphi 0, %s120
    %s140 = sphi 0, %s140
    %s142 = sphi 0, %s140
    %s143 = sphi 0, %s142
    %s157 = sphi 0, %s143
    %s161 = sphi 0, %s161
    %s163 = sphi 0, %s161
    %s164 = sphi 0, %s163
    %s178 = sphi 0, %s164
    %s182 = sphi 0, %s182
    %s184 = sphi 0, %s182
    %s185 = sphi 0, %s184
    %s199 = sphi 0, %s185
    %s203 = sphi 0, %s203
    %s205 = sphi 0, %s203
    %s206 = sphi 0, %s205
    %s220 = sphi 0, %s206
    %s224 = sphi 0, %s224
    %s226 = sphi 0, %s224
    %s227 = sphi 0, %s226
    %s241 = sphi 0, %s227
    %s245 = sphi 0, %s245
    %s247 = sphi 0, %s245
    %s248 = sphi 0, %s247
    %s262 = sphi 0, %s248
    %s266 = sphi 0, %s266
    %s268 = sphi 0, %s266
    %s269 = sphi 0, %s268
    %s283 = sphi 0, %s269
    %s287 = sphi 0, %s287
    %s289 = sphi 0, %s287
    %s290 = sphi 0, %s289
    %s304 = sphi 0, %s290
    %s308 = sphi 0, %s308
    %s310 = sphi 0, %s308
    %s311 = sphi 0, %s310
    %s325 = sphi 0, %s311
    %s333 = sphi 0, %s335
    %s336 = sphi 0, %s333
    %s337 = sphi 0, %s336
    %s353 = sphi 0, %s337
  $region4: #{pointnet_densecls_forward.5} parent=0 // loop_header_branch
    %22 = sbr.rel (%p20) target = $region8
  $region5: #{pointnet_densecls_forward.5} parent=0 // loop_body
    %s24 = ssub.s32 %s19, 1
    %s25 = ssub.s32 %s19, 2
    %s32 = sadd.s32 1, %s27
    %p33 = scmp.ge.s32.totalorder %s32, 1
    %s34 = scalar_select %p33, 0, %s32
    %s35 = sadd.s32 1, %s26
    %s36 = scalar_select %p33, %s35, %s26
    %p37 = scmp.ge.s32.totalorder %s36, 2
    %s38 = scalar_select %p37, 0, %s36
    %s39 = ssub.s32 %s26, %s38
    %s40 = ssub.s32 %s27, %s34
    %s41 = sor.u32 %s39, %s40
    %p42 = scmp.eq.s32.totalorder %s41, 0
    %s44 = sadd.s32 %s43, 1
    %s45 = scalar_select %p42, %s43, %s44
    %p48 = pneg %p42
    %p49 = scmp.eq.s32.totalorder %s19, 1
    %p50 = por %p48, %p49
    %p51 = scmp.ne.s32.totalorder %s43, %s46
    %p52 = scmp.eq.s32.totalorder %s19, 0
    %p53 = por %p51, %p52
    %p54 = scmp.ne.s32.totalorder %s43, %s46
    %p55 = scmp.eq.s32.totalorder %s24, 1
    %p56 = por %p54, %p55
    %p57 = scmp.ne.s32.totalorder %s46, %s47
    %p58 = scmp.eq.s32.totalorder %s24, 0
    %p59 = por %p57, %p58
    %p60 = scmp.ne.s32.totalorder %s46, %s47
    %p61 = scmp.eq.s32.totalorder %s25, 1
    %p62 = por %p60, %p61
    %p64 = scmp.ne.s32.totalorder %s47, %s63
    %p65 = scmp.eq.s32.totalorder %s25, 0
    %p66 = por %p64, %p65
    %s67 = ssub.s32 %s26, %s38
    %p68 = scmp.eq.s32.totalorder %s67, 0
    %s70 = sadd.s32 %s69, 1
    %s71 = scalar_select %p68, %s69, %s70
    %p74 = pneg %p68
    %p75 = scmp.eq.s32.totalorder %s19, 1
    %p76 = por %p74, %p75
    %p77 = scmp.ne.s32.totalorder %s69, %s72
    %p78 = scmp.eq.s32.totalorder %s19, 0
    %p79 = por %p77, %p78
    %p80 = scmp.ne.s32.totalorder %s69, %s72
    %p81 = scmp.eq.s32.totalorder %s24, 1
    %p82 = por %p80, %p81
    %p83 = scmp.ne.s32.totalorder %s72, %s73
    %p84 = scmp.eq.s32.totalorder %s24, 0
    %p85 = por %p83, %p84
    %p86 = scmp.ne.s32.totalorder %s72, %s73
    %p87 = scmp.eq.s32.totalorder %s25, 1
    %p88 = por %p86, %p87
    %p90 = scmp.ne.s32.totalorder %s73, %s89
    %p91 = scmp.eq.s32.totalorder %s25, 0
    %p92 = por %p90, %p91
    %s94 = sadd.s32 %s93, 1
    %p97 = scmp.eq.s32.totalorder %s19, 1
    %p98 = scmp.ne.s32.totalorder %s93, %s95
    %p99 = scmp.eq.s32.totalorder %s19, 0
    %p100 = por %p98, %p99
    %p101 = scmp.ne.s32.totalorder %s93, %s95
    %p102 = scmp.eq.s32.totalorder %s24, 1
    %p103 = por %p101, %p102
    %p104 = scmp.ne.s32.totalorder %s95, %s96
    %p105 = scmp.eq.s32.totalorder %s24, 0
    %p106 = por %p104, %p105
    %p107 = scmp.ne.s32.totalorder %s95, %s96
    %p108 = scmp.eq.s32.totalorder %s25, 1
    %p109 = por %p107, %p108
    %p111 = scmp.ne.s32.totalorder %s96, %s110
    %p112 = scmp.eq.s32.totalorder %s25, 0
    %p113 = por %p111, %p112
    %s114 = ssub.s32 %s26, %s38
    %p115 = scmp.eq.s32.totalorder %s114, 0
    %s117 = sadd.s32 %s116, 1
    %s118 = scalar_select %p115, %s116, %s117
    %p121 = pneg %p115
    %p122 = scmp.eq.s32.totalorder %s19, 1
    %p123 = por %p121, %p122
    %p124 = scmp.ne.s32.totalorder %s116, %s119
    %p125 = scmp.eq.s32.totalorder %s19, 0
    %p126 = por %p124, %p125
    %p127 = scmp.ne.s32.totalorder %s116, %s119
    %p128 = scmp.eq.s32.totalorder %s24, 1
    %p129 = por %p127, %p128
    %p130 = scmp.ne.s32.totalorder %s119, %s120
    %p131 = scmp.eq.s32.totalorder %s24, 0
    %p132 = por %p130, %p131
    %p133 = scmp.ne.s32.totalorder %s119, %s120
    %p134 = scmp.eq.s32.totalorder %s25, 1
    %p135 = por %p133, %p134
    %p137 = scmp.ne.s32.totalorder %s120, %s136
    %p138 = scmp.eq.s32.totalorder %s25, 0
    %p139 = por %p137, %p138
    %s141 = sadd.s32 %s140, 1
    %p144 = scmp.eq.s32.totalorder %s19, 1
    %p145 = scmp.ne.s32.totalorder %s140, %s142
    %p146 = scmp.eq.s32.totalorder %s19, 0
    %p147 = por %p145, %p146
    %p148 = scmp.ne.s32.totalorder %s140, %s142
    %p149 = scmp.eq.s32.totalorder %s24, 1
    %p150 = por %p148, %p149
    %p151 = scmp.ne.s32.totalorder %s142, %s143
    %p152 = scmp.eq.s32.totalorder %s24, 0
    %p153 = por %p151, %p152
    %p154 = scmp.ne.s32.totalorder %s142, %s143
    %p155 = scmp.eq.s32.totalorder %s25, 1
    %p156 = por %p154, %p155
    %p158 = scmp.ne.s32.totalorder %s143, %s157
    %p159 = scmp.eq.s32.totalorder %s25, 0
    %p160 = por %p158, %p159
    %s162 = sadd.s32 %s161, 1
    %p165 = scmp.eq.s32.totalorder %s19, 1
    %p166 = scmp.ne.s32.totalorder %s161, %s163
    %p167 = scmp.eq.s32.totalorder %s19, 0
    %p168 = por %p166, %p167
    %p169 = scmp.ne.s32.totalorder %s161, %s163
    %p170 = scmp.eq.s32.totalorder %s24, 1
    %p171 = por %p169, %p170
    %p172 = scmp.ne.s32.totalorder %s163, %s164
    %p173 = scmp.eq.s32.totalorder %s24, 0
    %p174 = por %p172, %p173
    %p175 = scmp.ne.s32.totalorder %s163, %s164
    %p176 = scmp.eq.s32.totalorder %s25, 1
    %p177 = por %p175, %p176
    %p179 = scmp.ne.s32.totalorder %s164, %s178
    %p180 = scmp.eq.s32.totalorder %s25, 0
    %p181 = por %p179, %p180
    %s183 = sadd.s32 %s182, 1
    %p186 = scmp.eq.s32.totalorder %s19, 1
    %p187 = scmp.ne.s32.totalorder %s182, %s184
    %p188 = scmp.eq.s32.totalorder %s19, 0
    %p189 = por %p187, %p188
    %p190 = scmp.ne.s32.totalorder %s182, %s184
    %p191 = scmp.eq.s32.totalorder %s24, 1
    %p192 = por %p190, %p191
    %p193 = scmp.ne.s32.totalorder %s184, %s185
    %p194 = scmp.eq.s32.totalorder %s24, 0
    %p195 = por %p193, %p194
    %p196 = scmp.ne.s32.totalorder %s184, %s185
    %p197 = scmp.eq.s32.totalorder %s25, 1
    %p198 = por %p196, %p197
    %p200 = scmp.ne.s32.totalorder %s185, %s199
    %p201 = scmp.eq.s32.totalorder %s25, 0
    %p202 = por %p200, %p201
    %s204 = sadd.s32 %s203, 1
    %p207 = scmp.eq.s32.totalorder %s19, 1
    %p208 = scmp.ne.s32.totalorder %s203, %s205
    %p209 = scmp.eq.s32.totalorder %s19, 0
    %p210 = por %p208, %p209
    %p211 = scmp.ne.s32.totalorder %s203, %s205
    %p212 = scmp.eq.s32.totalorder %s24, 1
    %p213 = por %p211, %p212
    %p214 = scmp.ne.s32.totalorder %s205, %s206
    %p215 = scmp.eq.s32.totalorder %s24, 0
    %p216 = por %p214, %p215
    %p217 = scmp.ne.s32.totalorder %s205, %s206
    %p218 = scmp.eq.s32.totalorder %s25, 1
    %p219 = por %p217, %p218
    %p221 = scmp.ne.s32.totalorder %s206, %s220
    %p222 = scmp.eq.s32.totalorder %s25, 0
    %p223 = por %p221, %p222
    %s225 = sadd.s32 %s224, 1
    %p228 = scmp.eq.s32.totalorder %s19, 1
    %p229 = scmp.ne.s32.totalorder %s224, %s226
    %p230 = scmp.eq.s32.totalorder %s19, 0
    %p231 = por %p229, %p230
    %p232 = scmp.ne.s32.totalorder %s224, %s226
    %p233 = scmp.eq.s32.totalorder %s24, 1
    %p234 = por %p232, %p233
    %p235 = scmp.ne.s32.totalorder %s226, %s227
    %p236 = scmp.eq.s32.totalorder %s24, 0
    %p237 = por %p235, %p236
    %p238 = scmp.ne.s32.totalorder %s226, %s227
    %p239 = scmp.eq.s32.totalorder %s25, 1
    %p240 = por %p238, %p239
    %p242 = scmp.ne.s32.totalorder %s227, %s241
    %p243 = scmp.eq.s32.totalorder %s25, 0
    %p244 = por %p242, %p243
    %s246 = sadd.s32 %s245, 1
    %p249 = scmp.eq.s32.totalorder %s19, 1
    %p250 = scmp.ne.s32.totalorder %s245, %s247
    %p251 = scmp.eq.s32.totalorder %s19, 0
    %p252 = por %p250, %p251
    %p253 = scmp.ne.s32.totalorder %s245, %s247
    %p254 = scmp.eq.s32.totalorder %s24, 1
    %p255 = por %p253, %p254
    %p256 = scmp.ne.s32.totalorder %s247, %s248
    %p257 = scmp.eq.s32.totalorder %s24, 0
    %p258 = por %p256, %p257
    %p259 = scmp.ne.s32.totalorder %s247, %s248
    %p260 = scmp.eq.s32.totalorder %s25, 1
    %p261 = por %p259, %p260
    %p263 = scmp.ne.s32.totalorder %s248, %s262
    %p264 = scmp.eq.s32.totalorder %s25, 0
    %p265 = por %p263, %p264
    %s267 = sadd.s32 %s266, 1
    %p270 = scmp.eq.s32.totalorder %s19, 1
    %p271 = scmp.ne.s32.totalorder %s266, %s268
    %p272 = scmp.eq.s32.totalorder %s19, 0
    %p273 = por %p271, %p272
    %p274 = scmp.ne.s32.totalorder %s266, %s268
    %p275 = scmp.eq.s32.totalorder %s24, 1
    %p276 = por %p274, %p275
    %p277 = scmp.ne.s32.totalorder %s268, %s269
    %p278 = scmp.eq.s32.totalorder %s24, 0
    %p279 = por %p277, %p278
    %p280 = scmp.ne.s32.totalorder %s268, %s269
    %p281 = scmp.eq.s32.totalorder %s25, 1
    %p282 = por %p280, %p281
    %p284 = scmp.ne.s32.totalorder %s269, %s283
    %p285 = scmp.eq.s32.totalorder %s25, 0
    %p286 = por %p284, %p285
    %s288 = sadd.s32 %s287, 1
    %p291 = scmp.eq.s32.totalorder %s19, 1
    %p292 = scmp.ne.s32.totalorder %s287, %s289
    %p293 = scmp.eq.s32.totalorder %s19, 0
    %p294 = por %p292, %p293
    %p295 = scmp.ne.s32.totalorder %s287, %s289
    %p296 = scmp.eq.s32.totalorder %s24, 1
    %p297 = por %p295, %p296
    %p298 = scmp.ne.s32.totalorder %s289, %s290
    %p299 = scmp.eq.s32.totalorder %s24, 0
    %p300 = por %p298, %p299
    %p301 = scmp.ne.s32.totalorder %s289, %s290
    %p302 = scmp.eq.s32.totalorder %s25, 1
    %p303 = por %p301, %p302
    %p305 = scmp.ne.s32.totalorder %s290, %s304
    %p306 = scmp.eq.s32.totalorder %s25, 0
    %p307 = por %p305, %p306
    %s309 = sadd.s32 %s308, 1
    %p312 = scmp.eq.s32.totalorder %s19, 1
    %p313 = scmp.ne.s32.totalorder %s308, %s310
    %p314 = scmp.eq.s32.totalorder %s19, 0
    %p315 = por %p313, %p314
    %p316 = scmp.ne.s32.totalorder %s308, %s310
    %p317 = scmp.eq.s32.totalorder %s24, 1
    %p318 = por %p316, %p317
    %p319 = scmp.ne.s32.totalorder %s310, %s311
    %p320 = scmp.eq.s32.totalorder %s24, 0
    %p321 = por %p319, %p320
    %p322 = scmp.ne.s32.totalorder %s310, %s311
    %p323 = scmp.eq.s32.totalorder %s25, 1
    %p324 = por %p322, %p323
    %p326 = scmp.ne.s32.totalorder %s311, %s325
    %p327 = scmp.eq.s32.totalorder %s25, 0
    %p328 = por %p326, %p327
    %s329 = ssub.s32 %s26, %s38
    %s330 = ssub.s32 %s27, %s34
    %s331 = sor.u32 %s329, %s330
    %p332 = scmp.eq.s32.totalorder %s331, 0
    %s334 = sadd.s32 %s333, 1
    %s335 = scalar_select %p332, %s333, %s334
    %p338 = pneg %p332
    %p339 = scmp.eq.s32.totalorder %s19, 1
    %p340 = por %p338, %p339
    %p341 = scmp.ne.s32.totalorder %s333, %s336
    %p342 = scmp.eq.s32.totalorder %s19, 0
    %p343 = por %p341, %p342
    %p344 = scmp.ne.s32.totalorder %s333, %s336
    %p345 = scmp.eq.s32.totalorder %s24, 1
    %p346 = por %p344, %p345
    %p347 = scmp.ne.s32.totalorder %s336, %s337
    %p348 = scmp.eq.s32.totalorder %s24, 0
    %p349 = por %p347, %p348
    %p350 = scmp.ne.s32.totalorder %s336, %s337
    %p351 = scmp.eq.s32.totalorder %s25, 1
    %p352 = por %p350, %p351
    %p354 = scmp.ne.s32.totalorder %s337, %s353
    %p355 = scmp.eq.s32.totalorder %s25, 0
    %p356 = por %p354, %p355
    %p357 = scmp.le.s32.totalorder 1, %s19
    %p358 = scmp.lt.s32.totalorder %s19, 3
    %p359 = pnand %p357, %p358
    %p360 = pneg %p359
    // Predicated region
    $region9: #{pointnet_densecls_forward.5} parent=5 // pred_check
      _
    $region10: #{pointnet_densecls_forward.5} parent=5 // pred_check_branch
      %362 = sbr.rel (%p359) target = $region12
    $region11: #{pointnet_densecls_forward.5} parent=5 // pred_region
      %s363 = ssub.s32 %s19, 1
      // Predicated region
      $region13: #{pointnet_densecls_forward.5} parent=11 // pred_check
        %p364 = pneg %p106
      $region14: #{pointnet_densecls_forward.5} parent=11 // pred_check_branch
        %366 = sbr.rel (%p364) target = $region16
      $region15: #{pointnet_densecls_forward.5} parent=11 // pred_region
        _
      $region16: #{pointnet_densecls_forward.5} parent=11 // pred_fallthru
        _
      // Predicated region
      $region17: #{pointnet_densecls_forward.5} parent=11 // pred_check
        %p367 = pneg %p153
      $region18: #{pointnet_densecls_forward.5} parent=11 // pred_check_branch
        %369 = sbr.rel (%p367) target = $region20
      $region19: #{pointnet_densecls_forward.5} parent=11 // pred_region
        _
      $region20: #{pointnet_densecls_forward.5} parent=11 // pred_fallthru
        _
      // Predicated region
      $region21: #{pointnet_densecls_forward.5} parent=11 // pred_check
        %p370 = pneg %p174
      $region22: #{pointnet_densecls_forward.5} parent=11 // pred_check_branch
        %372 = sbr.rel (%p370) target = $region24
      $region23: #{pointnet_densecls_forward.5} parent=11 // pred_region
        _
      $region24: #{pointnet_densecls_forward.5} parent=11 // pred_fallthru
        _
      // Predicated region
      $region25: #{pointnet_densecls_forward.5} parent=11 // pred_check
        %p373 = pneg %p195
      $region26: #{pointnet_densecls_forward.5} parent=11 // pred_check_branch
        %375 = sbr.rel (%p373) target = $region28
      $region27: #{pointnet_densecls_forward.5} parent=11 // pred_region
        _
      $region28: #{pointnet_densecls_forward.5} parent=11 // pred_fallthru
        _
      // Predicated region
      $region29: #{pointnet_densecls_forward.5} parent=11 // pred_check
        %p376 = pneg %p216
      $region30: #{pointnet_densecls_forward.5} parent=11 // pred_check_branch
        %378 = sbr.rel (%p376) target = $region32
      $region31: #{pointnet_densecls_forward.5} parent=11 // pred_region
        _
      $region32: #{pointnet_densecls_forward.5} parent=11 // pred_fallthru
        _
      // Predicated region
      $region33: #{pointnet_densecls_forward.5} parent=11 // pred_check
        %p379 = pneg %p237
      $region34: #{pointnet_densecls_forward.5} parent=11 // pred_check_branch
        %381 = sbr.rel (%p379) target = $region36
      $region35: #{pointnet_densecls_forward.5} parent=11 // pred_region
        _
      $region36: #{pointnet_densecls_forward.5} parent=11 // pred_fallthru
        _
      // Predicated region
      $region37: #{pointnet_densecls_forward.5} parent=11 // pred_check
        %p382 = pneg %p258
      $region38: #{pointnet_densecls_forward.5} parent=11 // pred_check_branch
        %384 = sbr.rel (%p382) target = $region40
      $region39: #{pointnet_densecls_forward.5} parent=11 // pred_region
        _
      $region40: #{pointnet_densecls_forward.5} parent=11 // pred_fallthru
        _
      // Predicated region
      $region41: #{pointnet_densecls_forward.5} parent=11 // pred_check
        %p385 = pneg %p279
      $region42: #{pointnet_densecls_forward.5} parent=11 // pred_check_branch
        %387 = sbr.rel (%p385) target = $region44
      $region43: #{pointnet_densecls_forward.5} parent=11 // pred_region
        _
      $region44: #{pointnet_densecls_forward.5} parent=11 // pred_fallthru
        _
      // Predicated region
      $region45: #{pointnet_densecls_forward.5} parent=11 // pred_check
        %p388 = pneg %p300
      $region46: #{pointnet_densecls_forward.5} parent=11 // pred_check_branch
        %390 = sbr.rel (%p388) target = $region48
      $region47: #{pointnet_densecls_forward.5} parent=11 // pred_region
        _
      $region48: #{pointnet_densecls_forward.5} parent=11 // pred_fallthru
        _
      // Predicated region
      $region49: #{pointnet_densecls_forward.5} parent=11 // pred_check
        %p391 = pneg %p321
      $region50: #{pointnet_densecls_forward.5} parent=11 // pred_check_branch
        %393 = sbr.rel (%p391) target = $region52
      $region51: #{pointnet_densecls_forward.5} parent=11 // pred_region
        _
      $region52: #{pointnet_densecls_forward.5} parent=11 // pred_fallthru
        _
    $region12: #{pointnet_densecls_forward.5} parent=5 // pred_fallthru
      _
    %p394 = scmp.lt.s32.totalorder %s19, 2
    // Predicated region
    $region53: #{pointnet_densecls_forward.5} parent=5 // pred_check
      %p395 = pneg %p394
    $region54: #{pointnet_densecls_forward.5} parent=5 // pred_check_branch
      %397 = sbr.rel (%p395) target = $region56
    $region55: #{pointnet_densecls_forward.5} parent=5 // pred_region
      // Predicated region
      $region57: #{pointnet_densecls_forward.5} parent=55 // pred_check
        %p398 = pneg %p53
      $region58: #{pointnet_densecls_forward.5} parent=55 // pred_check_branch
        %400 = sbr.rel (%p398) target = $region60
      $region59: #{pointnet_densecls_forward.5} parent=55 // pred_region
        %s401 = smul.u32 8, %s27
        %p402 = scmp.lt.s32.totalorder %s26, 1
        %s403 = scalar_select %p402, %s26, 1
        %p404 = scmp.lt.s32.totalorder %s401, 7
        %s405 = scalar_select %p404, %s401, 7
        %s406 = smul.addr %s403, 8
        %s407 = sadd.s32 %s405, %s406
        %s408 = smul.addr %s407, 4
        %s409 = scalar_lea.vmem %s0, %s408
        %s410 = smul.u32 8, %s27
      $region60: #{pointnet_densecls_forward.5} parent=55 // pred_fallthru
        _
      // Predicated region
      $region61: #{pointnet_densecls_forward.5} parent=55 // pred_check
        %p411 = pneg %p79
      $region62: #{pointnet_densecls_forward.5} parent=55 // pred_check_branch
        %413 = sbr.rel (%p411) target = $region64
      $region63: #{pointnet_densecls_forward.5} parent=55 // pred_region
        %p414 = scmp.lt.s32.totalorder %s26, 1
        %s415 = scalar_select %p414, %s26, 1
        %s416 = smul.addr %s415, 2
        %s417 = smul.addr %s416, 4
        %s418 = scalar_lea.vmem %s1, %s417
      $region64: #{pointnet_densecls_forward.5} parent=55 // pred_fallthru
        _
      // Predicated region
      $region65: #{pointnet_densecls_forward.5} parent=55 // pred_check
        %p419 = pneg %p126
      $region66: #{pointnet_densecls_forward.5} parent=55 // pred_check_branch
        %421 = sbr.rel (%p419) target = $region68
      $region67: #{pointnet_densecls_forward.5} parent=55 // pred_region
        %p422 = scmp.lt.s32.totalorder %s26, 1
        %s423 = scalar_select %p422, %s26, 1
        %s424 = smul.addr %s423, 8
        %s425 = scalar_lea.vmem %s3, %s424
      $region68: #{pointnet_densecls_forward.5} parent=55 // pred_fallthru
        _
    $region56: #{pointnet_densecls_forward.5} parent=5 // pred_fallthru
      _
    %p426 = scmp.le.s32.totalorder 1, %s19
    %p427 = scmp.lt.s32.totalorder %s19, 3
    %p428 = pnand %p426, %p427
    %p429 = pneg %p428
    // Predicated region
    $region69: #{pointnet_densecls_forward.5} parent=5 // pred_check
      _
    $region70: #{pointnet_densecls_forward.5} parent=5 // pred_check_branch
      %431 = sbr.rel (%p428) target = $region72
    $region71: #{pointnet_densecls_forward.5} parent=5 // pred_region
      %s432 = ssub.s32 %s19, 1
      %s433 = smul.u32 8, %s29
      %p434 = scmp.lt.s32.totalorder %s28, 1
      %s435 = scalar_select %p434, %s28, 1
      %p436 = scmp.lt.s32.totalorder %s433, 7
      %s437 = scalar_select %p436, %s433, 7
      %s438 = smul.addr %s435, 8
      %s439 = sadd.s32 %s437, %s438
      %s440 = smul.addr %s439, 4
      %s441 = scalar_lea.vmem %s0, %s440
      %p442 = pneg %p59
      %p443 = pneg %p56
      %p444 = scmp.lt.s32.totalorder %s28, 1
      %s445 = scalar_select %p444, %s28, 1
      %s446 = smul.addr %s445, 2
      %s447 = smul.addr %s446, 4
      %s448 = scalar_lea.vmem %s1, %s447
      %p449 = pneg %p85
      %p450 = pneg %p82
      %p451 = pneg %p106
      %p452 = pneg %p103
      %p453 = scmp.lt.s32.totalorder %s28, 1
      %s454 = scalar_select %p453, %s28, 1
      %s455 = smul.addr %s454, 8
      %s456 = scalar_lea.vmem %s3, %s455
      %p457 = pneg %p132
      %p458 = pneg %p129
      %p459 = pneg %p153
      %p460 = pneg %p150
      %p461 = pneg %p174
      %p462 = pneg %p171
      %p463 = pneg %p195
      %p464 = pneg %p192
      %p465 = pneg %p216
      %p466 = pneg %p213
      %p467 = pneg %p237
      %p468 = pneg %p234
      %p469 = pneg %p258
      %p470 = pneg %p255
      %p471 = pneg %p279
      %p472 = pneg %p276
      %p473 = pneg %p300
      %p474 = pneg %p297
      %p475 = pneg %p321
      %p476 = pneg %p318
      %p477 = pneg %p349
      %p478 = pneg %p346
      %s479 = smul.u32 8, %s29
      %p480 = scmp.lt.s32.totalorder %s28, 1
      %s481 = scalar_select %p480, %s28, 1
      %p482 = scmp.lt.s32.totalorder %s479, 7
      %s483 = scalar_select %p482, %s479, 7
      %s484 = smul.addr %s481, 8
      %s485 = sadd.s32 %s483, %s484
      %s486 = smul.addr %s485, 8
      %s487 = scalar_lea.vmem %s13, %s486
      %s488 = smul.u32 8, %s29
      %p489 = scmp.lt.s32.totalorder %s28, 1
      %s490 = scalar_select %p489, %s28, 1
      %p491 = scmp.lt.s32.totalorder %s488, 7
      %s492 = scalar_select %p491, %s488, 7
      %s493 = smul.addr %s490, 8
      %s494 = sadd.s32 %s492, %s493
      %s495 = smul.addr %s494, 4
      %s496 = scalar_lea.vmem %s0, %s495
      %s497 = smul.u32 8, %s29
      %p498 = scmp.lt.s32.totalorder %s28, 1
      %s499 = scalar_select %p498, %s28, 1
      %s500 = smul.addr %s499, 2
      %s501 = smul.addr %s500, 4
      %s502 = scalar_lea.vmem %s1, %s501
      %p503 = scmp.lt.s32.totalorder %s28, 1
      %s504 = scalar_select %p503, %s28, 1
      %s505 = smul.addr %s504, 8
      %s506 = scalar_lea.vmem %s3, %s505
      %s507 = smul.u32 8, %s29
      %p508 = scmp.lt.s32.totalorder %s28, 1
      %s509 = scalar_select %p508, %s28, 1
      %p510 = scmp.lt.s32.totalorder %s507, 7
      %s511 = scalar_select %p510, %s507, 7
      %s512 = smul.addr %s509, 8
      %s513 = sadd.s32 %s511, %s512
      %s514 = smul.addr %s513, 8
      %s515 = scalar_lea.vmem %s13, %s514
      %s516 = smul.u32 8, %s29
      %v518 = vld [vmem:[%s506] sm:$0xff]
      %v520 = vlaneseq
      %v521 = vshrl.u32 %v520, 7
      %v522 = vsub.s32 0, %v521
      %v523 = vrot.slane %v518, %v522
      %v524 = vlaneseq
      %v525 = vshrl.u32 %v524, 7
      %v526 = vsub.s32 1, %v525
      %v527 = vrot.slane %v518, %v526
      %v528 = vlaneseq
      %v529 = vshrl.u32 %v528, 7
      %v530 = vsub.s32 2, %v529
      %v531 = vrot.slane %v518, %v530
      %v532 = vlaneseq
      %v533 = vshrl.u32 %v532, 7
      %v534 = vsub.s32 3, %v533
      %v535 = vrot.slane %v518, %v534
      %v536 = vlaneseq
      %v537 = vshrl.u32 %v536, 7
      %v538 = vsub.s32 4, %v537
      %v539 = vrot.slane %v518, %v538
      %v540 = vlaneseq
      %v541 = vshrl.u32 %v540, 7
      %v542 = vsub.s32 5, %v541
      %v543 = vrot.slane %v518, %v542
      %v544 = vlaneseq
      %v545 = vshrl.u32 %v544, 7
      %v546 = vsub.s32 6, %v545
      %v547 = vrot.slane %v518, %v546
      %v548 = vlaneseq
      %v549 = vshrl.u32 %v548, 7
      %v550 = vsub.s32 7, %v549
      %v551 = vrot.slane %v518, %v550
      %v560 = vpack.c.bf16 %v523, %v523
      %v561 = vpack.c.bf16 %v527, %v527
      %v562 = vpack.c.bf16 %v531, %v531
      %v563 = vpack.c.bf16 %v535, %v535
      %v564 = vpack.c.bf16 %v539, %v539
      %v565 = vpack.c.bf16 %v543, %v543
      %v566 = vpack.c.bf16 %v547, %v547
      %v567 = vpack.c.bf16 %v551, %v551
      %v568 = vld [vmem:[%s4] sm:$0xff]
      %v569 = vld [vmem:[%s4 + $0x8] sm:$0xff]
      %v570 = vld [vmem:[%s4 + $0x10] sm:$0xff]
      %v571 = vld [vmem:[%s4 + $0x18] sm:$0xff]
      %v572 = vld [vmem:[%s4 + $0x20] sm:$0xff]
      %v573 = vld [vmem:[%s4 + $0x28] sm:$0xff]
      %v574 = vld [vmem:[%s4 + $0x30] sm:$0xff]
      %v575 = vld [vmem:[%s4 + $0x38] sm:$0xff]
      %v576 = vld [vmem:[%s4 + $0x40] sm:$0xff]
      %v577 = vld [vmem:[%s4 + $0x48] sm:$0xff]
      %v578 = vld [vmem:[%s4 + $0x50] sm:$0xff]
      %v579 = vld [vmem:[%s4 + $0x58] sm:$0xff]
      %v580 = vld [vmem:[%s4 + $0x60] sm:$0xff]
      %v581 = vld [vmem:[%s4 + $0x68] sm:$0xff]
      %v582 = vld [vmem:[%s4 + $0x70] sm:$0xff]
      %v583 = vld [vmem:[%s4 + $0x78] sm:$0xff]
      %v584 = vld [vmem:[%s4 + $0x80] sm:$0xff]
      %v585 = vld [vmem:[%s4 + $0x88] sm:$0xff]
      %v586 = vld [vmem:[%s4 + $0x90] sm:$0xff]
      %v587 = vld [vmem:[%s4 + $0x98] sm:$0xff]
      %v588 = vld [vmem:[%s4 + $0xa0] sm:$0xff]
      %v589 = vld [vmem:[%s4 + $0xa8] sm:$0xff]
      %v590 = vld [vmem:[%s4 + $0xb0] sm:$0xff]
      %v591 = vld [vmem:[%s4 + $0xb8] sm:$0xff]
      %v592 = vld [vmem:[%s4 + $0xc0] sm:$0xff]
      %v593 = vld [vmem:[%s4 + $0xc8] sm:$0xff]
      %v594 = vld [vmem:[%s4 + $0xd0] sm:$0xff]
      %v595 = vld [vmem:[%s4 + $0xd8] sm:$0xff]
      %v596 = vld [vmem:[%s4 + $0xe0] sm:$0xff]
      %v597 = vld [vmem:[%s4 + $0xe8] sm:$0xff]
      %v598 = vld [vmem:[%s4 + $0xf0] sm:$0xff]
      %v599 = vld [vmem:[%s4 + $0xf8] sm:$0xff]
      %v600 = vld [vmem:[%s4 + $0x100] sm:$0xff]
      %v601 = vld [vmem:[%s4 + $0x108] sm:$0xff]
      %v602 = vld [vmem:[%s4 + $0x110] sm:$0xff]
      %v603 = vld [vmem:[%s4 + $0x118] sm:$0xff]
      %v604 = vld [vmem:[%s4 + $0x120] sm:$0xff]
      %v605 = vld [vmem:[%s4 + $0x128] sm:$0xff]
      %v606 = vld [vmem:[%s4 + $0x130] sm:$0xff]
      %v607 = vld [vmem:[%s4 + $0x138] sm:$0xff]
      %v608 = vld [vmem:[%s4 + $0x140] sm:$0xff]
      %v609 = vld [vmem:[%s4 + $0x148] sm:$0xff]
      %v610 = vld [vmem:[%s4 + $0x150] sm:$0xff]
      %v611 = vld [vmem:[%s4 + $0x158] sm:$0xff]
      %v612 = vld [vmem:[%s4 + $0x160] sm:$0xff]
      %v613 = vld [vmem:[%s4 + $0x168] sm:$0xff]
      %v614 = vld [vmem:[%s4 + $0x170] sm:$0xff]
      %v615 = vld [vmem:[%s4 + $0x178] sm:$0xff]
      %v616 = vld [vmem:[%s4 + $0x180] sm:$0xff]
      %v617 = vld [vmem:[%s4 + $0x188] sm:$0xff]
      %v618 = vld [vmem:[%s4 + $0x190] sm:$0xff]
      %v619 = vld [vmem:[%s4 + $0x198] sm:$0xff]
      %v620 = vld [vmem:[%s4 + $0x1a0] sm:$0xff]
      %v621 = vld [vmem:[%s4 + $0x1a8] sm:$0xff]
      %v622 = vld [vmem:[%s4 + $0x1b0] sm:$0xff]
      %v623 = vld [vmem:[%s4 + $0x1b8] sm:$0xff]
      %v624 = vld [vmem:[%s4 + $0x1c0] sm:$0xff]
      %v625 = vld [vmem:[%s4 + $0x1c8] sm:$0xff]
      %v626 = vld [vmem:[%s4 + $0x1d0] sm:$0xff]
      %v627 = vld [vmem:[%s4 + $0x1d8] sm:$0xff]
      %v628 = vld [vmem:[%s4 + $0x1e0] sm:$0xff]
      %v629 = vld [vmem:[%s4 + $0x1e8] sm:$0xff]
      %v630 = vld [vmem:[%s4 + $0x1f0] sm:$0xff]
      %v631 = vld [vmem:[%s4 + $0x1f8] sm:$0xff]
      %v632 = vld [vmem:[%s4 + $0x200] sm:$0xff]
      %v633 = vld [vmem:[%s4 + $0x208] sm:$0xff]
      %v634 = vld [vmem:[%s4 + $0x210] sm:$0xff]
      %v635 = vld [vmem:[%s4 + $0x218] sm:$0xff]
      %v636 = vld [vmem:[%s4 + $0x220] sm:$0xff]
      %v637 = vld [vmem:[%s4 + $0x228] sm:$0xff]
      %v638 = vld [vmem:[%s4 + $0x230] sm:$0xff]
      %v639 = vld [vmem:[%s4 + $0x238] sm:$0xff]
      %v640 = vld [vmem:[%s4 + $0x240] sm:$0xff]
      %v641 = vld [vmem:[%s4 + $0x248] sm:$0xff]
      %v642 = vld [vmem:[%s4 + $0x250] sm:$0xff]
      %v643 = vld [vmem:[%s4 + $0x258] sm:$0xff]
      %v644 = vld [vmem:[%s4 + $0x260] sm:$0xff]
      %v645 = vld [vmem:[%s4 + $0x268] sm:$0xff]
      %v646 = vld [vmem:[%s4 + $0x270] sm:$0xff]
      %v647 = vld [vmem:[%s4 + $0x278] sm:$0xff]
      %v648 = vld [vmem:[%s4 + $0x280] sm:$0xff]
      %v649 = vld [vmem:[%s4 + $0x288] sm:$0xff]
      %v650 = vld [vmem:[%s4 + $0x290] sm:$0xff]
      %v651 = vld [vmem:[%s4 + $0x298] sm:$0xff]
      %v652 = vld [vmem:[%s4 + $0x2a0] sm:$0xff]
      %v653 = vld [vmem:[%s4 + $0x2a8] sm:$0xff]
      %v654 = vld [vmem:[%s4 + $0x2b0] sm:$0xff]
      %v655 = vld [vmem:[%s4 + $0x2b8] sm:$0xff]
      %v656 = vld [vmem:[%s4 + $0x2c0] sm:$0xff]
      %v657 = vld [vmem:[%s4 + $0x2c8] sm:$0xff]
      %v658 = vld [vmem:[%s4 + $0x2d0] sm:$0xff]
      %v659 = vld [vmem:[%s4 + $0x2d8] sm:$0xff]
      %v660 = vld [vmem:[%s4 + $0x2e0] sm:$0xff]
      %v661 = vld [vmem:[%s4 + $0x2e8] sm:$0xff]
      %v662 = vld [vmem:[%s4 + $0x2f0] sm:$0xff]
      %v663 = vld [vmem:[%s4 + $0x2f8] sm:$0xff]
      %v664 = vld [vmem:[%s4 + $0x300] sm:$0xff]
      %v665 = vld [vmem:[%s4 + $0x308] sm:$0xff]
      %v666 = vld [vmem:[%s4 + $0x310] sm:$0xff]
      %v667 = vld [vmem:[%s4 + $0x318] sm:$0xff]
      %v668 = vld [vmem:[%s4 + $0x320] sm:$0xff]
      %v669 = vld [vmem:[%s4 + $0x328] sm:$0xff]
      %v670 = vld [vmem:[%s4 + $0x330] sm:$0xff]
      %v671 = vld [vmem:[%s4 + $0x338] sm:$0xff]
      %v672 = vld [vmem:[%s4 + $0x340] sm:$0xff]
      %v673 = vld [vmem:[%s4 + $0x348] sm:$0xff]
      %v674 = vld [vmem:[%s4 + $0x350] sm:$0xff]
      %v675 = vld [vmem:[%s4 + $0x358] sm:$0xff]
      %v676 = vld [vmem:[%s4 + $0x360] sm:$0xff]
      %v677 = vld [vmem:[%s4 + $0x368] sm:$0xff]
      %v678 = vld [vmem:[%s4 + $0x370] sm:$0xff]
      %v679 = vld [vmem:[%s4 + $0x378] sm:$0xff]
      %v680 = vld [vmem:[%s4 + $0x380] sm:$0xff]
      %v681 = vld [vmem:[%s4 + $0x388] sm:$0xff]
      %v682 = vld [vmem:[%s4 + $0x390] sm:$0xff]
      %v683 = vld [vmem:[%s4 + $0x398] sm:$0xff]
      %v684 = vld [vmem:[%s4 + $0x3a0] sm:$0xff]
      %v685 = vld [vmem:[%s4 + $0x3a8] sm:$0xff]
      %v686 = vld [vmem:[%s4 + $0x3b0] sm:$0xff]
      %v687 = vld [vmem:[%s4 + $0x3b8] sm:$0xff]
      %v688 = vld [vmem:[%s4 + $0x3c0] sm:$0xff]
      %v689 = vld [vmem:[%s4 + $0x3c8] sm:$0xff]
      %v690 = vld [vmem:[%s4 + $0x3d0] sm:$0xff]
      %v691 = vld [vmem:[%s4 + $0x3d8] sm:$0xff]
      %v692 = vld [vmem:[%s4 + $0x3e0] sm:$0xff]
      %v693 = vld [vmem:[%s4 + $0x3e8] sm:$0xff]
      %v694 = vld [vmem:[%s4 + $0x3f0] sm:$0xff]
      %v695 = vld [vmem:[%s4 + $0x3f8] sm:$0xff]
      %v696 = vld [vmem:[%s4 + $0x400] sm:$0xff]
      %v697 = vld [vmem:[%s4 + $0x408] sm:$0xff]
      %v698 = vld [vmem:[%s4 + $0x410] sm:$0xff]
      %v699 = vld [vmem:[%s4 + $0x418] sm:$0xff]
      %v700 = vld [vmem:[%s4 + $0x420] sm:$0xff]
      %v701 = vld [vmem:[%s4 + $0x428] sm:$0xff]
      %v702 = vld [vmem:[%s4 + $0x430] sm:$0xff]
      %v703 = vld [vmem:[%s4 + $0x438] sm:$0xff]
      %v704 = vld [vmem:[%s4 + $0x440] sm:$0xff]
      %v705 = vld [vmem:[%s4 + $0x448] sm:$0xff]
      %v706 = vld [vmem:[%s4 + $0x450] sm:$0xff]
      %v707 = vld [vmem:[%s4 + $0x458] sm:$0xff]
      %v708 = vld [vmem:[%s4 + $0x460] sm:$0xff]
      %v709 = vld [vmem:[%s4 + $0x468] sm:$0xff]
      %v710 = vld [vmem:[%s4 + $0x470] sm:$0xff]
      %v711 = vld [vmem:[%s4 + $0x478] sm:$0xff]
      %v712 = vld [vmem:[%s4 + $0x480] sm:$0xff]
      %v713 = vld [vmem:[%s4 + $0x488] sm:$0xff]
      %v714 = vld [vmem:[%s4 + $0x490] sm:$0xff]
      %v715 = vld [vmem:[%s4 + $0x498] sm:$0xff]
      %v716 = vld [vmem:[%s4 + $0x4a0] sm:$0xff]
      %v717 = vld [vmem:[%s4 + $0x4a8] sm:$0xff]
      %v718 = vld [vmem:[%s4 + $0x4b0] sm:$0xff]
      %v719 = vld [vmem:[%s4 + $0x4b8] sm:$0xff]
      %v720 = vld [vmem:[%s4 + $0x4c0] sm:$0xff]
      %v721 = vld [vmem:[%s4 + $0x4c8] sm:$0xff]
      %v722 = vld [vmem:[%s4 + $0x4d0] sm:$0xff]
      %v723 = vld [vmem:[%s4 + $0x4d8] sm:$0xff]
      %v724 = vld [vmem:[%s4 + $0x4e0] sm:$0xff]
      %v725 = vld [vmem:[%s4 + $0x4e8] sm:$0xff]
      %v726 = vld [vmem:[%s4 + $0x4f0] sm:$0xff]
      %v727 = vld [vmem:[%s4 + $0x4f8] sm:$0xff]
      %v728 = vld [vmem:[%s4 + $0x500] sm:$0xff]
      %v729 = vld [vmem:[%s4 + $0x508] sm:$0xff]
      %v730 = vld [vmem:[%s4 + $0x510] sm:$0xff]
      %v731 = vld [vmem:[%s4 + $0x518] sm:$0xff]
      %v732 = vld [vmem:[%s4 + $0x520] sm:$0xff]
      %v733 = vld [vmem:[%s4 + $0x528] sm:$0xff]
      %v734 = vld [vmem:[%s4 + $0x530] sm:$0xff]
      %v735 = vld [vmem:[%s4 + $0x538] sm:$0xff]
      %v736 = vld [vmem:[%s4 + $0x540] sm:$0xff]
      %v737 = vld [vmem:[%s4 + $0x548] sm:$0xff]
      %v738 = vld [vmem:[%s4 + $0x550] sm:$0xff]
      %v739 = vld [vmem:[%s4 + $0x558] sm:$0xff]
      %v740 = vld [vmem:[%s4 + $0x560] sm:$0xff]
      %v741 = vld [vmem:[%s4 + $0x568] sm:$0xff]
      %v742 = vld [vmem:[%s4 + $0x570] sm:$0xff]
      %v743 = vld [vmem:[%s4 + $0x578] sm:$0xff]
      %v744 = vld [vmem:[%s4 + $0x580] sm:$0xff]
      %v745 = vld [vmem:[%s4 + $0x588] sm:$0xff]
      %v746 = vld [vmem:[%s4 + $0x590] sm:$0xff]
      %v747 = vld [vmem:[%s4 + $0x598] sm:$0xff]
      %v748 = vld [vmem:[%s4 + $0x5a0] sm:$0xff]
      %v749 = vld [vmem:[%s4 + $0x5a8] sm:$0xff]
      %v750 = vld [vmem:[%s4 + $0x5b0] sm:$0xff]
      %v751 = vld [vmem:[%s4 + $0x5b8] sm:$0xff]
      %v752 = vld [vmem:[%s4 + $0x5c0] sm:$0xff]
      %v753 = vld [vmem:[%s4 + $0x5c8] sm:$0xff]
      %v754 = vld [vmem:[%s4 + $0x5d0] sm:$0xff]
      %v755 = vld [vmem:[%s4 + $0x5d8] sm:$0xff]
      %v756 = vld [vmem:[%s4 + $0x5e0] sm:$0xff]
      %v757 = vld [vmem:[%s4 + $0x5e8] sm:$0xff]
      %v758 = vld [vmem:[%s4 + $0x5f0] sm:$0xff]
      %v759 = vld [vmem:[%s4 + $0x5f8] sm:$0xff]
      %v760 = vld [vmem:[%s4 + $0x600] sm:$0xff]
      %v761 = vld [vmem:[%s4 + $0x608] sm:$0xff]
      %v762 = vld [vmem:[%s4 + $0x610] sm:$0xff]
      %v763 = vld [vmem:[%s4 + $0x618] sm:$0xff]
      %v764 = vld [vmem:[%s4 + $0x620] sm:$0xff]
      %v765 = vld [vmem:[%s4 + $0x628] sm:$0xff]
      %v766 = vld [vmem:[%s4 + $0x630] sm:$0xff]
      %v767 = vld [vmem:[%s4 + $0x638] sm:$0xff]
      %v768 = vld [vmem:[%s4 + $0x640] sm:$0xff]
      %v769 = vld [vmem:[%s4 + $0x648] sm:$0xff]
      %v770 = vld [vmem:[%s4 + $0x650] sm:$0xff]
      %v771 = vld [vmem:[%s4 + $0x658] sm:$0xff]
      %v772 = vld [vmem:[%s4 + $0x660] sm:$0xff]
      %v773 = vld [vmem:[%s4 + $0x668] sm:$0xff]
      %v774 = vld [vmem:[%s4 + $0x670] sm:$0xff]
      %v775 = vld [vmem:[%s4 + $0x678] sm:$0xff]
      %v776 = vld [vmem:[%s4 + $0x680] sm:$0xff]
      %v777 = vld [vmem:[%s4 + $0x688] sm:$0xff]
      %v778 = vld [vmem:[%s4 + $0x690] sm:$0xff]
      %v779 = vld [vmem:[%s4 + $0x698] sm:$0xff]
      %v780 = vld [vmem:[%s4 + $0x6a0] sm:$0xff]
      %v781 = vld [vmem:[%s4 + $0x6a8] sm:$0xff]
      %v782 = vld [vmem:[%s4 + $0x6b0] sm:$0xff]
      %v783 = vld [vmem:[%s4 + $0x6b8] sm:$0xff]
      %v784 = vld [vmem:[%s4 + $0x6c0] sm:$0xff]
      %v785 = vld [vmem:[%s4 + $0x6c8] sm:$0xff]
      %v786 = vld [vmem:[%s4 + $0x6d0] sm:$0xff]
      %v787 = vld [vmem:[%s4 + $0x6d8] sm:$0xff]
      %v788 = vld [vmem:[%s4 + $0x6e0] sm:$0xff]
      %v789 = vld [vmem:[%s4 + $0x6e8] sm:$0xff]
      %v790 = vld [vmem:[%s4 + $0x6f0] sm:$0xff]
      %v791 = vld [vmem:[%s4 + $0x6f8] sm:$0xff]
      %v792 = vld [vmem:[%s4 + $0x700] sm:$0xff]
      %v793 = vld [vmem:[%s4 + $0x708] sm:$0xff]
      %v794 = vld [vmem:[%s4 + $0x710] sm:$0xff]
      %v795 = vld [vmem:[%s4 + $0x718] sm:$0xff]
      %v796 = vld [vmem:[%s4 + $0x720] sm:$0xff]
      %v797 = vld [vmem:[%s4 + $0x728] sm:$0xff]
      %v798 = vld [vmem:[%s4 + $0x730] sm:$0xff]
      %v799 = vld [vmem:[%s4 + $0x738] sm:$0xff]
      %v800 = vld [vmem:[%s4 + $0x740] sm:$0xff]
      %v801 = vld [vmem:[%s4 + $0x748] sm:$0xff]
      %v802 = vld [vmem:[%s4 + $0x750] sm:$0xff]
      %v803 = vld [vmem:[%s4 + $0x758] sm:$0xff]
      %v804 = vld [vmem:[%s4 + $0x760] sm:$0xff]
      %v805 = vld [vmem:[%s4 + $0x768] sm:$0xff]
      %v806 = vld [vmem:[%s4 + $0x770] sm:$0xff]
      %v807 = vld [vmem:[%s4 + $0x778] sm:$0xff]
      %v808 = vld [vmem:[%s4 + $0x780] sm:$0xff]
      %v809 = vld [vmem:[%s4 + $0x788] sm:$0xff]
      %v810 = vld [vmem:[%s4 + $0x790] sm:$0xff]
      %v811 = vld [vmem:[%s4 + $0x798] sm:$0xff]
      %v812 = vld [vmem:[%s4 + $0x7a0] sm:$0xff]
      %v813 = vld [vmem:[%s4 + $0x7a8] sm:$0xff]
      %v814 = vld [vmem:[%s4 + $0x7b0] sm:$0xff]
      %v815 = vld [vmem:[%s4 + $0x7b8] sm:$0xff]
      %v816 = vld [vmem:[%s4 + $0x7c0] sm:$0xff]
      %v817 = vld [vmem:[%s4 + $0x7c8] sm:$0xff]
      %v818 = vld [vmem:[%s4 + $0x7d0] sm:$0xff]
      %v819 = vld [vmem:[%s4 + $0x7d8] sm:$0xff]
      %v820 = vld [vmem:[%s4 + $0x7e0] sm:$0xff]
      %v821 = vld [vmem:[%s4 + $0x7e8] sm:$0xff]
      %v822 = vld [vmem:[%s4 + $0x7f0] sm:$0xff]
      %v823 = vld [vmem:[%s4 + $0x7f8] sm:$0xff]
      %v824 = vld [vmem:[%s5] sm:$0xf]
      %v1081 = vunpack.c.l.b16 %v568
      %v1082 = vunpack.c.h.b16 %v568
      %v1083 = vunpack.c.l.b16 %v569
      %v1084 = vunpack.c.h.b16 %v569
      %v1085 = vunpack.c.l.b16 %v570
      %v1086 = vunpack.c.h.b16 %v570
      %v1087 = vunpack.c.l.b16 %v571
      %v1088 = vunpack.c.h.b16 %v571
      %v1089 = vunpack.c.l.b16 %v572
      %v1090 = vunpack.c.h.b16 %v572
      %v1091 = vunpack.c.l.b16 %v573
      %v1092 = vunpack.c.h.b16 %v573
      %v1093 = vunpack.c.l.b16 %v574
      %v1094 = vunpack.c.h.b16 %v574
      %v1095 = vunpack.c.l.b16 %v575
      %v1096 = vunpack.c.h.b16 %v575
      %v1097 = vunpack.c.l.b16 %v576
      %v1098 = vunpack.c.h.b16 %v576
      %v1099 = vunpack.c.l.b16 %v577
      %v1100 = vunpack.c.h.b16 %v577
      %v1101 = vunpack.c.l.b16 %v578
      %v1102 = vunpack.c.h.b16 %v578
      %v1103 = vunpack.c.l.b16 %v579
      %v1104 = vunpack.c.h.b16 %v579
      %v1105 = vunpack.c.l.b16 %v580
      %v1106 = vunpack.c.h.b16 %v580
      %v1107 = vunpack.c.l.b16 %v581
      %v1108 = vunpack.c.h.b16 %v581
      %v1109 = vunpack.c.l.b16 %v582
      %v1110 = vunpack.c.h.b16 %v582
      %v1111 = vunpack.c.l.b16 %v583
      %v1112 = vunpack.c.h.b16 %v583
      %v1113 = vunpack.c.l.b16 %v584
      %v1114 = vunpack.c.h.b16 %v584
      %v1115 = vunpack.c.l.b16 %v585
      %v1116 = vunpack.c.h.b16 %v585
      %v1117 = vunpack.c.l.b16 %v586
      %v1118 = vunpack.c.h.b16 %v586
      %v1119 = vunpack.c.l.b16 %v587
      %v1120 = vunpack.c.h.b16 %v587
      %v1121 = vunpack.c.l.b16 %v588
      %v1122 = vunpack.c.h.b16 %v588
      %v1123 = vunpack.c.l.b16 %v589
      %v1124 = vunpack.c.h.b16 %v589
      %v1125 = vunpack.c.l.b16 %v590
      %v1126 = vunpack.c.h.b16 %v590
      %v1127 = vunpack.c.l.b16 %v591
      %v1128 = vunpack.c.h.b16 %v591
      %v1129 = vunpack.c.l.b16 %v592
      %v1130 = vunpack.c.h.b16 %v592
      %v1131 = vunpack.c.l.b16 %v593
      %v1132 = vunpack.c.h.b16 %v593
      %v1133 = vunpack.c.l.b16 %v594
      %v1134 = vunpack.c.h.b16 %v594
      %v1135 = vunpack.c.l.b16 %v595
      %v1136 = vunpack.c.h.b16 %v595
      %v1137 = vunpack.c.l.b16 %v596
      %v1138 = vunpack.c.h.b16 %v596
      %v1139 = vunpack.c.l.b16 %v597
      %v1140 = vunpack.c.h.b16 %v597
      %v1141 = vunpack.c.l.b16 %v598
      %v1142 = vunpack.c.h.b16 %v598
      %v1143 = vunpack.c.l.b16 %v599
      %v1144 = vunpack.c.h.b16 %v599
      %v1145 = vunpack.c.l.b16 %v600
      %v1146 = vunpack.c.h.b16 %v600
      %v1147 = vunpack.c.l.b16 %v601
      %v1148 = vunpack.c.h.b16 %v601
      %v1149 = vunpack.c.l.b16 %v602
      %v1150 = vunpack.c.h.b16 %v602
      %v1151 = vunpack.c.l.b16 %v603
      %v1152 = vunpack.c.h.b16 %v603
      %v1153 = vunpack.c.l.b16 %v604
      %v1154 = vunpack.c.h.b16 %v604
      %v1155 = vunpack.c.l.b16 %v605
      %v1156 = vunpack.c.h.b16 %v605
      %v1157 = vunpack.c.l.b16 %v606
      %v1158 = vunpack.c.h.b16 %v606
      %v1159 = vunpack.c.l.b16 %v607
      %v1160 = vunpack.c.h.b16 %v607
      %v1161 = vunpack.c.l.b16 %v608
      %v1162 = vunpack.c.h.b16 %v608
      %v1163 = vunpack.c.l.b16 %v609
      %v1164 = vunpack.c.h.b16 %v609
      %v1165 = vunpack.c.l.b16 %v610
      %v1166 = vunpack.c.h.b16 %v610
      %v1167 = vunpack.c.l.b16 %v611
      %v1168 = vunpack.c.h.b16 %v611
      %v1169 = vunpack.c.l.b16 %v612
      %v1170 = vunpack.c.h.b16 %v612
      %v1171 = vunpack.c.l.b16 %v613
      %v1172 = vunpack.c.h.b16 %v613
      %v1173 = vunpack.c.l.b16 %v614
      %v1174 = vunpack.c.h.b16 %v614
      %v1175 = vunpack.c.l.b16 %v615
      %v1176 = vunpack.c.h.b16 %v615
      %v1177 = vunpack.c.l.b16 %v616
      %v1178 = vunpack.c.h.b16 %v616
      %v1179 = vunpack.c.l.b16 %v617
      %v1180 = vunpack.c.h.b16 %v617
      %v1181 = vunpack.c.l.b16 %v618
      %v1182 = vunpack.c.h.b16 %v618
      %v1183 = vunpack.c.l.b16 %v619
      %v1184 = vunpack.c.h.b16 %v619
      %v1185 = vunpack.c.l.b16 %v620
      %v1186 = vunpack.c.h.b16 %v620
      %v1187 = vunpack.c.l.b16 %v621
      %v1188 = vunpack.c.h.b16 %v621
      %v1189 = vunpack.c.l.b16 %v622
      %v1190 = vunpack.c.h.b16 %v622
      %v1191 = vunpack.c.l.b16 %v623
      %v1192 = vunpack.c.h.b16 %v623
      %v1193 = vunpack.c.l.b16 %v624
      %v1194 = vunpack.c.h.b16 %v624
      %v1195 = vunpack.c.l.b16 %v625
      %v1196 = vunpack.c.h.b16 %v625
      %v1197 = vunpack.c.l.b16 %v626
      %v1198 = vunpack.c.h.b16 %v626
      %v1199 = vunpack.c.l.b16 %v627
      %v1200 = vunpack.c.h.b16 %v627
      %v1201 = vunpack.c.l.b16 %v628
      %v1202 = vunpack.c.h.b16 %v628
      %v1203 = vunpack.c.l.b16 %v629
      %v1204 = vunpack.c.h.b16 %v629
      %v1205 = vunpack.c.l.b16 %v630
      %v1206 = vunpack.c.h.b16 %v630
      %v1207 = vunpack.c.l.b16 %v631
      %v1208 = vunpack.c.h.b16 %v631
      %v1209 = vunpack.c.l.b16 %v632
      %v1210 = vunpack.c.h.b16 %v632
      %v1211 = vunpack.c.l.b16 %v633
      %v1212 = vunpack.c.h.b16 %v633
      %v1213 = vunpack.c.l.b16 %v634
      %v1214 = vunpack.c.h.b16 %v634
      %v1215 = vunpack.c.l.b16 %v635
      %v1216 = vunpack.c.h.b16 %v635
      %v1217 = vunpack.c.l.b16 %v636
      %v1218 = vunpack.c.h.b16 %v636
      %v1219 = vunpack.c.l.b16 %v637
      %v1220 = vunpack.c.h.b16 %v637
      %v1221 = vunpack.c.l.b16 %v638
      %v1222 = vunpack.c.h.b16 %v638
      %v1223 = vunpack.c.l.b16 %v639
      %v1224 = vunpack.c.h.b16 %v639
      %v1225 = vunpack.c.l.b16 %v640
      %v1226 = vunpack.c.h.b16 %v640
      %v1227 = vunpack.c.l.b16 %v641
      %v1228 = vunpack.c.h.b16 %v641
      %v1229 = vunpack.c.l.b16 %v642
      %v1230 = vunpack.c.h.b16 %v642
      %v1231 = vunpack.c.l.b16 %v643
      %v1232 = vunpack.c.h.b16 %v643
      %v1233 = vunpack.c.l.b16 %v644
      %v1234 = vunpack.c.h.b16 %v644
      %v1235 = vunpack.c.l.b16 %v645
      %v1236 = vunpack.c.h.b16 %v645
      %v1237 = vunpack.c.l.b16 %v646
      %v1238 = vunpack.c.h.b16 %v646
      %v1239 = vunpack.c.l.b16 %v647
      %v1240 = vunpack.c.h.b16 %v647
      %v1241 = vunpack.c.l.b16 %v648
      %v1242 = vunpack.c.h.b16 %v648
      %v1243 = vunpack.c.l.b16 %v649
      %v1244 = vunpack.c.h.b16 %v649
      %v1245 = vunpack.c.l.b16 %v650
      %v1246 = vunpack.c.h.b16 %v650
      %v1247 = vunpack.c.l.b16 %v651
      %v1248 = vunpack.c.h.b16 %v651
      %v1249 = vunpack.c.l.b16 %v652
      %v1250 = vunpack.c.h.b16 %v652
      %v1251 = vunpack.c.l.b16 %v653
      %v1252 = vunpack.c.h.b16 %v653
      %v1253 = vunpack.c.l.b16 %v654
      %v1254 = vunpack.c.h.b16 %v654
      %v1255 = vunpack.c.l.b16 %v655
      %v1256 = vunpack.c.h.b16 %v655
      %v1257 = vunpack.c.l.b16 %v656
      %v1258 = vunpack.c.h.b16 %v656
      %v1259 = vunpack.c.l.b16 %v657
      %v1260 = vunpack.c.h.b16 %v657
      %v1261 = vunpack.c.l.b16 %v658
      %v1262 = vunpack.c.h.b16 %v658
      %v1263 = vunpack.c.l.b16 %v659
      %v1264 = vunpack.c.h.b16 %v659
      %v1265 = vunpack.c.l.b16 %v660
      %v1266 = vunpack.c.h.b16 %v660
      %v1267 = vunpack.c.l.b16 %v661
      %v1268 = vunpack.c.h.b16 %v661
      %v1269 = vunpack.c.l.b16 %v662
      %v1270 = vunpack.c.h.b16 %v662
      %v1271 = vunpack.c.l.b16 %v663
      %v1272 = vunpack.c.h.b16 %v663
      %v1273 = vunpack.c.l.b16 %v664
      %v1274 = vunpack.c.h.b16 %v664
      %v1275 = vunpack.c.l.b16 %v665
      %v1276 = vunpack.c.h.b16 %v665
      %v1277 = vunpack.c.l.b16 %v666
      %v1278 = vunpack.c.h.b16 %v666
      %v1279 = vunpack.c.l.b16 %v667
      %v1280 = vunpack.c.h.b16 %v667
      %v1281 = vunpack.c.l.b16 %v668
      %v1282 = vunpack.c.h.b16 %v668
      %v1283 = vunpack.c.l.b16 %v669
      %v1284 = vunpack.c.h.b16 %v669
      %v1285 = vunpack.c.l.b16 %v670
      %v1286 = vunpack.c.h.b16 %v670
      %v1287 = vunpack.c.l.b16 %v671
      %v1288 = vunpack.c.h.b16 %v671
      %v1289 = vunpack.c.l.b16 %v672
      %v1290 = vunpack.c.h.b16 %v672
      %v1291 = vunpack.c.l.b16 %v673
      %v1292 = vunpack.c.h.b16 %v673
      %v1293 = vunpack.c.l.b16 %v674
      %v1294 = vunpack.c.h.b16 %v674
      %v1295 = vunpack.c.l.b16 %v675
      %v1296 = vunpack.c.h.b16 %v675
      %v1297 = vunpack.c.l.b16 %v676
      %v1298 = vunpack.c.h.b16 %v676
      %v1299 = vunpack.c.l.b16 %v677
      %v1300 = vunpack.c.h.b16 %v677
      %v1301 = vunpack.c.l.b16 %v678
      %v1302 = vunpack.c.h.b16 %v678
      %v1303 = vunpack.c.l.b16 %v679
      %v1304 = vunpack.c.h.b16 %v679
      %v1305 = vunpack.c.l.b16 %v680
      %v1306 = vunpack.c.h.b16 %v680
      %v1307 = vunpack.c.l.b16 %v681
      %v1308 = vunpack.c.h.b16 %v681
      %v1309 = vunpack.c.l.b16 %v682
      %v1310 = vunpack.c.h.b16 %v682
      %v1311 = vunpack.c.l.b16 %v683
      %v1312 = vunpack.c.h.b16 %v683
      %v1313 = vunpack.c.l.b16 %v684
      %v1314 = vunpack.c.h.b16 %v684
      %v1315 = vunpack.c.l.b16 %v685
      %v1316 = vunpack.c.h.b16 %v685
      %v1317 = vunpack.c.l.b16 %v686
      %v1318 = vunpack.c.h.b16 %v686
      %v1319 = vunpack.c.l.b16 %v687
      %v1320 = vunpack.c.h.b16 %v687
      %v1321 = vunpack.c.l.b16 %v688
      %v1322 = vunpack.c.h.b16 %v688
      %v1323 = vunpack.c.l.b16 %v689
      %v1324 = vunpack.c.h.b16 %v689
      %v1325 = vunpack.c.l.b16 %v690
      %v1326 = vunpack.c.h.b16 %v690
      %v1327 = vunpack.c.l.b16 %v691
      %v1328 = vunpack.c.h.b16 %v691
      %v1329 = vunpack.c.l.b16 %v692
      %v1330 = vunpack.c.h.b16 %v692
      %v1331 = vunpack.c.l.b16 %v693
      %v1332 = vunpack.c.h.b16 %v693
      %v1333 = vunpack.c.l.b16 %v694
      %v1334 = vunpack.c.h.b16 %v694
      %v1335 = vunpack.c.l.b16 %v695
      %v1336 = vunpack.c.h.b16 %v695
      %v1337 = vunpack.c.l.b16 %v696
      %v1338 = vunpack.c.h.b16 %v696
      %v1339 = vunpack.c.l.b16 %v697
      %v1340 = vunpack.c.h.b16 %v697
      %v1341 = vunpack.c.l.b16 %v698
      %v1342 = vunpack.c.h.b16 %v698
      %v1343 = vunpack.c.l.b16 %v699
      %v1344 = vunpack.c.h.b16 %v699
      %v1345 = vunpack.c.l.b16 %v700
      %v1346 = vunpack.c.h.b16 %v700
      %v1347 = vunpack.c.l.b16 %v701
      %v1348 = vunpack.c.h.b16 %v701
      %v1349 = vunpack.c.l.b16 %v702
      %v1350 = vunpack.c.h.b16 %v702
      %v1351 = vunpack.c.l.b16 %v703
      %v1352 = vunpack.c.h.b16 %v703
      %v1353 = vunpack.c.l.b16 %v704
      %v1354 = vunpack.c.h.b16 %v704
      %v1355 = vunpack.c.l.b16 %v705
      %v1356 = vunpack.c.h.b16 %v705
      %v1357 = vunpack.c.l.b16 %v706
      %v1358 = vunpack.c.h.b16 %v706
      %v1359 = vunpack.c.l.b16 %v707
      %v1360 = vunpack.c.h.b16 %v707
      %v1361 = vunpack.c.l.b16 %v708
      %v1362 = vunpack.c.h.b16 %v708
      %v1363 = vunpack.c.l.b16 %v709
      %v1364 = vunpack.c.h.b16 %v709
      %v1365 = vunpack.c.l.b16 %v710
      %v1366 = vunpack.c.h.b16 %v710
      %v1367 = vunpack.c.l.b16 %v711
      %v1368 = vunpack.c.h.b16 %v711
      %v1369 = vunpack.c.l.b16 %v712
      %v1370 = vunpack.c.h.b16 %v712
      %v1371 = vunpack.c.l.b16 %v713
      %v1372 = vunpack.c.h.b16 %v713
      %v1373 = vunpack.c.l.b16 %v714
      %v1374 = vunpack.c.h.b16 %v714
      %v1375 = vunpack.c.l.b16 %v715
      %v1376 = vunpack.c.h.b16 %v715
      %v1377 = vunpack.c.l.b16 %v716
      %v1378 = vunpack.c.h.b16 %v716
      %v1379 = vunpack.c.l.b16 %v717
      %v1380 = vunpack.c.h.b16 %v717
      %v1381 = vunpack.c.l.b16 %v718
      %v1382 = vunpack.c.h.b16 %v718
      %v1383 = vunpack.c.l.b16 %v719
      %v1384 = vunpack.c.h.b16 %v719
      %v1385 = vunpack.c.l.b16 %v720
      %v1386 = vunpack.c.h.b16 %v720
      %v1387 = vunpack.c.l.b16 %v721
      %v1388 = vunpack.c.h.b16 %v721
      %v1389 = vunpack.c.l.b16 %v722
      %v1390 = vunpack.c.h.b16 %v722
      %v1391 = vunpack.c.l.b16 %v723
      %v1392 = vunpack.c.h.b16 %v723
      %v1393 = vunpack.c.l.b16 %v724
      %v1394 = vunpack.c.h.b16 %v724
      %v1395 = vunpack.c.l.b16 %v725
      %v1396 = vunpack.c.h.b16 %v725
      %v1397 = vunpack.c.l.b16 %v726
      %v1398 = vunpack.c.h.b16 %v726
      %v1399 = vunpack.c.l.b16 %v727
      %v1400 = vunpack.c.h.b16 %v727
      %v1401 = vunpack.c.l.b16 %v728
      %v1402 = vunpack.c.h.b16 %v728
      %v1403 = vunpack.c.l.b16 %v729
      %v1404 = vunpack.c.h.b16 %v729
      %v1405 = vunpack.c.l.b16 %v730
      %v1406 = vunpack.c.h.b16 %v730
      %v1407 = vunpack.c.l.b16 %v731
      %v1408 = vunpack.c.h.b16 %v731
      %v1409 = vunpack.c.l.b16 %v732
      %v1410 = vunpack.c.h.b16 %v732
      %v1411 = vunpack.c.l.b16 %v733
      %v1412 = vunpack.c.h.b16 %v733
      %v1413 = vunpack.c.l.b16 %v734
      %v1414 = vunpack.c.h.b16 %v734
      %v1415 = vunpack.c.l.b16 %v735
      %v1416 = vunpack.c.h.b16 %v735
      %v1417 = vunpack.c.l.b16 %v736
      %v1418 = vunpack.c.h.b16 %v736
      %v1419 = vunpack.c.l.b16 %v737
      %v1420 = vunpack.c.h.b16 %v737
      %v1421 = vunpack.c.l.b16 %v738
      %v1422 = vunpack.c.h.b16 %v738
      %v1423 = vunpack.c.l.b16 %v739
      %v1424 = vunpack.c.h.b16 %v739
      %v1425 = vunpack.c.l.b16 %v740
      %v1426 = vunpack.c.h.b16 %v740
      %v1427 = vunpack.c.l.b16 %v741
      %v1428 = vunpack.c.h.b16 %v741
      %v1429 = vunpack.c.l.b16 %v742
      %v1430 = vunpack.c.h.b16 %v742
      %v1431 = vunpack.c.l.b16 %v743
      %v1432 = vunpack.c.h.b16 %v743
      %v1433 = vunpack.c.l.b16 %v744
      %v1434 = vunpack.c.h.b16 %v744
      %v1435 = vunpack.c.l.b16 %v745
      %v1436 = vunpack.c.h.b16 %v745
      %v1437 = vunpack.c.l.b16 %v746
      %v1438 = vunpack.c.h.b16 %v746
      %v1439 = vunpack.c.l.b16 %v747
      %v1440 = vunpack.c.h.b16 %v747
      %v1441 = vunpack.c.l.b16 %v748
      %v1442 = vunpack.c.h.b16 %v748
      %v1443 = vunpack.c.l.b16 %v749
      %v1444 = vunpack.c.h.b16 %v749
      %v1445 = vunpack.c.l.b16 %v750
      %v1446 = vunpack.c.h.b16 %v750
      %v1447 = vunpack.c.l.b16 %v751
      %v1448 = vunpack.c.h.b16 %v751
      %v1449 = vunpack.c.l.b16 %v752
      %v1450 = vunpack.c.h.b16 %v752
      %v1451 = vunpack.c.l.b16 %v753
      %v1452 = vunpack.c.h.b16 %v753
      %v1453 = vunpack.c.l.b16 %v754
      %v1454 = vunpack.c.h.b16 %v754
      %v1455 = vunpack.c.l.b16 %v755
      %v1456 = vunpack.c.h.b16 %v755
      %v1457 = vunpack.c.l.b16 %v756
      %v1458 = vunpack.c.h.b16 %v756
      %v1459 = vunpack.c.l.b16 %v757
      %v1460 = vunpack.c.h.b16 %v757
      %v1461 = vunpack.c.l.b16 %v758
      %v1462 = vunpack.c.h.b16 %v758
      %v1463 = vunpack.c.l.b16 %v759
      %v1464 = vunpack.c.h.b16 %v759
      %v1465 = vunpack.c.l.b16 %v760
      %v1466 = vunpack.c.h.b16 %v760
      %v1467 = vunpack.c.l.b16 %v761
      %v1468 = vunpack.c.h.b16 %v761
      %v1469 = vunpack.c.l.b16 %v762
      %v1470 = vunpack.c.h.b16 %v762
      %v1471 = vunpack.c.l.b16 %v763
      %v1472 = vunpack.c.h.b16 %v763
      %v1473 = vunpack.c.l.b16 %v764
      %v1474 = vunpack.c.h.b16 %v764
      %v1475 = vunpack.c.l.b16 %v765
      %v1476 = vunpack.c.h.b16 %v765
      %v1477 = vunpack.c.l.b16 %v766
      %v1478 = vunpack.c.h.b16 %v766
      %v1479 = vunpack.c.l.b16 %v767
      %v1480 = vunpack.c.h.b16 %v767
      %v1481 = vunpack.c.l.b16 %v768
      %v1482 = vunpack.c.h.b16 %v768
      %v1483 = vunpack.c.l.b16 %v769
      %v1484 = vunpack.c.h.b16 %v769
      %v1485 = vunpack.c.l.b16 %v770
      %v1486 = vunpack.c.h.b16 %v770
      %v1487 = vunpack.c.l.b16 %v771
      %v1488 = vunpack.c.h.b16 %v771
      %v1489 = vunpack.c.l.b16 %v772
      %v1490 = vunpack.c.h.b16 %v772
      %v1491 = vunpack.c.l.b16 %v773
      %v1492 = vunpack.c.h.b16 %v773
      %v1493 = vunpack.c.l.b16 %v774
      %v1494 = vunpack.c.h.b16 %v774
      %v1495 = vunpack.c.l.b16 %v775
      %v1496 = vunpack.c.h.b16 %v775
      %v1497 = vunpack.c.l.b16 %v776
      %v1498 = vunpack.c.h.b16 %v776
      %v1499 = vunpack.c.l.b16 %v777
      %v1500 = vunpack.c.h.b16 %v777
      %v1501 = vunpack.c.l.b16 %v778
      %v1502 = vunpack.c.h.b16 %v778
      %v1503 = vunpack.c.l.b16 %v779
      %v1504 = vunpack.c.h.b16 %v779
      %v1505 = vunpack.c.l.b16 %v780
      %v1506 = vunpack.c.h.b16 %v780
      %v1507 = vunpack.c.l.b16 %v781
      %v1508 = vunpack.c.h.b16 %v781
      %v1509 = vunpack.c.l.b16 %v782
      %v1510 = vunpack.c.h.b16 %v782
      %v1511 = vunpack.c.l.b16 %v783
      %v1512 = vunpack.c.h.b16 %v783
      %v1513 = vunpack.c.l.b16 %v784
      %v1514 = vunpack.c.h.b16 %v784
      %v1515 = vunpack.c.l.b16 %v785
      %v1516 = vunpack.c.h.b16 %v785
      %v1517 = vunpack.c.l.b16 %v786
      %v1518 = vunpack.c.h.b16 %v786
      %v1519 = vunpack.c.l.b16 %v787
      %v1520 = vunpack.c.h.b16 %v787
      %v1521 = vunpack.c.l.b16 %v788
      %v1522 = vunpack.c.h.b16 %v788
      %v1523 = vunpack.c.l.b16 %v789
      %v1524 = vunpack.c.h.b16 %v789
      %v1525 = vunpack.c.l.b16 %v790
      %v1526 = vunpack.c.h.b16 %v790
      %v1527 = vunpack.c.l.b16 %v791
      %v1528 = vunpack.c.h.b16 %v791
      %v1529 = vunpack.c.l.b16 %v792
      %v1530 = vunpack.c.h.b16 %v792
      %v1531 = vunpack.c.l.b16 %v793
      %v1532 = vunpack.c.h.b16 %v793
      %v1533 = vunpack.c.l.b16 %v794
      %v1534 = vunpack.c.h.b16 %v794
      %v1535 = vunpack.c.l.b16 %v795
      %v1536 = vunpack.c.h.b16 %v795
      %v1537 = vunpack.c.l.b16 %v796
      %v1538 = vunpack.c.h.b16 %v796
      %v1539 = vunpack.c.l.b16 %v797
      %v1540 = vunpack.c.h.b16 %v797
      %v1541 = vunpack.c.l.b16 %v798
      %v1542 = vunpack.c.h.b16 %v798
      %v1543 = vunpack.c.l.b16 %v799
      %v1544 = vunpack.c.h.b16 %v799
      %v1545 = vunpack.c.l.b16 %v800
      %v1546 = vunpack.c.h.b16 %v800
      %v1547 = vunpack.c.l.b16 %v801
      %v1548 = vunpack.c.h.b16 %v801
      %v1549 = vunpack.c.l.b16 %v802
      %v1550 = vunpack.c.h.b16 %v802
      %v1551 = vunpack.c.l.b16 %v803
      %v1552 = vunpack.c.h.b16 %v803
      %v1553 = vunpack.c.l.b16 %v804
      %v1554 = vunpack.c.h.b16 %v804
      %v1555 = vunpack.c.l.b16 %v805
      %v1556 = vunpack.c.h.b16 %v805
      %v1557 = vunpack.c.l.b16 %v806
      %v1558 = vunpack.c.h.b16 %v806
      %v1559 = vunpack.c.l.b16 %v807
      %v1560 = vunpack.c.h.b16 %v807
      %v1561 = vunpack.c.l.b16 %v808
      %v1562 = vunpack.c.h.b16 %v808
      %v1563 = vunpack.c.l.b16 %v809
      %v1564 = vunpack.c.h.b16 %v809
      %v1565 = vunpack.c.l.b16 %v810
      %v1566 = vunpack.c.h.b16 %v810
      %v1567 = vunpack.c.l.b16 %v811
      %v1568 = vunpack.c.h.b16 %v811
      %v1569 = vunpack.c.l.b16 %v812
      %v1570 = vunpack.c.h.b16 %v812
      %v1571 = vunpack.c.l.b16 %v813
      %v1572 = vunpack.c.h.b16 %v813
      %v1573 = vunpack.c.l.b16 %v814
      %v1574 = vunpack.c.h.b16 %v814
      %v1575 = vunpack.c.l.b16 %v815
      %v1576 = vunpack.c.h.b16 %v815
      %v1577 = vunpack.c.l.b16 %v816
      %v1578 = vunpack.c.h.b16 %v816
      %v1579 = vunpack.c.l.b16 %v817
      %v1580 = vunpack.c.h.b16 %v817
      %v1581 = vunpack.c.l.b16 %v818
      %v1582 = vunpack.c.h.b16 %v818
      %v1583 = vunpack.c.l.b16 %v819
      %v1584 = vunpack.c.h.b16 %v819
      %v1585 = vunpack.c.l.b16 %v820
      %v1586 = vunpack.c.h.b16 %v820
      %v1587 = vunpack.c.l.b16 %v821
      %v1588 = vunpack.c.h.b16 %v821
      %v1589 = vunpack.c.l.b16 %v822
      %v1590 = vunpack.c.h.b16 %v822
      %v1591 = vunpack.c.l.b16 %v823
      %v1592 = vunpack.c.h.b16 %v823
      %v1593 = vpack.c.b16 %v1085, %v1081
      %v1594 = vpack.c.b16 %v1086, %v1082
      %v1595 = vpack.c.b16 %v1087, %v1083
      %v1596 = vpack.c.b16 %v1088, %v1084
      %v1597 = vpack.c.b16 %v1093, %v1089
      %v1598 = vpack.c.b16 %v1094, %v1090
      %v1599 = vpack.c.b16 %v1095, %v1091
      %v1600 = vpack.c.b16 %v1096, %v1092
      %v1601 = vpack.c.b16 %v1101, %v1097
      %v1602 = vpack.c.b16 %v1102, %v1098
      %v1603 = vpack.c.b16 %v1103, %v1099
      %v1604 = vpack.c.b16 %v1104, %v1100
      %v1605 = vpack.c.b16 %v1109, %v1105
      %v1606 = vpack.c.b16 %v1110, %v1106
      %v1607 = vpack.c.b16 %v1111, %v1107
      %v1608 = vpack.c.b16 %v1112, %v1108
      %v1609 = vpack.c.b16 %v1117, %v1113
      %v1610 = vpack.c.b16 %v1118, %v1114
      %v1611 = vpack.c.b16 %v1119, %v1115
      %v1612 = vpack.c.b16 %v1120, %v1116
      %v1613 = vpack.c.b16 %v1125, %v1121
      %v1614 = vpack.c.b16 %v1126, %v1122
      %v1615 = vpack.c.b16 %v1127, %v1123
      %v1616 = vpack.c.b16 %v1128, %v1124
      %v1617 = vpack.c.b16 %v1133, %v1129
      %v1618 = vpack.c.b16 %v1134, %v1130
      %v1619 = vpack.c.b16 %v1135, %v1131
      %v1620 = vpack.c.b16 %v1136, %v1132
      %v1621 = vpack.c.b16 %v1141, %v1137
      %v1622 = vpack.c.b16 %v1142, %v1138
      %v1623 = vpack.c.b16 %v1143, %v1139
      %v1624 = vpack.c.b16 %v1144, %v1140
      %v1625 = vpack.c.b16 %v1149, %v1145
      %v1626 = vpack.c.b16 %v1150, %v1146
      %v1627 = vpack.c.b16 %v1151, %v1147
      %v1628 = vpack.c.b16 %v1152, %v1148
      %v1629 = vpack.c.b16 %v1157, %v1153
      %v1630 = vpack.c.b16 %v1158, %v1154
      %v1631 = vpack.c.b16 %v1159, %v1155
      %v1632 = vpack.c.b16 %v1160, %v1156
      %v1633 = vpack.c.b16 %v1165, %v1161
      %v1634 = vpack.c.b16 %v1166, %v1162
      %v1635 = vpack.c.b16 %v1167, %v1163
      %v1636 = vpack.c.b16 %v1168, %v1164
      %v1637 = vpack.c.b16 %v1173, %v1169
      %v1638 = vpack.c.b16 %v1174, %v1170
      %v1639 = vpack.c.b16 %v1175, %v1171
      %v1640 = vpack.c.b16 %v1176, %v1172
      %v1641 = vpack.c.b16 %v1181, %v1177
      %v1642 = vpack.c.b16 %v1182, %v1178
      %v1643 = vpack.c.b16 %v1183, %v1179
      %v1644 = vpack.c.b16 %v1184, %v1180
      %v1645 = vpack.c.b16 %v1189, %v1185
      %v1646 = vpack.c.b16 %v1190, %v1186
      %v1647 = vpack.c.b16 %v1191, %v1187
      %v1648 = vpack.c.b16 %v1192, %v1188
      %v1649 = vpack.c.b16 %v1197, %v1193
      %v1650 = vpack.c.b16 %v1198, %v1194
      %v1651 = vpack.c.b16 %v1199, %v1195
      %v1652 = vpack.c.b16 %v1200, %v1196
      %v1653 = vpack.c.b16 %v1205, %v1201
      %v1654 = vpack.c.b16 %v1206, %v1202
      %v1655 = vpack.c.b16 %v1207, %v1203
      %v1656 = vpack.c.b16 %v1208, %v1204
      %v1657 = vpack.c.b16 %v1213, %v1209
      %v1658 = vpack.c.b16 %v1214, %v1210
      %v1659 = vpack.c.b16 %v1215, %v1211
      %v1660 = vpack.c.b16 %v1216, %v1212
      %v1661 = vpack.c.b16 %v1221, %v1217
      %v1662 = vpack.c.b16 %v1222, %v1218
      %v1663 = vpack.c.b16 %v1223, %v1219
      %v1664 = vpack.c.b16 %v1224, %v1220
      %v1665 = vpack.c.b16 %v1229, %v1225
      %v1666 = vpack.c.b16 %v1230, %v1226
      %v1667 = vpack.c.b16 %v1231, %v1227
      %v1668 = vpack.c.b16 %v1232, %v1228
      %v1669 = vpack.c.b16 %v1237, %v1233
      %v1670 = vpack.c.b16 %v1238, %v1234
      %v1671 = vpack.c.b16 %v1239, %v1235
      %v1672 = vpack.c.b16 %v1240, %v1236
      %v1673 = vpack.c.b16 %v1245, %v1241
      %v1674 = vpack.c.b16 %v1246, %v1242
      %v1675 = vpack.c.b16 %v1247, %v1243
      %v1676 = vpack.c.b16 %v1248, %v1244
      %v1677 = vpack.c.b16 %v1253, %v1249
      %v1678 = vpack.c.b16 %v1254, %v1250
      %v1679 = vpack.c.b16 %v1255, %v1251
      %v1680 = vpack.c.b16 %v1256, %v1252
      %v1681 = vpack.c.b16 %v1261, %v1257
      %v1682 = vpack.c.b16 %v1262, %v1258
      %v1683 = vpack.c.b16 %v1263, %v1259
      %v1684 = vpack.c.b16 %v1264, %v1260
      %v1685 = vpack.c.b16 %v1269, %v1265
      %v1686 = vpack.c.b16 %v1270, %v1266
      %v1687 = vpack.c.b16 %v1271, %v1267
      %v1688 = vpack.c.b16 %v1272, %v1268
      %v1689 = vpack.c.b16 %v1277, %v1273
      %v1690 = vpack.c.b16 %v1278, %v1274
      %v1691 = vpack.c.b16 %v1279, %v1275
      %v1692 = vpack.c.b16 %v1280, %v1276
      %v1693 = vpack.c.b16 %v1285, %v1281
      %v1694 = vpack.c.b16 %v1286, %v1282
      %v1695 = vpack.c.b16 %v1287, %v1283
      %v1696 = vpack.c.b16 %v1288, %v1284
      %v1697 = vpack.c.b16 %v1293, %v1289
      %v1698 = vpack.c.b16 %v1294, %v1290
      %v1699 = vpack.c.b16 %v1295, %v1291
      %v1700 = vpack.c.b16 %v1296, %v1292
      %v1701 = vpack.c.b16 %v1301, %v1297
      %v1702 = vpack.c.b16 %v1302, %v1298
      %v1703 = vpack.c.b16 %v1303, %v1299
      %v1704 = vpack.c.b16 %v1304, %v1300
      %v1705 = vpack.c.b16 %v1309, %v1305
      %v1706 = vpack.c.b16 %v1310, %v1306
      %v1707 = vpack.c.b16 %v1311, %v1307
      %v1708 = vpack.c.b16 %v1312, %v1308
      %v1709 = vpack.c.b16 %v1317, %v1313
      %v1710 = vpack.c.b16 %v1318, %v1314
      %v1711 = vpack.c.b16 %v1319, %v1315
      %v1712 = vpack.c.b16 %v1320, %v1316
      %v1713 = vpack.c.b16 %v1325, %v1321
      %v1714 = vpack.c.b16 %v1326, %v1322
      %v1715 = vpack.c.b16 %v1327, %v1323
      %v1716 = vpack.c.b16 %v1328, %v1324
      %v1717 = vpack.c.b16 %v1333, %v1329
      %v1718 = vpack.c.b16 %v1334, %v1330
      %v1719 = vpack.c.b16 %v1335, %v1331
      %v1720 = vpack.c.b16 %v1336, %v1332
      %v1721 = vpack.c.b16 %v1341, %v1337
      %v1722 = vpack.c.b16 %v1342, %v1338
      %v1723 = vpack.c.b16 %v1343, %v1339
      %v1724 = vpack.c.b16 %v1344, %v1340
      %v1725 = vpack.c.b16 %v1349, %v1345
      %v1726 = vpack.c.b16 %v1350, %v1346
      %v1727 = vpack.c.b16 %v1351, %v1347
      %v1728 = vpack.c.b16 %v1352, %v1348
      %v1729 = vpack.c.b16 %v1357, %v1353
      %v1730 = vpack.c.b16 %v1358, %v1354
      %v1731 = vpack.c.b16 %v1359, %v1355
      %v1732 = vpack.c.b16 %v1360, %v1356
      %v1733 = vpack.c.b16 %v1365, %v1361
      %v1734 = vpack.c.b16 %v1366, %v1362
      %v1735 = vpack.c.b16 %v1367, %v1363
      %v1736 = vpack.c.b16 %v1368, %v1364
      %v1737 = vpack.c.b16 %v1373, %v1369
      %v1738 = vpack.c.b16 %v1374, %v1370
      %v1739 = vpack.c.b16 %v1375, %v1371
      %v1740 = vpack.c.b16 %v1376, %v1372
      %v1741 = vpack.c.b16 %v1381, %v1377
      %v1742 = vpack.c.b16 %v1382, %v1378
      %v1743 = vpack.c.b16 %v1383, %v1379
      %v1744 = vpack.c.b16 %v1384, %v1380
      %v1745 = vpack.c.b16 %v1389, %v1385
      %v1746 = vpack.c.b16 %v1390, %v1386
      %v1747 = vpack.c.b16 %v1391, %v1387
      %v1748 = vpack.c.b16 %v1392, %v1388
      %v1749 = vpack.c.b16 %v1397, %v1393
      %v1750 = vpack.c.b16 %v1398, %v1394
      %v1751 = vpack.c.b16 %v1399, %v1395
      %v1752 = vpack.c.b16 %v1400, %v1396
      %v1753 = vpack.c.b16 %v1405, %v1401
      %v1754 = vpack.c.b16 %v1406, %v1402
      %v1755 = vpack.c.b16 %v1407, %v1403
      %v1756 = vpack.c.b16 %v1408, %v1404
      %v1757 = vpack.c.b16 %v1413, %v1409
      %v1758 = vpack.c.b16 %v1414, %v1410
      %v1759 = vpack.c.b16 %v1415, %v1411
      %v1760 = vpack.c.b16 %v1416, %v1412
      %v1761 = vpack.c.b16 %v1421, %v1417
      %v1762 = vpack.c.b16 %v1422, %v1418
      %v1763 = vpack.c.b16 %v1423, %v1419
      %v1764 = vpack.c.b16 %v1424, %v1420
      %v1765 = vpack.c.b16 %v1429, %v1425
      %v1766 = vpack.c.b16 %v1430, %v1426
      %v1767 = vpack.c.b16 %v1431, %v1427
      %v1768 = vpack.c.b16 %v1432, %v1428
      %v1769 = vpack.c.b16 %v1437, %v1433
      %v1770 = vpack.c.b16 %v1438, %v1434
      %v1771 = vpack.c.b16 %v1439, %v1435
      %v1772 = vpack.c.b16 %v1440, %v1436
      %v1773 = vpack.c.b16 %v1445, %v1441
      %v1774 = vpack.c.b16 %v1446, %v1442
      %v1775 = vpack.c.b16 %v1447, %v1443
      %v1776 = vpack.c.b16 %v1448, %v1444
      %v1777 = vpack.c.b16 %v1453, %v1449
      %v1778 = vpack.c.b16 %v1454, %v1450
      %v1779 = vpack.c.b16 %v1455, %v1451
      %v1780 = vpack.c.b16 %v1456, %v1452
      %v1781 = vpack.c.b16 %v1461, %v1457
      %v1782 = vpack.c.b16 %v1462, %v1458
      %v1783 = vpack.c.b16 %v1463, %v1459
      %v1784 = vpack.c.b16 %v1464, %v1460
      %v1785 = vpack.c.b16 %v1469, %v1465
      %v1786 = vpack.c.b16 %v1470, %v1466
      %v1787 = vpack.c.b16 %v1471, %v1467
      %v1788 = vpack.c.b16 %v1472, %v1468
      %v1789 = vpack.c.b16 %v1477, %v1473
      %v1790 = vpack.c.b16 %v1478, %v1474
      %v1791 = vpack.c.b16 %v1479, %v1475
      %v1792 = vpack.c.b16 %v1480, %v1476
      %v1793 = vpack.c.b16 %v1485, %v1481
      %v1794 = vpack.c.b16 %v1486, %v1482
      %v1795 = vpack.c.b16 %v1487, %v1483
      %v1796 = vpack.c.b16 %v1488, %v1484
      %v1797 = vpack.c.b16 %v1493, %v1489
      %v1798 = vpack.c.b16 %v1494, %v1490
      %v1799 = vpack.c.b16 %v1495, %v1491
      %v1800 = vpack.c.b16 %v1496, %v1492
      %v1801 = vpack.c.b16 %v1501, %v1497
      %v1802 = vpack.c.b16 %v1502, %v1498
      %v1803 = vpack.c.b16 %v1503, %v1499
      %v1804 = vpack.c.b16 %v1504, %v1500
      %v1805 = vpack.c.b16 %v1509, %v1505
      %v1806 = vpack.c.b16 %v1510, %v1506
      %v1807 = vpack.c.b16 %v1511, %v1507
      %v1808 = vpack.c.b16 %v1512, %v1508
      %v1809 = vpack.c.b16 %v1517, %v1513
      %v1810 = vpack.c.b16 %v1518, %v1514
      %v1811 = vpack.c.b16 %v1519, %v1515
      %v1812 = vpack.c.b16 %v1520, %v1516
      %v1813 = vpack.c.b16 %v1525, %v1521
      %v1814 = vpack.c.b16 %v1526, %v1522
      %v1815 = vpack.c.b16 %v1527, %v1523
      %v1816 = vpack.c.b16 %v1528, %v1524
      %v1817 = vpack.c.b16 %v1533, %v1529
      %v1818 = vpack.c.b16 %v1534, %v1530
      %v1819 = vpack.c.b16 %v1535, %v1531
      %v1820 = vpack.c.b16 %v1536, %v1532
      %v1821 = vpack.c.b16 %v1541, %v1537
      %v1822 = vpack.c.b16 %v1542, %v1538
      %v1823 = vpack.c.b16 %v1543, %v1539
      %v1824 = vpack.c.b16 %v1544, %v1540
      %v1825 = vpack.c.b16 %v1549, %v1545
      %v1826 = vpack.c.b16 %v1550, %v1546
      %v1827 = vpack.c.b16 %v1551, %v1547
      %v1828 = vpack.c.b16 %v1552, %v1548
      %v1829 = vpack.c.b16 %v1557, %v1553
      %v1830 = vpack.c.b16 %v1558, %v1554
      %v1831 = vpack.c.b16 %v1559, %v1555
      %v1832 = vpack.c.b16 %v1560, %v1556
      %v1833 = vpack.c.b16 %v1565, %v1561
      %v1834 = vpack.c.b16 %v1566, %v1562
      %v1835 = vpack.c.b16 %v1567, %v1563
      %v1836 = vpack.c.b16 %v1568, %v1564
      %v1837 = vpack.c.b16 %v1573, %v1569
      %v1838 = vpack.c.b16 %v1574, %v1570
      %v1839 = vpack.c.b16 %v1575, %v1571
      %v1840 = vpack.c.b16 %v1576, %v1572
      %v1841 = vpack.c.b16 %v1581, %v1577
      %v1842 = vpack.c.b16 %v1582, %v1578
      %v1843 = vpack.c.b16 %v1583, %v1579
      %v1844 = vpack.c.b16 %v1584, %v1580
      %v1845 = vpack.c.b16 %v1589, %v1585
      %v1846 = vpack.c.b16 %v1590, %v1586
      %v1847 = vpack.c.b16 %v1591, %v1587
      %v1848 = vpack.c.b16 %v1592, %v1588
      %v2106 = vlaneseq
      %v2107 = vshrl.u32 %v2106, 7
      %v2108 = vsub.s32 0, %v2107
      %v2109 = vrot.slane %v824, %v2108
      %v2110 = vlaneseq
      %v2111 = vshrl.u32 %v2110, 7
      %v2112 = vsub.s32 1, %v2111
      %v2113 = vrot.slane %v824, %v2112
      %v2114 = vlaneseq
      %v2115 = vshrl.u32 %v2114, 7
      %v2116 = vsub.s32 2, %v2115
      %v2117 = vrot.slane %v824, %v2116
      %v2118 = vlaneseq
      %v2119 = vshrl.u32 %v2118, 7
      %v2120 = vsub.s32 3, %v2119
      %v2121 = vrot.slane %v824, %v2120
      %2126 = vmatprep.subr.bf16.mxu0 %v1594
      %2127 = vmatpush1.bf16.msra.mxu0 %v1593
      %2128 = vmatprep.subr.bf16.mxu0 %v1598
      %2129 = vmatpush1.bf16.msra.mxu0 %v1597
      %2130 = vmatprep.subr.bf16.mxu0 %v1602
      %2131 = vmatpush1.bf16.msra.mxu0 %v1601
      %2132 = vmatprep.subr.bf16.mxu0 %v1606
      %2133 = vmatpush1.bf16.msra.mxu0 %v1605
      %2134 = vmatprep.subr.bf16.mxu0 %v1610
      %2135 = vmatpush1.bf16.msra.mxu0 %v1609
      %2136 = vmatprep.subr.bf16.mxu0 %v1614
      %2137 = vmatpush1.bf16.msra.mxu0 %v1613
      %2138 = vmatprep.subr.bf16.mxu0 %v1618
      %2139 = vmatpush1.bf16.msra.mxu0 %v1617
      %2140 = vmatprep.subr.bf16.mxu0 %v1622
      %2141 = vmatpush1.bf16.msra.mxu0 %v1621
      %2142 = vmatprep.subr.bf16.mxu0 %v1626
      %2143 = vmatpush1.bf16.msra.mxu0 %v1625
      %2144 = vmatprep.subr.bf16.mxu0 %v1630
      %2145 = vmatpush1.bf16.msra.mxu0 %v1629
      %2146 = vmatprep.subr.bf16.mxu0 %v1634
      %2147 = vmatpush1.bf16.msra.mxu0 %v1633
      %2148 = vmatprep.subr.bf16.mxu0 %v1638
      %2149 = vmatpush1.bf16.msra.mxu0 %v1637
      %2150 = vmatprep.subr.bf16.mxu0 %v1642
      %2151 = vmatpush1.bf16.msra.mxu0 %v1641
      %2152 = vmatprep.subr.bf16.mxu0 %v1646
      %2153 = vmatpush1.bf16.msra.mxu0 %v1645
      %2154 = vmatprep.subr.bf16.mxu0 %v1650
      %2155 = vmatpush1.bf16.msra.mxu0 %v1649
      %2156 = vmatprep.subr.bf16.mxu0 %v1654
      %2157 = vmatpush1.bf16.msra.mxu0 %v1653
      %2158 = vmatprep.mubr.bf16.mxu0 %v561
      %2159 = vmatmul.mubr.bf16.gmra.mrb[0].mxu0 %v560
      %v2160 = vpop.f32.mrb[0].mxu0
      %v2161 = vadd.f32 %v2109, %v2160
      %v2162 = vpop.f32.mrb[0].mxu0
      %v2163 = vadd.f32 %v2113, %v2162
      %v2164 = vpop.f32.mrb[0].mxu0
      %v2165 = vpop.f32.mrb[0].mxu0
      %2166 = vdwg.mxu0
      %2167 = vmatprep.subr.bf16.mxu0 %v1658
      %2168 = vmatpush1.bf16.msra.mxu0 %v1657
      %2169 = vmatprep.subr.bf16.mxu0 %v1662
      %2170 = vmatpush1.bf16.msra.mxu0 %v1661
      %2171 = vmatprep.subr.bf16.mxu0 %v1666
      %2172 = vmatpush1.bf16.msra.mxu0 %v1665
      %2173 = vmatprep.subr.bf16.mxu0 %v1670
      %2174 = vmatpush1.bf16.msra.mxu0 %v1669
      %2175 = vmatprep.subr.bf16.mxu0 %v1674
      %2176 = vmatpush1.bf16.msra.mxu0 %v1673
      %2177 = vmatprep.subr.bf16.mxu0 %v1678
      %2178 = vmatpush1.bf16.msra.mxu0 %v1677
      %2179 = vmatprep.subr.bf16.mxu0 %v1682
      %2180 = vmatpush1.bf16.msra.mxu0 %v1681
      %2181 = vmatprep.subr.bf16.mxu0 %v1686
      %2182 = vmatpush1.bf16.msra.mxu0 %v1685
      %2183 = vmatprep.subr.bf16.mxu0 %v1690
      %2184 = vmatpush1.bf16.msra.mxu0 %v1689
      %2185 = vmatprep.subr.bf16.mxu0 %v1694
      %2186 = vmatpush1.bf16.msra.mxu0 %v1693
      %2187 = vmatprep.subr.bf16.mxu0 %v1698
      %2188 = vmatpush1.bf16.msra.mxu0 %v1697
      %2189 = vmatprep.subr.bf16.mxu0 %v1702
      %2190 = vmatpush1.bf16.msra.mxu0 %v1701
      %2191 = vmatprep.subr.bf16.mxu0 %v1706
      %2192 = vmatpush1.bf16.msra.mxu0 %v1705
      %2193 = vmatprep.subr.bf16.mxu0 %v1710
      %2194 = vmatpush1.bf16.msra.mxu0 %v1709
      %2195 = vmatprep.subr.bf16.mxu0 %v1714
      %2196 = vmatpush1.bf16.msra.mxu0 %v1713
      %2197 = vmatprep.subr.bf16.mxu0 %v1718
      %2198 = vmatpush1.bf16.msra.mxu0 %v1717
      %2199 = vmatprep.mubr.bf16.mxu0 %v563
      %2200 = vmatmul.mubr.bf16.gmra.mrb[0].mxu0 %v562
      %v2201 = vpop.f32.mrb[0].mxu0
      %v2202 = vadd.f32 %v2161, %v2201
      %v2203 = vpop.f32.mrb[0].mxu0
      %v2204 = vadd.f32 %v2163, %v2203
      %v2205 = vpop.f32.mrb[0].mxu0
      %v2206 = vpop.f32.mrb[0].mxu0
      %2207 = vdwg.mxu0
      %2208 = vmatprep.subr.bf16.mxu0 %v1722
      %2209 = vmatpush1.bf16.msra.mxu0 %v1721
      %2210 = vmatprep.subr.bf16.mxu0 %v1726
      %2211 = vmatpush1.bf16.msra.mxu0 %v1725
      %2212 = vmatprep.subr.bf16.mxu0 %v1730
      %2213 = vmatpush1.bf16.msra.mxu0 %v1729
      %2214 = vmatprep.subr.bf16.mxu0 %v1734
      %2215 = vmatpush1.bf16.msra.mxu0 %v1733
      %2216 = vmatprep.subr.bf16.mxu0 %v1738
      %2217 = vmatpush1.bf16.msra.mxu0 %v1737
      %2218 = vmatprep.subr.bf16.mxu0 %v1742
      %2219 = vmatpush1.bf16.msra.mxu0 %v1741
      %2220 = vmatprep.subr.bf16.mxu0 %v1746
      %2221 = vmatpush1.bf16.msra.mxu0 %v1745
      %2222 = vmatprep.subr.bf16.mxu0 %v1750
      %2223 = vmatpush1.bf16.msra.mxu0 %v1749
      %2224 = vmatprep.subr.bf16.mxu0 %v1754
      %2225 = vmatpush1.bf16.msra.mxu0 %v1753
      %2226 = vmatprep.subr.bf16.mxu0 %v1758
      %2227 = vmatpush1.bf16.msra.mxu0 %v1757
      %2228 = vmatprep.subr.bf16.mxu0 %v1762
      %2229 = vmatpush1.bf16.msra.mxu0 %v1761
      %2230 = vmatprep.subr.bf16.mxu0 %v1766
      %2231 = vmatpush1.bf16.msra.mxu0 %v1765
      %2232 = vmatprep.subr.bf16.mxu0 %v1770
      %2233 = vmatpush1.bf16.msra.mxu0 %v1769
      %2234 = vmatprep.subr.bf16.mxu0 %v1774
      %2235 = vmatpush1.bf16.msra.mxu0 %v1773
      %2236 = vmatprep.subr.bf16.mxu0 %v1778
      %2237 = vmatpush1.bf16.msra.mxu0 %v1777
      %2238 = vmatprep.subr.bf16.mxu0 %v1782
      %2239 = vmatpush1.bf16.msra.mxu0 %v1781
      %2240 = vmatprep.mubr.bf16.mxu0 %v565
      %2241 = vmatmul.mubr.bf16.gmra.mrb[0].mxu0 %v564
      %v2242 = vpop.f32.mrb[0].mxu0
      %v2243 = vadd.f32 %v2202, %v2242
      %v2244 = vpop.f32.mrb[0].mxu0
      %v2245 = vadd.f32 %v2204, %v2244
      %v2246 = vpop.f32.mrb[0].mxu0
      %v2247 = vpop.f32.mrb[0].mxu0
      %2248 = vdwg.mxu0
      %2249 = vmatprep.subr.bf16.mxu0 %v1786
      %2250 = vmatpush1.bf16.msra.mxu0 %v1785
      %2251 = vmatprep.subr.bf16.mxu0 %v1790
      %2252 = vmatpush1.bf16.msra.mxu0 %v1789
      %2253 = vmatprep.subr.bf16.mxu0 %v1794
      %2254 = vmatpush1.bf16.msra.mxu0 %v1793
      %2255 = vmatprep.subr.bf16.mxu0 %v1798
      %2256 = vmatpush1.bf16.msra.mxu0 %v1797
      %2257 = vmatprep.subr.bf16.mxu0 %v1802
      %2258 = vmatpush1.bf16.msra.mxu0 %v1801
      %2259 = vmatprep.subr.bf16.mxu0 %v1806
      %2260 = vmatpush1.bf16.msra.mxu0 %v1805
      %2261 = vmatprep.subr.bf16.mxu0 %v1810
      %2262 = vmatpush1.bf16.msra.mxu0 %v1809
      %2263 = vmatprep.subr.bf16.mxu0 %v1814
      %2264 = vmatpush1.bf16.msra.mxu0 %v1813
      %2265 = vmatprep.subr.bf16.mxu0 %v1818
      %2266 = vmatpush1.bf16.msra.mxu0 %v1817
      %2267 = vmatprep.subr.bf16.mxu0 %v1822
      %2268 = vmatpush1.bf16.msra.mxu0 %v1821
      %2269 = vmatprep.subr.bf16.mxu0 %v1826
      %2270 = vmatpush1.bf16.msra.mxu0 %v1825
      %2271 = vmatprep.subr.bf16.mxu0 %v1830
      %2272 = vmatpush1.bf16.msra.mxu0 %v1829
      %2273 = vmatprep.subr.bf16.mxu0 %v1834
      %2274 = vmatpush1.bf16.msra.mxu0 %v1833
      %2275 = vmatprep.subr.bf16.mxu0 %v1838
      %2276 = vmatpush1.bf16.msra.mxu0 %v1837
      %2277 = vmatprep.subr.bf16.mxu0 %v1842
      %2278 = vmatpush1.bf16.msra.mxu0 %v1841
      %2279 = vmatprep.subr.bf16.mxu0 %v1846
      %2280 = vmatpush1.bf16.msra.mxu0 %v1845
      %2281 = vmatprep.mubr.bf16.mxu0 %v567
      %2282 = vmatmul.mubr.bf16.gmra.mrb[0].mxu0 %v566
      %v2283 = vpop.f32.mrb[0].mxu0
      %v2284 = vadd.f32 %v2243, %v2283
      %v2285 = vpop.f32.mrb[0].mxu0
      %v2286 = vadd.f32 %v2245, %v2285
      %v2287 = vpop.f32.mrb[0].mxu0
      %v2288 = vpop.f32.mrb[0].mxu0
      %2289 = vdwg.mxu0
      %2290 = vmatprep.subr.bf16.mxu0 %v1596
      %2291 = vmatpush1.bf16.msra.mxu0 %v1595
      %2292 = vmatprep.subr.bf16.mxu0 %v1600
      %2293 = vmatpush1.bf16.msra.mxu0 %v1599
      %2294 = vmatprep.subr.bf16.mxu0 %v1604
      %2295 = vmatpush1.bf16.msra.mxu0 %v1603
      %2296 = vmatprep.subr.bf16.mxu0 %v1608
      %2297 = vmatpush1.bf16.msra.mxu0 %v1607
      %2298 = vmatprep.subr.bf16.mxu0 %v1612
      %2299 = vmatpush1.bf16.msra.mxu0 %v1611
      %2300 = vmatprep.subr.bf16.mxu0 %v1616
      %2301 = vmatpush1.bf16.msra.mxu0 %v1615
      %2302 = vmatprep.subr.bf16.mxu0 %v1620
      %2303 = vmatpush1.bf16.msra.mxu0 %v1619
      %2304 = vmatprep.subr.bf16.mxu0 %v1624
      %2305 = vmatpush1.bf16.msra.mxu0 %v1623
      %2306 = vmatprep.subr.bf16.mxu0 %v1628
      %2307 = vmatpush1.bf16.msra.mxu0 %v1627
      %2308 = vmatprep.subr.bf16.mxu0 %v1632
      %2309 = vmatpush1.bf16.msra.mxu0 %v1631
      %2310 = vmatprep.subr.bf16.mxu0 %v1636
      %2311 = vmatpush1.bf16.msra.mxu0 %v1635
      %2312 = vmatprep.subr.bf16.mxu0 %v1640
      %2313 = vmatpush1.bf16.msra.mxu0 %v1639
      %2314 = vmatprep.subr.bf16.mxu0 %v1644
      %2315 = vmatpush1.bf16.msra.mxu0 %v1643
      %2316 = vmatprep.subr.bf16.mxu0 %v1648
      %2317 = vmatpush1.bf16.msra.mxu0 %v1647
      %2318 = vmatprep.subr.bf16.mxu0 %v1652
      %2319 = vmatpush1.bf16.msra.mxu0 %v1651
      %2320 = vmatprep.subr.bf16.mxu0 %v1656
      %2321 = vmatpush1.bf16.msra.mxu0 %v1655
      %2322 = vmatprep.mubr.bf16.mxu0 %v561
      %2323 = vmatmul.mubr.bf16.gmra.mrb[0].mxu0 %v560
      %v2324 = vpop.f32.mrb[0].mxu0
      %v2325 = vadd.f32 %v2117, %v2324
      %v2326 = vpop.f32.mrb[0].mxu0
      %v2327 = vadd.f32 %v2121, %v2326
      %v2328 = vpop.f32.mrb[0].mxu0
      %v2329 = vpop.f32.mrb[0].mxu0
      %2330 = vdwg.mxu0
      %2331 = vmatprep.subr.bf16.mxu0 %v1660
      %2332 = vmatpush1.bf16.msra.mxu0 %v1659
      %2333 = vmatprep.subr.bf16.mxu0 %v1664
      %2334 = vmatpush1.bf16.msra.mxu0 %v1663
      %2335 = vmatprep.subr.bf16.mxu0 %v1668
      %2336 = vmatpush1.bf16.msra.mxu0 %v1667
      %2337 = vmatprep.subr.bf16.mxu0 %v1672
      %2338 = vmatpush1.bf16.msra.mxu0 %v1671
      %2339 = vmatprep.subr.bf16.mxu0 %v1676
      %2340 = vmatpush1.bf16.msra.mxu0 %v1675
      %2341 = vmatprep.subr.bf16.mxu0 %v1680
      %2342 = vmatpush1.bf16.msra.mxu0 %v1679
      %2343 = vmatprep.subr.bf16.mxu0 %v1684
      %2344 = vmatpush1.bf16.msra.mxu0 %v1683
      %2345 = vmatprep.subr.bf16.mxu0 %v1688
      %2346 = vmatpush1.bf16.msra.mxu0 %v1687
      %2347 = vmatprep.subr.bf16.mxu0 %v1692
      %2348 = vmatpush1.bf16.msra.mxu0 %v1691
      %2349 = vmatprep.subr.bf16.mxu0 %v1696
      %2350 = vmatpush1.bf16.msra.mxu0 %v1695
      %2351 = vmatprep.subr.bf16.mxu0 %v1700
      %2352 = vmatpush1.bf16.msra.mxu0 %v1699
      %2353 = vmatprep.subr.bf16.mxu0 %v1704
      %2354 = vmatpush1.bf16.msra.mxu0 %v1703
      %2355 = vmatprep.subr.bf16.mxu0 %v1708
      %2356 = vmatpush1.bf16.msra.mxu0 %v1707
      %2357 = vmatprep.subr.bf16.mxu0 %v1712
      %2358 = vmatpush1.bf16.msra.mxu0 %v1711
      %2359 = vmatprep.subr.bf16.mxu0 %v1716
      %2360 = vmatpush1.bf16.msra.mxu0 %v1715
      %2361 = vmatprep.subr.bf16.mxu0 %v1720
      %2362 = vmatpush1.bf16.msra.mxu0 %v1719
      %2363 = vmatprep.mubr.bf16.mxu0 %v563
      %2364 = vmatmul.mubr.bf16.gmra.mrb[0].mxu0 %v562
      %v2365 = vpop.f32.mrb[0].mxu0
      %v2366 = vadd.f32 %v2325, %v2365
      %v2367 = vpop.f32.mrb[0].mxu0
      %v2368 = vadd.f32 %v2327, %v2367
      %v2369 = vpop.f32.mrb[0].mxu0
      %v2370 = vpop.f32.mrb[0].mxu0
      %2371 = vdwg.mxu0
      %2372 = vmatprep.subr.bf16.mxu0 %v1724
      %2373 = vmatpush1.bf16.msra.mxu0 %v1723
      %2374 = vmatprep.subr.bf16.mxu0 %v1728
      %2375 = vmatpush1.bf16.msra.mxu0 %v1727
      %2376 = vmatprep.subr.bf16.mxu0 %v1732
      %2377 = vmatpush1.bf16.msra.mxu0 %v1731
      %2378 = vmatprep.subr.bf16.mxu0 %v1736
      %2379 = vmatpush1.bf16.msra.mxu0 %v1735
      %2380 = vmatprep.subr.bf16.mxu0 %v1740
      %2381 = vmatpush1.bf16.msra.mxu0 %v1739
      %2382 = vmatprep.subr.bf16.mxu0 %v1744
      %2383 = vmatpush1.bf16.msra.mxu0 %v1743
      %2384 = vmatprep.subr.bf16.mxu0 %v1748
      %2385 = vmatpush1.bf16.msra.mxu0 %v1747
      %2386 = vmatprep.subr.bf16.mxu0 %v1752
      %2387 = vmatpush1.bf16.msra.mxu0 %v1751
      %2388 = vmatprep.subr.bf16.mxu0 %v1756
      %2389 = vmatpush1.bf16.msra.mxu0 %v1755
      %2390 = vmatprep.subr.bf16.mxu0 %v1760
      %2391 = vmatpush1.bf16.msra.mxu0 %v1759
      %2392 = vmatprep.subr.bf16.mxu0 %v1764
      %2393 = vmatpush1.bf16.msra.mxu0 %v1763
      %2394 = vmatprep.subr.bf16.mxu0 %v1768
      %2395 = vmatpush1.bf16.msra.mxu0 %v1767
      %2396 = vmatprep.subr.bf16.mxu0 %v1772
      %2397 = vmatpush1.bf16.msra.mxu0 %v1771
      %2398 = vmatprep.subr.bf16.mxu0 %v1776
      %2399 = vmatpush1.bf16.msra.mxu0 %v1775
      %2400 = vmatprep.subr.bf16.mxu0 %v1780
      %2401 = vmatpush1.bf16.msra.mxu0 %v1779
      %2402 = vmatprep.subr.bf16.mxu0 %v1784
      %2403 = vmatpush1.bf16.msra.mxu0 %v1783
      %2404 = vmatprep.mubr.bf16.mxu0 %v565
      %2405 = vmatmul.mubr.bf16.gmra.mrb[0].mxu0 %v564
      %v2406 = vpop.f32.mrb[0].mxu0
      %v2407 = vadd.f32 %v2366, %v2406
      %v2408 = vpop.f32.mrb[0].mxu0
      %v2409 = vadd.f32 %v2368, %v2408
      %v2410 = vpop.f32.mrb[0].mxu0
      %v2411 = vpop.f32.mrb[0].mxu0
      %2412 = vdwg.mxu0
      %2413 = vmatprep.subr.bf16.mxu0 %v1788
      %2414 = vmatpush1.bf16.msra.mxu0 %v1787
      %2415 = vmatprep.subr.bf16.mxu0 %v1792
      %2416 = vmatpush1.bf16.msra.mxu0 %v1791
      %2417 = vmatprep.subr.bf16.mxu0 %v1796
      %2418 = vmatpush1.bf16.msra.mxu0 %v1795
      %2419 = vmatprep.subr.bf16.mxu0 %v1800
      %2420 = vmatpush1.bf16.msra.mxu0 %v1799
      %2421 = vmatprep.subr.bf16.mxu0 %v1804
      %2422 = vmatpush1.bf16.msra.mxu0 %v1803
      %2423 = vmatprep.subr.bf16.mxu0 %v1808
      %2424 = vmatpush1.bf16.msra.mxu0 %v1807
      %2425 = vmatprep.subr.bf16.mxu0 %v1812
      %2426 = vmatpush1.bf16.msra.mxu0 %v1811
      %2427 = vmatprep.subr.bf16.mxu0 %v1816
      %2428 = vmatpush1.bf16.msra.mxu0 %v1815
      %2429 = vmatprep.subr.bf16.mxu0 %v1820
      %2430 = vmatpush1.bf16.msra.mxu0 %v1819
      %2431 = vmatprep.subr.bf16.mxu0 %v1824
      %2432 = vmatpush1.bf16.msra.mxu0 %v1823
      %2433 = vmatprep.subr.bf16.mxu0 %v1828
      %2434 = vmatpush1.bf16.msra.mxu0 %v1827
      %2435 = vmatprep.subr.bf16.mxu0 %v1832
      %2436 = vmatpush1.bf16.msra.mxu0 %v1831
      %2437 = vmatprep.subr.bf16.mxu0 %v1836
      %2438 = vmatpush1.bf16.msra.mxu0 %v1835
      %2439 = vmatprep.subr.bf16.mxu0 %v1840
      %2440 = vmatpush1.bf16.msra.mxu0 %v1839
      %2441 = vmatprep.subr.bf16.mxu0 %v1844
      %2442 = vmatpush1.bf16.msra.mxu0 %v1843
      %2443 = vmatprep.subr.bf16.mxu0 %v1848
      %2444 = vmatpush1.bf16.msra.mxu0 %v1847
      %2445 = vmatprep.mubr.bf16.mxu0 %v567
      %2446 = vmatmul.mubr.bf16.gmra.mrb[0].mxu0 %v566
      %v2447 = vpop.f32.mrb[0].mxu0
      %v2448 = vadd.f32 %v2407, %v2447
      %v2449 = vpop.f32.mrb[0].mxu0
      %v2450 = vadd.f32 %v2409, %v2449
      %v2451 = vpop.f32.mrb[0].mxu0
      %v2452 = vpop.f32.mrb[0].mxu0
      %2453 = vdwg.mxu0
      %v2454 = vld [vmem:[%s496] sm:$0xf]
      %v2455 = vld [vmem:[%s496 + $0x4] sm:$0xf]
      %v2456 = vld [vmem:[%s496 + $0x8] sm:$0xf]
      %v2457 = vld [vmem:[%s496 + $0xc] sm:$0xf]
      %v2458 = vld [vmem:[%s496 + $0x10] sm:$0xf]
      %v2459 = vld [vmem:[%s496 + $0x14] sm:$0xf]
      %v2460 = vld [vmem:[%s496 + $0x18] sm:$0xf]
      %v2461 = vld [vmem:[%s496 + $0x1c] sm:$0xf]
      %v2462 = vld [vmem:[%s502] sm:$0xf]
      %v2463 = vld [vmem:[%s502 + $0x4] sm:$0xf]
      %v2464 = vld [vmem:[%s2] sm:$0x1]
      %v2466 = vlaneseq
      %v2467 = vshrl.u32 %v2466, 7
      %v2468 = vsub.s32 0, %v2467
      %v2469 = vrot.slane %v2464, %v2468
      %v2479 = vunpack.c.l.b16 %v2454
      %v2480 = vunpack.c.l.b16 %v2455
      %v2481 = vunpack.c.l.b16 %v2456
      %v2482 = vunpack.c.l.b16 %v2457
      %v2483 = vunpack.c.l.b16 %v2458
      %v2484 = vunpack.c.l.b16 %v2459
      %v2485 = vunpack.c.l.b16 %v2460
      %v2486 = vunpack.c.l.b16 %v2461
      %v2487 = vpack.c.b16 %v2480, %v2479
      %v2488 = vpack.c.b16 %v2482, %v2481
      %v2489 = vpack.c.b16 %v2484, %v2483
      %v2490 = vpack.c.b16 %v2486, %v2485
      %v2493 = vunpack.c.l.b16 %v2462
      %v2494 = vunpack.c.l.b16 %v2463
      %v2495 = vpack.c.b16 %v2494, %v2493
      %vm2497 = vcmask 130048
      %v2499 = vsel %vm2497, %v2487, 0
      %v2502 = vsel %vm2497, %v2488, 0
      %v2505 = vsel %vm2497, %v2489, 0
      %v2508 = vsel %vm2497, %v2490, 0
      %2510 = vmatprep.subr.bf16.mxu0 0
      %2511 = vmatpush1.bf16.msra.mxu0 %v2495
      %2512 = vmatprep.subr.bf16.mxu0 0
      %2513 = vmatpush1.bf16.msra.mxu0 0
      %2514 = vmatprep.subr.bf16.mxu0 0
      %2515 = vmatpush1.bf16.msra.mxu0 0
      %2516 = vmatprep.subr.bf16.mxu0 0
      %2517 = vmatpush1.bf16.msra.mxu0 0
      %2518 = vmatprep.subr.bf16.mxu0 0
      %2519 = vmatpush1.bf16.msra.mxu0 0
      %2520 = vmatprep.subr.bf16.mxu0 0
      %2521 = vmatpush1.bf16.msra.mxu0 0
      %2522 = vmatprep.subr.bf16.mxu0 0
      %2523 = vmatpush1.bf16.msra.mxu0 0
      %2524 = vmatprep.subr.bf16.mxu0 0
      %2525 = vmatpush1.bf16.msra.mxu0 0
      %2526 = vmatprep.subr.bf16.mxu0 0
      %2527 = vmatpush1.bf16.msra.mxu0 0
      %2528 = vmatprep.subr.bf16.mxu0 0
      %2529 = vmatpush1.bf16.msra.mxu0 0
      %2530 = vmatprep.subr.bf16.mxu0 0
      %2531 = vmatpush1.bf16.msra.mxu0 0
      %2532 = vmatprep.subr.bf16.mxu0 0
      %2533 = vmatpush1.bf16.msra.mxu0 0
      %2534 = vmatprep.subr.bf16.mxu0 0
      %2535 = vmatpush1.bf16.msra.mxu0 0
      %2536 = vmatprep.subr.bf16.mxu0 0
      %2537 = vmatpush1.bf16.msra.mxu0 0
      %2538 = vmatprep.subr.bf16.mxu0 0
      %2539 = vmatpush1.bf16.msra.mxu0 0
      %2540 = vmatprep.subr.bf16.mxu0 0
      %2541 = vmatpush1.bf16.msra.mxu0 0
      %2542 = vmatprep.mubr.bf16.mxu0 0
      %2543 = vmatmul.mubr.bf16.gmra.mrb[0].mxu0 %v2499
      %v2544 = vpop.f32.mrb[0].mxu0
      %v2545 = vadd.f32 %v2469, %v2544
      %v2546 = vpop.f32.mrb[0].mxu0
      %v2547 = vpop.f32.mrb[0].mxu0
      %v2548 = vadd.f32 %v2469, %v2547
      %v2549 = vpop.f32.mrb[0].mxu0
      %2550 = vmatprep.mubr.bf16.mxu0 0
      %2551 = vmatmul.mubr.bf16.gmra.mrb[0].mxu0 %v2502
      %v2552 = vpop.f32.mrb[0].mxu0
      %v2553 = vadd.f32 %v2469, %v2552
      %v2554 = vpop.f32.mrb[0].mxu0
      %v2555 = vpop.f32.mrb[0].mxu0
      %v2556 = vadd.f32 %v2469, %v2555
      %v2557 = vpop.f32.mrb[0].mxu0
      %2558 = vmatprep.mubr.bf16.mxu0 0
      %2559 = vmatmul.mubr.bf16.gmra.mrb[0].mxu0 %v2505
      %v2560 = vpop.f32.mrb[0].mxu0
      %v2561 = vadd.f32 %v2469, %v2560
      %v2562 = vpop.f32.mrb[0].mxu0
      %v2563 = vpop.f32.mrb[0].mxu0
      %v2564 = vadd.f32 %v2469, %v2563
      %v2565 = vpop.f32.mrb[0].mxu0
      %2566 = vmatprep.mubr.bf16.mxu0 0
      %2567 = vmatmul.mubr.bf16.gmra.mrb[0].mxu0 %v2508
      %v2568 = vpop.f32.mrb[0].mxu0
      %v2569 = vadd.f32 %v2469, %v2568
      %v2570 = vpop.f32.mrb[0].mxu0
      %v2571 = vpop.f32.mrb[0].mxu0
      %v2572 = vadd.f32 %v2469, %v2571
      %v2573 = vpop.f32.mrb[0].mxu0
      %2574 = vdwg.mxu0
      %v2575 = vmax.f32 %v2545, 0.0
      %v2576 = vmax.f32 %v2548, 0.0
      %v2577 = vmax.f32 %v2553, 0.0
      %v2578 = vmax.f32 %v2556, 0.0
      %v2579 = vmax.f32 %v2561, 0.0
      %v2580 = vmax.f32 %v2564, 0.0
      %v2581 = vmax.f32 %v2569, 0.0
      %v2582 = vmax.f32 %v2572, 0.0
      %v2583 = vpack.c.bf16 %v2576, %v2575
      %v2584 = vpack.c.bf16 %v2578, %v2577
      %v2585 = vpack.c.bf16 %v2580, %v2579
      %v2586 = vpack.c.bf16 %v2582, %v2581
      %v2587 = vld [vmem:[%s6] sm:$0xff]
      %v2588 = vld [vmem:[%s6 + $0x8] sm:$0xff]
      %v2589 = vld [vmem:[%s6 + $0x10] sm:$0xff]
      %v2590 = vld [vmem:[%s6 + $0x18] sm:$0xff]
      %v2591 = vld [vmem:[%s6 + $0x20] sm:$0xff]
      %v2592 = vld [vmem:[%s6 + $0x28] sm:$0xff]
      %v2593 = vld [vmem:[%s6 + $0x30] sm:$0xff]
      %v2594 = vld [vmem:[%s6 + $0x38] sm:$0xff]
      %v2595 = vld [vmem:[%s6 + $0x40] sm:$0xff]
      %v2596 = vld [vmem:[%s6 + $0x48] sm:$0xff]
      %v2597 = vld [vmem:[%s6 + $0x50] sm:$0xff]
      %v2598 = vld [vmem:[%s6 + $0x58] sm:$0xff]
      %v2599 = vld [vmem:[%s6 + $0x60] sm:$0xff]
      %v2600 = vld [vmem:[%s6 + $0x68] sm:$0xff]
      %v2601 = vld [vmem:[%s6 + $0x70] sm:$0xff]
      %v2602 = vld [vmem:[%s6 + $0x78] sm:$0xff]
      %v2603 = vlaneseq
      %v2604 = vshrl.u32 %v2603, 7
      %v2605 = vsub.s32 0, %v2604
      %v2606 = vrot.slane %v2284, %v2605
      %v2607 = vlaneseq
      %v2608 = vshrl.u32 %v2607, 7
      %v2609 = vsub.s32 0, %v2608
      %v2610 = vrot.slane %v2286, %v2609
      %v2611 = vlaneseq
      %v2612 = vshrl.u32 %v2611, 7
      %v2613 = vsub.s32 0, %v2612
      %v2614 = vrot.slane %v2448, %v2613
      %v2615 = vlaneseq
      %v2616 = vshrl.u32 %v2615, 7
      %v2617 = vsub.s32 0, %v2616
      %v2618 = vrot.slane %v2450, %v2617
      %v2635 = vunpack.c.l.b16 %v2587
      %v2636 = vunpack.c.h.b16 %v2587
      %v2637 = vunpack.c.l.b16 %v2588
      %v2638 = vunpack.c.h.b16 %v2588
      %v2639 = vunpack.c.l.b16 %v2589
      %v2640 = vunpack.c.h.b16 %v2589
      %v2641 = vunpack.c.l.b16 %v2590
      %v2642 = vunpack.c.h.b16 %v2590
      %v2643 = vunpack.c.l.b16 %v2591
      %v2644 = vunpack.c.h.b16 %v2591
      %v2645 = vunpack.c.l.b16 %v2592
      %v2646 = vunpack.c.h.b16 %v2592
      %v2647 = vunpack.c.l.b16 %v2593
      %v2648 = vunpack.c.h.b16 %v2593
      %v2649 = vunpack.c.l.b16 %v2594
      %v2650 = vunpack.c.h.b16 %v2594
      %v2651 = vunpack.c.l.b16 %v2595
      %v2652 = vunpack.c.h.b16 %v2595
      %v2653 = vunpack.c.l.b16 %v2596
      %v2654 = vunpack.c.h.b16 %v2596
      %v2655 = vunpack.c.l.b16 %v2597
      %v2656 = vunpack.c.h.b16 %v2597
      %v2657 = vunpack.c.l.b16 %v2598
      %v2658 = vunpack.c.h.b16 %v2598
      %v2659 = vunpack.c.l.b16 %v2599
      %v2660 = vunpack.c.h.b16 %v2599
      %v2661 = vunpack.c.l.b16 %v2600
      %v2662 = vunpack.c.h.b16 %v2600
      %v2663 = vunpack.c.l.b16 %v2601
      %v2664 = vunpack.c.h.b16 %v2601
      %v2665 = vunpack.c.l.b16 %v2602
      %v2666 = vunpack.c.h.b16 %v2602
      %v2667 = vpack.c.b16 %v2639, %v2635
      %v2668 = vpack.c.b16 %v2640, %v2636
      %v2669 = vpack.c.b16 %v2641, %v2637
      %v2670 = vpack.c.b16 %v2642, %v2638
      %v2671 = vpack.c.b16 %v2647, %v2643
      %v2672 = vpack.c.b16 %v2648, %v2644
      %v2673 = vpack.c.b16 %v2649, %v2645
      %v2674 = vpack.c.b16 %v2650, %v2646
      %v2675 = vpack.c.b16 %v2655, %v2651
      %v2676 = vpack.c.b16 %v2656, %v2652
      %v2677 = vpack.c.b16 %v2657, %v2653
      %v2678 = vpack.c.b16 %v2658, %v2654
      %v2679 = vpack.c.b16 %v2663, %v2659
      %v2680 = vpack.c.b16 %v2664, %v2660
      %v2681 = vpack.c.b16 %v2665, %v2661
      %v2682 = vpack.c.b16 %v2666, %v2662
      %vm2699 = vcmask 523264
      %v2701 = vsel %vm2699, %v2583, 0
      %v2704 = vsel %vm2699, %v2584, 0
      %v2707 = vsel %vm2699, %v2585, 0
      %v2710 = vsel %vm2699, %v2586, 0
      %2712 = vmatprep.subr.bf16.mxu0 %v2668
      %2713 = vmatpush1.bf16.msra.mxu0 %v2667
      %2714 = vmatprep.subr.bf16.mxu0 %v2672
      %2715 = vmatpush1.bf16.msra.mxu0 %v2671
      %2716 = vmatprep.subr.bf16.mxu0 %v2676
      %2717 = vmatpush1.bf16.msra.mxu0 %v2675
      %2718 = vmatprep.subr.bf16.mxu0 %v2680
      %2719 = vmatpush1.bf16.msra.mxu0 %v2679
      %2720 = vmatprep.subr.bf16.mxu0 0
      %2721 = vmatpush1.bf16.msra.mxu0 0
      %2722 = vmatprep.subr.bf16.mxu0 0
      %2723 = vmatpush1.bf16.msra.mxu0 0
      %2724 = vmatprep.subr.bf16.mxu0 0
      %2725 = vmatpush1.bf16.msra.mxu0 0
      %2726 = vmatprep.subr.bf16.mxu0 0
      %2727 = vmatpush1.bf16.msra.mxu0 0
      %2728 = vmatprep.subr.bf16.mxu0 0
      %2729 = vmatpush1.bf16.msra.mxu0 0
      %2730 = vmatprep.subr.bf16.mxu0 0
      %2731 = vmatpush1.bf16.msra.mxu0 0
      %2732 = vmatprep.subr.bf16.mxu0 0
      %2733 = vmatpush1.bf16.msra.mxu0 0
      %2734 = vmatprep.subr.bf16.mxu0 0
      %2735 = vmatpush1.bf16.msra.mxu0 0
      %2736 = vmatprep.subr.bf16.mxu0 0
      %2737 = vmatpush1.bf16.msra.mxu0 0
      %2738 = vmatprep.subr.bf16.mxu0 0
      %2739 = vmatpush1.bf16.msra.mxu0 0
      %2740 = vmatprep.subr.bf16.mxu0 0
      %2741 = vmatpush1.bf16.msra.mxu0 0
      %2742 = vmatprep.subr.bf16.mxu0 0
      %2743 = vmatpush1.bf16.msra.mxu0 0
      %2744 = vmatprep.mubr.bf16.mxu0 0
      %2745 = vmatmul.mubr.bf16.gmra.mrb[0].mxu0 %v2701
      %v2746 = vpop.f32.mrb[0].mxu0
      %v2747 = vadd.f32 %v2606, %v2746
      %v2748 = vpop.f32.mrb[0].mxu0
      %v2749 = vadd.f32 %v2610, %v2748
      %v2750 = vpop.f32.mrb[0].mxu0
      %v2751 = vadd.f32 %v2606, %v2750
      %v2752 = vpop.f32.mrb[0].mxu0
      %v2753 = vadd.f32 %v2610, %v2752
      %2754 = vmatprep.mubr.bf16.mxu0 0
      %2755 = vmatmul.mubr.bf16.gmra.mrb[0].mxu0 %v2704
      %v2756 = vpop.f32.mrb[0].mxu0
      %v2757 = vadd.f32 %v2606, %v2756
      %v2758 = vpop.f32.mrb[0].mxu0
      %v2759 = vadd.f32 %v2610, %v2758
      %v2760 = vpop.f32.mrb[0].mxu0
      %v2761 = vadd.f32 %v2606, %v2760
      %v2762 = vpop.f32.mrb[0].mxu0
      %v2763 = vadd.f32 %v2610, %v2762
      %2764 = vmatprep.mubr.bf16.mxu0 0
      %2765 = vmatmul.mubr.bf16.gmra.mrb[0].mxu0 %v2707
      %v2766 = vpop.f32.mrb[0].mxu0
      %v2767 = vadd.f32 %v2606, %v2766
      %v2768 = vpop.f32.mrb[0].mxu0
      %v2769 = vadd.f32 %v2610, %v2768
      %v2770 = vpop.f32.mrb[0].mxu0
      %v2771 = vadd.f32 %v2606, %v2770
      %v2772 = vpop.f32.mrb[0].mxu0
      %v2773 = vadd.f32 %v2610, %v2772
      %2774 = vmatprep.mubr.bf16.mxu0 0
      %2775 = vmatmul.mubr.bf16.gmra.mrb[0].mxu0 %v2710
      %v2776 = vpop.f32.mrb[0].mxu0
      %v2777 = vadd.f32 %v2606, %v2776
      %v2778 = vpop.f32.mrb[0].mxu0
      %v2779 = vadd.f32 %v2610, %v2778
      %v2780 = vpop.f32.mrb[0].mxu0
      %v2781 = vadd.f32 %v2606, %v2780
      %v2782 = vpop.f32.mrb[0].mxu0
      %v2783 = vadd.f32 %v2610, %v2782
      %2784 = vdwg.mxu0
      %2785 = vmatprep.subr.bf16.mxu0 %v2670
      %2786 = vmatpush1.bf16.msra.mxu0 %v2669
      %2787 = vmatprep.subr.bf16.mxu0 %v2674
      %2788 = vmatpush1.bf16.msra.mxu0 %v2673
      %2789 = vmatprep.subr.bf16.mxu0 %v2678
      %2790 = vmatpush1.bf16.msra.mxu0 %v2677
      %2791 = vmatprep.subr.bf16.mxu0 %v2682
      %2792 = vmatpush1.bf16.msra.mxu0 %v2681
      %2793 = vmatprep.subr.bf16.mxu0 0
      %2794 = vmatpush1.bf16.msra.mxu0 0
      %2795 = vmatprep.subr.bf16.mxu0 0
      %2796 = vmatpush1.bf16.msra.mxu0 0
      %2797 = vmatprep.subr.bf16.mxu0 0
      %2798 = vmatpush1.bf16.msra.mxu0 0
      %2799 = vmatprep.subr.bf16.mxu0 0
      %2800 = vmatpush1.bf16.msra.mxu0 0
      %2801 = vmatprep.subr.bf16.mxu0 0
      %2802 = vmatpush1.bf16.msra.mxu0 0
      %2803 = vmatprep.subr.bf16.mxu0 0
      %2804 = vmatpush1.bf16.msra.mxu0 0
      %2805 = vmatprep.subr.bf16.mxu0 0
      %2806 = vmatpush1.bf16.msra.mxu0 0
      %2807 = vmatprep.subr.bf16.mxu0 0
      %2808 = vmatpush1.bf16.msra.mxu0 0
      %2809 = vmatprep.subr.bf16.mxu0 0
      %2810 = vmatpush1.bf16.msra.mxu0 0
      %2811 = vmatprep.subr.bf16.mxu0 0
      %2812 = vmatpush1.bf16.msra.mxu0 0
      %2813 = vmatprep.subr.bf16.mxu0 0
      %2814 = vmatpush1.bf16.msra.mxu0 0
      %2815 = vmatprep.subr.bf16.mxu0 0
      %2816 = vmatpush1.bf16.msra.mxu0 0
      %2817 = vmatprep.mubr.bf16.mxu0 0
      %2818 = vmatmul.mubr.bf16.gmra.mrb[0].mxu0 %v2701
      %v2819 = vpop.f32.mrb[0].mxu0
      %v2820 = vadd.f32 %v2614, %v2819
      %v2821 = vpop.f32.mrb[0].mxu0
      %v2822 = vadd.f32 %v2618, %v2821
      %v2823 = vpop.f32.mrb[0].mxu0
      %v2824 = vadd.f32 %v2614, %v2823
      %v2825 = vpop.f32.mrb[0].mxu0
      %v2826 = vadd.f32 %v2618, %v2825
      %2827 = vmatprep.mubr.bf16.mxu0 0
      %2828 = vmatmul.mubr.bf16.gmra.mrb[0].mxu0 %v2704
      %v2829 = vpop.f32.mrb[0].mxu0
      %v2830 = vadd.f32 %v2614, %v2829
      %v2831 = vpop.f32.mrb[0].mxu0
      %v2832 = vadd.f32 %v2618, %v2831
      %v2833 = vpop.f32.mrb[0].mxu0
      %v2834 = vadd.f32 %v2614, %v2833
      %v2835 = vpop.f32.mrb[0].mxu0
      %v2836 = vadd.f32 %v2618, %v2835
      %2837 = vmatprep.mubr.bf16.mxu0 0
      %2838 = vmatmul.mubr.bf16.gmra.mrb[0].mxu0 %v2707
      %v2839 = vpop.f32.mrb[0].mxu0
      %v2840 = vadd.f32 %v2614, %v2839
      %v2841 = vpop.f32.mrb[0].mxu0
      %v2842 = vadd.f32 %v2618, %v2841
      %v2843 = vpop.f32.mrb[0].mxu0
      %v2844 = vadd.f32 %v2614, %v2843
      %v2845 = vpop.f32.mrb[0].mxu0
      %v2846 = vadd.f32 %v2618, %v2845
      %2847 = vmatprep.mubr.bf16.mxu0 0
      %2848 = vmatmul.mubr.bf16.gmra.mrb[0].mxu0 %v2710
      %v2849 = vpop.f32.mrb[0].mxu0
      %v2850 = vadd.f32 %v2614, %v2849
      %v2851 = vpop.f32.mrb[0].mxu0
      %v2852 = vadd.f32 %v2618, %v2851
      %v2853 = vpop.f32.mrb[0].mxu0
      %v2854 = vadd.f32 %v2614, %v2853
      %v2855 = vpop.f32.mrb[0].mxu0
      %v2856 = vadd.f32 %v2618, %v2855
      %2857 = vdwg.mxu0
      %v2858 = vmax.f32 %v2747, 0.0
      %v2859 = vmax.f32 %v2749, 0.0
      %v2860 = vmax.f32 %v2820, 0.0
      %v2861 = vmax.f32 %v2822, 0.0
      %v2862 = vmax.f32 %v2751, 0.0
      %v2863 = vmax.f32 %v2753, 0.0
      %v2864 = vmax.f32 %v2824, 0.0
      %v2865 = vmax.f32 %v2826, 0.0
      %v2866 = vmax.f32 %v2757, 0.0
      %v2867 = vmax.f32 %v2759, 0.0
      %v2868 = vmax.f32 %v2830, 0.0
      %v2869 = vmax.f32 %v2832, 0.0
      %v2870 = vmax.f32 %v2761, 0.0
      %v2871 = vmax.f32 %v2763, 0.0
      %v2872 = vmax.f32 %v2834, 0.0
      %v2873 = vmax.f32 %v2836, 0.0
      %v2874 = vmax.f32 %v2767, 0.0
      %v2875 = vmax.f32 %v2769, 0.0
      %v2876 = vmax.f32 %v2840, 0.0
      %v2877 = vmax.f32 %v2842, 0.0
      %v2878 = vmax.f32 %v2771, 0.0
      %v2879 = vmax.f32 %v2773, 0.0
      %v2880 = vmax.f32 %v2844, 0.0
      %v2881 = vmax.f32 %v2846, 0.0
      %v2882 = vmax.f32 %v2777, 0.0
      %v2883 = vmax.f32 %v2779, 0.0
      %v2884 = vmax.f32 %v2850, 0.0
      %v2885 = vmax.f32 %v2852, 0.0
      %v2886 = vmax.f32 %v2781, 0.0
      %v2887 = vmax.f32 %v2783, 0.0
      %v2888 = vmax.f32 %v2854, 0.0
      %v2889 = vmax.f32 %v2856, 0.0
      %v2890 = vpack.c.bf16 %v2862, %v2858
      %v2891 = vpack.c.bf16 %v2863, %v2859
      %v2892 = vpack.c.bf16 %v2864, %v2860
      %v2893 = vpack.c.bf16 %v2865, %v2861
      %v2894 = vpack.c.bf16 %v2870, %v2866
      %v2895 = vpack.c.bf16 %v2871, %v2867
      %v2896 = vpack.c.bf16 %v2872, %v2868
      %v2897 = vpack.c.bf16 %v2873, %v2869
      %v2898 = vpack.c.bf16 %v2878, %v2874
      %v2899 = vpack.c.bf16 %v2879, %v2875
      %v2900 = vpack.c.bf16 %v2880, %v2876
      %v2901 = vpack.c.bf16 %v2881, %v2877
      %v2902 = vpack.c.bf16 %v2886, %v2882
      %v2903 = vpack.c.bf16 %v2887, %v2883
      %v2904 = vpack.c.bf16 %v2888, %v2884
      %v2905 = vpack.c.bf16 %v2889, %v2885
      %v2906 = vld [vmem:[%s7] sm:$0xff]
      %v2907 = vld [vmem:[%s7 + $0x8] sm:$0xff]
      %v2908 = vld [vmem:[%s7 + $0x10] sm:$0xff]
      %v2909 = vld [vmem:[%s7 + $0x18] sm:$0xff]
      %v2910 = vld [vmem:[%s7 + $0x20] sm:$0xff]
      %v2911 = vld [vmem:[%s7 + $0x28] sm:$0xff]
      %v2912 = vld [vmem:[%s7 + $0x30] sm:$0xff]
      %v2913 = vld [vmem:[%s7 + $0x38] sm:$0xff]
      %v2914 = vld [vmem:[%s7 + $0x40] sm:$0xff]
      %v2915 = vld [vmem:[%s7 + $0x48] sm:$0xff]
      %v2916 = vld [vmem:[%s7 + $0x50] sm:$0xff]
      %v2917 = vld [vmem:[%s7 + $0x58] sm:$0xff]
      %v2918 = vld [vmem:[%s7 + $0x60] sm:$0xff]
      %v2919 = vld [vmem:[%s7 + $0x68] sm:$0xff]
      %v2920 = vld [vmem:[%s7 + $0x70] sm:$0xff]
      %v2921 = vld [vmem:[%s7 + $0x78] sm:$0xff]
      %v2922 = vld [vmem:[%s7 + $0x80] sm:$0xff]
      %v2923 = vld [vmem:[%s7 + $0x88] sm:$0xff]
      %v2924 = vld [vmem:[%s7 + $0x90] sm:$0xff]
      %v2925 = vld [vmem:[%s7 + $0x98] sm:$0xff]
      %v2926 = vld [vmem:[%s7 + $0xa0] sm:$0xff]
      %v2927 = vld [vmem:[%s7 + $0xa8] sm:$0xff]
      %v2928 = vld [vmem:[%s7 + $0xb0] sm:$0xff]
      %v2929 = vld [vmem:[%s7 + $0xb8] sm:$0xff]
      %v2930 = vld [vmem:[%s7 + $0xc0] sm:$0xff]
      %v2931 = vld [vmem:[%s7 + $0xc8] sm:$0xff]
      %v2932 = vld [vmem:[%s7 + $0xd0] sm:$0xff]
      %v2933 = vld [vmem:[%s7 + $0xd8] sm:$0xff]
      %v2934 = vld [vmem:[%s7 + $0xe0] sm:$0xff]
      %v2935 = vld [vmem:[%s7 + $0xe8] sm:$0xff]
      %v2936 = vld [vmem:[%s7 + $0xf0] sm:$0xff]
      %v2937 = vld [vmem:[%s7 + $0xf8] sm:$0xff]
      %v2938 = vld [vmem:[%s7 + $0x100] sm:$0xff]
      %v2939 = vld [vmem:[%s7 + $0x108] sm:$0xff]
      %v2940 = vld [vmem:[%s7 + $0x110] sm:$0xff]
      %v2941 = vld [vmem:[%s7 + $0x118] sm:$0xff]
      %v2942 = vld [vmem:[%s7 + $0x120] sm:$0xff]
      %v2943 = vld [vmem:[%s7 + $0x128] sm:$0xff]
      %v2944 = vld [vmem:[%s7 + $0x130] sm:$0xff]
      %v2945 = vld [vmem:[%s7 + $0x138] sm:$0xff]
      %v2946 = vld [vmem:[%s7 + $0x140] sm:$0xff]
      %v2947 = vld [vmem:[%s7 + $0x148] sm:$0xff]
      %v2948 = vld [vmem:[%s7 + $0x150] sm:$0xff]
      %v2949 = vld [vmem:[%s7 + $0x158] sm:$0xff]
      %v2950 = vld [vmem:[%s7 + $0x160] sm:$0xff]
      %v2951 = vld [vmem:[%s7 + $0x168] sm:$0xff]
      %v2952 = vld [vmem:[%s7 + $0x170] sm:$0xff]
      %v2953 = vld [vmem:[%s7 + $0x178] sm:$0xff]
      %v2954 = vld [vmem:[%s7 + $0x180] sm:$0xff]
      %v2955 = vld [vmem:[%s7 + $0x188] sm:$0xff]
      %v2956 = vld [vmem:[%s7 + $0x190] sm:$0xff]
      %v2957 = vld [vmem:[%s7 + $0x198] sm:$0xff]
      %v2958 = vld [vmem:[%s7 + $0x1a0] sm:$0xff]
      %v2959 = vld [vmem:[%s7 + $0x1a8] sm:$0xff]
      %v2960 = vld [vmem:[%s7 + $0x1b0] sm:$0xff]
      %v2961 = vld [vmem:[%s7 + $0x1b8] sm:$0xff]
      %v2962 = vld [vmem:[%s7 + $0x1c0] sm:$0xff]
      %v2963 = vld [vmem:[%s7 + $0x1c8] sm:$0xff]
      %v2964 = vld [vmem:[%s7 + $0x1d0] sm:$0xff]
      %v2965 = vld [vmem:[%s7 + $0x1d8] sm:$0xff]
      %v2966 = vld [vmem:[%s7 + $0x1e0] sm:$0xff]
      %v2967 = vld [vmem:[%s7 + $0x1e8] sm:$0xff]
      %v2968 = vld [vmem:[%s7 + $0x1f0] sm:$0xff]
      %v2969 = vld [vmem:[%s7 + $0x1f8] sm:$0xff]
      %v2970 = vld [vmem:[%s8] sm:$0x3]
      %v2972 = vlaneseq
      %v2973 = vshrl.u32 %v2972, 7
      %v2974 = vsub.s32 0, %v2973
      %v2975 = vrot.slane %v2970, %v2974
      %v2976 = vlaneseq
      %v2977 = vshrl.u32 %v2976, 7
      %v2978 = vsub.s32 1, %v2977
      %v2979 = vrot.slane %v2970, %v2978
      %v3046 = vunpack.c.l.b16 %v2906
      %v3047 = vunpack.c.h.b16 %v2906
      %v3048 = vunpack.c.l.b16 %v2907
      %v3049 = vunpack.c.h.b16 %v2907
      %v3050 = vunpack.c.l.b16 %v2908
      %v3051 = vunpack.c.h.b16 %v2908
      %v3052 = vunpack.c.l.b16 %v2909
      %v3053 = vunpack.c.h.b16 %v2909
      %v3054 = vunpack.c.l.b16 %v2910
      %v3055 = vunpack.c.h.b16 %v2910
      %v3056 = vunpack.c.l.b16 %v2911
      %v3057 = vunpack.c.h.b16 %v2911
      %v3058 = vunpack.c.l.b16 %v2912
      %v3059 = vunpack.c.h.b16 %v2912
      %v3060 = vunpack.c.l.b16 %v2913
      %v3061 = vunpack.c.h.b16 %v2913
      %v3062 = vunpack.c.l.b16 %v2914
      %v3063 = vunpack.c.h.b16 %v2914
      %v3064 = vunpack.c.l.b16 %v2915
      %v3065 = vunpack.c.h.b16 %v2915
      %v3066 = vunpack.c.l.b16 %v2916
      %v3067 = vunpack.c.h.b16 %v2916
      %v3068 = vunpack.c.l.b16 %v2917
      %v3069 = vunpack.c.h.b16 %v2917
      %v3070 = vunpack.c.l.b16 %v2918
      %v3071 = vunpack.c.h.b16 %v2918
      %v3072 = vunpack.c.l.b16 %v2919
      %v3073 = vunpack.c.h.b16 %v2919
      %v3074 = vunpack.c.l.b16 %v2920
      %v3075 = vunpack.c.h.b16 %v2920
      %v3076 = vunpack.c.l.b16 %v2921
      %v3077 = vunpack.c.h.b16 %v2921
      %v3078 = vunpack.c.l.b16 %v2922
      %v3079 = vunpack.c.h.b16 %v2922
      %v3080 = vunpack.c.l.b16 %v2923
      %v3081 = vunpack.c.h.b16 %v2923
      %v3082 = vunpack.c.l.b16 %v2924
      %v3083 = vunpack.c.h.b16 %v2924
      %v3084 = vunpack.c.l.b16 %v2925
      %v3085 = vunpack.c.h.b16 %v2925
      %v3086 = vunpack.c.l.b16 %v2926
      %v3087 = vunpack.c.h.b16 %v2926
      %v3088 = vunpack.c.l.b16 %v2927
      %v3089 = vunpack.c.h.b16 %v2927
      %v3090 = vunpack.c.l.b16 %v2928
      %v3091 = vunpack.c.h.b16 %v2928
      %v3092 = vunpack.c.l.b16 %v2929
      %v3093 = vunpack.c.h.b16 %v2929
      %v3094 = vunpack.c.l.b16 %v2930
      %v3095 = vunpack.c.h.b16 %v2930
      %v3096 = vunpack.c.l.b16 %v2931
      %v3097 = vunpack.c.h.b16 %v2931
      %v3098 = vunpack.c.l.b16 %v2932
      %v3099 = vunpack.c.h.b16 %v2932
      %v3100 = vunpack.c.l.b16 %v2933
      %v3101 = vunpack.c.h.b16 %v2933
      %v3102 = vunpack.c.l.b16 %v2934
      %v3103 = vunpack.c.h.b16 %v2934
      %v3104 = vunpack.c.l.b16 %v2935
      %v3105 = vunpack.c.h.b16 %v2935
      %v3106 = vunpack.c.l.b16 %v2936
      %v3107 = vunpack.c.h.b16 %v2936
      %v3108 = vunpack.c.l.b16 %v2937
      %v3109 = vunpack.c.h.b16 %v2937
      %v3110 = vunpack.c.l.b16 %v2938
      %v3111 = vunpack.c.h.b16 %v2938
      %v3112 = vunpack.c.l.b16 %v2939
      %v3113 = vunpack.c.h.b16 %v2939
      %v3114 = vunpack.c.l.b16 %v2940
      %v3115 = vunpack.c.h.b16 %v2940
      %v3116 = vunpack.c.l.b16 %v2941
      %v3117 = vunpack.c.h.b16 %v2941
      %v3118 = vunpack.c.l.b16 %v2942
      %v3119 = vunpack.c.h.b16 %v2942
      %v3120 = vunpack.c.l.b16 %v2943
      %v3121 = vunpack.c.h.b16 %v2943
      %v3122 = vunpack.c.l.b16 %v2944
      %v3123 = vunpack.c.h.b16 %v2944
      %v3124 = vunpack.c.l.b16 %v2945
      %v3125 = vunpack.c.h.b16 %v2945
      %v3126 = vunpack.c.l.b16 %v2946
      %v3127 = vunpack.c.h.b16 %v2946
      %v3128 = vunpack.c.l.b16 %v2947
      %v3129 = vunpack.c.h.b16 %v2947
      %v3130 = vunpack.c.l.b16 %v2948
      %v3131 = vunpack.c.h.b16 %v2948
      %v3132 = vunpack.c.l.b16 %v2949
      %v3133 = vunpack.c.h.b16 %v2949
      %v3134 = vunpack.c.l.b16 %v2950
      %v3135 = vunpack.c.h.b16 %v2950
      %v3136 = vunpack.c.l.b16 %v2951
      %v3137 = vunpack.c.h.b16 %v2951
      %v3138 = vunpack.c.l.b16 %v2952
      %v3139 = vunpack.c.h.b16 %v2952
      %v3140 = vunpack.c.l.b16 %v2953
      %v3141 = vunpack.c.h.b16 %v2953
      %v3142 = vunpack.c.l.b16 %v2954
      %v3143 = vunpack.c.h.b16 %v2954
      %v3144 = vunpack.c.l.b16 %v2955
      %v3145 = vunpack.c.h.b16 %v2955
      %v3146 = vunpack.c.l.b16 %v2956
      %v3147 = vunpack.c.h.b16 %v2956
      %v3148 = vunpack.c.l.b16 %v2957
      %v3149 = vunpack.c.h.b16 %v2957
      %v3150 = vunpack.c.l.b16 %v2958
      %v3151 = vunpack.c.h.b16 %v2958
      %v3152 = vunpack.c.l.b16 %v2959
      %v3153 = vunpack.c.h.b16 %v2959
      %v3154 = vunpack.c.l.b16 %v2960
      %v3155 = vunpack.c.h.b16 %v2960
      %v3156 = vunpack.c.l.b16 %v2961
      %v3157 = vunpack.c.h.b16 %v2961
      %v3158 = vunpack.c.l.b16 %v2962
      %v3159 = vunpack.c.h.b16 %v2962
      %v3160 = vunpack.c.l.b16 %v2963
      %v3161 = vunpack.c.h.b16 %v2963
      %v3162 = vunpack.c.l.b16 %v2964
      %v3163 = vunpack.c.h.b16 %v2964
      %v3164 = vunpack.c.l.b16 %v2965
      %v3165 = vunpack.c.h.b16 %v2965
      %v3166 = vunpack.c.l.b16 %v2966
      %v3167 = vunpack.c.h.b16 %v2966
      %v3168 = vunpack.c.l.b16 %v2967
      %v3169 = vunpack.c.h.b16 %v2967
      %v3170 = vunpack.c.l.b16 %v2968
      %v3171 = vunpack.c.h.b16 %v2968
      %v3172 = vunpack.c.l.b16 %v2969
      %v3173 = vunpack.c.h.b16 %v2969
      %v3174 = vpack.c.b16 %v3048, %v3046
      %v3175 = vpack.c.b16 %v3049, %v3047
      %v3176 = vpack.c.b16 %v3052, %v3050
      %v3177 = vpack.c.b16 %v3053, %v3051
      %v3178 = vpack.c.b16 %v3056, %v3054
      %v3179 = vpack.c.b16 %v3057, %v3055
      %v3180 = vpack.c.b16 %v3060, %v3058
      %v3181 = vpack.c.b16 %v3061, %v3059
      %v3182 = vpack.c.b16 %v3064, %v3062
      %v3183 = vpack.c.b16 %v3065, %v3063
      %v3184 = vpack.c.b16 %v3068, %v3066
      %v3185 = vpack.c.b16 %v3069, %v3067
      %v3186 = vpack.c.b16 %v3072, %v3070
      %v3187 = vpack.c.b16 %v3073, %v3071
      %v3188 = vpack.c.b16 %v3076, %v3074
      %v3189 = vpack.c.b16 %v3077, %v3075
      %v3190 = vpack.c.b16 %v3080, %v3078
      %v3191 = vpack.c.b16 %v3081, %v3079
      %v3192 = vpack.c.b16 %v3084, %v3082
      %v3193 = vpack.c.b16 %v3085, %v3083
      %v3194 = vpack.c.b16 %v3088, %v3086
      %v3195 = vpack.c.b16 %v3089, %v3087
      %v3196 = vpack.c.b16 %v3092, %v3090
      %v3197 = vpack.c.b16 %v3093, %v3091
      %v3198 = vpack.c.b16 %v3096, %v3094
      %v3199 = vpack.c.b16 %v3097, %v3095
      %v3200 = vpack.c.b16 %v3100, %v3098
      %v3201 = vpack.c.b16 %v3101, %v3099
      %v3202 = vpack.c.b16 %v3104, %v3102
      %v3203 = vpack.c.b16 %v3105, %v3103
      %v3204 = vpack.c.b16 %v3108, %v3106
      %v3205 = vpack.c.b16 %v3109, %v3107
      %v3206 = vpack.c.b16 %v3112, %v3110
      %v3207 = vpack.c.b16 %v3113, %v3111
      %v3208 = vpack.c.b16 %v3116, %v3114
      %v3209 = vpack.c.b16 %v3117, %v3115
      %v3210 = vpack.c.b16 %v3120, %v3118
      %v3211 = vpack.c.b16 %v3121, %v3119
      %v3212 = vpack.c.b16 %v3124, %v3122
      %v3213 = vpack.c.b16 %v3125, %v3123
      %v3214 = vpack.c.b16 %v3128, %v3126
      %v3215 = vpack.c.b16 %v3129, %v3127
      %v3216 = vpack.c.b16 %v3132, %v3130
      %v3217 = vpack.c.b16 %v3133, %v3131
      %v3218 = vpack.c.b16 %v3136, %v3134
      %v3219 = vpack.c.b16 %v3137, %v3135
      %v3220 = vpack.c.b16 %v3140, %v3138
      %v3221 = vpack.c.b16 %v3141, %v3139
      %v3222 = vpack.c.b16 %v3144, %v3142
      %v3223 = vpack.c.b16 %v3145, %v3143
      %v3224 = vpack.c.b16 %v3148, %v3146
      %v3225 = vpack.c.b16 %v3149, %v3147
      %v3226 = vpack.c.b16 %v3152, %v3150
      %v3227 = vpack.c.b16 %v3153, %v3151
      %v3228 = vpack.c.b16 %v3156, %v3154
      %v3229 = vpack.c.b16 %v3157, %v3155
      %v3230 = vpack.c.b16 %v3160, %v3158
      %v3231 = vpack.c.b16 %v3161, %v3159
      %v3232 = vpack.c.b16 %v3164, %v3162
      %v3233 = vpack.c.b16 %v3165, %v3163
      %v3234 = vpack.c.b16 %v3168, %v3166
      %v3235 = vpack.c.b16 %v3169, %v3167
      %v3236 = vpack.c.b16 %v3172, %v3170
      %v3237 = vpack.c.b16 %v3173, %v3171
      %3302 = vmatprep.subr.bf16.mxu0 %v3175
      %3303 = vmatpush1.bf16.msra.mxu0 %v3174
      %3304 = vmatprep.subr.bf16.mxu0 %v3177
      %3305 = vmatpush1.bf16.msra.mxu0 %v3176
      %3306 = vmatprep.subr.bf16.mxu0 %v3179
      %3307 = vmatpush1.bf16.msra.mxu0 %v3178
      %3308 = vmatprep.subr.bf16.mxu0 %v3181
      %3309 = vmatpush1.bf16.msra.mxu0 %v3180
      %3310 = vmatprep.subr.bf16.mxu0 %v3183
      %3311 = vmatpush1.bf16.msra.mxu0 %v3182
      %3312 = vmatprep.subr.bf16.mxu0 %v3185
      %3313 = vmatpush1.bf16.msra.mxu0 %v3184
      %3314 = vmatprep.subr.bf16.mxu0 %v3187
      %3315 = vmatpush1.bf16.msra.mxu0 %v3186
      %3316 = vmatprep.subr.bf16.mxu0 %v3189
      %3317 = vmatpush1.bf16.msra.mxu0 %v3188
      %3318 = vmatprep.subr.bf16.mxu0 %v3191
      %3319 = vmatpush1.bf16.msra.mxu0 %v3190
      %3320 = vmatprep.subr.bf16.mxu0 %v3193
      %3321 = vmatpush1.bf16.msra.mxu0 %v3192
      %3322 = vmatprep.subr.bf16.mxu0 %v3195
      %3323 = vmatpush1.bf16.msra.mxu0 %v3194
      %3324 = vmatprep.subr.bf16.mxu0 %v3197
      %3325 = vmatpush1.bf16.msra.mxu0 %v3196
      %3326 = vmatprep.subr.bf16.mxu0 %v3199
      %3327 = vmatpush1.bf16.msra.mxu0 %v3198
      %3328 = vmatprep.subr.bf16.mxu0 %v3201
      %3329 = vmatpush1.bf16.msra.mxu0 %v3200
      %3330 = vmatprep.subr.bf16.mxu0 %v3203
      %3331 = vmatpush1.bf16.msra.mxu0 %v3202
      %3332 = vmatprep.subr.bf16.mxu0 %v3205
      %3333 = vmatpush1.bf16.msra.mxu0 %v3204
      %3334 = vmatprep.mubr.bf16.mxu0 %v2891
      %3335 = vmatmul.mubr.bf16.gmra.mrb[0].mxu0 %v2890
      %v3336 = vpop.f32.mrb[0].mxu0
      %v3337 = vadd.f32 %v2975, %v3336
      %v3338 = vpop.f32.mrb[0].mxu0
      %v3339 = vadd.f32 %v2979, %v3338
      %v3340 = vpop.f32.mrb[0].mxu0
      %v3341 = vadd.f32 %v2975, %v3340
      %v3342 = vpop.f32.mrb[0].mxu0
      %v3343 = vadd.f32 %v2979, %v3342
      %3344 = vmatprep.mubr.bf16.mxu0 %v2895
      %3345 = vmatmul.mubr.bf16.gmra.mrb[0].mxu0 %v2894
      %v3346 = vpop.f32.mrb[0].mxu0
      %v3347 = vadd.f32 %v2975, %v3346
      %v3348 = vpop.f32.mrb[0].mxu0
      %v3349 = vadd.f32 %v2979, %v3348
      %v3350 = vpop.f32.mrb[0].mxu0
      %v3351 = vadd.f32 %v2975, %v3350
      %v3352 = vpop.f32.mrb[0].mxu0
      %v3353 = vadd.f32 %v2979, %v3352
      %3354 = vmatprep.mubr.bf16.mxu0 %v2899
      %3355 = vmatmul.mubr.bf16.gmra.mrb[0].mxu0 %v2898
      %v3356 = vpop.f32.mrb[0].mxu0
      %v3357 = vadd.f32 %v2975, %v3356
      %v3358 = vpop.f32.mrb[0].mxu0
      %v3359 = vadd.f32 %v2979, %v3358
      %v3360 = vpop.f32.mrb[0].mxu0
      %v3361 = vadd.f32 %v2975, %v3360
      %v3362 = vpop.f32.mrb[0].mxu0
      %v3363 = vadd.f32 %v2979, %v3362
      %3364 = vmatprep.mubr.bf16.mxu0 %v2903
      %3365 = vmatmul.mubr.bf16.gmra.mrb[0].mxu0 %v2902
      %v3366 = vpop.f32.mrb[0].mxu0
      %v3367 = vadd.f32 %v2975, %v3366
      %v3368 = vpop.f32.mrb[0].mxu0
      %v3369 = vadd.f32 %v2979, %v3368
      %v3370 = vpop.f32.mrb[0].mxu0
      %v3371 = vadd.f32 %v2975, %v3370
      %v3372 = vpop.f32.mrb[0].mxu0
      %v3373 = vadd.f32 %v2979, %v3372
      %3374 = vdwg.mxu0
      %3375 = vmatprep.subr.bf16.mxu0 %v3207
      %3376 = vmatpush1.bf16.msra.mxu0 %v3206
      %3377 = vmatprep.subr.bf16.mxu0 %v3209
      %3378 = vmatpush1.bf16.msra.mxu0 %v3208
      %3379 = vmatprep.subr.bf16.mxu0 %v3211
      %3380 = vmatpush1.bf16.msra.mxu0 %v3210
      %3381 = vmatprep.subr.bf16.mxu0 %v3213
      %3382 = vmatpush1.bf16.msra.mxu0 %v3212
      %3383 = vmatprep.subr.bf16.mxu0 %v3215
      %3384 = vmatpush1.bf16.msra.mxu0 %v3214
      %3385 = vmatprep.subr.bf16.mxu0 %v3217
      %3386 = vmatpush1.bf16.msra.mxu0 %v3216
      %3387 = vmatprep.subr.bf16.mxu0 %v3219
      %3388 = vmatpush1.bf16.msra.mxu0 %v3218
      %3389 = vmatprep.subr.bf16.mxu0 %v3221
      %3390 = vmatpush1.bf16.msra.mxu0 %v3220
      %3391 = vmatprep.subr.bf16.mxu0 %v3223
      %3392 = vmatpush1.bf16.msra.mxu0 %v3222
      %3393 = vmatprep.subr.bf16.mxu0 %v3225
      %3394 = vmatpush1.bf16.msra.mxu0 %v3224
      %3395 = vmatprep.subr.bf16.mxu0 %v3227
      %3396 = vmatpush1.bf16.msra.mxu0 %v3226
      %3397 = vmatprep.subr.bf16.mxu0 %v3229
      %3398 = vmatpush1.bf16.msra.mxu0 %v3228
      %3399 = vmatprep.subr.bf16.mxu0 %v3231
      %3400 = vmatpush1.bf16.msra.mxu0 %v3230
      %3401 = vmatprep.subr.bf16.mxu0 %v3233
      %3402 = vmatpush1.bf16.msra.mxu0 %v3232
      %3403 = vmatprep.subr.bf16.mxu0 %v3235
      %3404 = vmatpush1.bf16.msra.mxu0 %v3234
      %3405 = vmatprep.subr.bf16.mxu0 %v3237
      %3406 = vmatpush1.bf16.msra.mxu0 %v3236
      %3407 = vmatprep.mubr.bf16.mxu0 %v2893
      %3408 = vmatmul.mubr.bf16.gmra.mrb[0].mxu0 %v2892
      %v3409 = vpop.f32.mrb[0].mxu0
      %v3410 = vadd.f32 %v3337, %v3409
      %v3411 = vpop.f32.mrb[0].mxu0
      %v3412 = vadd.f32 %v3339, %v3411
      %v3413 = vpop.f32.mrb[0].mxu0
      %v3414 = vadd.f32 %v3341, %v3413
      %v3415 = vpop.f32.mrb[0].mxu0
      %v3416 = vadd.f32 %v3343, %v3415
      %3417 = vmatprep.mubr.bf16.mxu0 %v2897
      %3418 = vmatmul.mubr.bf16.gmra.mrb[0].mxu0 %v2896
      %v3419 = vpop.f32.mrb[0].mxu0
      %v3420 = vadd.f32 %v3347, %v3419
      %v3421 = vpop.f32.mrb[0].mxu0
      %v3422 = vadd.f32 %v3349, %v3421
      %v3423 = vpop.f32.mrb[0].mxu0
      %v3424 = vadd.f32 %v3351, %v3423
      %v3425 = vpop.f32.mrb[0].mxu0
      %v3426 = vadd.f32 %v3353, %v3425
      %3427 = vmatprep.mubr.bf16.mxu0 %v2901
      %3428 = vmatmul.mubr.bf16.gmra.mrb[0].mxu0 %v2900
      %v3429 = vpop.f32.mrb[0].mxu0
      %v3430 = vadd.f32 %v3357, %v3429
      %v3431 = vpop.f32.mrb[0].mxu0
      %v3432 = vadd.f32 %v3359, %v3431
      %v3433 = vpop.f32.mrb[0].mxu0
      %v3434 = vadd.f32 %v3361, %v3433
      %v3435 = vpop.f32.mrb[0].mxu0
      %v3436 = vadd.f32 %v3363, %v3435
      %3437 = vmatprep.mubr.bf16.mxu0 %v2905
      %3438 = vmatmul.mubr.bf16.gmra.mrb[0].mxu0 %v2904
      %v3439 = vpop.f32.mrb[0].mxu0
      %v3440 = vadd.f32 %v3367, %v3439
      %v3441 = vpop.f32.mrb[0].mxu0
      %v3442 = vadd.f32 %v3369, %v3441
      %v3443 = vpop.f32.mrb[0].mxu0
      %v3444 = vadd.f32 %v3371, %v3443
      %v3445 = vpop.f32.mrb[0].mxu0
      %v3446 = vadd.f32 %v3373, %v3445
      %3447 = vdwg.mxu0
      %v3448 = vmax.f32 %v3410, 0.0
      %v3449 = vmax.f32 %v3412, 0.0
      %v3450 = vmax.f32 %v3414, 0.0
      %v3451 = vmax.f32 %v3416, 0.0
      %v3452 = vmax.f32 %v3420, 0.0
      %v3453 = vmax.f32 %v3422, 0.0
      %v3454 = vmax.f32 %v3424, 0.0
      %v3455 = vmax.f32 %v3426, 0.0
      %v3456 = vmax.f32 %v3430, 0.0
      %v3457 = vmax.f32 %v3432, 0.0
      %v3458 = vmax.f32 %v3434, 0.0
      %v3459 = vmax.f32 %v3436, 0.0
      %v3460 = vmax.f32 %v3440, 0.0
      %v3461 = vmax.f32 %v3442, 0.0
      %v3462 = vmax.f32 %v3444, 0.0
      %v3463 = vmax.f32 %v3446, 0.0
      %v3464 = vpack.c.bf16 %v3450, %v3448
      %v3465 = vpack.c.bf16 %v3451, %v3449
      %v3466 = vpack.c.bf16 %v3454, %v3452
      %v3467 = vpack.c.bf16 %v3455, %v3453
      %v3468 = vpack.c.bf16 %v3458, %v3456
      %v3469 = vpack.c.bf16 %v3459, %v3457
      %v3470 = vpack.c.bf16 %v3462, %v3460
      %v3471 = vpack.c.bf16 %v3463, %v3461
      %v3472 = vld [vmem:[%s9] sm:$0xf]
      %v3473 = vld [vmem:[%s9 + $0x4] sm:$0xf]
      %v3474 = vld [vmem:[%s9 + $0x8] sm:$0xf]
      %v3475 = vld [vmem:[%s9 + $0xc] sm:$0xf]
      %v3476 = vld [vmem:[%s9 + $0x10] sm:$0xf]
      %v3477 = vld [vmem:[%s9 + $0x14] sm:$0xf]
      %v3478 = vld [vmem:[%s9 + $0x18] sm:$0xf]
      %v3479 = vld [vmem:[%s9 + $0x1c] sm:$0xf]
      %v3480 = vld [vmem:[%s9 + $0x20] sm:$0xf]
      %v3481 = vld [vmem:[%s9 + $0x24] sm:$0xf]
      %v3482 = vld [vmem:[%s9 + $0x28] sm:$0xf]
      %v3483 = vld [vmem:[%s9 + $0x2c] sm:$0xf]
      %v3484 = vld [vmem:[%s9 + $0x30] sm:$0xf]
      %v3485 = vld [vmem:[%s9 + $0x34] sm:$0xf]
      %v3486 = vld [vmem:[%s9 + $0x38] sm:$0xf]
      %v3487 = vld [vmem:[%s9 + $0x3c] sm:$0xf]
      %v3488 = vld [vmem:[%s9 + $0x40] sm:$0xf]
      %v3489 = vld [vmem:[%s9 + $0x44] sm:$0xf]
      %v3490 = vld [vmem:[%s9 + $0x48] sm:$0xf]
      %v3491 = vld [vmem:[%s9 + $0x4c] sm:$0xf]
      %v3492 = vld [vmem:[%s9 + $0x50] sm:$0xf]
      %v3493 = vld [vmem:[%s9 + $0x54] sm:$0xf]
      %v3494 = vld [vmem:[%s9 + $0x58] sm:$0xf]
      %v3495 = vld [vmem:[%s9 + $0x5c] sm:$0xf]
      %v3496 = vld [vmem:[%s9 + $0x60] sm:$0xf]
      %v3497 = vld [vmem:[%s9 + $0x64] sm:$0xf]
      %v3498 = vld [vmem:[%s9 + $0x68] sm:$0xf]
      %v3499 = vld [vmem:[%s9 + $0x6c] sm:$0xf]
      %v3500 = vld [vmem:[%s9 + $0x70] sm:$0xf]
      %v3501 = vld [vmem:[%s9 + $0x74] sm:$0xf]
      %v3502 = vld [vmem:[%s9 + $0x78] sm:$0xf]
      %v3503 = vld [vmem:[%s9 + $0x7c] sm:$0xf]
      %v3504 = vld [vmem:[%s10] sm:$0x1]
      %v3506 = vlaneseq
      %v3507 = vshrl.u32 %v3506, 7
      %v3508 = vsub.s32 0, %v3507
      %v3509 = vrot.slane %v3504, %v3508
      %v3543 = vunpack.c.l.b16 %v3472
      %v3544 = vunpack.c.l.b16 %v3473
      %v3545 = vunpack.c.l.b16 %v3474
      %v3546 = vunpack.c.l.b16 %v3475
      %v3547 = vunpack.c.l.b16 %v3476
      %v3548 = vunpack.c.l.b16 %v3477
      %v3549 = vunpack.c.l.b16 %v3478
      %v3550 = vunpack.c.l.b16 %v3479
      %v3551 = vunpack.c.l.b16 %v3480
      %v3552 = vunpack.c.l.b16 %v3481
      %v3553 = vunpack.c.l.b16 %v3482
      %v3554 = vunpack.c.l.b16 %v3483
      %v3555 = vunpack.c.l.b16 %v3484
      %v3556 = vunpack.c.l.b16 %v3485
      %v3557 = vunpack.c.l.b16 %v3486
      %v3558 = vunpack.c.l.b16 %v3487
      %v3559 = vunpack.c.l.b16 %v3488
      %v3560 = vunpack.c.l.b16 %v3489
      %v3561 = vunpack.c.l.b16 %v3490
      %v3562 = vunpack.c.l.b16 %v3491
      %v3563 = vunpack.c.l.b16 %v3492
      %v3564 = vunpack.c.l.b16 %v3493
      %v3565 = vunpack.c.l.b16 %v3494
      %v3566 = vunpack.c.l.b16 %v3495
      %v3567 = vunpack.c.l.b16 %v3496
      %v3568 = vunpack.c.l.b16 %v3497
      %v3569 = vunpack.c.l.b16 %v3498
      %v3570 = vunpack.c.l.b16 %v3499
      %v3571 = vunpack.c.l.b16 %v3500
      %v3572 = vunpack.c.l.b16 %v3501
      %v3573 = vunpack.c.l.b16 %v3502
      %v3574 = vunpack.c.l.b16 %v3503
      %v3575 = vpack.c.b16 %v3544, %v3543
      %v3576 = vpack.c.b16 %v3546, %v3545
      %v3577 = vpack.c.b16 %v3548, %v3547
      %v3578 = vpack.c.b16 %v3550, %v3549
      %v3579 = vpack.c.b16 %v3552, %v3551
      %v3580 = vpack.c.b16 %v3554, %v3553
      %v3581 = vpack.c.b16 %v3556, %v3555
      %v3582 = vpack.c.b16 %v3558, %v3557
      %v3583 = vpack.c.b16 %v3560, %v3559
      %v3584 = vpack.c.b16 %v3562, %v3561
      %v3585 = vpack.c.b16 %v3564, %v3563
      %v3586 = vpack.c.b16 %v3566, %v3565
      %v3587 = vpack.c.b16 %v3568, %v3567
      %v3588 = vpack.c.b16 %v3570, %v3569
      %v3589 = vpack.c.b16 %v3572, %v3571
      %v3590 = vpack.c.b16 %v3574, %v3573
      %3607 = vmatprep.subr.bf16.mxu0 0
      %3608 = vmatpush1.bf16.msra.mxu0 %v3575
      %3609 = vmatprep.subr.bf16.mxu0 0
      %3610 = vmatpush1.bf16.msra.mxu0 %v3576
      %3611 = vmatprep.subr.bf16.mxu0 0
      %3612 = vmatpush1.bf16.msra.mxu0 %v3577
      %3613 = vmatprep.subr.bf16.mxu0 0
      %3614 = vmatpush1.bf16.msra.mxu0 %v3578
      %3615 = vmatprep.subr.bf16.mxu0 0
      %3616 = vmatpush1.bf16.msra.mxu0 %v3579
      %3617 = vmatprep.subr.bf16.mxu0 0
      %3618 = vmatpush1.bf16.msra.mxu0 %v3580
      %3619 = vmatprep.subr.bf16.mxu0 0
      %3620 = vmatpush1.bf16.msra.mxu0 %v3581
      %3621 = vmatprep.subr.bf16.mxu0 0
      %3622 = vmatpush1.bf16.msra.mxu0 %v3582
      %3623 = vmatprep.subr.bf16.mxu0 0
      %3624 = vmatpush1.bf16.msra.mxu0 %v3583
      %3625 = vmatprep.subr.bf16.mxu0 0
      %3626 = vmatpush1.bf16.msra.mxu0 %v3584
      %3627 = vmatprep.subr.bf16.mxu0 0
      %3628 = vmatpush1.bf16.msra.mxu0 %v3585
      %3629 = vmatprep.subr.bf16.mxu0 0
      %3630 = vmatpush1.bf16.msra.mxu0 %v3586
      %3631 = vmatprep.subr.bf16.mxu0 0
      %3632 = vmatpush1.bf16.msra.mxu0 %v3587
      %3633 = vmatprep.subr.bf16.mxu0 0
      %3634 = vmatpush1.bf16.msra.mxu0 %v3588
      %3635 = vmatprep.subr.bf16.mxu0 0
      %3636 = vmatpush1.bf16.msra.mxu0 %v3589
      %3637 = vmatprep.subr.bf16.mxu0 0
      %3638 = vmatpush1.bf16.msra.mxu0 %v3590
      %3639 = vmatprep.mubr.bf16.mxu0 %v3465
      %3640 = vmatmul.mubr.bf16.gmra.mrb[0].mxu0 %v3464
      %v3641 = vpop.f32.mrb[0].mxu0
      %v3642 = vadd.f32 %v3509, %v3641
      %v3643 = vpop.f32.mrb[0].mxu0
      %v3644 = vpop.f32.mrb[0].mxu0
      %v3645 = vadd.f32 %v3509, %v3644
      %v3646 = vpop.f32.mrb[0].mxu0
      %3647 = vmatprep.mubr.bf16.mxu0 %v3467
      %3648 = vmatmul.mubr.bf16.gmra.mrb[0].mxu0 %v3466
      %v3649 = vpop.f32.mrb[0].mxu0
      %v3650 = vadd.f32 %v3509, %v3649
      %v3651 = vpop.f32.mrb[0].mxu0
      %v3652 = vpop.f32.mrb[0].mxu0
      %v3653 = vadd.f32 %v3509, %v3652
      %v3654 = vpop.f32.mrb[0].mxu0
      %3655 = vmatprep.mubr.bf16.mxu0 %v3469
      %3656 = vmatmul.mubr.bf16.gmra.mrb[0].mxu0 %v3468
      %v3657 = vpop.f32.mrb[0].mxu0
      %v3658 = vadd.f32 %v3509, %v3657
      %v3659 = vpop.f32.mrb[0].mxu0
      %v3660 = vpop.f32.mrb[0].mxu0
      %v3661 = vadd.f32 %v3509, %v3660
      %v3662 = vpop.f32.mrb[0].mxu0
      %3663 = vmatprep.mubr.bf16.mxu0 %v3471
      %3664 = vmatmul.mubr.bf16.gmra.mrb[0].mxu0 %v3470
      %v3665 = vpop.f32.mrb[0].mxu0
      %v3666 = vadd.f32 %v3509, %v3665
      %v3667 = vpop.f32.mrb[0].mxu0
      %v3668 = vpop.f32.mrb[0].mxu0
      %v3669 = vadd.f32 %v3509, %v3668
      %v3670 = vpop.f32.mrb[0].mxu0
      %3671 = vdwg.mxu0
      %v3672 = vmax.f32 %v3642, 0.0
      %v3673 = vmax.f32 %v3645, 0.0
      %v3674 = vmax.f32 %v3650, 0.0
      %v3675 = vmax.f32 %v3653, 0.0
      %v3676 = vmax.f32 %v3658, 0.0
      %v3677 = vmax.f32 %v3661, 0.0
      %v3678 = vmax.f32 %v3666, 0.0
      %v3679 = vmax.f32 %v3669, 0.0
      %v3680 = vpack.c.bf16 %v3673, %v3672
      %v3681 = vpack.c.bf16 %v3675, %v3674
      %v3682 = vpack.c.bf16 %v3677, %v3676
      %v3683 = vpack.c.bf16 %v3679, %v3678
      %v3684 = vld [vmem:[%s11] sm:$0xf]
      %v3685 = vld [vmem:[%s11 + $0x4] sm:$0xf]
      %v3686 = vld [vmem:[%s11 + $0x8] sm:$0xf]
      %v3687 = vld [vmem:[%s11 + $0xc] sm:$0xf]
      %v3688 = vld [vmem:[%s11 + $0x10] sm:$0xf]
      %v3689 = vld [vmem:[%s11 + $0x14] sm:$0xf]
      %v3690 = vld [vmem:[%s11 + $0x18] sm:$0xf]
      %v3691 = vld [vmem:[%s11 + $0x1c] sm:$0xf]
      %v3692 = vld [vmem:[%s11 + $0x20] sm:$0xf]
      %v3693 = vld [vmem:[%s11 + $0x24] sm:$0xf]
      %v3694 = vld [vmem:[%s11 + $0x28] sm:$0xf]
      %v3695 = vld [vmem:[%s11 + $0x2c] sm:$0xf]
      %v3696 = vld [vmem:[%s11 + $0x30] sm:$0xf]
      %v3697 = vld [vmem:[%s11 + $0x34] sm:$0xf]
      %v3698 = vld [vmem:[%s11 + $0x38] sm:$0xf]
      %v3699 = vld [vmem:[%s11 + $0x3c] sm:$0xf]
      %v3700 = vld [vmem:[%s12] sm:$0x1]
      %v3702 = vlaneseq
      %v3703 = vshrl.u32 %v3702, 7
      %v3704 = vsub.s32 0, %v3703
      %v3705 = vrot.slane %v3700, %v3704
      %v3723 = vunpack.c.l.b16 %v3684
      %v3724 = vunpack.c.l.b16 %v3685
      %v3725 = vunpack.c.l.b16 %v3686
      %v3726 = vunpack.c.l.b16 %v3687
      %v3727 = vunpack.c.l.b16 %v3688
      %v3728 = vunpack.c.l.b16 %v3689
      %v3729 = vunpack.c.l.b16 %v3690
      %v3730 = vunpack.c.l.b16 %v3691
      %v3731 = vunpack.c.l.b16 %v3692
      %v3732 = vunpack.c.l.b16 %v3693
      %v3733 = vunpack.c.l.b16 %v3694
      %v3734 = vunpack.c.l.b16 %v3695
      %v3735 = vunpack.c.l.b16 %v3696
      %v3736 = vunpack.c.l.b16 %v3697
      %v3737 = vunpack.c.l.b16 %v3698
      %v3738 = vunpack.c.l.b16 %v3699
      %v3739 = vpack.c.b16 %v3724, %v3723
      %v3740 = vpack.c.b16 %v3726, %v3725
      %v3741 = vpack.c.b16 %v3728, %v3727
      %v3742 = vpack.c.b16 %v3730, %v3729
      %v3743 = vpack.c.b16 %v3732, %v3731
      %v3744 = vpack.c.b16 %v3734, %v3733
      %v3745 = vpack.c.b16 %v3736, %v3735
      %v3746 = vpack.c.b16 %v3738, %v3737
      %3755 = vmatprep.subr.bf16.mxu0 0
      %3756 = vmatpush1.bf16.msra.mxu0 %v3739
      %3757 = vmatprep.subr.bf16.mxu0 0
      %3758 = vmatpush1.bf16.msra.mxu0 %v3740
      %3759 = vmatprep.subr.bf16.mxu0 0
      %3760 = vmatpush1.bf16.msra.mxu0 %v3741
      %3761 = vmatprep.subr.bf16.mxu0 0
      %3762 = vmatpush1.bf16.msra.mxu0 %v3742
      %3763 = vmatprep.subr.bf16.mxu0 0
      %3764 = vmatpush1.bf16.msra.mxu0 %v3743
      %3765 = vmatprep.subr.bf16.mxu0 0
      %3766 = vmatpush1.bf16.msra.mxu0 %v3744
      %3767 = vmatprep.subr.bf16.mxu0 0
      %3768 = vmatpush1.bf16.msra.mxu0 %v3745
      %3769 = vmatprep.subr.bf16.mxu0 0
      %3770 = vmatpush1.bf16.msra.mxu0 %v3746
      %3771 = vmatprep.subr.bf16.mxu0 0
      %3772 = vmatpush1.bf16.msra.mxu0 0
      %3773 = vmatprep.subr.bf16.mxu0 0
      %3774 = vmatpush1.bf16.msra.mxu0 0
      %3775 = vmatprep.subr.bf16.mxu0 0
      %3776 = vmatpush1.bf16.msra.mxu0 0
      %3777 = vmatprep.subr.bf16.mxu0 0
      %3778 = vmatpush1.bf16.msra.mxu0 0
      %3779 = vmatprep.subr.bf16.mxu0 0
      %3780 = vmatpush1.bf16.msra.mxu0 0
      %3781 = vmatprep.subr.bf16.mxu0 0
      %3782 = vmatpush1.bf16.msra.mxu0 0
      %3783 = vmatprep.subr.bf16.mxu0 0
      %3784 = vmatpush1.bf16.msra.mxu0 0
      %3785 = vmatprep.subr.bf16.mxu0 0
      %3786 = vmatpush1.bf16.msra.mxu0 0
      %3787 = vmatprep.mubr.bf16.mxu0 0
      %3788 = vmatmul.mubr.bf16.gmra.mrb[0].mxu0 %v3680
      %v3789 = vpop.f32.mrb[0].mxu0
      %v3790 = vadd.f32 %v3705, %v3789
      %v3791 = vpop.f32.mrb[0].mxu0
      %v3792 = vpop.f32.mrb[0].mxu0
      %v3793 = vadd.f32 %v3705, %v3792
      %v3794 = vpop.f32.mrb[0].mxu0
      %3795 = vmatprep.mubr.bf16.mxu0 0
      %3796 = vmatmul.mubr.bf16.gmra.mrb[0].mxu0 %v3681
      %v3797 = vpop.f32.mrb[0].mxu0
      %v3798 = vadd.f32 %v3705, %v3797
      %v3799 = vpop.f32.mrb[0].mxu0
      %v3800 = vpop.f32.mrb[0].mxu0
      %v3801 = vadd.f32 %v3705, %v3800
      %v3802 = vpop.f32.mrb[0].mxu0
      %3803 = vmatprep.mubr.bf16.mxu0 0
      %3804 = vmatmul.mubr.bf16.gmra.mrb[0].mxu0 %v3682
      %v3805 = vpop.f32.mrb[0].mxu0
      %v3806 = vadd.f32 %v3705, %v3805
      %v3807 = vpop.f32.mrb[0].mxu0
      %v3808 = vpop.f32.mrb[0].mxu0
      %v3809 = vadd.f32 %v3705, %v3808
      %v3810 = vpop.f32.mrb[0].mxu0
      %3811 = vmatprep.mubr.bf16.mxu0 0
      %3812 = vmatmul.mubr.bf16.gmra.mrb[0].mxu0 %v3683
      %v3813 = vpop.f32.mrb[0].mxu0
      %v3814 = vadd.f32 %v3705, %v3813
      %v3815 = vpop.f32.mrb[0].mxu0
      %v3816 = vpop.f32.mrb[0].mxu0
      %v3817 = vadd.f32 %v3705, %v3816
      %v3818 = vpop.f32.mrb[0].mxu0
      %3819 = vdwg.mxu0
      %3820 = vmax.xlane.f32.xlu0 %v3790
      %v3821 = vpop.xlane.xlu0 %3820
      %3822 = vmax.xlane.f32.xlu0 %v3793
      %v3823 = vpop.xlane.xlu0 %3822
      %3824 = vmax.xlane.f32.xlu0 %v3798
      %v3825 = vpop.xlane.xlu0 %3824
      %3826 = vmax.xlane.f32.xlu0 %v3801
      %v3827 = vpop.xlane.xlu0 %3826
      %3828 = vmax.xlane.f32.xlu0 %v3806
      %v3829 = vpop.xlane.xlu0 %3828
      %3830 = vmax.xlane.f32.xlu0 %v3809
      %v3831 = vpop.xlane.xlu0 %3830
      %3832 = vmax.xlane.f32.xlu0 %v3814
      %v3833 = vpop.xlane.xlu0 %3832
      %3834 = vmax.xlane.f32.xlu0 %v3817
      %v3835 = vpop.xlane.xlu0 %3834
      %v3836 = vsub.f32 %v3790, %v3821
      %v3837 = vsub.f32 %v3793, %v3823
      %v3838 = vsub.f32 %v3798, %v3825
      %v3839 = vsub.f32 %v3801, %v3827
      %v3840 = vsub.f32 %v3806, %v3829
      %v3841 = vsub.f32 %v3809, %v3831
      %v3842 = vsub.f32 %v3814, %v3833
      %v3843 = vsub.f32 %v3817, %v3835
      %v3844 = vmul.f32 %v3836, 1.442695
      %v3845 = vpow.pop %v3844
      %v3846 = vmul.f32 %v3837, 1.442695
      %v3847 = vpow.pop %v3846
      %v3848 = vmul.f32 %v3838, 1.442695
      %v3849 = vpow.pop %v3848
      %v3850 = vmul.f32 %v3839, 1.442695
      %v3851 = vpow.pop %v3850
      %v3852 = vmul.f32 %v3840, 1.442695
      %v3853 = vpow.pop %v3852
      %v3854 = vmul.f32 %v3841, 1.442695
      %v3855 = vpow.pop %v3854
      %v3856 = vmul.f32 %v3842, 1.442695
      %v3857 = vpow.pop %v3856
      %v3858 = vmul.f32 %v3843, 1.442695
      %v3859 = vpow.pop %v3858
      %3860 = vadd.xlane.f32.xlu0 %v3845
      %v3861 = vpop.xlane.xlu0 %3860
      %3862 = vadd.xlane.f32.xlu0 %v3847
      %v3863 = vpop.xlane.xlu0 %3862
      %3864 = vadd.xlane.f32.xlu0 %v3849
      %v3865 = vpop.xlane.xlu0 %3864
      %3866 = vadd.xlane.f32.xlu0 %v3851
      %v3867 = vpop.xlane.xlu0 %3866
      %3868 = vadd.xlane.f32.xlu0 %v3853
      %v3869 = vpop.xlane.xlu0 %3868
      %3870 = vadd.xlane.f32.xlu0 %v3855
      %v3871 = vpop.xlane.xlu0 %3870
      %3872 = vadd.xlane.f32.xlu0 %v3857
      %v3873 = vpop.xlane.xlu0 %3872
      %3874 = vadd.xlane.f32.xlu0 %v3859
      %v3875 = vpop.xlane.xlu0 %3874
      %v3876 = vlog2.pop %v3861
      %v3877 = vmul.f32 %v3876, 0.6931472
      %v3878 = vlog2.pop %v3863
      %v3879 = vmul.f32 %v3878, 0.6931472
      %v3880 = vlog2.pop %v3865
      %v3881 = vmul.f32 %v3880, 0.6931472
      %v3882 = vlog2.pop %v3867
      %v3883 = vmul.f32 %v3882, 0.6931472
      %v3884 = vlog2.pop %v3869
      %v3885 = vmul.f32 %v3884, 0.6931472
      %v3886 = vlog2.pop %v3871
      %v3887 = vmul.f32 %v3886, 0.6931472
      %v3888 = vlog2.pop %v3873
      %v3889 = vmul.f32 %v3888, 0.6931472
      %v3890 = vlog2.pop %v3875
      %v3891 = vmul.f32 %v3890, 0.6931472
      %v3892 = vsub.f32 %v3836, %v3877
      %v3893 = vsub.f32 %v3837, %v3879
      %v3894 = vsub.f32 %v3838, %v3881
      %v3895 = vsub.f32 %v3839, %v3883
      %v3896 = vsub.f32 %v3840, %v3885
      %v3897 = vsub.f32 %v3841, %v3887
      %v3898 = vsub.f32 %v3842, %v3889
      %v3899 = vsub.f32 %v3843, %v3891
      %3900 = vst [vmem:[%s515] sm:$0xff] %v3892
      %3901 = vst [vmem:[%s515 + $0x8] sm:$0xff] %v3893
      %3902 = vst [vmem:[%s515 + $0x10] sm:$0xff] %v3894
      %3903 = vst [vmem:[%s515 + $0x18] sm:$0xff] %v3895
      %3904 = vst [vmem:[%s515 + $0x20] sm:$0xff] %v3896
      %3905 = vst [vmem:[%s515 + $0x28] sm:$0xff] %v3897
      %3906 = vst [vmem:[%s515 + $0x30] sm:$0xff] %v3898
      %3907 = vst [vmem:[%s515 + $0x38] sm:$0xff] %v3899
      %s3908 = smul.u32 8, %s29
      %p3909 = scmp.lt.s32.totalorder %s28, 1
      %s3910 = scalar_select %p3909, %s28, 1
      %p3911 = scmp.lt.s32.totalorder %s3908, 7
      %s3912 = scalar_select %p3911, %s3908, 7
      %s3913 = smul.addr %s3910, 8
      %s3914 = sadd.s32 %s3912, %s3913
      %s3915 = smul.addr %s3914, 8
      %s3916 = scalar_lea.vmem %s13, %s3915
      // Predicated region
      $region73: #{pointnet_densecls_forward.5} parent=71 // pred_check
        %p3917 = pneg %p346
      $region74: #{pointnet_densecls_forward.5} parent=71 // pred_check_branch
        %3919 = sbr.rel (%p3917) target = $region76
      $region75: #{pointnet_densecls_forward.5} parent=71 // pred_region
        %s3920 = smul.u32 8, %s29
      $region76: #{pointnet_densecls_forward.5} parent=71 // pred_fallthru
        _
    $region72: #{pointnet_densecls_forward.5} parent=5 // pred_fallthru
      _
    %p3921 = scmp.le.s32.totalorder 2, %s19
    // Predicated region
    $region77: #{pointnet_densecls_forward.5} parent=5 // pred_check
      %p3922 = pneg %p3921
    $region78: #{pointnet_densecls_forward.5} parent=5 // pred_check_branch
      %3924 = sbr.rel (%p3922) target = $region80
    $region79: #{pointnet_densecls_forward.5} parent=5 // pred_region
      %s3925 = ssub.s32 %s19, 2
      // Predicated region
      $region81: #{pointnet_densecls_forward.5} parent=79 // pred_check
        %p3926 = pneg %p352
      $region82: #{pointnet_densecls_forward.5} parent=79 // pred_check_branch
        %3928 = sbr.rel (%p3926) target = $region84
      $region83: #{pointnet_densecls_forward.5} parent=79 // pred_region
        %s3929 = smul.u32 8, %s31
        %p3930 = scmp.lt.s32.totalorder %s30, 1
        %s3931 = scalar_select %p3930, %s30, 1
        %p3932 = scmp.lt.s32.totalorder %s3929, 7
        %s3933 = scalar_select %p3932, %s3929, 7
        %s3934 = smul.addr %s3931, 8
        %s3935 = sadd.s32 %s3933, %s3934
        %s3936 = smul.addr %s3935, 8
        %s3937 = scalar_lea.vmem %s13, %s3936
      $region84: #{pointnet_densecls_forward.5} parent=79 // pred_fallthru
        _
    $region80: #{pointnet_densecls_forward.5} parent=5 // pred_fallthru
      _
  $region6: #{pointnet_densecls_forward.5} parent=0 // loop_footer
    %s23 = sadd.s32 1, %s19
  $region7: #{pointnet_densecls_forward.5} parent=0 // loop_footer_branch
    %18 = sbr.rel target = $region3
  $region8: #{pointnet_densecls_forward.5} parent=0 // loop_exit
    _

</llo_original>
